<compile_context>
chip_gen: v7x
topology: tpu7x:2x2x1
jax: 0.10.0
libtpu: 0.0.40
codegen_flags: <defaults>
</compile_context>

<pallas_src>
import functools
import math

import numpy as np
import jax
import jax.numpy as jnp
from jax.experimental import pallas as pl
from jax.experimental.pallas import tpu as pltpu

# ----------------------------- small-shape config ----------------------------
NUM_CLASSES = 10
D_MODEL = 32
NHEAD = 4
NUM_LAYERS = 2
DIM_FF = 64
N_FFT = 64
HOP = 32
N_MELS = 16
BASE_F = 4
SAMPLE_RATE = 16000
LN_EPS = 1e-5
TOP_DB = 80.0

_INV_SQRT2 = 0.7071067811865476
_LOG10_SCALE = np.float32(10.0 / np.log(10.0))


# --------------------------- in-kernel math helpers ---------------------------
def _erf(x):
    # Abramowitz & Stegun 7.1.26 (max abs err ~1.5e-7): exact-GELU semantics using
    # only abs/exp/mul/add/where, all guaranteed to lower in Mosaic.
    a1, a2, a3, a4, a5 = 0.254829592, -0.284496736, 1.421413741, -1.453152027, 1.061405429
    p = 0.3275911
    ax = jnp.abs(x)
    t = 1.0 / (1.0 + p * ax)
    poly = ((((a5 * t + a4) * t + a3) * t + a2) * t + a1) * t
    y = 1.0 - poly * jnp.exp(-ax * ax)
    return jnp.where(x >= 0, y, -y)


def _gelu(x):
    # nn.GELU() default = exact erf GELU
    return 0.5 * x * (1.0 + _erf(x * _INV_SQRT2))


def _layernorm(x, g, b, eps=LN_EPS):
    mu = jnp.mean(x, axis=-1, keepdims=True)
    var = jnp.mean(jnp.square(x - mu), axis=-1, keepdims=True)
    return (x - mu) * jax.lax.rsqrt(var + eps) * g + b


# ------------------------------- Pallas kernels ------------------------------
def _frontend_kernel(fr_ref, cos_ref, sin_ref, fb_ref, o_ref, *, top_db, n_elems):
    """One batch item: framed audio -> power spectrum -> mel -> dB -> normalize."""
    fr = fr_ref[0]                                                   # [n_frames, n_fft]
    re = jnp.dot(fr, cos_ref[...], preferred_element_type=jnp.float32)
    im = jnp.dot(fr, sin_ref[...], preferred_element_type=jnp.float32)
    power = re * re + im * im                                        # |STFT|^2
    mel = jnp.dot(power, fb_ref[...], preferred_element_type=jnp.float32)
    x = jnp.maximum(mel + 1e-10, 1e-10)                              # +1e-10, amin clamp
    db = jnp.log(x) * _LOG10_SCALE                                   # 10 * log10(x)
    mx = jnp.max(jnp.max(db, axis=1, keepdims=True), axis=0, keepdims=True)
    db = jnp.maximum(db, mx - top_db)                                # top_db clamp (per sample)
    mu = jnp.sum(jnp.sum(db, axis=1, keepdims=True), axis=0, keepdims=True) / n_elems
    var = jnp.sum(jnp.sum(jnp.square(db - mu), axis=1, keepdims=True),
                  axis=0, keepdims=True) / (n_elems - 1.0)           # unbiased (torch.std)
    y = (db - mu) / (jnp.sqrt(var) + 1e-5)
    finite = (y == y) & (jnp.abs(y) < jnp.inf)                       # nan_to_num -> 0
    o_ref[0] = jnp.where(finite, y, 0.0)                             # [n_frames, n_mels]


def _conv_gemm_kernel(a_ref, w_ref, b_ref, o_ref):
    """Fused im2col-GEMM + (folded BatchNorm) bias + exact GELU, single grid step."""
    y = jnp.dot(a_ref[...], w_ref[...], preferred_element_type=jnp.float32) + b_ref[...]
    o_ref[...] = _gelu(y)


def _transformer_kernel(feat_ref, pe_ref, w_in_ref, b_in_ref,
                        ln1_g_ref, ln1_b_ref, w_qkv_ref, b_qkv_ref,
                        w_out_ref, b_out_ref, ln2_g_ref, ln2_b_ref,
                        w_ff1_ref, b_ff1_ref, w_ff2_ref, b_ff2_ref,
                        w_c1_ref, b_c1_ref, ln_cg_ref, ln_cb_ref,
                        w_c2_ref, b_c2_ref, o_ref, *, num_layers, nhead):
    """One batch item: input projection + PE + all encoder layers + pool + classifier."""
    feat = feat_ref[0]                                               # [S, feat_dim]
    x = jnp.dot(feat, w_in_ref[...], preferred_element_type=jnp.float32) + b_in_ref[...]
    x = x + pe_ref[...]                                              # positional encoding
    d_model = x.shape[-1]
    dh = d_model // nhead
    scale = 1.0 / math.sqrt(dh)

    for l in range(num_layers):
        # ---- multi-head self-attention (pre-LN), heads unrolled in one kernel ----
        xn = _layernorm(x, ln1_g_ref[l], ln1_b_ref[l])
        qkv = jnp.dot(xn, w_qkv_ref[l], preferred_element_type=jnp.float32) + b_qkv_ref[l]
        w_out = w_out_ref[l]
        attn = None
        for h in range(nhead):
            q = qkv[:, h * dh:(h + 1) * dh]
            k = qkv[:, d_model + h * dh:d_model + (h + 1) * dh]
            v = qkv[:, 2 * d_model + h * dh:2 * d_model + (h + 1) * dh]
            s = jax.lax.dot_general(q, k, (((1,), (1,)), ((), ())),
                                    preferred_element_type=jnp.float32) * scale
            m = jnp.max(s, axis=-1, keepdims=True)
            p = jnp.exp(s - m)
            p = p * pl.reciprocal(jnp.sum(p, axis=-1, keepdims=True), approx=True)
            ctx = jnp.dot(p, v, preferred_element_type=jnp.float32)          # [S, dh]
            contrib = jnp.dot(ctx, w_out[h * dh:(h + 1) * dh, :],
                              preferred_element_type=jnp.float32)            # [S, D]
            attn = contrib if attn is None else attn + contrib
        x = x + attn + b_out_ref[l]                                  # residual (+ out-proj bias)

        # ---- feed-forward (pre-LN) with fused GELU ----
        xn = _layernorm(x, ln2_g_ref[l], ln2_b_ref[l])
        f = _gelu(jnp.dot(xn, w_ff1_ref[l], preferred_element_type=jnp.float32)
                  + b_ff1_ref[l])
        f = jnp.dot(f, w_ff2_ref[l], preferred_element_type=jnp.float32) + b_ff2_ref[l]
        x = x + f

    pooled = jnp.mean(x, axis=0, keepdims=True)                      # mean over sequence
    c = jnp.dot(pooled, w_c1_ref[...], preferred_element_type=jnp.float32) + b_c1_ref[...]
    c = _gelu(_layernorm(c, ln_cg_ref[...], ln_cb_ref[...]))
    logits = jnp.dot(c, w_c2_ref[...], preferred_element_type=jnp.float32) + b_c2_ref[...]
    o_ref[0] = logits                                                # [1, num_classes]


# ------------------------------- forward wrappers ------------------------------
def mel_frontend(params, x):
    """Raw audio [B,C,T] -> normalized log-mel spectrogram [B, n_mels, n_frames]."""
    B = x.shape[0]
    audio = jnp.mean(x, axis=1)                                      # mean over channels
    pad = N_FFT // 2
    audio_p = jnp.pad(audio, ((0, 0), (pad, pad)), mode="reflect")   # center=True, reflect
    n_frames = 1 + (audio_p.shape[1] - N_FFT) // HOP
    idx = np.arange(n_frames)[:, None] * HOP + np.arange(N_FFT)[None, :]
    frames = audio_p[:, idx]                                         # [B, n_frames, n_fft]
    n_freq = N_FFT // 2 + 1
    out = pl.pallas_call(
        functools.partial(_frontend_kernel, top_db=TOP_DB,
                          n_elems=float(N_MELS * n_frames)),
        grid=(B,),
        in_specs=[
            pl.BlockSpec((1, n_frames, N_FFT), lambda b: (b, 0, 0)),
            pl.BlockSpec((N_FFT, n_freq), lambda b: (0, 0)),
            pl.BlockSpec((N_FFT, n_freq), lambda b: (0, 0)),
            pl.BlockSpec((n_freq, N_MELS), lambda b: (0, 0)),
        ],
        out_specs=pl.BlockSpec((1, n_frames, N_MELS), lambda b: (b, 0, 0)),
        out_shape=jax.ShapeDtypeStruct((B, n_frames, N_MELS), jnp.float32),
        compiler_params=pltpu.CompilerParams(dimension_semantics=("parallel",)),
    )(frames, params["cos"], params["sin"], params["fb"])
    return out.transpose(0, 2, 1)                                    # [B, n_mels, n_frames]


def conv_block_nhwc(x, w2, b2):
    """3x3 / stride 2 / pad 1 conv (+folded BN) + GELU on NHWC activations."""
    B, H, W, C = x.shape
    Ho = (H - 1) // 2 + 1
    Wo = (W - 1) // 2 + 1
    xp = jnp.pad(x, ((0, 0), (1, 1), (1, 1), (0, 0)))
    cols = []
    for kh in range(3):
        for kw in range(3):
            cols.append(xp[:, kh:kh + 2 * (Ho - 1) + 1:2,
                           kw:kw + 2 * (Wo - 1) + 1:2, :])
    patches = jnp.stack(cols, axis=-1)                               # [B,Ho,Wo,C,9] (cin,kh,kw)
    patches = patches.reshape(B * Ho * Wo, C * 9)
    Cout = w2.shape[1]
    y = pl.pallas_call(                                              # single grid step
        _conv_gemm_kernel,
        out_shape=jax.ShapeDtypeStruct((B * Ho * Wo, Cout), jnp.float32),
    )(patches, w2, b2.reshape(1, Cout))
    return y.reshape(B, Ho, Wo, Cout)                                # stay in NHWC


def transformer_head(params, feat):
    """feat [B,S,feat_dim] -> logits [B,num_classes] in a single fused pallas_call."""
    B, S, Fd = feat.shape
    L, D, FF, NC = NUM_LAYERS, D_MODEL, DIM_FF, NUM_CLASSES
    pe_s = params["pe"][:S]

    def full2(r, c):
        return pl.BlockSpec((r, c), lambda b: (0, 0))

    def full3(a, r, c):
        return pl.BlockSpec((a, r, c), lambda b: (0, 0, 0))

    in_specs = [
        pl.BlockSpec((1, S, Fd), lambda b: (b, 0, 0)),               # feat
        full2(S, D),                                                 # pe
        full2(Fd, D), full2(1, D),                                   # input projection
        full3(L, 1, D), full3(L, 1, D),                              # ln1 gamma/beta
        full3(L, D, 3 * D), full3(L, 1, 3 * D),                      # qkv
        full3(L, D, D), full3(L, 1, D),                              # out-proj
        full3(L, 1, D), full3(L, 1, D),                              # ln2 gamma/beta
        full3(L, D, FF), full3(L, 1, FF),                            # ff1
        full3(L, FF, D), full3(L, 1, D),                             # ff2
        full2(D, D), full2(1, D),                                    # classifier linear 1
        full2(1, D), full2(1, D),                                    # classifier layernorm
        full2(D, NC), full2(1, NC),                                  # classifier linear 2
    ]
    out = pl.pallas_call(
        functools.partial(_transformer_kernel, num_layers=L, nhead=NHEAD),
        grid=(B,),
        in_specs=in_specs,
        out_specs=pl.BlockSpec((1, 1, NC), lambda b: (b, 0, 0)),
        out_shape=jax.ShapeDtypeStruct((B, 1, NC), jnp.float32),
        compiler_params=pltpu.CompilerParams(dimension_semantics=("parallel",)),
    )(feat, pe_s,
      params["w_in"], params["b_in"],
      params["ln1_g"], params["ln1_b"], params["w_qkv"], params["b_qkv"],
      params["w_out"], params["b_out"], params["ln2_g"], params["ln2_b"],
      params["w_ff1"], params["b_ff1"], params["w_ff2"], params["b_ff2"],
      params["w_c1"], params["b_c1"], params["ln_c_g"], params["ln_c_b"],
      params["w_c2"], params["b_c2"])
    return out[:, 0, :]


def forward(params, x):
    feat_hw = mel_frontend(params, x)                                # [B, n_mels, n_frames]
    h = feat_hw[..., None]                                           # NHWC, C=1
    for w2, b2 in params["convs"]:
        h = conv_block_nhwc(h, w2, b2)
    B, H, W, C = h.shape
    # PyTorch: NCHW permute(0,3,1,2).reshape(B, W, C*H)  ==  NHWC transpose(0,2,3,1)
    feat = jnp.transpose(h, (0, 2, 3, 1)).reshape(B, W, C * H)       # [B, S, feat_dim]
    return transformer_head(params, feat)


# ------------------------------ parameter setup -------------------------------
class ParamGen:
    def __init__(self, seed):
        self._key = jax.random.PRNGKey(seed)

    def normal(self, shape, scale=0.02):
        self._key, sub = jax.random.split(self._key)
        return scale * jax.random.normal(sub, shape, dtype=jnp.float32)


def mel_filterbank(n_freqs, f_min, f_max, n_mels, sample_rate):
    # torchaudio.functional.melscale_fbanks, mel_scale="htk", norm=None
    all_freqs = np.linspace(0, sample_rate // 2, n_freqs)
    hz_to_mel = lambda f: 2595.0 * np.log10(1.0 + f / 700.0)
    mel_to_hz = lambda m: 700.0 * (10.0 ** (m / 2595.0) - 1.0)
    m_pts = np.linspace(hz_to_mel(f_min), hz_to_mel(f_max), n_mels + 2)
    f_pts = mel_to_hz(m_pts)
    f_diff = f_pts[1:] - f_pts[:-1]
    slopes = f_pts[None, :] - all_freqs[:, None]
    down = -slopes[:, :-2] / f_diff[:-1]
    up = slopes[:, 2:] / f_diff[1:]
    return np.maximum(0.0, np.minimum(down, up)).astype(np.float32)  # [n_freqs, n_mels]


def build_params():
    pg = ParamGen(1)

    # windowed-DFT matrices (periodic Hann folded in); imag sign irrelevant for power
    n = np.arange(N_FFT)
    k = np.arange(N_FFT // 2 + 1)
    ang = 2.0 * np.pi * np.outer(n, k) / N_FFT
    win = 0.5 * (1.0 - np.cos(2.0 * np.pi * n / N_FFT))
    cos_mat = jnp.asarray((win[:, None] * np.cos(ang)).astype(np.float32))
    sin_mat = jnp.asarray((win[:, None] * np.sin(ang)).astype(np.float32))
    fb = jnp.asarray(mel_filterbank(N_FFT // 2 + 1, 20.0, SAMPLE_RATE / 2 - 100,
                                    N_MELS, SAMPLE_RATE))

    # conv stack; eval-mode BatchNorm folded into GEMM weights/bias
    convs = []
    cin = 1
    for cout in (BASE_F, BASE_F * 2, BASE_F * 4):
        w = pg.normal((cout, cin, 3, 3))
        b = jnp.zeros((cout,), jnp.float32)
        gamma = jnp.ones((cout,), jnp.float32)
        beta = jnp.zeros((cout,), jnp.float32)
        run_mean = jnp.zeros((cout,), jnp.float32)
        run_var = jnp.ones((cout,), jnp.float32)
        scale = gamma / jnp.sqrt(run_var + 1e-5)
        w2 = w.reshape(cout, cin * 9).T * scale[None, :]             # [cin*9, cout]
        b2 = (b - run_mean) * scale + beta
        convs.append((w2, b2))
        cin = cout

    feat_dim = (BASE_F * 4) * N_MELS // 8                            # input_projection in_features

    # positional encoding buffer
    max_len = 512
    position = np.arange(max_len)[:, None].astype(np.float64)
    div_term = np.exp(np.arange(0, D_MODEL, 2) * (-math.log(10000.0) / D_MODEL))
    pe = np.zeros((max_len, D_MODEL), np.float32)
    pe[:, 0::2] = np.sin(position * div_term)
    pe[:, 1::2] = np.cos(position * div_term)

    def stack(make):
        return jnp.stack([make() for _ in range(NUM_LAYERS)], axis=0)

    return dict(
        cos=cos_mat, sin=sin_mat, fb=fb, convs=convs,
        w_in=pg.normal((feat_dim, D_MODEL)),
        b_in=jnp.zeros((1, D_MODEL), jnp.float32),
        pe=jnp.asarray(pe),
        # transformer layer params stacked along a leading layer axis
        ln1_g=jnp.ones((NUM_LAYERS, 1, D_MODEL), jnp.float32),
        ln1_b=jnp.zeros((NUM_LAYERS, 1, D_MODEL), jnp.float32),
        w_qkv=stack(lambda: pg.normal((D_MODEL, 3 * D_MODEL))),
        b_qkv=jnp.zeros((NUM_LAYERS, 1, 3 * D_MODEL), jnp.float32),
        w_out=stack(lambda: pg.normal((D_MODEL, D_MODEL))),
        b_out=jnp.zeros((NUM_LAYERS, 1, D_MODEL), jnp.float32),
        ln2_g=jnp.ones((NUM_LAYERS, 1, D_MODEL), jnp.float32),
        ln2_b=jnp.zeros((NUM_LAYERS, 1, D_MODEL), jnp.float32),
        w_ff1=stack(lambda: pg.normal((D_MODEL, DIM_FF))),
        b_ff1=jnp.zeros((NUM_LAYERS, 1, DIM_FF), jnp.float32),
        w_ff2=stack(lambda: pg.normal((DIM_FF, D_MODEL))),
        b_ff2=jnp.zeros((NUM_LAYERS, 1, D_MODEL), jnp.float32),
        # classifier
        w_c1=pg.normal((D_MODEL, D_MODEL)),
        b_c1=jnp.zeros((1, D_MODEL), jnp.float32),
        ln_c_g=jnp.ones((1, D_MODEL), jnp.float32),
        ln_c_b=jnp.zeros((1, D_MODEL), jnp.float32),
        w_c2=pg.normal((D_MODEL, NUM_CLASSES)),
        b_c2=jnp.zeros((1, NUM_CLASSES), jnp.float32),
    )


# ------------------------------------ main ------------------------------------
if __name__ == "__main__":
    params = build_params()
    # raw audio waveform [batch, channels, time]
    x = jax.random.normal(jax.random.PRNGKey(0), (2, 2, 1024), dtype=jnp.float32)
    logits = jax.jit(forward)(params, x)
    logits = jax.block_until_ready(logits)
    assert logits.shape == (2, NUM_CLASSES)
    assert bool(jnp.all(jnp.isfinite(logits)))
    print("KERNEL_OK")
</pallas_src>

<mosaic_0001>
module attributes {stable_mosaic.version = 11 : i64} {
  func.func private @main(%arg0: i32) attributes {dimension_semantics = [#tpu.dimension_semantics<core_parallel>], iteration_bounds = array<i64: 2>, tpu.core_type = #tpu.core_type<sc_scalar_subcore>, window_params = []} {
    return
  }
}

module attributes {stable_mosaic.version = 11 : i64} {
  func.func private @main(%arg0: i32) attributes {dimension_semantics = [#tpu.dimension_semantics<core_parallel>], iteration_bounds = array<i64: 2>, tpu.core_type = #tpu.core_type<sc_scalar_subcore>, window_params = []} {
    return
  }
}

module attributes {stable_mosaic.version = 11 : i64} {
  func.func @_frontend_kernel(%arg0: i32, %arg1: memref<1x33x64xf32, #tpu.memory_space<vmem>>, %arg2: memref<64x33xf32, #tpu.memory_space<vmem>>, %arg3: memref<64x33xf32, #tpu.memory_space<vmem>>, %arg4: memref<33x16xf32, #tpu.memory_space<vmem>>, %arg5: memref<1x33x16xf32, #tpu.memory_space<vmem>>) attributes {dimension_semantics = [#tpu.dimension_semantics<parallel>], iteration_bounds = array<i64: 2>, scalar_prefetch = 0 : i64, scratch_operands = 0 : i64, tpu.core_type = #tpu.core_type<tc>, window_params = [{transform_indices = @transform_0, window_bounds = array<i64: 1, 33, 64>}, {pipeline_mode = #tpu.pipeline_mode<synchronous>, transform_indices = @transform_1, window_bounds = array<i64: 64, 33>}, {pipeline_mode = #tpu.pipeline_mode<synchronous>, transform_indices = @transform_2, window_bounds = array<i64: 64, 33>}, {pipeline_mode = #tpu.pipeline_mode<synchronous>, transform_indices = @transform_3, window_bounds = array<i64: 33, 16>}, {transform_indices = @transform_4, window_bounds = array<i64: 1, 33, 16>}]} {
    %c0 = arith.constant 0 : index
    %c0_0 = arith.constant 0 : index
    %c0_1 = arith.constant 0 : index
    %0 = vector.load %arg1[%c0, %c0_0, %c0_1] : memref<1x33x64xf32, #tpu.memory_space<vmem>>, vector<1x33x64xf32>
    %1 = vector.shape_cast %0 : vector<1x33x64xf32> to vector<33x64xf32>
    %c0_2 = arith.constant 0 : index
    %c0_3 = arith.constant 0 : index
    %2 = vector.load %arg2[%c0_2, %c0_3] : memref<64x33xf32, #tpu.memory_space<vmem>>, vector<64x33xf32>
    %cst = arith.constant dense<0.000000e+00> : vector<33x33xf32>
    %3 = tpu.matmul %1, %2, %cst {dimension_numbers = #tpu.dot_dimension_numbers<[1], [0], [0], [1], [0, 0, 1, 1], [], []>} : vector<33x64xf32>, vector<64x33xf32>, vector<33x33xf32> -> vector<33x33xf32>
    %c0_4 = arith.constant 0 : index
    %c0_5 = arith.constant 0 : index
    %4 = vector.load %arg3[%c0_4, %c0_5] : memref<64x33xf32, #tpu.memory_space<vmem>>, vector<64x33xf32>
    %cst_6 = arith.constant dense<0.000000e+00> : vector<33x33xf32>
    %5 = tpu.matmul %1, %4, %cst_6 {dimension_numbers = #tpu.dot_dimension_numbers<[1], [0], [0], [1], [0, 0, 1, 1], [], []>} : vector<33x64xf32>, vector<64x33xf32>, vector<33x33xf32> -> vector<33x33xf32>
    %6 = arith.mulf %3, %3 : vector<33x33xf32>
    %7 = arith.mulf %5, %5 : vector<33x33xf32>
    %8 = arith.addf %6, %7 : vector<33x33xf32>
    %c0_7 = arith.constant 0 : index
    %c0_8 = arith.constant 0 : index
    %9 = vector.load %arg4[%c0_7, %c0_8] : memref<33x16xf32, #tpu.memory_space<vmem>>, vector<33x16xf32>
    %cst_9 = arith.constant dense<0.000000e+00> : vector<33x16xf32>
    %10 = tpu.matmul %8, %9, %cst_9 {dimension_numbers = #tpu.dot_dimension_numbers<[1], [0], [0], [1], [0, 0, 1, 1], [], []>} : vector<33x33xf32>, vector<33x16xf32>, vector<33x16xf32> -> vector<33x16xf32>
    %cst_10 = arith.constant 1.000000e-10 : f32
    %11 = vector.broadcast %cst_10 : f32 to vector<33x16xf32>
    %12 = arith.addf %10, %11 : vector<33x16xf32>
    %cst_11 = arith.constant 1.000000e-10 : f32
    %13 = vector.broadcast %cst_11 : f32 to vector<33x16xf32>
    %14 = arith.maximumf %12, %13 : vector<33x16xf32>
    %15 = math.log %14 : vector<33x16xf32>
    %cst_12 = arith.constant 4.34294462 : f32
    %16 = vector.broadcast %cst_12 : f32 to vector<33x16xf32>
    %17 = arith.mulf %15, %16 : vector<33x16xf32>
    %cst_13 = arith.constant dense<0xFF800000> : vector<33xf32>
    %18 = vector.multi_reduction <maximumf>, %17, %cst_13 [1] : vector<33x16xf32> to vector<33xf32>
    %19 = vector.shape_cast %18 : vector<33xf32> to vector<33x1xf32>
    %cst_14 = arith.constant dense<0xFF800000> : vector<1xf32>
    %20 = vector.multi_reduction <maximumf>, %19, %cst_14 [0] : vector<33x1xf32> to vector<1xf32>
    %21 = vector.shape_cast %20 : vector<1xf32> to vector<1x1xf32>
    %cst_15 = arith.constant 8.000000e+01 : f32
    %22 = vector.broadcast %cst_15 : f32 to vector<1x1xf32>
    %23 = arith.subf %21, %22 : vector<1x1xf32>
    %24 = vector.broadcast %23 : vector<1x1xf32> to vector<33x16xf32>
    %25 = arith.maximumf %17, %24 : vector<33x16xf32>
    %cst_16 = arith.constant dense<0.000000e+00> : vector<33xf32>
    %26 = vector.multi_reduction <add>, %25, %cst_16 [1] : vector<33x16xf32> to vector<33xf32>
    %27 = vector.shape_cast %26 : vector<33xf32> to vector<33x1xf32>
    %cst_17 = arith.constant dense<0.000000e+00> : vector<1xf32>
    %28 = vector.multi_reduction <add>, %27, %cst_17 [0] : vector<33x1xf32> to vector<1xf32>
    %29 = vector.shape_cast %28 : vector<1xf32> to vector<1x1xf32>
    %cst_18 = arith.constant 5.280000e+02 : f32
    %30 = vector.broadcast %cst_18 : f32 to vector<1x1xf32>
    %31 = arith.divf %29, %30 : vector<1x1xf32>
    %32 = vector.broadcast %31 : vector<1x1xf32> to vector<33x16xf32>
    %33 = arith.subf %25, %32 : vector<33x16xf32>
    %34 = arith.mulf %33, %33 : vector<33x16xf32>
    %cst_19 = arith.constant dense<0.000000e+00> : vector<33xf32>
    %35 = vector.multi_reduction <add>, %34, %cst_19 [1] : vector<33x16xf32> to vector<33xf32>
    %36 = vector.shape_cast %35 : vector<33xf32> to vector<33x1xf32>
    %cst_20 = arith.constant dense<0.000000e+00> : vector<1xf32>
    %37 = vector.multi_reduction <add>, %36, %cst_20 [0] : vector<33x1xf32> to vector<1xf32>
    %38 = vector.shape_cast %37 : vector<1xf32> to vector<1x1xf32>
    %cst_21 = arith.constant 5.270000e+02 : f32
    %39 = vector.broadcast %cst_21 : f32 to vector<1x1xf32>
    %40 = arith.divf %38, %39 : vector<1x1xf32>
    %41 = vector.broadcast %31 : vector<1x1xf32> to vector<33x16xf32>
    %42 = arith.subf %25, %41 : vector<33x16xf32>
    %43 = math.sqrt %40 : vector<1x1xf32>
    %cst_22 = arith.constant 9.99999974E-6 : f32
    %44 = vector.broadcast %cst_22 : f32 to vector<1x1xf32>
    %45 = arith.addf %43, %44 : vector<1x1xf32>
    %46 = vector.broadcast %45 : vector<1x1xf32> to vector<33x16xf32>
    %47 = arith.divf %42, %46 : vector<33x16xf32>
    %48 = arith.cmpf oeq, %47, %47 : vector<33x16xf32>
    %49 = math.absf %47 : vector<33x16xf32>
    %cst_23 = arith.constant 0x7F800000 : f32
    %50 = vector.broadcast %cst_23 : f32 to vector<33x16xf32>
    %51 = arith.cmpf olt, %49, %50 : vector<33x16xf32>
    %52 = arith.andi %48, %51 : vector<33x16xi1>
    %cst_24 = arith.constant 0.000000e+00 : f32
    %53 = vector.broadcast %cst_24 : f32 to vector<33x16xf32>
    %54 = arith.select %52, %47, %53 : vector<33x16xi1>, vector<33x16xf32>
    %c0_25 = arith.constant 0 : index
    %c0_26 = arith.constant 0 : index
    %c0_27 = arith.constant 0 : index
    %55 = vector.load %arg5[%c0_25, %c0_26, %c0_27] : memref<1x33x16xf32, #tpu.memory_space<vmem>>, vector<1x33x16xf32>
    %56 = vector.shape_cast %55 : vector<1x33x16xf32> to vector<33x16xf32>
    %57 = vector.shape_cast %54 : vector<33x16xf32> to vector<1x33x16xf32>
    tpu.vector_store %arg5[%c0_25, %c0_26, %c0_27], %57 {strides = array<i32>} : memref<1x33x16xf32, #tpu.memory_space<vmem>>, vector<1x33x16xf32>,
    return
  }
  func.func @transform_0(%arg0: i32) -> (i32, i32, i32) {
    %c0_i32 = arith.constant 0 : i32
    %c0_i32_0 = arith.constant 0 : i32
    %c0_i32_1 = arith.constant 0 : i32
    return %arg0, %c0_i32, %c0_i32_0 : i32, i32, i32
  }
  func.func @transform_1(%arg0: i32) -> (i32, i32) {
    %c0_i32 = arith.constant 0 : i32
    %c0_i32_0 = arith.constant 0 : i32
    %c0_i32_1 = arith.constant 0 : i32
    return %c0_i32, %c0_i32_0 : i32, i32
  }
  func.func @transform_2(%arg0: i32) -> (i32, i32) {
    %c0_i32 = arith.constant 0 : i32
    %c0_i32_0 = arith.constant 0 : i32
    %c0_i32_1 = arith.constant 0 : i32
    return %c0_i32, %c0_i32_0 : i32, i32
  }
  func.func @transform_3(%arg0: i32) -> (i32, i32) {
    %c0_i32 = arith.constant 0 : i32
    %c0_i32_0 = arith.constant 0 : i32
    %c0_i32_1 = arith.constant 0 : i32
    return %c0_i32, %c0_i32_0 : i32, i32
  }
  func.func @transform_4(%arg0: i32) -> (i32, i32, i32) {
    %c0_i32 = arith.constant 0 : i32
    %c0_i32_0 = arith.constant 0 : i32
    %c0_i32_1 = arith.constant 0 : i32
    return %arg0, %c0_i32, %c0_i32_0 : i32, i32, i32
  }
}

module attributes {stable_mosaic.version = 11 : i64} {
  func.func @_conv_gemm_kernel(%arg0: memref<272x9xf32, #tpu.memory_space<vmem>>, %arg1: memref<9x4xf32, #tpu.memory_space<vmem>>, %arg2: memref<1x4xf32, #tpu.memory_space<vmem>>, %arg3: memref<272x4xf32, #tpu.memory_space<vmem>>) attributes {dimension_semantics = [], scalar_prefetch = 0 : i64, scratch_operands = 0 : i64, tpu.core_type = #tpu.core_type<tc>} {
    %c0 = arith.constant 0 : index
    %c0_0 = arith.constant 0 : index
    %0 = vector.load %arg0[%c0, %c0_0] : memref<272x9xf32, #tpu.memory_space<vmem>>, vector<272x9xf32>
    %c0_1 = arith.constant 0 : index
    %c0_2 = arith.constant 0 : index
    %1 = vector.load %arg1[%c0_1, %c0_2] : memref<9x4xf32, #tpu.memory_space<vmem>>, vector<9x4xf32>
    %cst = arith.constant dense<0.000000e+00> : vector<272x4xf32>
    %2 = tpu.matmul %0, %1, %cst {dimension_numbers = #tpu.dot_dimension_numbers<[1], [0], [0], [1], [0, 0, 1, 1], [], []>} : vector<272x9xf32>, vector<9x4xf32>, vector<272x4xf32> -> vector<272x4xf32>
    %c0_3 = arith.constant 0 : index
    %c0_4 = arith.constant 0 : index
    %3 = vector.load %arg2[%c0_3, %c0_4] : memref<1x4xf32, #tpu.memory_space<vmem>>, vector<1x4xf32>
    %4 = vector.broadcast %3 : vector<1x4xf32> to vector<272x4xf32>
    %5 = arith.addf %2, %4 : vector<272x4xf32>
    %cst_5 = arith.constant 5.000000e-01 : f32
    %6 = vector.broadcast %cst_5 : f32 to vector<272x4xf32>
    %7 = arith.mulf %6, %5 : vector<272x4xf32>
    %cst_6 = arith.constant 0.707106769 : f32
    %8 = vector.broadcast %cst_6 : f32 to vector<272x4xf32>
    %9 = arith.mulf %5, %8 : vector<272x4xf32>
    %10 = math.absf %9 : vector<272x4xf32>
    %cst_7 = arith.constant 0.327591091 : f32
    %11 = vector.broadcast %cst_7 : f32 to vector<272x4xf32>
    %12 = arith.mulf %11, %10 : vector<272x4xf32>
    %cst_8 = arith.constant 1.000000e+00 : f32
    %13 = vector.broadcast %cst_8 : f32 to vector<272x4xf32>
    %14 = arith.addf %13, %12 : vector<272x4xf32>
    %cst_9 = arith.constant 1.000000e+00 : f32
    %15 = vector.broadcast %cst_9 : f32 to vector<272x4xf32>
    %16 = arith.divf %15, %14 : vector<272x4xf32>
    %cst_10 = arith.constant 1.06140542 : f32
    %17 = vector.broadcast %cst_10 : f32 to vector<272x4xf32>
    %18 = arith.mulf %17, %16 : vector<272x4xf32>
    %cst_11 = arith.constant -1.45315206 : f32
    %19 = vector.broadcast %cst_11 : f32 to vector<272x4xf32>
    %20 = arith.addf %18, %19 : vector<272x4xf32>
    %21 = arith.mulf %20, %16 : vector<272x4xf32>
    %cst_12 = arith.constant 1.42141378 : f32
    %22 = vector.broadcast %cst_12 : f32 to vector<272x4xf32>
    %23 = arith.addf %21, %22 : vector<272x4xf32>
    %24 = arith.mulf %23, %16 : vector<272x4xf32>
    %cst_13 = arith.constant -0.284496725 : f32
    %25 = vector.broadcast %cst_13 : f32 to vector<272x4xf32>
    %26 = arith.addf %24, %25 : vector<272x4xf32>
    %27 = arith.mulf %26, %16 : vector<272x4xf32>
    %cst_14 = arith.constant 0.254829586 : f32
    %28 = vector.broadcast %cst_14 : f32 to vector<272x4xf32>
    %29 = arith.addf %27, %28 : vector<272x4xf32>
    %30 = arith.mulf %29, %16 : vector<272x4xf32>
    %cst_15 = arith.constant 0.000000e+00 : f32
    %31 = vector.broadcast %cst_15 : f32 to vector<272x4xf32>
    %32 = arith.subf %31, %10 : vector<272x4xf32>
    %33 = arith.mulf %32, %10 : vector<272x4xf32>
    %34 = math.exp %33 : vector<272x4xf32>
    %35 = arith.mulf %30, %34 : vector<272x4xf32>
    %cst_16 = arith.constant 1.000000e+00 : f32
    %36 = vector.broadcast %cst_16 : f32 to vector<272x4xf32>
    %37 = arith.subf %36, %35 : vector<272x4xf32>
    %cst_17 = arith.constant 0.000000e+00 : f32
    %38 = vector.broadcast %cst_17 : f32 to vector<272x4xf32>
    %39 = arith.cmpf oge, %9, %38 : vector<272x4xf32>
    %cst_18 = arith.constant 0.000000e+00 : f32
    %40 = vector.broadcast %cst_18 : f32 to vector<272x4xf32>
    %41 = arith.subf %40, %37 : vector<272x4xf32>
    %42 = arith.select %39, %37, %41 : vector<272x4xi1>, vector<272x4xf32>
    %cst_19 = arith.constant 1.000000e+00 : f32
    %43 = vector.broadcast %cst_19 : f32 to vector<272x4xf32>
    %44 = arith.addf %43, %42 : vector<272x4xf32>
    %45 = arith.mulf %7, %44 : vector<272x4xf32>
    %c0_20 = arith.constant 0 : index
    %c0_21 = arith.constant 0 : index
    %46 = vector.load %arg3[%c0_20, %c0_21] : memref<272x4xf32, #tpu.memory_space<vmem>>, vector<272x4xf32>
    tpu.vector_store %arg3[%c0_20, %c0_21], %45 {strides = array<i32>} : memref<272x4xf32, #tpu.memory_space<vmem>>, vector<272x4xf32>,
    return
  }
}

module attributes {stable_mosaic.version = 11 : i64} {
  func.func @_conv_gemm_kernel(%arg0: memref<72x36xf32, #tpu.memory_space<vmem>>, %arg1: memref<36x8xf32, #tpu.memory_space<vmem>>, %arg2: memref<1x8xf32, #tpu.memory_space<vmem>>, %arg3: memref<72x8xf32, #tpu.memory_space<vmem>>) attributes {dimension_semantics = [], scalar_prefetch = 0 : i64, scratch_operands = 0 : i64, tpu.core_type = #tpu.core_type<tc>} {
    %c0 = arith.constant 0 : index
    %c0_0 = arith.constant 0 : index
    %0 = vector.load %arg0[%c0, %c0_0] : memref<72x36xf32, #tpu.memory_space<vmem>>, vector<72x36xf32>
    %c0_1 = arith.constant 0 : index
    %c0_2 = arith.constant 0 : index
    %1 = vector.load %arg1[%c0_1, %c0_2] : memref<36x8xf32, #tpu.memory_space<vmem>>, vector<36x8xf32>
    %cst = arith.constant dense<0.000000e+00> : vector<72x8xf32>
    %2 = tpu.matmul %0, %1, %cst {dimension_numbers = #tpu.dot_dimension_numbers<[1], [0], [0], [1], [0, 0, 1, 1], [], []>} : vector<72x36xf32>, vector<36x8xf32>, vector<72x8xf32> -> vector<72x8xf32>
    %c0_3 = arith.constant 0 : index
    %c0_4 = arith.constant 0 : index
    %3 = vector.load %arg2[%c0_3, %c0_4] : memref<1x8xf32, #tpu.memory_space<vmem>>, vector<1x8xf32>
    %4 = vector.broadcast %3 : vector<1x8xf32> to vector<72x8xf32>
    %5 = arith.addf %2, %4 : vector<72x8xf32>
    %cst_5 = arith.constant 5.000000e-01 : f32
    %6 = vector.broadcast %cst_5 : f32 to vector<72x8xf32>
    %7 = arith.mulf %6, %5 : vector<72x8xf32>
    %cst_6 = arith.constant 0.707106769 : f32
    %8 = vector.broadcast %cst_6 : f32 to vector<72x8xf32>
    %9 = arith.mulf %5, %8 : vector<72x8xf32>
    %10 = math.absf %9 : vector<72x8xf32>
    %cst_7 = arith.constant 0.327591091 : f32
    %11 = vector.broadcast %cst_7 : f32 to vector<72x8xf32>
    %12 = arith.mulf %11, %10 : vector<72x8xf32>
    %cst_8 = arith.constant 1.000000e+00 : f32
    %13 = vector.broadcast %cst_8 : f32 to vector<72x8xf32>
    %14 = arith.addf %13, %12 : vector<72x8xf32>
    %cst_9 = arith.constant 1.000000e+00 : f32
    %15 = vector.broadcast %cst_9 : f32 to vector<72x8xf32>
    %16 = arith.divf %15, %14 : vector<72x8xf32>
    %cst_10 = arith.constant 1.06140542 : f32
    %17 = vector.broadcast %cst_10 : f32 to vector<72x8xf32>
    %18 = arith.mulf %17, %16 : vector<72x8xf32>
    %cst_11 = arith.constant -1.45315206 : f32
    %19 = vector.broadcast %cst_11 : f32 to vector<72x8xf32>
    %20 = arith.addf %18, %19 : vector<72x8xf32>
    %21 = arith.mulf %20, %16 : vector<72x8xf32>
    %cst_12 = arith.constant 1.42141378 : f32
    %22 = vector.broadcast %cst_12 : f32 to vector<72x8xf32>
    %23 = arith.addf %21, %22 : vector<72x8xf32>
    %24 = arith.mulf %23, %16 : vector<72x8xf32>
    %cst_13 = arith.constant -0.284496725 : f32
    %25 = vector.broadcast %cst_13 : f32 to vector<72x8xf32>
    %26 = arith.addf %24, %25 : vector<72x8xf32>
    %27 = arith.mulf %26, %16 : vector<72x8xf32>
    %cst_14 = arith.constant 0.254829586 : f32
    %28 = vector.broadcast %cst_14 : f32 to vector<72x8xf32>
    %29 = arith.addf %27, %28 : vector<72x8xf32>
    %30 = arith.mulf %29, %16 : vector<72x8xf32>
    %cst_15 = arith.constant 0.000000e+00 : f32
    %31 = vector.broadcast %cst_15 : f32 to vector<72x8xf32>
    %32 = arith.subf %31, %10 : vector<72x8xf32>
    %33 = arith.mulf %32, %10 : vector<72x8xf32>
    %34 = math.exp %33 : vector<72x8xf32>
    %35 = arith.mulf %30, %34 : vector<72x8xf32>
    %cst_16 = arith.constant 1.000000e+00 : f32
    %36 = vector.broadcast %cst_16 : f32 to vector<72x8xf32>
    %37 = arith.subf %36, %35 : vector<72x8xf32>
    %cst_17 = arith.constant 0.000000e+00 : f32
    %38 = vector.broadcast %cst_17 : f32 to vector<72x8xf32>
    %39 = arith.cmpf oge, %9, %38 : vector<72x8xf32>
    %cst_18 = arith.constant 0.000000e+00 : f32
    %40 = vector.broadcast %cst_18 : f32 to vector<72x8xf32>
    %41 = arith.subf %40, %37 : vector<72x8xf32>
    %42 = arith.select %39, %37, %41 : vector<72x8xi1>, vector<72x8xf32>
    %cst_19 = arith.constant 1.000000e+00 : f32
    %43 = vector.broadcast %cst_19 : f32 to vector<72x8xf32>
    %44 = arith.addf %43, %42 : vector<72x8xf32>
    %45 = arith.mulf %7, %44 : vector<72x8xf32>
    %c0_20 = arith.constant 0 : index
    %c0_21 = arith.constant 0 : index
    %46 = vector.load %arg3[%c0_20, %c0_21] : memref<72x8xf32, #tpu.memory_space<vmem>>, vector<72x8xf32>
    tpu.vector_store %arg3[%c0_20, %c0_21], %45 {strides = array<i32>} : memref<72x8xf32, #tpu.memory_space<vmem>>, vector<72x8xf32>,
    return
  }
}

module attributes {stable_mosaic.version = 11 : i64} {
  func.func @_conv_gemm_kernel(%arg0: memref<20x72xf32, #tpu.memory_space<vmem>>, %arg1: memref<72x16xf32, #tpu.memory_space<vmem>>, %arg2: memref<1x16xf32, #tpu.memory_space<vmem>>, %arg3: memref<20x16xf32, #tpu.memory_space<vmem>>) attributes {dimension_semantics = [], scalar_prefetch = 0 : i64, scratch_operands = 0 : i64, tpu.core_type = #tpu.core_type<tc>} {
    %c0 = arith.constant 0 : index
    %c0_0 = arith.constant 0 : index
    %0 = vector.load %arg0[%c0, %c0_0] : memref<20x72xf32, #tpu.memory_space<vmem>>, vector<20x72xf32>
    %c0_1 = arith.constant 0 : index
    %c0_2 = arith.constant 0 : index
    %1 = vector.load %arg1[%c0_1, %c0_2] : memref<72x16xf32, #tpu.memory_space<vmem>>, vector<72x16xf32>
    %cst = arith.constant dense<0.000000e+00> : vector<20x16xf32>
    %2 = tpu.matmul %0, %1, %cst {dimension_numbers = #tpu.dot_dimension_numbers<[1], [0], [0], [1], [0, 0, 1, 1], [], []>} : vector<20x72xf32>, vector<72x16xf32>, vector<20x16xf32> -> vector<20x16xf32>
    %c0_3 = arith.constant 0 : index
    %c0_4 = arith.constant 0 : index
    %3 = vector.load %arg2[%c0_3, %c0_4] : memref<1x16xf32, #tpu.memory_space<vmem>>, vector<1x16xf32>
    %4 = vector.broadcast %3 : vector<1x16xf32> to vector<20x16xf32>
    %5 = arith.addf %2, %4 : vector<20x16xf32>
    %cst_5 = arith.constant 5.000000e-01 : f32
    %6 = vector.broadcast %cst_5 : f32 to vector<20x16xf32>
    %7 = arith.mulf %6, %5 : vector<20x16xf32>
    %cst_6 = arith.constant 0.707106769 : f32
    %8 = vector.broadcast %cst_6 : f32 to vector<20x16xf32>
    %9 = arith.mulf %5, %8 : vector<20x16xf32>
    %10 = math.absf %9 : vector<20x16xf32>
    %cst_7 = arith.constant 0.327591091 : f32
    %11 = vector.broadcast %cst_7 : f32 to vector<20x16xf32>
    %12 = arith.mulf %11, %10 : vector<20x16xf32>
    %cst_8 = arith.constant 1.000000e+00 : f32
    %13 = vector.broadcast %cst_8 : f32 to vector<20x16xf32>
    %14 = arith.addf %13, %12 : vector<20x16xf32>
    %cst_9 = arith.constant 1.000000e+00 : f32
    %15 = vector.broadcast %cst_9 : f32 to vector<20x16xf32>
    %16 = arith.divf %15, %14 : vector<20x16xf32>
    %cst_10 = arith.constant 1.06140542 : f32
    %17 = vector.broadcast %cst_10 : f32 to vector<20x16xf32>
    %18 = arith.mulf %17, %16 : vector<20x16xf32>
    %cst_11 = arith.constant -1.45315206 : f32
    %19 = vector.broadcast %cst_11 : f32 to vector<20x16xf32>
    %20 = arith.addf %18, %19 : vector<20x16xf32>
    %21 = arith.mulf %20, %16 : vector<20x16xf32>
    %cst_12 = arith.constant 1.42141378 : f32
    %22 = vector.broadcast %cst_12 : f32 to vector<20x16xf32>
    %23 = arith.addf %21, %22 : vector<20x16xf32>
    %24 = arith.mulf %23, %16 : vector<20x16xf32>
    %cst_13 = arith.constant -0.284496725 : f32
    %25 = vector.broadcast %cst_13 : f32 to vector<20x16xf32>
    %26 = arith.addf %24, %25 : vector<20x16xf32>
    %27 = arith.mulf %26, %16 : vector<20x16xf32>
    %cst_14 = arith.constant 0.254829586 : f32
    %28 = vector.broadcast %cst_14 : f32 to vector<20x16xf32>
    %29 = arith.addf %27, %28 : vector<20x16xf32>
    %30 = arith.mulf %29, %16 : vector<20x16xf32>
    %cst_15 = arith.constant 0.000000e+00 : f32
    %31 = vector.broadcast %cst_15 : f32 to vector<20x16xf32>
    %32 = arith.subf %31, %10 : vector<20x16xf32>
    %33 = arith.mulf %32, %10 : vector<20x16xf32>
    %34 = math.exp %33 : vector<20x16xf32>
    %35 = arith.mulf %30, %34 : vector<20x16xf32>
    %cst_16 = arith.constant 1.000000e+00 : f32
    %36 = vector.broadcast %cst_16 : f32 to vector<20x16xf32>
    %37 = arith.subf %36, %35 : vector<20x16xf32>
    %cst_17 = arith.constant 0.000000e+00 : f32
    %38 = vector.broadcast %cst_17 : f32 to vector<20x16xf32>
    %39 = arith.cmpf oge, %9, %38 : vector<20x16xf32>
    %cst_18 = arith.constant 0.000000e+00 : f32
    %40 = vector.broadcast %cst_18 : f32 to vector<20x16xf32>
    %41 = arith.subf %40, %37 : vector<20x16xf32>
    %42 = arith.select %39, %37, %41 : vector<20x16xi1>, vector<20x16xf32>
    %cst_19 = arith.constant 1.000000e+00 : f32
    %43 = vector.broadcast %cst_19 : f32 to vector<20x16xf32>
    %44 = arith.addf %43, %42 : vector<20x16xf32>
    %45 = arith.mulf %7, %44 : vector<20x16xf32>
    %c0_20 = arith.constant 0 : index
    %c0_21 = arith.constant 0 : index
    %46 = vector.load %arg3[%c0_20, %c0_21] : memref<20x16xf32, #tpu.memory_space<vmem>>, vector<20x16xf32>
    tpu.vector_store %arg3[%c0_20, %c0_21], %45 {strides = array<i32>} : memref<20x16xf32, #tpu.memory_space<vmem>>, vector<20x16xf32>,
    return
  }
}

module attributes {stable_mosaic.version = 11 : i64} {
  func.func @_transformer_kernel(%arg0: i32, %arg1: memref<1x5x32xf32, #tpu.memory_space<vmem>>, %arg2: memref<5x32xf32, #tpu.memory_space<vmem>>, %arg3: memref<32x32xf32, #tpu.memory_space<vmem>>, %arg4: memref<1x32xf32, #tpu.memory_space<vmem>>, %arg5: memref<2x1x32xf32, #tpu.memory_space<vmem>>, %arg6: memref<2x1x32xf32, #tpu.memory_space<vmem>>, %arg7: memref<2x32x96xf32, #tpu.memory_space<vmem>>, %arg8: memref<2x1x96xf32, #tpu.memory_space<vmem>>, %arg9: memref<2x32x32xf32, #tpu.memory_space<vmem>>, %arg10: memref<2x1x32xf32, #tpu.memory_space<vmem>>, %arg11: memref<2x1x32xf32, #tpu.memory_space<vmem>>, %arg12: memref<2x1x32xf32, #tpu.memory_space<vmem>>, %arg13: memref<2x32x64xf32, #tpu.memory_space<vmem>>, %arg14: memref<2x1x64xf32, #tpu.memory_space<vmem>>, %arg15: memref<2x64x32xf32, #tpu.memory_space<vmem>>, %arg16: memref<2x1x32xf32, #tpu.memory_space<vmem>>, %arg17: memref<32x32xf32, #tpu.memory_space<vmem>>, %arg18: memref<1x32xf32, #tpu.memory_space<vmem>>, %arg19: memref<1x32xf32, #tpu.memory_space<vmem>>, %arg20: memref<1x32xf32, #tpu.memory_space<vmem>>, %arg21: memref<32x10xf32, #tpu.memory_space<vmem>>, %arg22: memref<1x10xf32, #tpu.memory_space<vmem>>, %arg23: memref<1x1x10xf32, #tpu.memory_space<vmem>>) attributes {dimension_semantics = [#tpu.dimension_semantics<parallel>], iteration_bounds = array<i64: 2>, scalar_prefetch = 0 : i64, scratch_operands = 0 : i64, tpu.core_type = #tpu.core_type<tc>, window_params = [{transform_indices = @transform_0, window_bounds = array<i64: 1, 5, 32>}, {pipeline_mode = #tpu.pipeline_mode<synchronous>, transform_indices = @transform_1, window_bounds = array<i64: 5, 32>}, {pipeline_mode = #tpu.pipeline_mode<synchronous>, transform_indices = @transform_2, window_bounds = array<i64: 32, 32>}, {pipeline_mode = #tpu.pipeline_mode<synchronous>, transform_indices = @transform_3, window_bounds = array<i64: 1, 32>}, {pipeline_mode = #tpu.pipeline_mode<synchronous>, transform_indices = @transform_4, window_bounds = array<i64: 2, 1, 32>}, {pipeline_mode = #tpu.pipeline_mode<synchronous>, transform_indices = @transform_5, window_bounds = array<i64: 2, 1, 32>}, {pipeline_mode = #tpu.pipeline_mode<synchronous>, transform_indices = @transform_6, window_bounds = array<i64: 2, 32, 96>}, {pipeline_mode = #tpu.pipeline_mode<synchronous>, transform_indices = @transform_7, window_bounds = array<i64: 2, 1, 96>}, {pipeline_mode = #tpu.pipeline_mode<synchronous>, transform_indices = @transform_8, window_bounds = array<i64: 2, 32, 32>}, {pipeline_mode = #tpu.pipeline_mode<synchronous>, transform_indices = @transform_9, window_bounds = array<i64: 2, 1, 32>}, {pipeline_mode = #tpu.pipeline_mode<synchronous>, transform_indices = @transform_10, window_bounds = array<i64: 2, 1, 32>}, {pipeline_mode = #tpu.pipeline_mode<synchronous>, transform_indices = @transform_11, window_bounds = array<i64: 2, 1, 32>}, {pipeline_mode = #tpu.pipeline_mode<synchronous>, transform_indices = @transform_12, window_bounds = array<i64: 2, 32, 64>}, {pipeline_mode = #tpu.pipeline_mode<synchronous>, transform_indices = @transform_13, window_bounds = array<i64: 2, 1, 64>}, {pipeline_mode = #tpu.pipeline_mode<synchronous>, transform_indices = @transform_14, window_bounds = array<i64: 2, 64, 32>}, {pipeline_mode = #tpu.pipeline_mode<synchronous>, transform_indices = @transform_15, window_bounds = array<i64: 2, 1, 32>}, {pipeline_mode = #tpu.pipeline_mode<synchronous>, transform_indices = @transform_16, window_bounds = array<i64: 32, 32>}, {pipeline_mode = #tpu.pipeline_mode<synchronous>, transform_indices = @transform_17, window_bounds = array<i64: 1, 32>}, {pipeline_mode = #tpu.pipeline_mode<synchronous>, transform_indices = @transform_18, window_bounds = array<i64: 1, 32>}, {pipeline_mode = #tpu.pipeline_mode<synchronous>, transform_indices = @transform_19, window_bounds = array<i64: 1, 32>}, {pipeline_mode = #tpu.pipeline_mode<synchronous>, transform_indices = @transform_20, window_bounds = array<i64: 32, 10>}, {pipeline_mode = #tpu.pipeline_mode<synchronous>, transform_indices = @transform_21, window_bounds = array<i64: 1, 10>}, {transform_indices = @transform_22, window_bounds = array<i64: 1, 1, 10>}]} {
    %c0 = arith.constant 0 : index
    %c0_0 = arith.constant 0 : index
    %c0_1 = arith.constant 0 : index
    %0 = vector.load %arg1[%c0, %c0_0, %c0_1] : memref<1x5x32xf32, #tpu.memory_space<vmem>>, vector<1x5x32xf32>
    %1 = vector.shape_cast %0 : vector<1x5x32xf32> to vector<5x32xf32>
    %c0_2 = arith.constant 0 : index
    %c0_3 = arith.constant 0 : index
    %2 = vector.load %arg3[%c0_2, %c0_3] : memref<32x32xf32, #tpu.memory_space<vmem>>, vector<32x32xf32>
    %cst = arith.constant dense<0.000000e+00> : vector<5x32xf32>
    %3 = tpu.matmul %1, %2, %cst {dimension_numbers = #tpu.dot_dimension_numbers<[1], [0], [0], [1], [0, 0, 1, 1], [], []>} : vector<5x32xf32>, vector<32x32xf32>, vector<5x32xf32> -> vector<5x32xf32>
    %c0_4 = arith.constant 0 : index
    %c0_5 = arith.constant 0 : index
    %4 = vector.load %arg4[%c0_4, %c0_5] : memref<1x32xf32, #tpu.memory_space<vmem>>, vector<1x32xf32>
    %5 = vector.broadcast %4 : vector<1x32xf32> to vector<5x32xf32>
    %6 = arith.addf %3, %5 : vector<5x32xf32>
    %c0_6 = arith.constant 0 : index
    %c0_7 = arith.constant 0 : index
    %7 = vector.load %arg2[%c0_6, %c0_7] : memref<5x32xf32, #tpu.memory_space<vmem>>, vector<5x32xf32>
    %8 = arith.addf %6, %7 : vector<5x32xf32>
    %c0_8 = arith.constant 0 : index
    %c0_9 = arith.constant 0 : index
    %c0_10 = arith.constant 0 : index
    %9 = vector.load %arg5[%c0_8, %c0_9, %c0_10] : memref<2x1x32xf32, #tpu.memory_space<vmem>>, vector<1x1x32xf32>
    %10 = vector.shape_cast %9 : vector<1x1x32xf32> to vector<1x32xf32>
    %c0_11 = arith.constant 0 : index
    %c0_12 = arith.constant 0 : index
    %c0_13 = arith.constant 0 : index
    %11 = vector.load %arg6[%c0_11, %c0_12, %c0_13] : memref<2x1x32xf32, #tpu.memory_space<vmem>>, vector<1x1x32xf32>
    %12 = vector.shape_cast %11 : vector<1x1x32xf32> to vector<1x32xf32>
    %cst_14 = arith.constant dense<0.000000e+00> : vector<5xf32>
    %13 = vector.multi_reduction <add>, %8, %cst_14 [1] : vector<5x32xf32> to vector<5xf32>
    %14 = vector.shape_cast %13 : vector<5xf32> to vector<5x1xf32>
    %cst_15 = arith.constant 3.200000e+01 : f32
    %15 = vector.broadcast %cst_15 : f32 to vector<5x1xf32>
    %16 = arith.divf %14, %15 : vector<5x1xf32>
    %17 = vector.broadcast %16 : vector<5x1xf32> to vector<5x32xf32>
    %18 = arith.subf %8, %17 : vector<5x32xf32>
    %19 = arith.mulf %18, %18 : vector<5x32xf32>
    %cst_16 = arith.constant dense<0.000000e+00> : vector<5xf32>
    %20 = vector.multi_reduction <add>, %19, %cst_16 [1] : vector<5x32xf32> to vector<5xf32>
    %21 = vector.shape_cast %20 : vector<5xf32> to vector<5x1xf32>
    %cst_17 = arith.constant 3.200000e+01 : f32
    %22 = vector.broadcast %cst_17 : f32 to vector<5x1xf32>
    %23 = arith.divf %21, %22 : vector<5x1xf32>
    %24 = vector.broadcast %16 : vector<5x1xf32> to vector<5x32xf32>
    %25 = arith.subf %8, %24 : vector<5x32xf32>
    %cst_18 = arith.constant 9.99999974E-6 : f32
    %26 = vector.broadcast %cst_18 : f32 to vector<5x1xf32>
    %27 = arith.addf %23, %26 : vector<5x1xf32>
    %28 = math.rsqrt %27 : vector<5x1xf32>
    %29 = vector.broadcast %28 : vector<5x1xf32> to vector<5x32xf32>
    %30 = arith.mulf %25, %29 : vector<5x32xf32>
    %31 = vector.broadcast %10 : vector<1x32xf32> to vector<5x32xf32>
    %32 = arith.mulf %30, %31 : vector<5x32xf32>
    %33 = vector.broadcast %12 : vector<1x32xf32> to vector<5x32xf32>
    %34 = arith.addf %32, %33 : vector<5x32xf32>
    %c0_19 = arith.constant 0 : index
    %c0_20 = arith.constant 0 : index
    %c0_21 = arith.constant 0 : index
    %35 = vector.load %arg7[%c0_19, %c0_20, %c0_21] : memref<2x32x96xf32, #tpu.memory_space<vmem>>, vector<1x32x96xf32>
    %36 = vector.shape_cast %35 : vector<1x32x96xf32> to vector<32x96xf32>
    %cst_22 = arith.constant dense<0.000000e+00> : vector<5x96xf32>
    %37 = tpu.matmul %34, %36, %cst_22 {dimension_numbers = #tpu.dot_dimension_numbers<[1], [0], [0], [1], [0, 0, 1, 1], [], []>} : vector<5x32xf32>, vector<32x96xf32>, vector<5x96xf32> -> vector<5x96xf32>
    %c0_23 = arith.constant 0 : index
    %c0_24 = arith.constant 0 : index
    %c0_25 = arith.constant 0 : index
    %38 = vector.load %arg8[%c0_23, %c0_24, %c0_25] : memref<2x1x96xf32, #tpu.memory_space<vmem>>, vector<1x1x96xf32>
    %39 = vector.shape_cast %38 : vector<1x1x96xf32> to vector<1x96xf32>
    %40 = vector.broadcast %39 : vector<1x96xf32> to vector<5x96xf32>
    %41 = arith.addf %37, %40 : vector<5x96xf32>
    %c0_26 = arith.constant 0 : index
    %c0_27 = arith.constant 0 : index
    %c0_28 = arith.constant 0 : index
    %42 = vector.load %arg9[%c0_26, %c0_27, %c0_28] : memref<2x32x32xf32, #tpu.memory_space<vmem>>, vector<1x32x32xf32>
    %43 = vector.shape_cast %42 : vector<1x32x32xf32> to vector<32x32xf32>
    %44 = vector.extract_strided_slice %41 {offsets = [0, 0], sizes = [5, 8], strides = [1, 1]} : vector<5x96xf32> to vector<5x8xf32>
    %45 = vector.extract_strided_slice %41 {offsets = [0, 32], sizes = [5, 8], strides = [1, 1]} : vector<5x96xf32> to vector<5x8xf32>
    %46 = vector.extract_strided_slice %41 {offsets = [0, 64], sizes = [5, 8], strides = [1, 1]} : vector<5x96xf32> to vector<5x8xf32>
    %cst_29 = arith.constant dense<0.000000e+00> : vector<5x5xf32>
    %47 = tpu.matmul %44, %45, %cst_29 {dimension_numbers = #tpu.dot_dimension_numbers<[1], [1], [0], [0], [0, 0, 1, 0], [], []>} : vector<5x8xf32>, vector<5x8xf32>, vector<5x5xf32> -> vector<5x5xf32>
    %cst_30 = arith.constant 0.353553385 : f32
    %48 = vector.broadcast %cst_30 : f32 to vector<5x5xf32>
    %49 = arith.mulf %47, %48 : vector<5x5xf32>
    %cst_31 = arith.constant dense<0xFF800000> : vector<5xf32>
    %50 = vector.multi_reduction <maximumf>, %49, %cst_31 [1] : vector<5x5xf32> to vector<5xf32>
    %51 = vector.shape_cast %50 : vector<5xf32> to vector<5x1xf32>
    %52 = vector.broadcast %51 : vector<5x1xf32> to vector<5x5xf32>
    %53 = arith.subf %49, %52 : vector<5x5xf32>
    %54 = math.exp %53 : vector<5x5xf32>
    %cst_32 = arith.constant dense<0.000000e+00> : vector<5xf32>
    %55 = vector.multi_reduction <add>, %54, %cst_32 [1] : vector<5x5xf32> to vector<5xf32>
    %56 = vector.shape_cast %55 : vector<5xf32> to vector<5x1xf32>
    %57 = tpu.reciprocal %56 {approx = true} : vector<5x1xf32> -> vector<5x1xf32>
    %58 = vector.broadcast %57 : vector<5x1xf32> to vector<5x5xf32>
    %59 = arith.mulf %54, %58 : vector<5x5xf32>
    %cst_33 = arith.constant dense<0.000000e+00> : vector<5x8xf32>
    %60 = tpu.matmul %59, %46, %cst_33 {dimension_numbers = #tpu.dot_dimension_numbers<[1], [0], [0], [1], [0, 0, 1, 1], [], []>} : vector<5x5xf32>, vector<5x8xf32>, vector<5x8xf32> -> vector<5x8xf32>
    %61 = vector.extract_strided_slice %43 {offsets = [0, 0], sizes = [8, 32], strides = [1, 1]} : vector<32x32xf32> to vector<8x32xf32>
    %cst_34 = arith.constant dense<0.000000e+00> : vector<5x32xf32>
    %62 = tpu.matmul %60, %61, %cst_34 {dimension_numbers = #tpu.dot_dimension_numbers<[1], [0], [0], [1], [0, 0, 1, 1], [], []>} : vector<5x8xf32>, vector<8x32xf32>, vector<5x32xf32> -> vector<5x32xf32>
    %63 = vector.extract_strided_slice %41 {offsets = [0, 8], sizes = [5, 8], strides = [1, 1]} : vector<5x96xf32> to vector<5x8xf32>
    %64 = vector.extract_strided_slice %41 {offsets = [0, 40], sizes = [5, 8], strides = [1, 1]} : vector<5x96xf32> to vector<5x8xf32>
    %65 = vector.extract_strided_slice %41 {offsets = [0, 72], sizes = [5, 8], strides = [1, 1]} : vector<5x96xf32> to vector<5x8xf32>
    %cst_35 = arith.constant dense<0.000000e+00> : vector<5x5xf32>
    %66 = tpu.matmul %63, %64, %cst_35 {dimension_numbers = #tpu.dot_dimension_numbers<[1], [1], [0], [0], [0, 0, 1, 0], [], []>} : vector<5x8xf32>, vector<5x8xf32>, vector<5x5xf32> -> vector<5x5xf32>
    %cst_36 = arith.constant 0.353553385 : f32
    %67 = vector.broadcast %cst_36 : f32 to vector<5x5xf32>
    %68 = arith.mulf %66, %67 : vector<5x5xf32>
    %cst_37 = arith.constant dense<0xFF800000> : vector<5xf32>
    %69 = vector.multi_reduction <maximumf>, %68, %cst_37 [1] : vector<5x5xf32> to vector<5xf32>
    %70 = vector.shape_cast %69 : vector<5xf32> to vector<5x1xf32>
    %71 = vector.broadcast %70 : vector<5x1xf32> to vector<5x5xf32>
    %72 = arith.subf %68, %71 : vector<5x5xf32>
    %73 = math.exp %72 : vector<5x5xf32>
    %cst_38 = arith.constant dense<0.000000e+00> : vector<5xf32>
    %74 = vector.multi_reduction <add>, %73, %cst_38 [1] : vector<5x5xf32> to vector<5xf32>
    %75 = vector.shape_cast %74 : vector<5xf32> to vector<5x1xf32>
    %76 = tpu.reciprocal %75 {approx = true} : vector<5x1xf32> -> vector<5x1xf32>
    %77 = vector.broadcast %76 : vector<5x1xf32> to vector<5x5xf32>
    %78 = arith.mulf %73, %77 : vector<5x5xf32>
    %cst_39 = arith.constant dense<0.000000e+00> : vector<5x8xf32>
    %79 = tpu.matmul %78, %65, %cst_39 {dimension_numbers = #tpu.dot_dimension_numbers<[1], [0], [0], [1], [0, 0, 1, 1], [], []>} : vector<5x5xf32>, vector<5x8xf32>, vector<5x8xf32> -> vector<5x8xf32>
    %80 = vector.extract_strided_slice %43 {offsets = [8, 0], sizes = [8, 32], strides = [1, 1]} : vector<32x32xf32> to vector<8x32xf32>
    %cst_40 = arith.constant dense<0.000000e+00> : vector<5x32xf32>
    %81 = tpu.matmul %79, %80, %cst_40 {dimension_numbers = #tpu.dot_dimension_numbers<[1], [0], [0], [1], [0, 0, 1, 1], [], []>} : vector<5x8xf32>, vector<8x32xf32>, vector<5x32xf32> -> vector<5x32xf32>
    %82 = arith.addf %62, %81 : vector<5x32xf32>
    %83 = vector.extract_strided_slice %41 {offsets = [0, 16], sizes = [5, 8], strides = [1, 1]} : vector<5x96xf32> to vector<5x8xf32>
    %84 = vector.extract_strided_slice %41 {offsets = [0, 48], sizes = [5, 8], strides = [1, 1]} : vector<5x96xf32> to vector<5x8xf32>
    %85 = vector.extract_strided_slice %41 {offsets = [0, 80], sizes = [5, 8], strides = [1, 1]} : vector<5x96xf32> to vector<5x8xf32>
    %cst_41 = arith.constant dense<0.000000e+00> : vector<5x5xf32>
    %86 = tpu.matmul %83, %84, %cst_41 {dimension_numbers = #tpu.dot_dimension_numbers<[1], [1], [0], [0], [0, 0, 1, 0], [], []>} : vector<5x8xf32>, vector<5x8xf32>, vector<5x5xf32> -> vector<5x5xf32>
    %cst_42 = arith.constant 0.353553385 : f32
    %87 = vector.broadcast %cst_42 : f32 to vector<5x5xf32>
    %88 = arith.mulf %86, %87 : vector<5x5xf32>
    %cst_43 = arith.constant dense<0xFF800000> : vector<5xf32>
    %89 = vector.multi_reduction <maximumf>, %88, %cst_43 [1] : vector<5x5xf32> to vector<5xf32>
    %90 = vector.shape_cast %89 : vector<5xf32> to vector<5x1xf32>
    %91 = vector.broadcast %90 : vector<5x1xf32> to vector<5x5xf32>
    %92 = arith.subf %88, %91 : vector<5x5xf32>
    %93 = math.exp %92 : vector<5x5xf32>
    %cst_44 = arith.constant dense<0.000000e+00> : vector<5xf32>
    %94 = vector.multi_reduction <add>, %93, %cst_44 [1] : vector<5x5xf32> to vector<5xf32>
    %95 = vector.shape_cast %94 : vector<5xf32> to vector<5x1xf32>
    %96 = tpu.reciprocal %95 {approx = true} : vector<5x1xf32> -> vector<5x1xf32>
    %97 = vector.broadcast %96 : vector<5x1xf32> to vector<5x5xf32>
    %98 = arith.mulf %93, %97 : vector<5x5xf32>
    %cst_45 = arith.constant dense<0.000000e+00> : vector<5x8xf32>
    %99 = tpu.matmul %98, %85, %cst_45 {dimension_numbers = #tpu.dot_dimension_numbers<[1], [0], [0], [1], [0, 0, 1, 1], [], []>} : vector<5x5xf32>, vector<5x8xf32>, vector<5x8xf32> -> vector<5x8xf32>
    %100 = vector.extract_strided_slice %43 {offsets = [16, 0], sizes = [8, 32], strides = [1, 1]} : vector<32x32xf32> to vector<8x32xf32>
    %cst_46 = arith.constant dense<0.000000e+00> : vector<5x32xf32>
    %101 = tpu.matmul %99, %100, %cst_46 {dimension_numbers = #tpu.dot_dimension_numbers<[1], [0], [0], [1], [0, 0, 1, 1], [], []>} : vector<5x8xf32>, vector<8x32xf32>, vector<5x32xf32> -> vector<5x32xf32>
    %102 = arith.addf %82, %101 : vector<5x32xf32>
    %103 = vector.extract_strided_slice %41 {offsets = [0, 24], sizes = [5, 8], strides = [1, 1]} : vector<5x96xf32> to vector<5x8xf32>
    %104 = vector.extract_strided_slice %41 {offsets = [0, 56], sizes = [5, 8], strides = [1, 1]} : vector<5x96xf32> to vector<5x8xf32>
    %105 = vector.extract_strided_slice %41 {offsets = [0, 88], sizes = [5, 8], strides = [1, 1]} : vector<5x96xf32> to vector<5x8xf32>
    %cst_47 = arith.constant dense<0.000000e+00> : vector<5x5xf32>
    %106 = tpu.matmul %103, %104, %cst_47 {dimension_numbers = #tpu.dot_dimension_numbers<[1], [1], [0], [0], [0, 0, 1, 0], [], []>} : vector<5x8xf32>, vector<5x8xf32>, vector<5x5xf32> -> vector<5x5xf32>
    %cst_48 = arith.constant 0.353553385 : f32
    %107 = vector.broadcast %cst_48 : f32 to vector<5x5xf32>
    %108 = arith.mulf %106, %107 : vector<5x5xf32>
    %cst_49 = arith.constant dense<0xFF800000> : vector<5xf32>
    %109 = vector.multi_reduction <maximumf>, %108, %cst_49 [1] : vector<5x5xf32> to vector<5xf32>
    %110 = vector.shape_cast %109 : vector<5xf32> to vector<5x1xf32>
    %111 = vector.broadcast %110 : vector<5x1xf32> to vector<5x5xf32>
    %112 = arith.subf %108, %111 : vector<5x5xf32>
    %113 = math.exp %112 : vector<5x5xf32>
    %cst_50 = arith.constant dense<0.000000e+00> : vector<5xf32>
    %114 = vector.multi_reduction <add>, %113, %cst_50 [1] : vector<5x5xf32> to vector<5xf32>
    %115 = vector.shape_cast %114 : vector<5xf32> to vector<5x1xf32>
    %116 = tpu.reciprocal %115 {approx = true} : vector<5x1xf32> -> vector<5x1xf32>
    %117 = vector.broadcast %116 : vector<5x1xf32> to vector<5x5xf32>
    %118 = arith.mulf %113, %117 : vector<5x5xf32>
    %cst_51 = arith.constant dense<0.000000e+00> : vector<5x8xf32>
    %119 = tpu.matmul %118, %105, %cst_51 {dimension_numbers = #tpu.dot_dimension_numbers<[1], [0], [0], [1], [0, 0, 1, 1], [], []>} : vector<5x5xf32>, vector<5x8xf32>, vector<5x8xf32> -> vector<5x8xf32>
    %120 = vector.extract_strided_slice %43 {offsets = [24, 0], sizes = [8, 32], strides = [1, 1]} : vector<32x32xf32> to vector<8x32xf32>
    %cst_52 = arith.constant dense<0.000000e+00> : vector<5x32xf32>
    %121 = tpu.matmul %119, %120, %cst_52 {dimension_numbers = #tpu.dot_dimension_numbers<[1], [0], [0], [1], [0, 0, 1, 1], [], []>} : vector<5x8xf32>, vector<8x32xf32>, vector<5x32xf32> -> vector<5x32xf32>
    %122 = arith.addf %102, %121 : vector<5x32xf32>
    %123 = arith.addf %8, %122 : vector<5x32xf32>
    %c0_53 = arith.constant 0 : index
    %c0_54 = arith.constant 0 : index
    %c0_55 = arith.constant 0 : index
    %124 = vector.load %arg10[%c0_53, %c0_54, %c0_55] : memref<2x1x32xf32, #tpu.memory_space<vmem>>, vector<1x1x32xf32>
    %125 = vector.shape_cast %124 : vector<1x1x32xf32> to vector<1x32xf32>
    %126 = vector.broadcast %125 : vector<1x32xf32> to vector<5x32xf32>
    %127 = arith.addf %123, %126 : vector<5x32xf32>
    %c0_56 = arith.constant 0 : index
    %c0_57 = arith.constant 0 : index
    %c0_58 = arith.constant 0 : index
    %128 = vector.load %arg11[%c0_56, %c0_57, %c0_58] : memref<2x1x32xf32, #tpu.memory_space<vmem>>, vector<1x1x32xf32>
    %129 = vector.shape_cast %128 : vector<1x1x32xf32> to vector<1x32xf32>
    %c0_59 = arith.constant 0 : index
    %c0_60 = arith.constant 0 : index
    %c0_61 = arith.constant 0 : index
    %130 = vector.load %arg12[%c0_59, %c0_60, %c0_61] : memref<2x1x32xf32, #tpu.memory_space<vmem>>, vector<1x1x32xf32>
    %131 = vector.shape_cast %130 : vector<1x1x32xf32> to vector<1x32xf32>
    %cst_62 = arith.constant dense<0.000000e+00> : vector<5xf32>
    %132 = vector.multi_reduction <add>, %127, %cst_62 [1] : vector<5x32xf32> to vector<5xf32>
    %133 = vector.shape_cast %132 : vector<5xf32> to vector<5x1xf32>
    %cst_63 = arith.constant 3.200000e+01 : f32
    %134 = vector.broadcast %cst_63 : f32 to vector<5x1xf32>
    %135 = arith.divf %133, %134 : vector<5x1xf32>
    %136 = vector.broadcast %135 : vector<5x1xf32> to vector<5x32xf32>
    %137 = arith.subf %127, %136 : vector<5x32xf32>
    %138 = arith.mulf %137, %137 : vector<5x32xf32>
    %cst_64 = arith.constant dense<0.000000e+00> : vector<5xf32>
    %139 = vector.multi_reduction <add>, %138, %cst_64 [1] : vector<5x32xf32> to vector<5xf32>
    %140 = vector.shape_cast %139 : vector<5xf32> to vector<5x1xf32>
    %cst_65 = arith.constant 3.200000e+01 : f32
    %141 = vector.broadcast %cst_65 : f32 to vector<5x1xf32>
    %142 = arith.divf %140, %141 : vector<5x1xf32>
    %143 = vector.broadcast %135 : vector<5x1xf32> to vector<5x32xf32>
    %144 = arith.subf %127, %143 : vector<5x32xf32>
    %cst_66 = arith.constant 9.99999974E-6 : f32
    %145 = vector.broadcast %cst_66 : f32 to vector<5x1xf32>
    %146 = arith.addf %142, %145 : vector<5x1xf32>
    %147 = math.rsqrt %146 : vector<5x1xf32>
    %148 = vector.broadcast %147 : vector<5x1xf32> to vector<5x32xf32>
    %149 = arith.mulf %144, %148 : vector<5x32xf32>
    %150 = vector.broadcast %129 : vector<1x32xf32> to vector<5x32xf32>
    %151 = arith.mulf %149, %150 : vector<5x32xf32>
    %152 = vector.broadcast %131 : vector<1x32xf32> to vector<5x32xf32>
    %153 = arith.addf %151, %152 : vector<5x32xf32>
    %c0_67 = arith.constant 0 : index
    %c0_68 = arith.constant 0 : index
    %c0_69 = arith.constant 0 : index
    %154 = vector.load %arg13[%c0_67, %c0_68, %c0_69] : memref<2x32x64xf32, #tpu.memory_space<vmem>>, vector<1x32x64xf32>
    %155 = vector.shape_cast %154 : vector<1x32x64xf32> to vector<32x64xf32>
    %cst_70 = arith.constant dense<0.000000e+00> : vector<5x64xf32>
    %156 = tpu.matmul %153, %155, %cst_70 {dimension_numbers = #tpu.dot_dimension_numbers<[1], [0], [0], [1], [0, 0, 1, 1], [], []>} : vector<5x32xf32>, vector<32x64xf32>, vector<5x64xf32> -> vector<5x64xf32>
    %c0_71 = arith.constant 0 : index
    %c0_72 = arith.constant 0 : index
    %c0_73 = arith.constant 0 : index
    %157 = vector.load %arg14[%c0_71, %c0_72, %c0_73] : memref<2x1x64xf32, #tpu.memory_space<vmem>>, vector<1x1x64xf32>
    %158 = vector.shape_cast %157 : vector<1x1x64xf32> to vector<1x64xf32>
    %159 = vector.broadcast %158 : vector<1x64xf32> to vector<5x64xf32>
    %160 = arith.addf %156, %159 : vector<5x64xf32>
    %cst_74 = arith.constant 5.000000e-01 : f32
    %161 = vector.broadcast %cst_74 : f32 to vector<5x64xf32>
    %162 = arith.mulf %161, %160 : vector<5x64xf32>
    %cst_75 = arith.constant 0.707106769 : f32
    %163 = vector.broadcast %cst_75 : f32 to vector<5x64xf32>
    %164 = arith.mulf %160, %163 : vector<5x64xf32>
    %165 = math.absf %164 : vector<5x64xf32>
    %cst_76 = arith.constant 0.327591091 : f32
    %166 = vector.broadcast %cst_76 : f32 to vector<5x64xf32>
    %167 = arith.mulf %166, %165 : vector<5x64xf32>
    %cst_77 = arith.constant 1.000000e+00 : f32
    %168 = vector.broadcast %cst_77 : f32 to vector<5x64xf32>
    %169 = arith.addf %168, %167 : vector<5x64xf32>
    %cst_78 = arith.constant 1.000000e+00 : f32
    %170 = vector.broadcast %cst_78 : f32 to vector<5x64xf32>
    %171 = arith.divf %170, %169 : vector<5x64xf32>
    %cst_79 = arith.constant 1.06140542 : f32
    %172 = vector.broadcast %cst_79 : f32 to vector<5x64xf32>
    %173 = arith.mulf %172, %171 : vector<5x64xf32>
    %cst_80 = arith.constant -1.45315206 : f32
    %174 = vector.broadcast %cst_80 : f32 to vector<5x64xf32>
    %175 = arith.addf %173, %174 : vector<5x64xf32>
    %176 = arith.mulf %175, %171 : vector<5x64xf32>
    %cst_81 = arith.constant 1.42141378 : f32
    %177 = vector.broadcast %cst_81 : f32 to vector<5x64xf32>
    %178 = arith.addf %176, %177 : vector<5x64xf32>
    %179 = arith.mulf %178, %171 : vector<5x64xf32>
    %cst_82 = arith.constant -0.284496725 : f32
    %180 = vector.broadcast %cst_82 : f32 to vector<5x64xf32>
    %181 = arith.addf %179, %180 : vector<5x64xf32>
    %182 = arith.mulf %181, %171 : vector<5x64xf32>
    %cst_83 = arith.constant 0.254829586 : f32
    %183 = vector.broadcast %cst_83 : f32 to vector<5x64xf32>
    %184 = arith.addf %182, %183 : vector<5x64xf32>
    %185 = arith.mulf %184, %171 : vector<5x64xf32>
    %cst_84 = arith.constant 0.000000e+00 : f32
    %186 = vector.broadcast %cst_84 : f32 to vector<5x64xf32>
    %187 = arith.subf %186, %165 : vector<5x64xf32>
    %188 = arith.mulf %187, %165 : vector<5x64xf32>
    %189 = math.exp %188 : vector<5x64xf32>
    %190 = arith.mulf %185, %189 : vector<5x64xf32>
    %cst_85 = arith.constant 1.000000e+00 : f32
    %191 = vector.broadcast %cst_85 : f32 to vector<5x64xf32>
    %192 = arith.subf %191, %190 : vector<5x64xf32>
    %cst_86 = arith.constant 0.000000e+00 : f32
    %193 = vector.broadcast %cst_86 : f32 to vector<5x64xf32>
    %194 = arith.cmpf oge, %164, %193 : vector<5x64xf32>
    %cst_87 = arith.constant 0.000000e+00 : f32
    %195 = vector.broadcast %cst_87 : f32 to vector<5x64xf32>
    %196 = arith.subf %195, %192 : vector<5x64xf32>
    %197 = arith.select %194, %192, %196 : vector<5x64xi1>, vector<5x64xf32>
    %cst_88 = arith.constant 1.000000e+00 : f32
    %198 = vector.broadcast %cst_88 : f32 to vector<5x64xf32>
    %199 = arith.addf %198, %197 : vector<5x64xf32>
    %200 = arith.mulf %162, %199 : vector<5x64xf32>
    %c0_89 = arith.constant 0 : index
    %c0_90 = arith.constant 0 : index
    %c0_91 = arith.constant 0 : index
    %201 = vector.load %arg15[%c0_89, %c0_90, %c0_91] : memref<2x64x32xf32, #tpu.memory_space<vmem>>, vector<1x64x32xf32>
    %202 = vector.shape_cast %201 : vector<1x64x32xf32> to vector<64x32xf32>
    %cst_92 = arith.constant dense<0.000000e+00> : vector<5x32xf32>
    %203 = tpu.matmul %200, %202, %cst_92 {dimension_numbers = #tpu.dot_dimension_numbers<[1], [0], [0], [1], [0, 0, 1, 1], [], []>} : vector<5x64xf32>, vector<64x32xf32>, vector<5x32xf32> -> vector<5x32xf32>
    %c0_93 = arith.constant 0 : index
    %c0_94 = arith.constant 0 : index
    %c0_95 = arith.constant 0 : index
    %204 = vector.load %arg16[%c0_93, %c0_94, %c0_95] : memref<2x1x32xf32, #tpu.memory_space<vmem>>, vector<1x1x32xf32>
    %205 = vector.shape_cast %204 : vector<1x1x32xf32> to vector<1x32xf32>
    %206 = vector.broadcast %205 : vector<1x32xf32> to vector<5x32xf32>
    %207 = arith.addf %203, %206 : vector<5x32xf32>
    %208 = arith.addf %127, %207 : vector<5x32xf32>
    %c1 = arith.constant 1 : index
    %c0_96 = arith.constant 0 : index
    %c0_97 = arith.constant 0 : index
    %209 = vector.load %arg5[%c1, %c0_96, %c0_97] : memref<2x1x32xf32, #tpu.memory_space<vmem>>, vector<1x1x32xf32>
    %210 = vector.shape_cast %209 : vector<1x1x32xf32> to vector<1x32xf32>
    %c1_98 = arith.constant 1 : index
    %c0_99 = arith.constant 0 : index
    %c0_100 = arith.constant 0 : index
    %211 = vector.load %arg6[%c1_98, %c0_99, %c0_100] : memref<2x1x32xf32, #tpu.memory_space<vmem>>, vector<1x1x32xf32>
    %212 = vector.shape_cast %211 : vector<1x1x32xf32> to vector<1x32xf32>
    %cst_101 = arith.constant dense<0.000000e+00> : vector<5xf32>
    %213 = vector.multi_reduction <add>, %208, %cst_101 [1] : vector<5x32xf32> to vector<5xf32>
    %214 = vector.shape_cast %213 : vector<5xf32> to vector<5x1xf32>
    %cst_102 = arith.constant 3.200000e+01 : f32
    %215 = vector.broadcast %cst_102 : f32 to vector<5x1xf32>
    %216 = arith.divf %214, %215 : vector<5x1xf32>
    %217 = vector.broadcast %216 : vector<5x1xf32> to vector<5x32xf32>
    %218 = arith.subf %208, %217 : vector<5x32xf32>
    %219 = arith.mulf %218, %218 : vector<5x32xf32>
    %cst_103 = arith.constant dense<0.000000e+00> : vector<5xf32>
    %220 = vector.multi_reduction <add>, %219, %cst_103 [1] : vector<5x32xf32> to vector<5xf32>
    %221 = vector.shape_cast %220 : vector<5xf32> to vector<5x1xf32>
    %cst_104 = arith.constant 3.200000e+01 : f32
    %222 = vector.broadcast %cst_104 : f32 to vector<5x1xf32>
    %223 = arith.divf %221, %222 : vector<5x1xf32>
    %224 = vector.broadcast %216 : vector<5x1xf32> to vector<5x32xf32>
    %225 = arith.subf %208, %224 : vector<5x32xf32>
    %cst_105 = arith.constant 9.99999974E-6 : f32
    %226 = vector.broadcast %cst_105 : f32 to vector<5x1xf32>
    %227 = arith.addf %223, %226 : vector<5x1xf32>
    %228 = math.rsqrt %227 : vector<5x1xf32>
    %229 = vector.broadcast %228 : vector<5x1xf32> to vector<5x32xf32>
    %230 = arith.mulf %225, %229 : vector<5x32xf32>
    %231 = vector.broadcast %210 : vector<1x32xf32> to vector<5x32xf32>
    %232 = arith.mulf %230, %231 : vector<5x32xf32>
    %233 = vector.broadcast %212 : vector<1x32xf32> to vector<5x32xf32>
    %234 = arith.addf %232, %233 : vector<5x32xf32>
    %c1_106 = arith.constant 1 : index
    %c0_107 = arith.constant 0 : index
    %c0_108 = arith.constant 0 : index
    %235 = vector.load %arg7[%c1_106, %c0_107, %c0_108] : memref<2x32x96xf32, #tpu.memory_space<vmem>>, vector<1x32x96xf32>
    %236 = vector.shape_cast %235 : vector<1x32x96xf32> to vector<32x96xf32>
    %cst_109 = arith.constant dense<0.000000e+00> : vector<5x96xf32>
    %237 = tpu.matmul %234, %236, %cst_109 {dimension_numbers = #tpu.dot_dimension_numbers<[1], [0], [0], [1], [0, 0, 1, 1], [], []>} : vector<5x32xf32>, vector<32x96xf32>, vector<5x96xf32> -> vector<5x96xf32>
    %c1_110 = arith.constant 1 : index
    %c0_111 = arith.constant 0 : index
    %c0_112 = arith.constant 0 : index
    %238 = vector.load %arg8[%c1_110, %c0_111, %c0_112] : memref<2x1x96xf32, #tpu.memory_space<vmem>>, vector<1x1x96xf32>
    %239 = vector.shape_cast %238 : vector<1x1x96xf32> to vector<1x96xf32>
    %240 = vector.broadcast %239 : vector<1x96xf32> to vector<5x96xf32>
    %241 = arith.addf %237, %240 : vector<5x96xf32>
    %c1_113 = arith.constant 1 : index
    %c0_114 = arith.constant 0 : index
    %c0_115 = arith.constant 0 : index
    %242 = vector.load %arg9[%c1_113, %c0_114, %c0_115] : memref<2x32x32xf32, #tpu.memory_space<vmem>>, vector<1x32x32xf32>
    %243 = vector.shape_cast %242 : vector<1x32x32xf32> to vector<32x32xf32>
    %244 = vector.extract_strided_slice %241 {offsets = [0, 0], sizes = [5, 8], strides = [1, 1]} : vector<5x96xf32> to vector<5x8xf32>
    %245 = vector.extract_strided_slice %241 {offsets = [0, 32], sizes = [5, 8], strides = [1, 1]} : vector<5x96xf32> to vector<5x8xf32>
    %246 = vector.extract_strided_slice %241 {offsets = [0, 64], sizes = [5, 8], strides = [1, 1]} : vector<5x96xf32> to vector<5x8xf32>
    %cst_116 = arith.constant dense<0.000000e+00> : vector<5x5xf32>
    %247 = tpu.matmul %244, %245, %cst_116 {dimension_numbers = #tpu.dot_dimension_numbers<[1], [1], [0], [0], [0, 0, 1, 0], [], []>} : vector<5x8xf32>, vector<5x8xf32>, vector<5x5xf32> -> vector<5x5xf32>
    %cst_117 = arith.constant 0.353553385 : f32
    %248 = vector.broadcast %cst_117 : f32 to vector<5x5xf32>
    %249 = arith.mulf %247, %248 : vector<5x5xf32>
    %cst_118 = arith.constant dense<0xFF800000> : vector<5xf32>
    %250 = vector.multi_reduction <maximumf>, %249, %cst_118 [1] : vector<5x5xf32> to vector<5xf32>
    %251 = vector.shape_cast %250 : vector<5xf32> to vector<5x1xf32>
    %252 = vector.broadcast %251 : vector<5x1xf32> to vector<5x5xf32>
    %253 = arith.subf %249, %252 : vector<5x5xf32>
    %254 = math.exp %253 : vector<5x5xf32>
    %cst_119 = arith.constant dense<0.000000e+00> : vector<5xf32>
    %255 = vector.multi_reduction <add>, %254, %cst_119 [1] : vector<5x5xf32> to vector<5xf32>
    %256 = vector.shape_cast %255 : vector<5xf32> to vector<5x1xf32>
    %257 = tpu.reciprocal %256 {approx = true} : vector<5x1xf32> -> vector<5x1xf32>
    %258 = vector.broadcast %257 : vector<5x1xf32> to vector<5x5xf32>
    %259 = arith.mulf %254, %258 : vector<5x5xf32>
    %cst_120 = arith.constant dense<0.000000e+00> : vector<5x8xf32>
    %260 = tpu.matmul %259, %246, %cst_120 {dimension_numbers = #tpu.dot_dimension_numbers<[1], [0], [0], [1], [0, 0, 1, 1], [], []>} : vector<5x5xf32>, vector<5x8xf32>, vector<5x8xf32> -> vector<5x8xf32>
    %261 = vector.extract_strided_slice %243 {offsets = [0, 0], sizes = [8, 32], strides = [1, 1]} : vector<32x32xf32> to vector<8x32xf32>
    %cst_121 = arith.constant dense<0.000000e+00> : vector<5x32xf32>
    %262 = tpu.matmul %260, %261, %cst_121 {dimension_numbers = #tpu.dot_dimension_numbers<[1], [0], [0], [1], [0, 0, 1, 1], [], []>} : vector<5x8xf32>, vector<8x32xf32>, vector<5x32xf32> -> vector<5x32xf32>
    %263 = vector.extract_strided_slice %241 {offsets = [0, 8], sizes = [5, 8], strides = [1, 1]} : vector<5x96xf32> to vector<5x8xf32>
    %264 = vector.extract_strided_slice %241 {offsets = [0, 40], sizes = [5, 8], strides = [1, 1]} : vector<5x96xf32> to vector<5x8xf32>
    %265 = vector.extract_strided_slice %241 {offsets = [0, 72], sizes = [5, 8], strides = [1, 1]} : vector<5x96xf32> to vector<5x8xf32>
    %cst_122 = arith.constant dense<0.000000e+00> : vector<5x5xf32>
    %266 = tpu.matmul %263, %264, %cst_122 {dimension_numbers = #tpu.dot_dimension_numbers<[1], [1], [0], [0], [0, 0, 1, 0], [], []>} : vector<5x8xf32>, vector<5x8xf32>, vector<5x5xf32> -> vector<5x5xf32>
    %cst_123 = arith.constant 0.353553385 : f32
    %267 = vector.broadcast %cst_123 : f32 to vector<5x5xf32>
    %268 = arith.mulf %266, %267 : vector<5x5xf32>
    %cst_124 = arith.constant dense<0xFF800000> : vector<5xf32>
    %269 = vector.multi_reduction <maximumf>, %268, %cst_124 [1] : vector<5x5xf32> to vector<5xf32>
    %270 = vector.shape_cast %269 : vector<5xf32> to vector<5x1xf32>
    %271 = vector.broadcast %270 : vector<5x1xf32> to vector<5x5xf32>
    %272 = arith.subf %268, %271 : vector<5x5xf32>
    %273 = math.exp %272 : vector<5x5xf32>
    %cst_125 = arith.constant dense<0.000000e+00> : vector<5xf32>
    %274 = vector.multi_reduction <add>, %273, %cst_125 [1] : vector<5x5xf32> to vector<5xf32>
    %275 = vector.shape_cast %274 : vector<5xf32> to vector<5x1xf32>
    %276 = tpu.reciprocal %275 {approx = true} : vector<5x1xf32> -> vector<5x1xf32>
    %277 = vector.broadcast %276 : vector<5x1xf32> to vector<5x5xf32>
    %278 = arith.mulf %273, %277 : vector<5x5xf32>
    %cst_126 = arith.constant dense<0.000000e+00> : vector<5x8xf32>
    %279 = tpu.matmul %278, %265, %cst_126 {dimension_numbers = #tpu.dot_dimension_numbers<[1], [0], [0], [1], [0, 0, 1, 1], [], []>} : vector<5x5xf32>, vector<5x8xf32>, vector<5x8xf32> -> vector<5x8xf32>
    %280 = vector.extract_strided_slice %243 {offsets = [8, 0], sizes = [8, 32], strides = [1, 1]} : vector<32x32xf32> to vector<8x32xf32>
    %cst_127 = arith.constant dense<0.000000e+00> : vector<5x32xf32>
    %281 = tpu.matmul %279, %280, %cst_127 {dimension_numbers = #tpu.dot_dimension_numbers<[1], [0], [0], [1], [0, 0, 1, 1], [], []>} : vector<5x8xf32>, vector<8x32xf32>, vector<5x32xf32> -> vector<5x32xf32>
    %282 = arith.addf %262, %281 : vector<5x32xf32>
    %283 = vector.extract_strided_slice %241 {offsets = [0, 16], sizes = [5, 8], strides = [1, 1]} : vector<5x96xf32> to vector<5x8xf32>
    %284 = vector.extract_strided_slice %241 {offsets = [0, 48], sizes = [5, 8], strides = [1, 1]} : vector<5x96xf32> to vector<5x8xf32>
    %285 = vector.extract_strided_slice %241 {offsets = [0, 80], sizes = [5, 8], strides = [1, 1]} : vector<5x96xf32> to vector<5x8xf32>
    %cst_128 = arith.constant dense<0.000000e+00> : vector<5x5xf32>
    %286 = tpu.matmul %283, %284, %cst_128 {dimension_numbers = #tpu.dot_dimension_numbers<[1], [1], [0], [0], [0, 0, 1, 0], [], []>} : vector<5x8xf32>, vector<5x8xf32>, vector<5x5xf32> -> vector<5x5xf32>
    %cst_129 = arith.constant 0.353553385 : f32
    %287 = vector.broadcast %cst_129 : f32 to vector<5x5xf32>
    %288 = arith.mulf %286, %287 : vector<5x5xf32>
    %cst_130 = arith.constant dense<0xFF800000> : vector<5xf32>
    %289 = vector.multi_reduction <maximumf>, %288, %cst_130 [1] : vector<5x5xf32> to vector<5xf32>
    %290 = vector.shape_cast %289 : vector<5xf32> to vector<5x1xf32>
    %291 = vector.broadcast %290 : vector<5x1xf32> to vector<5x5xf32>
    %292 = arith.subf %288, %291 : vector<5x5xf32>
    %293 = math.exp %292 : vector<5x5xf32>
    %cst_131 = arith.constant dense<0.000000e+00> : vector<5xf32>
    %294 = vector.multi_reduction <add>, %293, %cst_131 [1] : vector<5x5xf32> to vector<5xf32>
    %295 = vector.shape_cast %294 : vector<5xf32> to vector<5x1xf32>
    %296 = tpu.reciprocal %295 {approx = true} : vector<5x1xf32> -> vector<5x1xf32>
    %297 = vector.broadcast %296 : vector<5x1xf32> to vector<5x5xf32>
    %298 = arith.mulf %293, %297 : vector<5x5xf32>
    %cst_132 = arith.constant dense<0.000000e+00> : vector<5x8xf32>
    %299 = tpu.matmul %298, %285, %cst_132 {dimension_numbers = #tpu.dot_dimension_numbers<[1], [0], [0], [1], [0, 0, 1, 1], [], []>} : vector<5x5xf32>, vector<5x8xf32>, vector<5x8xf32> -> vector<5x8xf32>
    %300 = vector.extract_strided_slice %243 {offsets = [16, 0], sizes = [8, 32], strides = [1, 1]} : vector<32x32xf32> to vector<8x32xf32>
    %cst_133 = arith.constant dense<0.000000e+00> : vector<5x32xf32>
    %301 = tpu.matmul %299, %300, %cst_133 {dimension_numbers = #tpu.dot_dimension_numbers<[1], [0], [0], [1], [0, 0, 1, 1], [], []>} : vector<5x8xf32>, vector<8x32xf32>, vector<5x32xf32> -> vector<5x32xf32>
    %302 = arith.addf %282, %301 : vector<5x32xf32>
    %303 = vector.extract_strided_slice %241 {offsets = [0, 24], sizes = [5, 8], strides = [1, 1]} : vector<5x96xf32> to vector<5x8xf32>
    %304 = vector.extract_strided_slice %241 {offsets = [0, 56], sizes = [5, 8], strides = [1, 1]} : vector<5x96xf32> to vector<5x8xf32>
    %305 = vector.extract_strided_slice %241 {offsets = [0, 88], sizes = [5, 8], strides = [1, 1]} : vector<5x96xf32> to vector<5x8xf32>
    %cst_134 = arith.constant dense<0.000000e+00> : vector<5x5xf32>
    %306 = tpu.matmul %303, %304, %cst_134 {dimension_numbers = #tpu.dot_dimension_numbers<[1], [1], [0], [0], [0, 0, 1, 0], [], []>} : vector<5x8xf32>, vector<5x8xf32>, vector<5x5xf32> -> vector<5x5xf32>
    %cst_135 = arith.constant 0.353553385 : f32
    %307 = vector.broadcast %cst_135 : f32 to vector<5x5xf32>
    %308 = arith.mulf %306, %307 : vector<5x5xf32>
    %cst_136 = arith.constant dense<0xFF800000> : vector<5xf32>
    %309 = vector.multi_reduction <maximumf>, %308, %cst_136 [1] : vector<5x5xf32> to vector<5xf32>
    %310 = vector.shape_cast %309 : vector<5xf32> to vector<5x1xf32>
    %311 = vector.broadcast %310 : vector<5x1xf32> to vector<5x5xf32>
    %312 = arith.subf %308, %311 : vector<5x5xf32>
    %313 = math.exp %312 : vector<5x5xf32>
    %cst_137 = arith.constant dense<0.000000e+00> : vector<5xf32>
    %314 = vector.multi_reduction <add>, %313, %cst_137 [1] : vector<5x5xf32> to vector<5xf32>
    %315 = vector.shape_cast %314 : vector<5xf32> to vector<5x1xf32>
    %316 = tpu.reciprocal %315 {approx = true} : vector<5x1xf32> -> vector<5x1xf32>
    %317 = vector.broadcast %316 : vector<5x1xf32> to vector<5x5xf32>
    %318 = arith.mulf %313, %317 : vector<5x5xf32>
    %cst_138 = arith.constant dense<0.000000e+00> : vector<5x8xf32>
    %319 = tpu.matmul %318, %305, %cst_138 {dimension_numbers = #tpu.dot_dimension_numbers<[1], [0], [0], [1], [0, 0, 1, 1], [], []>} : vector<5x5xf32>, vector<5x8xf32>, vector<5x8xf32> -> vector<5x8xf32>
    %320 = vector.extract_strided_slice %243 {offsets = [24, 0], sizes = [8, 32], strides = [1, 1]} : vector<32x32xf32> to vector<8x32xf32>
    %cst_139 = arith.constant dense<0.000000e+00> : vector<5x32xf32>
    %321 = tpu.matmul %319, %320, %cst_139 {dimension_numbers = #tpu.dot_dimension_numbers<[1], [0], [0], [1], [0, 0, 1, 1], [], []>} : vector<5x8xf32>, vector<8x32xf32>, vector<5x32xf32> -> vector<5x32xf32>
    %322 = arith.addf %302, %321 : vector<5x32xf32>
    %323 = arith.addf %208, %322 : vector<5x32xf32>
    %c1_140 = arith.constant 1 : index
    %c0_141 = arith.constant 0 : index
    %c0_142 = arith.constant 0 : index
    %324 = vector.load %arg10[%c1_140, %c0_141, %c0_142] : memref<2x1x32xf32, #tpu.memory_space<vmem>>, vector<1x1x32xf32>
    %325 = vector.shape_cast %324 : vector<1x1x32xf32> to vector<1x32xf32>
    %326 = vector.broadcast %325 : vector<1x32xf32> to vector<5x32xf32>
    %327 = arith.addf %323, %326 : vector<5x32xf32>
    %c1_143 = arith.constant 1 : index
    %c0_144 = arith.constant 0 : index
    %c0_145 = arith.constant 0 : index
    %328 = vector.load %arg11[%c1_143, %c0_144, %c0_145] : memref<2x1x32xf32, #tpu.memory_space<vmem>>, vector<1x1x32xf32>
    %329 = vector.shape_cast %328 : vector<1x1x32xf32> to vector<1x32xf32>
    %c1_146 = arith.constant 1 : index
    %c0_147 = arith.constant 0 : index
    %c0_148 = arith.constant 0 : index
    %330 = vector.load %arg12[%c1_146, %c0_147, %c0_148] : memref<2x1x32xf32, #tpu.memory_space<vmem>>, vector<1x1x32xf32>
    %331 = vector.shape_cast %330 : vector<1x1x32xf32> to vector<1x32xf32>
    %cst_149 = arith.constant dense<0.000000e+00> : vector<5xf32>
    %332 = vector.multi_reduction <add>, %327, %cst_149 [1] : vector<5x32xf32> to vector<5xf32>
    %333 = vector.shape_cast %332 : vector<5xf32> to vector<5x1xf32>
    %cst_150 = arith.constant 3.200000e+01 : f32
    %334 = vector.broadcast %cst_150 : f32 to vector<5x1xf32>
    %335 = arith.divf %333, %334 : vector<5x1xf32>
    %336 = vector.broadcast %335 : vector<5x1xf32> to vector<5x32xf32>
    %337 = arith.subf %327, %336 : vector<5x32xf32>
    %338 = arith.mulf %337, %337 : vector<5x32xf32>
    %cst_151 = arith.constant dense<0.000000e+00> : vector<5xf32>
    %339 = vector.multi_reduction <add>, %338, %cst_151 [1] : vector<5x32xf32> to vector<5xf32>
    %340 = vector.shape_cast %339 : vector<5xf32> to vector<5x1xf32>
    %cst_152 = arith.constant 3.200000e+01 : f32
    %341 = vector.broadcast %cst_152 : f32 to vector<5x1xf32>
    %342 = arith.divf %340, %341 : vector<5x1xf32>
    %343 = vector.broadcast %335 : vector<5x1xf32> to vector<5x32xf32>
    %344 = arith.subf %327, %343 : vector<5x32xf32>
    %cst_153 = arith.constant 9.99999974E-6 : f32
    %345 = vector.broadcast %cst_153 : f32 to vector<5x1xf32>
    %346 = arith.addf %342, %345 : vector<5x1xf32>
    %347 = math.rsqrt %346 : vector<5x1xf32>
    %348 = vector.broadcast %347 : vector<5x1xf32> to vector<5x32xf32>
    %349 = arith.mulf %344, %348 : vector<5x32xf32>
    %350 = vector.broadcast %329 : vector<1x32xf32> to vector<5x32xf32>
    %351 = arith.mulf %349, %350 : vector<5x32xf32>
    %352 = vector.broadcast %331 : vector<1x32xf32> to vector<5x32xf32>
    %353 = arith.addf %351, %352 : vector<5x32xf32>
    %c1_154 = arith.constant 1 : index
    %c0_155 = arith.constant 0 : index
    %c0_156 = arith.constant 0 : index
    %354 = vector.load %arg13[%c1_154, %c0_155, %c0_156] : memref<2x32x64xf32, #tpu.memory_space<vmem>>, vector<1x32x64xf32>
    %355 = vector.shape_cast %354 : vector<1x32x64xf32> to vector<32x64xf32>
    %cst_157 = arith.constant dense<0.000000e+00> : vector<5x64xf32>
    %356 = tpu.matmul %353, %355, %cst_157 {dimension_numbers = #tpu.dot_dimension_numbers<[1], [0], [0], [1], [0, 0, 1, 1], [], []>} : vector<5x32xf32>, vector<32x64xf32>, vector<5x64xf32> -> vector<5x64xf32>
    %c1_158 = arith.constant 1 : index
    %c0_159 = arith.constant 0 : index
    %c0_160 = arith.constant 0 : index
    %357 = vector.load %arg14[%c1_158, %c0_159, %c0_160] : memref<2x1x64xf32, #tpu.memory_space<vmem>>, vector<1x1x64xf32>
    %358 = vector.shape_cast %357 : vector<1x1x64xf32> to vector<1x64xf32>
    %359 = vector.broadcast %358 : vector<1x64xf32> to vector<5x64xf32>
    %360 = arith.addf %356, %359 : vector<5x64xf32>
    %cst_161 = arith.constant 5.000000e-01 : f32
    %361 = vector.broadcast %cst_161 : f32 to vector<5x64xf32>
    %362 = arith.mulf %361, %360 : vector<5x64xf32>
    %cst_162 = arith.constant 0.707106769 : f32
    %363 = vector.broadcast %cst_162 : f32 to vector<5x64xf32>
    %364 = arith.mulf %360, %363 : vector<5x64xf32>
    %365 = math.absf %364 : vector<5x64xf32>
    %cst_163 = arith.constant 0.327591091 : f32
    %366 = vector.broadcast %cst_163 : f32 to vector<5x64xf32>
    %367 = arith.mulf %366, %365 : vector<5x64xf32>
    %cst_164 = arith.constant 1.000000e+00 : f32
    %368 = vector.broadcast %cst_164 : f32 to vector<5x64xf32>
    %369 = arith.addf %368, %367 : vector<5x64xf32>
    %cst_165 = arith.constant 1.000000e+00 : f32
    %370 = vector.broadcast %cst_165 : f32 to vector<5x64xf32>
    %371 = arith.divf %370, %369 : vector<5x64xf32>
    %cst_166 = arith.constant 1.06140542 : f32
    %372 = vector.broadcast %cst_166 : f32 to vector<5x64xf32>
    %373 = arith.mulf %372, %371 : vector<5x64xf32>
    %cst_167 = arith.constant -1.45315206 : f32
    %374 = vector.broadcast %cst_167 : f32 to vector<5x64xf32>
    %375 = arith.addf %373, %374 : vector<5x64xf32>
    %376 = arith.mulf %375, %371 : vector<5x64xf32>
    %cst_168 = arith.constant 1.42141378 : f32
    %377 = vector.broadcast %cst_168 : f32 to vector<5x64xf32>
    %378 = arith.addf %376, %377 : vector<5x64xf32>
    %379 = arith.mulf %378, %371 : vector<5x64xf32>
    %cst_169 = arith.constant -0.284496725 : f32
    %380 = vector.broadcast %cst_169 : f32 to vector<5x64xf32>
    %381 = arith.addf %379, %380 : vector<5x64xf32>
    %382 = arith.mulf %381, %371 : vector<5x64xf32>
    %cst_170 = arith.constant 0.254829586 : f32
    %383 = vector.broadcast %cst_170 : f32 to vector<5x64xf32>
    %384 = arith.addf %382, %383 : vector<5x64xf32>
    %385 = arith.mulf %384, %371 : vector<5x64xf32>
    %cst_171 = arith.constant 0.000000e+00 : f32
    %386 = vector.broadcast %cst_171 : f32 to vector<5x64xf32>
    %387 = arith.subf %386, %365 : vector<5x64xf32>
    %388 = arith.mulf %387, %365 : vector<5x64xf32>
    %389 = math.exp %388 : vector<5x64xf32>
    %390 = arith.mulf %385, %389 : vector<5x64xf32>
    %cst_172 = arith.constant 1.000000e+00 : f32
    %391 = vector.broadcast %cst_172 : f32 to vector<5x64xf32>
    %392 = arith.subf %391, %390 : vector<5x64xf32>
    %cst_173 = arith.constant 0.000000e+00 : f32
    %393 = vector.broadcast %cst_173 : f32 to vector<5x64xf32>
    %394 = arith.cmpf oge, %364, %393 : vector<5x64xf32>
    %cst_174 = arith.constant 0.000000e+00 : f32
    %395 = vector.broadcast %cst_174 : f32 to vector<5x64xf32>
    %396 = arith.subf %395, %392 : vector<5x64xf32>
    %397 = arith.select %394, %392, %396 : vector<5x64xi1>, vector<5x64xf32>
    %cst_175 = arith.constant 1.000000e+00 : f32
    %398 = vector.broadcast %cst_175 : f32 to vector<5x64xf32>
    %399 = arith.addf %398, %397 : vector<5x64xf32>
    %400 = arith.mulf %362, %399 : vector<5x64xf32>
    %c1_176 = arith.constant 1 : index
    %c0_177 = arith.constant 0 : index
    %c0_178 = arith.constant 0 : index
    %401 = vector.load %arg15[%c1_176, %c0_177, %c0_178] : memref<2x64x32xf32, #tpu.memory_space<vmem>>, vector<1x64x32xf32>
    %402 = vector.shape_cast %401 : vector<1x64x32xf32> to vector<64x32xf32>
    %cst_179 = arith.constant dense<0.000000e+00> : vector<5x32xf32>
    %403 = tpu.matmul %400, %402, %cst_179 {dimension_numbers = #tpu.dot_dimension_numbers<[1], [0], [0], [1], [0, 0, 1, 1], [], []>} : vector<5x64xf32>, vector<64x32xf32>, vector<5x32xf32> -> vector<5x32xf32>
    %c1_180 = arith.constant 1 : index
    %c0_181 = arith.constant 0 : index
    %c0_182 = arith.constant 0 : index
    %404 = vector.load %arg16[%c1_180, %c0_181, %c0_182] : memref<2x1x32xf32, #tpu.memory_space<vmem>>, vector<1x1x32xf32>
    %405 = vector.shape_cast %404 : vector<1x1x32xf32> to vector<1x32xf32>
    %406 = vector.broadcast %405 : vector<1x32xf32> to vector<5x32xf32>
    %407 = arith.addf %403, %406 : vector<5x32xf32>
    %408 = arith.addf %327, %407 : vector<5x32xf32>
    %cst_183 = arith.constant dense<0.000000e+00> : vector<32xf32>
    %409 = vector.multi_reduction <add>, %408, %cst_183 [0] : vector<5x32xf32> to vector<32xf32>
    %410 = vector.shape_cast %409 : vector<32xf32> to vector<1x32xf32>
    %cst_184 = arith.constant 5.000000e+00 : f32
    %411 = vector.broadcast %cst_184 : f32 to vector<1x32xf32>
    %412 = arith.divf %410, %411 : vector<1x32xf32>
    %c0_185 = arith.constant 0 : index
    %c0_186 = arith.constant 0 : index
    %413 = vector.load %arg17[%c0_185, %c0_186] : memref<32x32xf32, #tpu.memory_space<vmem>>, vector<32x32xf32>
    %cst_187 = arith.constant dense<0.000000e+00> : vector<1x32xf32>
    %414 = tpu.matmul %412, %413, %cst_187 {dimension_numbers = #tpu.dot_dimension_numbers<[1], [0], [0], [1], [0, 0, 1, 1], [], []>} : vector<1x32xf32>, vector<32x32xf32>, vector<1x32xf32> -> vector<1x32xf32>
    %c0_188 = arith.constant 0 : index
    %c0_189 = arith.constant 0 : index
    %415 = vector.load %arg18[%c0_188, %c0_189] : memref<1x32xf32, #tpu.memory_space<vmem>>, vector<1x32xf32>
    %416 = arith.addf %414, %415 : vector<1x32xf32>
    %c0_190 = arith.constant 0 : index
    %c0_191 = arith.constant 0 : index
    %417 = vector.load %arg19[%c0_190, %c0_191] : memref<1x32xf32, #tpu.memory_space<vmem>>, vector<1x32xf32>
    %c0_192 = arith.constant 0 : index
    %c0_193 = arith.constant 0 : index
    %418 = vector.load %arg20[%c0_192, %c0_193] : memref<1x32xf32, #tpu.memory_space<vmem>>, vector<1x32xf32>
    %cst_194 = arith.constant dense<0.000000e+00> : vector<1xf32>
    %419 = vector.multi_reduction <add>, %416, %cst_194 [1] : vector<1x32xf32> to vector<1xf32>
    %420 = vector.shape_cast %419 : vector<1xf32> to vector<1x1xf32>
    %cst_195 = arith.constant 3.200000e+01 : f32
    %421 = vector.broadcast %cst_195 : f32 to vector<1x1xf32>
    %422 = arith.divf %420, %421 : vector<1x1xf32>
    %423 = vector.broadcast %422 : vector<1x1xf32> to vector<1x32xf32>
    %424 = arith.subf %416, %423 : vector<1x32xf32>
    %425 = arith.mulf %424, %424 : vector<1x32xf32>
    %cst_196 = arith.constant dense<0.000000e+00> : vector<1xf32>
    %426 = vector.multi_reduction <add>, %425, %cst_196 [1] : vector<1x32xf32> to vector<1xf32>
    %427 = vector.shape_cast %426 : vector<1xf32> to vector<1x1xf32>
    %cst_197 = arith.constant 3.200000e+01 : f32
    %428 = vector.broadcast %cst_197 : f32 to vector<1x1xf32>
    %429 = arith.divf %427, %428 : vector<1x1xf32>
    %430 = vector.broadcast %422 : vector<1x1xf32> to vector<1x32xf32>
    %431 = arith.subf %416, %430 : vector<1x32xf32>
    %cst_198 = arith.constant 9.99999974E-6 : f32
    %432 = vector.broadcast %cst_198 : f32 to vector<1x1xf32>
    %433 = arith.addf %429, %432 : vector<1x1xf32>
    %434 = math.rsqrt %433 : vector<1x1xf32>
    %435 = vector.broadcast %434 : vector<1x1xf32> to vector<1x32xf32>
    %436 = arith.mulf %431, %435 : vector<1x32xf32>
    %437 = arith.mulf %436, %417 : vector<1x32xf32>
    %438 = arith.addf %437, %418 : vector<1x32xf32>
    %cst_199 = arith.constant 5.000000e-01 : f32
    %439 = vector.broadcast %cst_199 : f32 to vector<1x32xf32>
    %440 = arith.mulf %439, %438 : vector<1x32xf32>
    %cst_200 = arith.constant 0.707106769 : f32
    %441 = vector.broadcast %cst_200 : f32 to vector<1x32xf32>
    %442 = arith.mulf %438, %441 : vector<1x32xf32>
    %443 = math.absf %442 : vector<1x32xf32>
    %cst_201 = arith.constant 0.327591091 : f32
    %444 = vector.broadcast %cst_201 : f32 to vector<1x32xf32>
    %445 = arith.mulf %444, %443 : vector<1x32xf32>
    %cst_202 = arith.constant 1.000000e+00 : f32
    %446 = vector.broadcast %cst_202 : f32 to vector<1x32xf32>
    %447 = arith.addf %446, %445 : vector<1x32xf32>
    %cst_203 = arith.constant 1.000000e+00 : f32
    %448 = vector.broadcast %cst_203 : f32 to vector<1x32xf32>
    %449 = arith.divf %448, %447 : vector<1x32xf32>
    %cst_204 = arith.constant 1.06140542 : f32
    %450 = vector.broadcast %cst_204 : f32 to vector<1x32xf32>
    %451 = arith.mulf %450, %449 : vector<1x32xf32>
    %cst_205 = arith.constant -1.45315206 : f32
    %452 = vector.broadcast %cst_205 : f32 to vector<1x32xf32>
    %453 = arith.addf %451, %452 : vector<1x32xf32>
    %454 = arith.mulf %453, %449 : vector<1x32xf32>
    %cst_206 = arith.constant 1.42141378 : f32
    %455 = vector.broadcast %cst_206 : f32 to vector<1x32xf32>
    %456 = arith.addf %454, %455 : vector<1x32xf32>
    %457 = arith.mulf %456, %449 : vector<1x32xf32>
    %cst_207 = arith.constant -0.284496725 : f32
    %458 = vector.broadcast %cst_207 : f32 to vector<1x32xf32>
    %459 = arith.addf %457, %458 : vector<1x32xf32>
    %460 = arith.mulf %459, %449 : vector<1x32xf32>
    %cst_208 = arith.constant 0.254829586 : f32
    %461 = vector.broadcast %cst_208 : f32 to vector<1x32xf32>
    %462 = arith.addf %460, %461 : vector<1x32xf32>
    %463 = arith.mulf %462, %449 : vector<1x32xf32>
    %cst_209 = arith.constant 0.000000e+00 : f32
    %464 = vector.broadcast %cst_209 : f32 to vector<1x32xf32>
    %465 = arith.subf %464, %443 : vector<1x32xf32>
    %466 = arith.mulf %465, %443 : vector<1x32xf32>
    %467 = math.exp %466 : vector<1x32xf32>
    %468 = arith.mulf %463, %467 : vector<1x32xf32>
    %cst_210 = arith.constant 1.000000e+00 : f32
    %469 = vector.broadcast %cst_210 : f32 to vector<1x32xf32>
    %470 = arith.subf %469, %468 : vector<1x32xf32>
    %cst_211 = arith.constant 0.000000e+00 : f32
    %471 = vector.broadcast %cst_211 : f32 to vector<1x32xf32>
    %472 = arith.cmpf oge, %442, %471 : vector<1x32xf32>
    %cst_212 = arith.constant 0.000000e+00 : f32
    %473 = vector.broadcast %cst_212 : f32 to vector<1x32xf32>
    %474 = arith.subf %473, %470 : vector<1x32xf32>
    %475 = arith.select %472, %470, %474 : vector<1x32xi1>, vector<1x32xf32>
    %cst_213 = arith.constant 1.000000e+00 : f32
    %476 = vector.broadcast %cst_213 : f32 to vector<1x32xf32>
    %477 = arith.addf %476, %475 : vector<1x32xf32>
    %478 = arith.mulf %440, %477 : vector<1x32xf32>
    %c0_214 = arith.constant 0 : index
    %c0_215 = arith.constant 0 : index
    %479 = vector.load %arg21[%c0_214, %c0_215] : memref<32x10xf32, #tpu.memory_space<vmem>>, vector<32x10xf32>
    %cst_216 = arith.constant dense<0.000000e+00> : vector<1x10xf32>
    %480 = tpu.matmul %478, %479, %cst_216 {dimension_numbers = #tpu.dot_dimension_numbers<[1], [0], [0], [1], [0, 0, 1, 1], [], []>} : vector<1x32xf32>, vector<32x10xf32>, vector<1x10xf32> -> vector<1x10xf32>
    %c0_217 = arith.constant 0 : index
    %c0_218 = arith.constant 0 : index
    %481 = vector.load %arg22[%c0_217, %c0_218] : memref<1x10xf32, #tpu.memory_space<vmem>>, vector<1x10xf32>
    %482 = arith.addf %480, %481 : vector<1x10xf32>
    %c0_219 = arith.constant 0 : index
    %c0_220 = arith.constant 0 : index
    %c0_221 = arith.constant 0 : index
    %483 = vector.load %arg23[%c0_219, %c0_220, %c0_221] : memref<1x1x10xf32, #tpu.memory_space<vmem>>, vector<1x1x10xf32>
    %484 = vector.shape_cast %483 : vector<1x1x10xf32> to vector<1x10xf32>
    %485 = vector.shape_cast %482 : vector<1x10xf32> to vector<1x1x10xf32>
    tpu.vector_store %arg23[%c0_219, %c0_220, %c0_221], %485 {strides = array<i32>} : memref<1x1x10xf32, #tpu.memory_space<vmem>>, vector<1x1x10xf32>,
    return
  }
  func.func @transform_0(%arg0: i32) -> (i32, i32, i32) {
    %c0_i32 = arith.constant 0 : i32
    %c0_i32_0 = arith.constant 0 : i32
    %c0_i32_1 = arith.constant 0 : i32
    return %arg0, %c0_i32, %c0_i32_0 : i32, i32, i32
  }
  func.func @transform_1(%arg0: i32) -> (i32, i32) {
    %c0_i32 = arith.constant 0 : i32
    %c0_i32_0 = arith.constant 0 : i32
    %c0_i32_1 = arith.constant 0 : i32
    return %c0_i32, %c0_i32_0 : i32, i32
  }
  func.func @transform_2(%arg0: i32) -> (i32, i32) {
    %c0_i32 = arith.constant 0 : i32
    %c0_i32_0 = arith.constant 0 : i32
    %c0_i32_1 = arith.constant 0 : i32
    return %c0_i32, %c0_i32_0 : i32, i32
  }
  func.func @transform_3(%arg0: i32) -> (i32, i32) {
    %c0_i32 = arith.constant 0 : i32
    %c0_i32_0 = arith.constant 0 : i32
    %c0_i32_1 = arith.constant 0 : i32
    return %c0_i32, %c0_i32_0 : i32, i32
  }
  func.func @transform_4(%arg0: i32) -> (i32, i32, i32) {
    %c0_i32 = arith.constant 0 : i32
    %c0_i32_0 = arith.constant 0 : i32
    %c0_i32_1 = arith.constant 0 : i32
    %c0_i32_2 = arith.constant 0 : i32
    return %c0_i32, %c0_i32_0, %c0_i32_1 : i32, i32, i32
  }
  func.func @transform_5(%arg0: i32) -> (i32, i32, i32) {
    %c0_i32 = arith.constant 0 : i32
    %c0_i32_0 = arith.constant 0 : i32
    %c0_i32_1 = arith.constant 0 : i32
    %c0_i32_2 = arith.constant 0 : i32
    return %c0_i32, %c0_i32_0, %c0_i32_1 : i32, i32, i32
  }
  func.func @transform_6(%arg0: i32) -> (i32, i32, i32) {
    %c0_i32 = arith.constant 0 : i32
    %c0_i32_0 = arith.constant 0 : i32
    %c0_i32_1 = arith.constant 0 : i32
    %c0_i32_2 = arith.constant 0 : i32
    return %c0_i32, %c0_i32_0, %c0_i32_1 : i32, i32, i32
  }
  func.func @transform_7(%arg0: i32) -> (i32, i32, i32) {
    %c0_i32 = arith.constant 0 : i32
    %c0_i32_0 = arith.constant 0 : i32
    %c0_i32_1 = arith.constant 0 : i32
    %c0_i32_2 = arith.constant 0 : i32
    return %c0_i32, %c0_i32_0, %c0_i32_1 : i32, i32, i32
  }
  func.func @transform_8(%arg0: i32) -> (i32, i32, i32) {
    %c0_i32 = arith.constant 0 : i32
    %c0_i32_0 = arith.constant 0 : i32
    %c0_i32_1 = arith.constant 0 : i32
    %c0_i32_2 = arith.constant 0 : i32
    return %c0_i32, %c0_i32_0, %c0_i32_1 : i32, i32, i32
  }
  func.func @transform_9(%arg0: i32) -> (i32, i32, i32) {
    %c0_i32 = arith.constant 0 : i32
    %c0_i32_0 = arith.constant 0 : i32
    %c0_i32_1 = arith.constant 0 : i32
    %c0_i32_2 = arith.constant 0 : i32
    return %c0_i32, %c0_i32_0, %c0_i32_1 : i32, i32, i32
  }
  func.func @transform_10(%arg0: i32) -> (i32, i32, i32) {
    %c0_i32 = arith.constant 0 : i32
    %c0_i32_0 = arith.constant 0 : i32
    %c0_i32_1 = arith.constant 0 : i32
    %c0_i32_2 = arith.constant 0 : i32
    return %c0_i32, %c0_i32_0, %c0_i32_1 : i32, i32, i32
  }
  func.func @transform_11(%arg0: i32) -> (i32, i32, i32) {
    %c0_i32 = arith.constant 0 : i32
    %c0_i32_0 = arith.constant 0 : i32
    %c0_i32_1 = arith.constant 0 : i32
    %c0_i32_2 = arith.constant 0 : i32
    return %c0_i32, %c0_i32_0, %c0_i32_1 : i32, i32, i32
  }
  func.func @transform_12(%arg0: i32) -> (i32, i32, i32) {
    %c0_i32 = arith.constant 0 : i32
    %c0_i32_0 = arith.constant 0 : i32
    %c0_i32_1 = arith.constant 0 : i32
    %c0_i32_2 = arith.constant 0 : i32
    return %c0_i32, %c0_i32_0, %c0_i32_1 : i32, i32, i32
  }
  func.func @transform_13(%arg0: i32) -> (i32, i32, i32) {
    %c0_i32 = arith.constant 0 : i32
    %c0_i32_0 = arith.constant 0 : i32
    %c0_i32_1 = arith.constant 0 : i32
    %c0_i32_2 = arith.constant 0 : i32
    return %c0_i32, %c0_i32_0, %c0_i32_1 : i32, i32, i32
  }
  func.func @transform_14(%arg0: i32) -> (i32, i32, i32) {
    %c0_i32 = arith.constant 0 : i32
    %c0_i32_0 = arith.constant 0 : i32
    %c0_i32_1 = arith.constant 0 : i32
    %c0_i32_2 = arith.constant 0 : i32
    return %c0_i32, %c0_i32_0, %c0_i32_1 : i32, i32, i32
  }
  func.func @transform_15(%arg0: i32) -> (i32, i32, i32) {
    %c0_i32 = arith.constant 0 : i32
    %c0_i32_0 = arith.constant 0 : i32
    %c0_i32_1 = arith.constant 0 : i32
    %c0_i32_2 = arith.constant 0 : i32
    return %c0_i32, %c0_i32_0, %c0_i32_1 : i32, i32, i32
  }
  func.func @transform_16(%arg0: i32) -> (i32, i32) {
    %c0_i32 = arith.constant 0 : i32
    %c0_i32_0 = arith.constant 0 : i32
    %c0_i32_1 = arith.constant 0 : i32
    return %c0_i32, %c0_i32_0 : i32, i32
  }
  func.func @transform_17(%arg0: i32) -> (i32, i32) {
    %c0_i32 = arith.constant 0 : i32
    %c0_i32_0 = arith.constant 0 : i32
    %c0_i32_1 = arith.constant 0 : i32
    return %c0_i32, %c0_i32_0 : i32, i32
  }
  func.func @transform_18(%arg0: i32) -> (i32, i32) {
    %c0_i32 = arith.constant 0 : i32
    %c0_i32_0 = arith.constant 0 : i32
    %c0_i32_1 = arith.constant 0 : i32
    return %c0_i32, %c0_i32_0 : i32, i32
  }
  func.func @transform_19(%arg0: i32) -> (i32, i32) {
    %c0_i32 = arith.constant 0 : i32
    %c0_i32_0 = arith.constant 0 : i32
    %c0_i32_1 = arith.constant 0 : i32
    return %c0_i32, %c0_i32_0 : i32, i32
  }
  func.func @transform_20(%arg0: i32) -> (i32, i32) {
    %c0_i32 = arith.constant 0 : i32
    %c0_i32_0 = arith.constant 0 : i32
    %c0_i32_1 = arith.constant 0 : i32
    return %c0_i32, %c0_i32_0 : i32, i32
  }
  func.func @transform_21(%arg0: i32) -> (i32, i32) {
    %c0_i32 = arith.constant 0 : i32
    %c0_i32_0 = arith.constant 0 : i32
    %c0_i32_1 = arith.constant 0 : i32
    return %c0_i32, %c0_i32_0 : i32, i32
  }
  func.func @transform_22(%arg0: i32) -> (i32, i32, i32) {
    %c0_i32 = arith.constant 0 : i32
    %c0_i32_0 = arith.constant 0 : i32
    %c0_i32_1 = arith.constant 0 : i32
    return %arg0, %c0_i32, %c0_i32_0 : i32, i32, i32
  }
}

</mosaic_0001>

<llo_original>
// kernel: forward.5
$region0: #{forward.5}
  #allocation0 [shape = 'u32[]', space=smem, size = 0x4, offset = 0x4, fixed_abs, tag = 'smem constant byte address 0x4 - core index']
  #allocation1 [shape = 'u32[144,128]{1,0:T(1,128)}', space=vmem, size = 0x12000, scoped, tag = 'internal scratch']
  %s0 = inlined_call_operand.vmem [shape: f32[2,33,64], index: 0, kind: input, shape index: {}]
  %s1 = inlined_call_operand.vmem [shape: f32[64,33], index: 1, kind: input, shape index: {}]
  %s2 = inlined_call_operand.vmem [shape: f32[64,33], index: 2, kind: input, shape index: {}]
  %s3 = inlined_call_operand.vmem [shape: f32[33,16], index: 3, kind: input, shape index: {}]
  %s4 = inlined_call_operand.vmem [shape: f32[2,33,16], index: 4, kind: output, shape index: {}]
  %s5 = sld [smem:[#allocation0]]
  $region49: #{forward.5} parent=0
    _
  %s7 = ssub.s32 1, %s5
  %s8 = scalar_select 0, %s7, %s5
  loop: start=0, step=1, limit=4
  $region2: #{forward.5} parent=0 // loop_pre_header
    _
  $region3: #{forward.5} parent=0 // loop_header
    %s10 = sphi 0, %s14
    %p11 = scmp.ge.s32.totalorder %s10, 4
    %s20 = sphi 0, %s22
    %s23 = sphi 0, %s20
    %s24 = sphi 0, %s23
    %s40 = sphi 0, %s24
    %s44 = sphi 0, %s44
    %s46 = sphi 0, %s44
    %s47 = sphi 0, %s46
    %s61 = sphi 0, %s47
    %s65 = sphi 0, %s65
    %s67 = sphi 0, %s65
    %s68 = sphi 0, %s67
    %s82 = sphi 0, %s68
    %s86 = sphi 0, %s86
    %s88 = sphi 0, %s86
    %s89 = sphi 0, %s88
    %s103 = sphi 0, %s89
    %s109 = sphi 0, %s111
    %s112 = sphi 0, %s109
    %s113 = sphi 0, %s112
    %s129 = sphi 0, %s113
  $region4: #{forward.5} parent=0 // loop_header_branch
    %13 = sbr.rel (%p11) target = $region8
  $region5: #{forward.5} parent=0 // loop_body
    %s15 = ssub.s32 %s10, 1
    %s16 = ssub.s32 %s10, 2
    %s17 = sadd.s32 %s10, 1
    %s18 = ssub.s32 %s10, %s17
    %p19 = scmp.eq.s32.totalorder %s18, 0
    %s21 = sadd.s32 %s20, 1
    %s22 = scalar_select %p19, %s20, %s21
    %p25 = pneg %p19
    %p26 = scmp.eq.s32.totalorder %s10, 1
    %p27 = por %p25, %p26
    %p28 = scmp.ne.s32.totalorder %s20, %s23
    %p29 = scmp.eq.s32.totalorder %s10, 0
    %p30 = por %p28, %p29
    %p31 = scmp.ne.s32.totalorder %s20, %s23
    %p32 = scmp.eq.s32.totalorder %s15, 1
    %p33 = por %p31, %p32
    %p34 = scmp.ne.s32.totalorder %s23, %s24
    %p35 = scmp.eq.s32.totalorder %s15, 0
    %p36 = por %p34, %p35
    %p37 = scmp.ne.s32.totalorder %s23, %s24
    %p38 = scmp.eq.s32.totalorder %s16, 1
    %p39 = por %p37, %p38
    %p41 = scmp.ne.s32.totalorder %s24, %s40
    %p42 = scmp.eq.s32.totalorder %s16, 0
    %p43 = por %p41, %p42
    %s45 = sadd.s32 %s44, 1
    %p48 = scmp.eq.s32.totalorder %s10, 1
    %p49 = scmp.ne.s32.totalorder %s44, %s46
    %p50 = scmp.eq.s32.totalorder %s10, 0
    %p51 = por %p49, %p50
    %p52 = scmp.ne.s32.totalorder %s44, %s46
    %p53 = scmp.eq.s32.totalorder %s15, 1
    %p54 = por %p52, %p53
    %p55 = scmp.ne.s32.totalorder %s46, %s47
    %p56 = scmp.eq.s32.totalorder %s15, 0
    %p57 = por %p55, %p56
    %p58 = scmp.ne.s32.totalorder %s46, %s47
    %p59 = scmp.eq.s32.totalorder %s16, 1
    %p60 = por %p58, %p59
    %p62 = scmp.ne.s32.totalorder %s47, %s61
    %p63 = scmp.eq.s32.totalorder %s16, 0
    %p64 = por %p62, %p63
    %s66 = sadd.s32 %s65, 1
    %p69 = scmp.eq.s32.totalorder %s10, 1
    %p70 = scmp.ne.s32.totalorder %s65, %s67
    %p71 = scmp.eq.s32.totalorder %s10, 0
    %p72 = por %p70, %p71
    %p73 = scmp.ne.s32.totalorder %s65, %s67
    %p74 = scmp.eq.s32.totalorder %s15, 1
    %p75 = por %p73, %p74
    %p76 = scmp.ne.s32.totalorder %s67, %s68
    %p77 = scmp.eq.s32.totalorder %s15, 0
    %p78 = por %p76, %p77
    %p79 = scmp.ne.s32.totalorder %s67, %s68
    %p80 = scmp.eq.s32.totalorder %s16, 1
    %p81 = por %p79, %p80
    %p83 = scmp.ne.s32.totalorder %s68, %s82
    %p84 = scmp.eq.s32.totalorder %s16, 0
    %p85 = por %p83, %p84
    %s87 = sadd.s32 %s86, 1
    %p90 = scmp.eq.s32.totalorder %s10, 1
    %p91 = scmp.ne.s32.totalorder %s86, %s88
    %p92 = scmp.eq.s32.totalorder %s10, 0
    %p93 = por %p91, %p92
    %p94 = scmp.ne.s32.totalorder %s86, %s88
    %p95 = scmp.eq.s32.totalorder %s15, 1
    %p96 = por %p94, %p95
    %p97 = scmp.ne.s32.totalorder %s88, %s89
    %p98 = scmp.eq.s32.totalorder %s15, 0
    %p99 = por %p97, %p98
    %p100 = scmp.ne.s32.totalorder %s88, %s89
    %p101 = scmp.eq.s32.totalorder %s16, 1
    %p102 = por %p100, %p101
    %p104 = scmp.ne.s32.totalorder %s89, %s103
    %p105 = scmp.eq.s32.totalorder %s16, 0
    %p106 = por %p104, %p105
    %s107 = ssub.s32 %s10, %s17
    %p108 = scmp.eq.s32.totalorder %s107, 0
    %s110 = sadd.s32 %s109, 1
    %s111 = scalar_select %p108, %s109, %s110
    %p114 = pneg %p108
    %p115 = scmp.eq.s32.totalorder %s10, 1
    %p116 = por %p114, %p115
    %p117 = scmp.ne.s32.totalorder %s109, %s112
    %p118 = scmp.eq.s32.totalorder %s10, 0
    %p119 = por %p117, %p118
    %p120 = scmp.ne.s32.totalorder %s109, %s112
    %p121 = scmp.eq.s32.totalorder %s15, 1
    %p122 = por %p120, %p121
    %p123 = scmp.ne.s32.totalorder %s112, %s113
    %p124 = scmp.eq.s32.totalorder %s15, 0
    %p125 = por %p123, %p124
    %p126 = scmp.ne.s32.totalorder %s112, %s113
    %p127 = scmp.eq.s32.totalorder %s16, 1
    %p128 = por %p126, %p127
    %p130 = scmp.ne.s32.totalorder %s113, %s129
    %p131 = scmp.eq.s32.totalorder %s16, 0
    %p132 = por %p130, %p131
    %p133 = scmp.le.s32.totalorder 1, %s10
    %p134 = scmp.lt.s32.totalorder %s10, 3
    %p135 = pnand %p133, %p134
    %p136 = pneg %p135
    // Predicated region
    $region9: #{forward.5} parent=5 // pred_check
      _
    $region10: #{forward.5} parent=5 // pred_check_branch
      %138 = sbr.rel (%p135) target = $region12
    $region11: #{forward.5} parent=5 // pred_region
      %s139 = ssub.s32 %s10, 1
      // Predicated region
      $region13: #{forward.5} parent=11 // pred_check
        %p140 = pneg %p57
      $region14: #{forward.5} parent=11 // pred_check_branch
        %142 = sbr.rel (%p140) target = $region16
      $region15: #{forward.5} parent=11 // pred_region
        _
      $region16: #{forward.5} parent=11 // pred_fallthru
        _
      // Predicated region
      $region17: #{forward.5} parent=11 // pred_check
        %p143 = pneg %p78
      $region18: #{forward.5} parent=11 // pred_check_branch
        %145 = sbr.rel (%p143) target = $region20
      $region19: #{forward.5} parent=11 // pred_region
        _
      $region20: #{forward.5} parent=11 // pred_fallthru
        _
      // Predicated region
      $region21: #{forward.5} parent=11 // pred_check
        %p146 = pneg %p99
      $region22: #{forward.5} parent=11 // pred_check_branch
        %148 = sbr.rel (%p146) target = $region24
      $region23: #{forward.5} parent=11 // pred_region
        _
      $region24: #{forward.5} parent=11 // pred_fallthru
        _
    $region12: #{forward.5} parent=5 // pred_fallthru
      _
    %p149 = scmp.lt.s32.totalorder %s10, 2
    // Predicated region
    $region25: #{forward.5} parent=5 // pred_check
      %p150 = pneg %p149
    $region26: #{forward.5} parent=5 // pred_check_branch
      %152 = sbr.rel (%p150) target = $region28
    $region27: #{forward.5} parent=5 // pred_region
      // Predicated region
      $region29: #{forward.5} parent=27 // pred_check
        %p153 = pneg %p30
      $region30: #{forward.5} parent=27 // pred_check_branch
        %155 = sbr.rel (%p153) target = $region32
      $region31: #{forward.5} parent=27 // pred_region
        %p156 = scmp.lt.s32.totalorder %s10, 1
        %s157 = scalar_select %p156, %s10, 1
        %s158 = smul.addr %s157, 5
        %s159 = smul.addr %s158, 8
        %s160 = scalar_lea.vmem %s0, %s159
      $region32: #{forward.5} parent=27 // pred_fallthru
        _
    $region28: #{forward.5} parent=5 // pred_fallthru
      _
    %p161 = scmp.le.s32.totalorder 1, %s10
    %p162 = scmp.lt.s32.totalorder %s10, 3
    %p163 = pnand %p161, %p162
    %p164 = pneg %p163
    // Predicated region
    $region33: #{forward.5} parent=5 // pred_check
      _
    $region34: #{forward.5} parent=5 // pred_check_branch
      %166 = sbr.rel (%p163) target = $region36
    $region35: #{forward.5} parent=5 // pred_region
      %s167 = ssub.s32 %s10, 1
      %p168 = scmp.lt.s32.totalorder %s15, 1
      %s169 = scalar_select %p168, %s15, 1
      %s170 = smul.addr %s169, 5
      %s171 = smul.addr %s170, 8
      %s172 = scalar_lea.vmem %s0, %s171
      %p173 = pneg %p36
      %p174 = pneg %p33
      %p175 = pneg %p57
      %p176 = pneg %p54
      %p177 = pneg %p78
      %p178 = pneg %p75
      %p179 = pneg %p99
      %p180 = pneg %p96
      %p181 = pneg %p125
      %p182 = pneg %p122
      %p183 = scmp.lt.s32.totalorder %s15, 1
      %s184 = scalar_select %p183, %s15, 1
      %s185 = smul.addr %s184, 5
      %s186 = smul.addr %s185, 8
      %s187 = scalar_lea.vmem %s4, %s186
      %p188 = scmp.lt.s32.totalorder %s15, 1
      %s189 = scalar_select %p188, %s15, 1
      %s190 = smul.addr %s189, 5
      %s191 = smul.addr %s190, 8
      %s192 = scalar_lea.vmem %s0, %s191
      %p193 = scmp.lt.s32.totalorder %s15, 1
      %s194 = scalar_select %p193, %s15, 1
      %s195 = smul.addr %s194, 5
      %s196 = smul.addr %s195, 8
      %s197 = scalar_lea.vmem %s4, %s196
      %v198 = vld [vmem:[%s192] sm:$0xff]
      %v199 = vld [vmem:[%s192 + $0x8] sm:$0xff]
      %v200 = vld [vmem:[%s192 + $0x10] sm:$0xff]
      %v201 = vld [vmem:[%s192 + $0x18] sm:$0xff]
      %v202 = vld [vmem:[%s192 + $0x20] sm:$0x1]
      %v203 = vld [vmem:[%s1] sm:$0xff]
      %v204 = vld [vmem:[%s1 + $0x8] sm:$0xff]
      %v205 = vld [vmem:[%s1 + $0x10] sm:$0xff]
      %v206 = vld [vmem:[%s1 + $0x18] sm:$0xff]
      %v207 = vld [vmem:[%s1 + $0x20] sm:$0xff]
      %v208 = vld [vmem:[%s1 + $0x28] sm:$0xff]
      %v209 = vld [vmem:[%s1 + $0x30] sm:$0xff]
      %v210 = vld [vmem:[%s1 + $0x38] sm:$0xff]
      %vm211 = vcmask 523264
      %v213 = vsel %vm211, %v198, 0
      %v216 = vsel %vm211, %v199, 0
      %v219 = vsel %vm211, %v200, 0
      %v222 = vsel %vm211, %v201, 0
      %v225 = vsel %vm211, %v202, 0
      %227 = vmatprep.subr.mxu0 0.0
      %228 = vmatpush1.msra.mxu0 %v203
      %229 = vmatprep.subr.mxu0 0.0
      %230 = vmatpush1.msra.mxu0 %v204
      %231 = vmatprep.subr.mxu0 0.0
      %232 = vmatpush1.msra.mxu0 %v205
      %233 = vmatprep.subr.mxu0 0.0
      %234 = vmatpush1.msra.mxu0 %v206
      %235 = vmatprep.subr.mxu0 0.0
      %236 = vmatpush1.msra.mxu0 %v207
      %237 = vmatprep.subr.mxu0 0.0
      %238 = vmatpush1.msra.mxu0 %v208
      %239 = vmatprep.subr.mxu0 0.0
      %240 = vmatpush1.msra.mxu0 %v209
      %241 = vmatprep.subr.mxu0 0.0
      %242 = vmatpush1.msra.mxu0 %v210
      %243 = vmatprep.subr.mxu0 0.0
      %244 = vmatpush1.msra.mxu0 0.0
      %245 = vmatprep.subr.mxu0 0.0
      %246 = vmatpush1.msra.mxu0 0.0
      %247 = vmatprep.subr.mxu0 0.0
      %248 = vmatpush1.msra.mxu0 0.0
      %249 = vmatprep.subr.mxu0 0.0
      %250 = vmatpush1.msra.mxu0 0.0
      %251 = vmatprep.subr.mxu0 0.0
      %252 = vmatpush1.msra.mxu0 0.0
      %253 = vmatprep.subr.mxu0 0.0
      %254 = vmatpush1.msra.mxu0 0.0
      %255 = vmatprep.subr.mxu0 0.0
      %256 = vmatpush1.msra.mxu0 0.0
      %257 = vmatprep.subr.mxu0 0.0
      %258 = vmatpush1.msra.mxu0 0.0
      %259 = vmatprep.subr.mxu0 0.0
      %260 = vmatpush1.msra.mxu0 0.0
      %261 = vmatprep.subr.mxu0 0.0
      %262 = vmatpush1.msra.mxu0 0.0
      %263 = vmatprep.subr.mxu0 0.0
      %264 = vmatpush1.msra.mxu0 0.0
      %265 = vmatprep.subr.mxu0 0.0
      %266 = vmatpush1.msra.mxu0 0.0
      %267 = vmatprep.subr.mxu0 0.0
      %268 = vmatpush1.msra.mxu0 0.0
      %269 = vmatprep.subr.mxu0 0.0
      %270 = vmatpush1.msra.mxu0 0.0
      %271 = vmatprep.subr.mxu0 0.0
      %272 = vmatpush1.msra.mxu0 0.0
      %273 = vmatprep.subr.mxu0 0.0
      %274 = vmatpush1.msra.mxu0 0.0
      %275 = vmatprep.subr.mxu0 0.0
      %276 = vmatpush1.msra.mxu0 0.0
      %277 = vmatprep.subr.mxu0 0.0
      %278 = vmatpush1.msra.mxu0 0.0
      %279 = vmatprep.subr.mxu0 0.0
      %280 = vmatpush1.msra.mxu0 0.0
      %281 = vmatprep.subr.mxu0 0.0
      %282 = vmatpush1.msra.mxu0 0.0
      %283 = vmatprep.subr.mxu0 0.0
      %284 = vmatpush1.msra.mxu0 0.0
      %285 = vmatprep.subr.mxu0 0.0
      %286 = vmatpush1.msra.mxu0 0.0
      %287 = vmatprep.subr.mxu0 0.0
      %288 = vmatpush1.msra.mxu0 0.0
      %289 = vmatprep.subr.mxu0 0.0
      %290 = vmatpush1.msra.mxu0 0.0
      %291 = vmatprep.mubr.f32.mxu0 0.0
      %292 = vmatmul.mubr.f32.gmra.mrb[0].mxu0 %v213
      %v293 = vpop.f32.mrb[0].mxu0
      %v294 = vadd.f32 0.0, %v293
      %v295 = vpop.f32.mrb[0].mxu0
      %296 = vmatprep.mubr.f32.mxu0 0.0
      %297 = vmatmul.mubr.f32.gmra.mrb[0].mxu0 %v216
      %v298 = vpop.f32.mrb[0].mxu0
      %v299 = vadd.f32 0.0, %v298
      %v300 = vpop.f32.mrb[0].mxu0
      %301 = vmatprep.mubr.f32.mxu0 0.0
      %302 = vmatmul.mubr.f32.gmra.mrb[0].mxu0 %v219
      %v303 = vpop.f32.mrb[0].mxu0
      %v304 = vadd.f32 0.0, %v303
      %v305 = vpop.f32.mrb[0].mxu0
      %306 = vmatprep.mubr.f32.mxu0 0.0
      %307 = vmatmul.mubr.f32.gmra.mrb[0].mxu0 %v222
      %v308 = vpop.f32.mrb[0].mxu0
      %v309 = vadd.f32 0.0, %v308
      %v310 = vpop.f32.mrb[0].mxu0
      %311 = vmatprep.mubr.f32.mxu0 0.0
      %312 = vmatmul.mubr.f32.gmra.mrb[0].mxu0 %v225
      %v313 = vpop.f32.mrb[0].mxu0
      %v314 = vadd.f32 0.0, %v313
      %v315 = vpop.f32.mrb[0].mxu0
      %316 = vdwg.mxu0
      %v317 = vld [vmem:[%s2] sm:$0xff]
      %v318 = vld [vmem:[%s2 + $0x8] sm:$0xff]
      %v319 = vld [vmem:[%s2 + $0x10] sm:$0xff]
      %v320 = vld [vmem:[%s2 + $0x18] sm:$0xff]
      %v321 = vld [vmem:[%s2 + $0x20] sm:$0xff]
      %v322 = vld [vmem:[%s2 + $0x28] sm:$0xff]
      %v323 = vld [vmem:[%s2 + $0x30] sm:$0xff]
      %v324 = vld [vmem:[%s2 + $0x38] sm:$0xff]
      %325 = vmatprep.subr.mxu0 0.0
      %326 = vmatpush1.msra.mxu0 %v317
      %327 = vmatprep.subr.mxu0 0.0
      %328 = vmatpush1.msra.mxu0 %v318
      %329 = vmatprep.subr.mxu0 0.0
      %330 = vmatpush1.msra.mxu0 %v319
      %331 = vmatprep.subr.mxu0 0.0
      %332 = vmatpush1.msra.mxu0 %v320
      %333 = vmatprep.subr.mxu0 0.0
      %334 = vmatpush1.msra.mxu0 %v321
      %335 = vmatprep.subr.mxu0 0.0
      %336 = vmatpush1.msra.mxu0 %v322
      %337 = vmatprep.subr.mxu0 0.0
      %338 = vmatpush1.msra.mxu0 %v323
      %339 = vmatprep.subr.mxu0 0.0
      %340 = vmatpush1.msra.mxu0 %v324
      %341 = vmatprep.subr.mxu0 0.0
      %342 = vmatpush1.msra.mxu0 0.0
      %343 = vmatprep.subr.mxu0 0.0
      %344 = vmatpush1.msra.mxu0 0.0
      %345 = vmatprep.subr.mxu0 0.0
      %346 = vmatpush1.msra.mxu0 0.0
      %347 = vmatprep.subr.mxu0 0.0
      %348 = vmatpush1.msra.mxu0 0.0
      %349 = vmatprep.subr.mxu0 0.0
      %350 = vmatpush1.msra.mxu0 0.0
      %351 = vmatprep.subr.mxu0 0.0
      %352 = vmatpush1.msra.mxu0 0.0
      %353 = vmatprep.subr.mxu0 0.0
      %354 = vmatpush1.msra.mxu0 0.0
      %355 = vmatprep.subr.mxu0 0.0
      %356 = vmatpush1.msra.mxu0 0.0
      %357 = vmatprep.subr.mxu0 0.0
      %358 = vmatpush1.msra.mxu0 0.0
      %359 = vmatprep.subr.mxu0 0.0
      %360 = vmatpush1.msra.mxu0 0.0
      %361 = vmatprep.subr.mxu0 0.0
      %362 = vmatpush1.msra.mxu0 0.0
      %363 = vmatprep.subr.mxu0 0.0
      %364 = vmatpush1.msra.mxu0 0.0
      %365 = vmatprep.subr.mxu0 0.0
      %366 = vmatpush1.msra.mxu0 0.0
      %367 = vmatprep.subr.mxu0 0.0
      %368 = vmatpush1.msra.mxu0 0.0
      %369 = vmatprep.subr.mxu0 0.0
      %370 = vmatpush1.msra.mxu0 0.0
      %371 = vmatprep.subr.mxu0 0.0
      %372 = vmatpush1.msra.mxu0 0.0
      %373 = vmatprep.subr.mxu0 0.0
      %374 = vmatpush1.msra.mxu0 0.0
      %375 = vmatprep.subr.mxu0 0.0
      %376 = vmatpush1.msra.mxu0 0.0
      %377 = vmatprep.subr.mxu0 0.0
      %378 = vmatpush1.msra.mxu0 0.0
      %379 = vmatprep.subr.mxu0 0.0
      %380 = vmatpush1.msra.mxu0 0.0
      %381 = vmatprep.subr.mxu0 0.0
      %382 = vmatpush1.msra.mxu0 0.0
      %383 = vmatprep.subr.mxu0 0.0
      %384 = vmatpush1.msra.mxu0 0.0
      %385 = vmatprep.subr.mxu0 0.0
      %386 = vmatpush1.msra.mxu0 0.0
      %387 = vmatprep.subr.mxu0 0.0
      %388 = vmatpush1.msra.mxu0 0.0
      %389 = vmatprep.mubr.f32.mxu0 0.0
      %390 = vmatmul.mubr.f32.gmra.mrb[0].mxu0 %v213
      %v391 = vpop.f32.mrb[0].mxu0
      %v392 = vadd.f32 0.0, %v391
      %v393 = vpop.f32.mrb[0].mxu0
      %394 = vmatprep.mubr.f32.mxu0 0.0
      %395 = vmatmul.mubr.f32.gmra.mrb[0].mxu0 %v216
      %v396 = vpop.f32.mrb[0].mxu0
      %v397 = vadd.f32 0.0, %v396
      %v398 = vpop.f32.mrb[0].mxu0
      %399 = vmatprep.mubr.f32.mxu0 0.0
      %400 = vmatmul.mubr.f32.gmra.mrb[0].mxu0 %v219
      %v401 = vpop.f32.mrb[0].mxu0
      %v402 = vadd.f32 0.0, %v401
      %v403 = vpop.f32.mrb[0].mxu0
      %404 = vmatprep.mubr.f32.mxu0 0.0
      %405 = vmatmul.mubr.f32.gmra.mrb[0].mxu0 %v222
      %v406 = vpop.f32.mrb[0].mxu0
      %v407 = vadd.f32 0.0, %v406
      %v408 = vpop.f32.mrb[0].mxu0
      %409 = vmatprep.mubr.f32.mxu0 0.0
      %410 = vmatmul.mubr.f32.gmra.mrb[0].mxu0 %v225
      %v411 = vpop.f32.mrb[0].mxu0
      %v412 = vadd.f32 0.0, %v411
      %v413 = vpop.f32.mrb[0].mxu0
      %414 = vdwg.mxu0
      %v415 = vmul.f32 %v294, %v294
      %v416 = vmul.f32 %v299, %v299
      %v417 = vmul.f32 %v304, %v304
      %v418 = vmul.f32 %v309, %v309
      %v419 = vmul.f32 %v314, %v314
      %v420 = vmul.f32 %v392, %v392
      %v421 = vmul.f32 %v397, %v397
      %v422 = vmul.f32 %v402, %v402
      %v423 = vmul.f32 %v407, %v407
      %v424 = vmul.f32 %v412, %v412
      %v425 = vadd.f32 %v415, %v420
      %v426 = vadd.f32 %v416, %v421
      %v427 = vadd.f32 %v417, %v422
      %v428 = vadd.f32 %v418, %v423
      %v429 = vadd.f32 %v419, %v424
      %v430 = vld [vmem:[%s3] sm:$0xff]
      %v431 = vld [vmem:[%s3 + $0x8] sm:$0xff]
      %v432 = vld [vmem:[%s3 + $0x10] sm:$0xff]
      %v433 = vld [vmem:[%s3 + $0x18] sm:$0xff]
      %v434 = vld [vmem:[%s3 + $0x20] sm:$0x1]
      %vm435 = vcmask 269312
      %v437 = vsel %vm435, %v425, 0
      %v440 = vsel %vm435, %v426, 0
      %v443 = vsel %vm435, %v427, 0
      %v446 = vsel %vm435, %v428, 0
      %v449 = vsel %vm435, %v429, 0
      %vm451 = vcmask 1040384
      %v453 = vsel %vm451, %v434, 0
      %455 = vmatprep.subr.mxu0 0.0
      %456 = vmatpush1.msra.mxu0 %v430
      %457 = vmatprep.subr.mxu0 0.0
      %458 = vmatpush1.msra.mxu0 %v431
      %459 = vmatprep.subr.mxu0 0.0
      %460 = vmatpush1.msra.mxu0 %v432
      %461 = vmatprep.subr.mxu0 0.0
      %462 = vmatpush1.msra.mxu0 %v433
      %463 = vmatprep.subr.mxu0 0.0
      %464 = vmatpush1.msra.mxu0 %v453
      %465 = vmatprep.subr.mxu0 0.0
      %466 = vmatpush1.msra.mxu0 0.0
      %467 = vmatprep.subr.mxu0 0.0
      %468 = vmatpush1.msra.mxu0 0.0
      %469 = vmatprep.subr.mxu0 0.0
      %470 = vmatpush1.msra.mxu0 0.0
      %471 = vmatprep.subr.mxu0 0.0
      %472 = vmatpush1.msra.mxu0 0.0
      %473 = vmatprep.subr.mxu0 0.0
      %474 = vmatpush1.msra.mxu0 0.0
      %475 = vmatprep.subr.mxu0 0.0
      %476 = vmatpush1.msra.mxu0 0.0
      %477 = vmatprep.subr.mxu0 0.0
      %478 = vmatpush1.msra.mxu0 0.0
      %479 = vmatprep.subr.mxu0 0.0
      %480 = vmatpush1.msra.mxu0 0.0
      %481 = vmatprep.subr.mxu0 0.0
      %482 = vmatpush1.msra.mxu0 0.0
      %483 = vmatprep.subr.mxu0 0.0
      %484 = vmatpush1.msra.mxu0 0.0
      %485 = vmatprep.subr.mxu0 0.0
      %486 = vmatpush1.msra.mxu0 0.0
      %487 = vmatprep.subr.mxu0 0.0
      %488 = vmatpush1.msra.mxu0 0.0
      %489 = vmatprep.subr.mxu0 0.0
      %490 = vmatpush1.msra.mxu0 0.0
      %491 = vmatprep.subr.mxu0 0.0
      %492 = vmatpush1.msra.mxu0 0.0
      %493 = vmatprep.subr.mxu0 0.0
      %494 = vmatpush1.msra.mxu0 0.0
      %495 = vmatprep.subr.mxu0 0.0
      %496 = vmatpush1.msra.mxu0 0.0
      %497 = vmatprep.subr.mxu0 0.0
      %498 = vmatpush1.msra.mxu0 0.0
      %499 = vmatprep.subr.mxu0 0.0
      %500 = vmatpush1.msra.mxu0 0.0
      %501 = vmatprep.subr.mxu0 0.0
      %502 = vmatpush1.msra.mxu0 0.0
      %503 = vmatprep.subr.mxu0 0.0
      %504 = vmatpush1.msra.mxu0 0.0
      %505 = vmatprep.subr.mxu0 0.0
      %506 = vmatpush1.msra.mxu0 0.0
      %507 = vmatprep.subr.mxu0 0.0
      %508 = vmatpush1.msra.mxu0 0.0
      %509 = vmatprep.subr.mxu0 0.0
      %510 = vmatpush1.msra.mxu0 0.0
      %511 = vmatprep.subr.mxu0 0.0
      %512 = vmatpush1.msra.mxu0 0.0
      %513 = vmatprep.subr.mxu0 0.0
      %514 = vmatpush1.msra.mxu0 0.0
      %515 = vmatprep.subr.mxu0 0.0
      %516 = vmatpush1.msra.mxu0 0.0
      %517 = vmatprep.subr.mxu0 0.0
      %518 = vmatpush1.msra.mxu0 0.0
      %519 = vmatprep.mubr.f32.mxu0 0.0
      %520 = vmatmul.mubr.f32.gmra.mrb[0].mxu0 %v437
      %v521 = vpop.f32.mrb[0].mxu0
      %v522 = vadd.f32 1e-10, %v521
      %v523 = vpop.f32.mrb[0].mxu0
      %524 = vmatprep.mubr.f32.mxu0 0.0
      %525 = vmatmul.mubr.f32.gmra.mrb[0].mxu0 %v440
      %v526 = vpop.f32.mrb[0].mxu0
      %v527 = vadd.f32 1e-10, %v526
      %v528 = vpop.f32.mrb[0].mxu0
      %529 = vmatprep.mubr.f32.mxu0 0.0
      %530 = vmatmul.mubr.f32.gmra.mrb[0].mxu0 %v443
      %v531 = vpop.f32.mrb[0].mxu0
      %v532 = vadd.f32 1e-10, %v531
      %v533 = vpop.f32.mrb[0].mxu0
      %534 = vmatprep.mubr.f32.mxu0 0.0
      %535 = vmatmul.mubr.f32.gmra.mrb[0].mxu0 %v446
      %v536 = vpop.f32.mrb[0].mxu0
      %v537 = vadd.f32 1e-10, %v536
      %v538 = vpop.f32.mrb[0].mxu0
      %539 = vmatprep.mubr.f32.mxu0 0.0
      %540 = vmatmul.mubr.f32.gmra.mrb[0].mxu0 %v449
      %v541 = vpop.f32.mrb[0].mxu0
      %v542 = vadd.f32 1e-10, %v541
      %v543 = vpop.f32.mrb[0].mxu0
      %544 = vdwg.mxu0
      %v545 = vmax.f32 %v522, 1e-10
      %v546 = vmax.f32 %v527, 1e-10
      %v547 = vmax.f32 %v532, 1e-10
      %v548 = vmax.f32 %v537, 1e-10
      %v549 = vmax.f32 %v542, 1e-10
      %v550 = vlog2.pop %v545
      %v551 = vmul.f32 %v550, 0.6931472
      %v552 = vlog2.pop %v546
      %v553 = vmul.f32 %v552, 0.6931472
      %v554 = vlog2.pop %v547
      %v555 = vmul.f32 %v554, 0.6931472
      %v556 = vlog2.pop %v548
      %v557 = vmul.f32 %v556, 0.6931472
      %v558 = vlog2.pop %v549
      %v559 = vmul.f32 %v558, 0.6931472
      %v560 = vmul.f32 %v551, 4.3429446
      %v561 = vmul.f32 %v553, 4.3429446
      %v562 = vmul.f32 %v555, 4.3429446
      %v563 = vmul.f32 %v557, 4.3429446
      %v564 = vmul.f32 %v559, 4.3429446
      %vm565 = vcmask 130048
      %v566 = vsel %vm565, %v560, -inf
      %567 = vmax.xlane.f32.xlu0 %v566
      %v568 = vpop.xlane.xlu0 %567
      %v569 = vsel %vm565, %v561, -inf
      %570 = vmax.xlane.f32.xlu0 %v569
      %v571 = vpop.xlane.xlu0 %570
      %v572 = vsel %vm565, %v562, -inf
      %573 = vmax.xlane.f32.xlu0 %v572
      %v574 = vpop.xlane.xlu0 %573
      %v575 = vsel %vm565, %v563, -inf
      %576 = vmax.xlane.f32.xlu0 %v575
      %v577 = vpop.xlane.xlu0 %576
      %vm578 = vcmask 122880
      %v579 = vsel %vm578, %v564, -inf
      %580 = vmax.xlane.f32.xlu0 %v579
      %v581 = vpop.xlane.xlu0 %580
      %v582 = vsel %vm451, %v581, -inf
      %v583 = vmax.f32 %v568, %v582
      %v584 = vmax.f32 %v583, %v571
      %v585 = vmax.f32 %v574, %v577
      %v586 = vmax.f32 %v584, %v585
      %v587 = vrot.slane %v586, 4
      %v588 = vmax.f32 %v586, %v587
      %v589 = vrot.slane %v588, 2
      %v590 = vmax.f32 %v588, %v589
      %v591 = vrot.slane %v590, 1
      %v592 = vmax.f32 %v590, %v591
      %v593 = vsub.f32 %v592, 80.0
      %v594 = vmax.f32 %v560, %v593
      %v595 = vmax.f32 %v561, %v593
      %v596 = vmax.f32 %v562, %v593
      %v597 = vmax.f32 %v563, %v593
      %v598 = vmax.f32 %v564, %v593
      %v599 = vsel %vm565, %v594, 0.0
      %600 = vadd.xlane.f32.xlu0 %v599
      %v601 = vpop.xlane.xlu0 %600
      %v602 = vsel %vm565, %v595, 0.0
      %603 = vadd.xlane.f32.xlu0 %v602
      %v604 = vpop.xlane.xlu0 %603
      %v605 = vsel %vm565, %v596, 0.0
      %606 = vadd.xlane.f32.xlu0 %v605
      %v607 = vpop.xlane.xlu0 %606
      %v608 = vsel %vm565, %v597, 0.0
      %609 = vadd.xlane.f32.xlu0 %v608
      %v610 = vpop.xlane.xlu0 %609
      %v611 = vsel %vm578, %v598, 0.0
      %612 = vadd.xlane.f32.xlu0 %v611
      %v613 = vpop.xlane.xlu0 %612
      %v614 = vadd.f32 %v601, %v604
      %v615 = vadd.f32 %v614, %v607
      %v616 = vadd.f32 %v615, %v610
      %v617 = vsel %vm451, %v613, 0.0
      %v618 = vadd.f32 %v616, %v617
      %v619 = vrot.slane %v618, 4
      %v620 = vadd.f32 %v618, %v619
      %v621 = vrot.slane %v620, 2
      %v622 = vadd.f32 %v620, %v621
      %v623 = vrot.slane %v622, 1
      %v624 = vadd.f32 %v622, %v623
      %v625 = vrcp.pop 528.0
      %v626 = vmul.f32 %v624, %v625
      %v627 = vsub.f32 %v594, %v626
      %v628 = vsub.f32 %v595, %v626
      %v629 = vsub.f32 %v596, %v626
      %v630 = vsub.f32 %v597, %v626
      %v631 = vsub.f32 %v598, %v626
      %v632 = vmul.f32 %v627, %v627
      %v633 = vmul.f32 %v628, %v628
      %v634 = vmul.f32 %v629, %v629
      %v635 = vmul.f32 %v630, %v630
      %v636 = vmul.f32 %v631, %v631
      %v637 = vsel %vm565, %v632, 0.0
      %638 = vadd.xlane.f32.xlu0 %v637
      %v639 = vpop.xlane.xlu0 %638
      %v640 = vsel %vm565, %v633, 0.0
      %641 = vadd.xlane.f32.xlu0 %v640
      %v642 = vpop.xlane.xlu0 %641
      %v643 = vsel %vm565, %v634, 0.0
      %644 = vadd.xlane.f32.xlu0 %v643
      %v645 = vpop.xlane.xlu0 %644
      %v646 = vsel %vm565, %v635, 0.0
      %647 = vadd.xlane.f32.xlu0 %v646
      %v648 = vpop.xlane.xlu0 %647
      %v649 = vsel %vm578, %v636, 0.0
      %650 = vadd.xlane.f32.xlu0 %v649
      %v651 = vpop.xlane.xlu0 %650
      %v652 = vadd.f32 %v639, %v642
      %v653 = vadd.f32 %v652, %v645
      %v654 = vadd.f32 %v653, %v648
      %v655 = vsel %vm451, %v651, 0.0
      %v656 = vadd.f32 %v654, %v655
      %v657 = vrot.slane %v656, 4
      %v658 = vadd.f32 %v656, %v657
      %v659 = vrot.slane %v658, 2
      %v660 = vadd.f32 %v658, %v659
      %v661 = vrot.slane %v660, 1
      %v662 = vadd.f32 %v660, %v661
      %v663 = vrcp.pop 527.0
      %v664 = vmul.f32 %v662, %v663
      %v665 = vrsqrt.pop %v664
      %v666 = vmul.f32 %v664, %v665
      %vm667 = vcmp.eq.f32.partialorder %v664, inf
      %v668 = vsel %vm667, %v664, %v666
      %vm669 = vcmp.eq.f32.partialorder %v664, 0.0
      %v670 = vand.u32 %v664, 2147483648
      %v671 = vsel %vm669, %v670, %v668
      %v672 = vadd.f32 %v671, 1e-05
      %v673 = vrcp.pop %v672
      %v674 = vmul.f32 %v627, %v673
      %v675 = vmul.f32 %v628, %v673
      %v676 = vmul.f32 %v629, %v673
      %v677 = vmul.f32 %v630, %v673
      %v678 = vmul.f32 %v631, %v673
      %vm679 = vcmp.eq.f32.partialorder %v674, %v674
      %vm680 = vcmp.eq.f32.partialorder %v675, %v675
      %vm681 = vcmp.eq.f32.partialorder %v676, %v676
      %vm682 = vcmp.eq.f32.partialorder %v677, %v677
      %vm683 = vcmp.eq.f32.partialorder %v678, %v678
      %v684 = vand.u32 2147483647, %v674
      %v685 = vand.u32 2147483647, %v675
      %v686 = vand.u32 2147483647, %v676
      %v687 = vand.u32 2147483647, %v677
      %v688 = vand.u32 2147483647, %v678
      %vm689 = vcmp.lt.f32.partialorder %v684, inf
      %vm690 = vcmp.lt.f32.partialorder %v685, inf
      %vm691 = vcmp.lt.f32.partialorder %v686, inf
      %vm692 = vcmp.lt.f32.partialorder %v687, inf
      %vm693 = vcmp.lt.f32.partialorder %v688, inf
      %vm694 = vmand %vm679, %vm689
      %vm695 = vmand %vm680, %vm690
      %vm696 = vmand %vm681, %vm691
      %vm697 = vmand %vm682, %vm692
      %vm698 = vmand %vm683, %vm693
      %v699 = vsel %vm694, %v674, 0.0
      %v700 = vsel %vm695, %v675, 0.0
      %v701 = vsel %vm696, %v676, 0.0
      %v702 = vsel %vm697, %v677, 0.0
      %v703 = vsel %vm698, %v678, 0.0
      %704 = vst.msk [vmem:[%s197] sm:$0xff] %vm565, %v699
      %705 = vst.msk [vmem:[%s197 + $0x8] sm:$0xff] %vm565, %v700
      %706 = vst.msk [vmem:[%s197 + $0x10] sm:$0xff] %vm565, %v701
      %707 = vst.msk [vmem:[%s197 + $0x18] sm:$0xff] %vm565, %v702
      %708 = vst.msk [vmem:[%s197 + $0x20] sm:$0x1] %vm578, %v703
      %p709 = scmp.lt.s32.totalorder %s15, 1
      %s710 = scalar_select %p709, %s15, 1
      %s711 = smul.addr %s710, 5
      %s712 = smul.addr %s711, 8
      %s713 = scalar_lea.vmem %s4, %s712
      // Predicated region
      $region37: #{forward.5} parent=35 // pred_check
        %p714 = pneg %p122
      $region38: #{forward.5} parent=35 // pred_check_branch
        %716 = sbr.rel (%p714) target = $region40
      $region39: #{forward.5} parent=35 // pred_region
        _
      $region40: #{forward.5} parent=35 // pred_fallthru
        _
    $region36: #{forward.5} parent=5 // pred_fallthru
      _
    %p717 = scmp.le.s32.totalorder 2, %s10
    // Predicated region
    $region41: #{forward.5} parent=5 // pred_check
      %p718 = pneg %p717
    $region42: #{forward.5} parent=5 // pred_check_branch
      %720 = sbr.rel (%p718) target = $region44
    $region43: #{forward.5} parent=5 // pred_region
      %s721 = ssub.s32 %s10, 2
      // Predicated region
      $region45: #{forward.5} parent=43 // pred_check
        %p722 = pneg %p128
      $region46: #{forward.5} parent=43 // pred_check_branch
        %724 = sbr.rel (%p722) target = $region48
      $region47: #{forward.5} parent=43 // pred_region
        %p725 = scmp.lt.s32.totalorder %s16, 1
        %s726 = scalar_select %p725, %s16, 1
        %s727 = smul.addr %s726, 5
        %s728 = smul.addr %s727, 8
        %s729 = scalar_lea.vmem %s4, %s728
      $region48: #{forward.5} parent=43 // pred_fallthru
        _
    $region44: #{forward.5} parent=5 // pred_fallthru
      _
  $region6: #{forward.5} parent=0 // loop_footer
    %s14 = sadd.s32 1, %s10
  $region7: #{forward.5} parent=0 // loop_footer_branch
    %9 = sbr.rel target = $region3
  $region8: #{forward.5} parent=0 // loop_exit
    _

// kernel: forward.6
$region0: #{forward.6}
  #allocation0 [shape = 'u32[]', space=smem, size = 0x4, offset = 0x4, fixed_abs, tag = 'smem constant byte address 0x4 - core index']
  #allocation1 [shape = 'u32[144,128]{1,0:T(1,128)}', space=vmem, size = 0x12000, scoped, tag = 'internal scratch']
  %s0 = inlined_call_operand.vmem [shape: f32[272,9], index: 0, kind: input, shape index: {}]
  %s1 = inlined_call_operand.vmem [shape: f32[9,4], index: 1, kind: input, shape index: {}]
  %s2 = inlined_call_operand.vmem [shape: f32[1,4], index: 2, kind: input, shape index: {}]
  %s3 = inlined_call_operand.vmem [shape: f32[272,4], index: 3, kind: output, shape index: {}]
  %s4 = sld [smem:[#allocation0]]
  $region22: #{forward.6} parent=0
    _
  %s6 = ssub.s32 1, %s4
  %s7 = scalar_select 0, %s6, %s4
  // Predicated region
  $region2: #{forward.6} parent=0 // pred_check
    _
  $region3: #{forward.6} parent=0 // pred_check_branch
    %9 = sbr.rel (0) target = $region5
  $region4: #{forward.6} parent=0 // pred_region
    _
  $region5: #{forward.6} parent=0 // pred_fallthru
    _
  // Predicated region
  $region6: #{forward.6} parent=0 // pred_check
    _
  $region7: #{forward.6} parent=0 // pred_check_branch
    %11 = sbr.rel (0) target = $region9
  $region8: #{forward.6} parent=0 // pred_region
    _
  $region9: #{forward.6} parent=0 // pred_fallthru
    _
  // Predicated region
  $region10: #{forward.6} parent=0 // pred_check
    _
  $region11: #{forward.6} parent=0 // pred_check_branch
    %13 = sbr.rel (0) target = $region13
  $region12: #{forward.6} parent=0 // pred_region
    _
  $region13: #{forward.6} parent=0 // pred_fallthru
    _
  %v14 = vld [vmem:[%s0] sm:$0xff]
  %v15 = vld [vmem:[%s0 + $0x8] sm:$0xff]
  %v16 = vld [vmem:[%s0 + $0x10] sm:$0xff]
  %v17 = vld [vmem:[%s0 + $0x18] sm:$0xff]
  %v18 = vld [vmem:[%s0 + $0x20] sm:$0xff]
  %v19 = vld [vmem:[%s0 + $0x28] sm:$0xff]
  %v20 = vld [vmem:[%s0 + $0x30] sm:$0xff]
  %v21 = vld [vmem:[%s0 + $0x38] sm:$0xff]
  %v22 = vld [vmem:[%s0 + $0x40] sm:$0xff]
  %v23 = vld [vmem:[%s0 + $0x48] sm:$0xff]
  %v24 = vld [vmem:[%s0 + $0x50] sm:$0xff]
  %v25 = vld [vmem:[%s0 + $0x58] sm:$0xff]
  %v26 = vld [vmem:[%s0 + $0x60] sm:$0xff]
  %v27 = vld [vmem:[%s0 + $0x68] sm:$0xff]
  %v28 = vld [vmem:[%s0 + $0x70] sm:$0xff]
  %v29 = vld [vmem:[%s0 + $0x78] sm:$0xff]
  %v30 = vld [vmem:[%s0 + $0x80] sm:$0xff]
  %v31 = vld [vmem:[%s0 + $0x88] sm:$0xff]
  %v32 = vld [vmem:[%s0 + $0x90] sm:$0xff]
  %v33 = vld [vmem:[%s0 + $0x98] sm:$0xff]
  %v34 = vld [vmem:[%s0 + $0xa0] sm:$0xff]
  %v35 = vld [vmem:[%s0 + $0xa8] sm:$0xff]
  %v36 = vld [vmem:[%s0 + $0xb0] sm:$0xff]
  %v37 = vld [vmem:[%s0 + $0xb8] sm:$0xff]
  %v38 = vld [vmem:[%s0 + $0xc0] sm:$0xff]
  %v39 = vld [vmem:[%s0 + $0xc8] sm:$0xff]
  %v40 = vld [vmem:[%s0 + $0xd0] sm:$0xff]
  %v41 = vld [vmem:[%s0 + $0xd8] sm:$0xff]
  %v42 = vld [vmem:[%s0 + $0xe0] sm:$0xff]
  %v43 = vld [vmem:[%s0 + $0xe8] sm:$0xff]
  %v44 = vld [vmem:[%s0 + $0xf0] sm:$0xff]
  %v45 = vld [vmem:[%s0 + $0xf8] sm:$0xff]
  %v46 = vld [vmem:[%s0 + $0x100] sm:$0xff]
  %v47 = vld [vmem:[%s0 + $0x108] sm:$0xff]
  %v48 = vld [vmem:[%s1] sm:$0xff]
  %v49 = vld [vmem:[%s1 + $0x8] sm:$0x1]
  %v50 = vld [vmem:[%s2] sm:$0x1]
  %v52 = vlaneseq
  %v53 = vshrl.u32 %v52, 7
  %v54 = vsub.s32 0, %v53
  %v55 = vrot.slane %v50, %v54
  %vm57 = vcmask 72704
  %v59 = vsel %vm57, %v14, 0
  %v62 = vsel %vm57, %v15, 0
  %v65 = vsel %vm57, %v16, 0
  %v68 = vsel %vm57, %v17, 0
  %v71 = vsel %vm57, %v18, 0
  %v74 = vsel %vm57, %v19, 0
  %v77 = vsel %vm57, %v20, 0
  %v80 = vsel %vm57, %v21, 0
  %v83 = vsel %vm57, %v22, 0
  %v86 = vsel %vm57, %v23, 0
  %v89 = vsel %vm57, %v24, 0
  %v92 = vsel %vm57, %v25, 0
  %v95 = vsel %vm57, %v26, 0
  %v98 = vsel %vm57, %v27, 0
  %v101 = vsel %vm57, %v28, 0
  %v104 = vsel %vm57, %v29, 0
  %v107 = vsel %vm57, %v30, 0
  %v110 = vsel %vm57, %v31, 0
  %v113 = vsel %vm57, %v32, 0
  %v116 = vsel %vm57, %v33, 0
  %v119 = vsel %vm57, %v34, 0
  %v122 = vsel %vm57, %v35, 0
  %v125 = vsel %vm57, %v36, 0
  %v128 = vsel %vm57, %v37, 0
  %v131 = vsel %vm57, %v38, 0
  %v134 = vsel %vm57, %v39, 0
  %v137 = vsel %vm57, %v40, 0
  %v140 = vsel %vm57, %v41, 0
  %v143 = vsel %vm57, %v42, 0
  %v146 = vsel %vm57, %v43, 0
  %v149 = vsel %vm57, %v44, 0
  %v152 = vsel %vm57, %v45, 0
  %v155 = vsel %vm57, %v46, 0
  %v158 = vsel %vm57, %v47, 0
  %vm160 = vcmask 1040384
  %v162 = vsel %vm160, %v49, 0
  %164 = vmatprep.subr.mxu0 0.0
  %165 = vmatpush1.msra.mxu0 %v48
  %166 = vmatprep.subr.mxu0 0.0
  %167 = vmatpush1.msra.mxu0 %v162
  %168 = vmatprep.subr.mxu0 0.0
  %169 = vmatpush1.msra.mxu0 0.0
  %170 = vmatprep.subr.mxu0 0.0
  %171 = vmatpush1.msra.mxu0 0.0
  %172 = vmatprep.subr.mxu0 0.0
  %173 = vmatpush1.msra.mxu0 0.0
  %174 = vmatprep.subr.mxu0 0.0
  %175 = vmatpush1.msra.mxu0 0.0
  %176 = vmatprep.subr.mxu0 0.0
  %177 = vmatpush1.msra.mxu0 0.0
  %178 = vmatprep.subr.mxu0 0.0
  %179 = vmatpush1.msra.mxu0 0.0
  %180 = vmatprep.subr.mxu0 0.0
  %181 = vmatpush1.msra.mxu0 0.0
  %182 = vmatprep.subr.mxu0 0.0
  %183 = vmatpush1.msra.mxu0 0.0
  %184 = vmatprep.subr.mxu0 0.0
  %185 = vmatpush1.msra.mxu0 0.0
  %186 = vmatprep.subr.mxu0 0.0
  %187 = vmatpush1.msra.mxu0 0.0
  %188 = vmatprep.subr.mxu0 0.0
  %189 = vmatpush1.msra.mxu0 0.0
  %190 = vmatprep.subr.mxu0 0.0
  %191 = vmatpush1.msra.mxu0 0.0
  %192 = vmatprep.subr.mxu0 0.0
  %193 = vmatpush1.msra.mxu0 0.0
  %194 = vmatprep.subr.mxu0 0.0
  %195 = vmatpush1.msra.mxu0 0.0
  %196 = vmatprep.subr.mxu0 0.0
  %197 = vmatpush1.msra.mxu0 0.0
  %198 = vmatprep.subr.mxu0 0.0
  %199 = vmatpush1.msra.mxu0 0.0
  %200 = vmatprep.subr.mxu0 0.0
  %201 = vmatpush1.msra.mxu0 0.0
  %202 = vmatprep.subr.mxu0 0.0
  %203 = vmatpush1.msra.mxu0 0.0
  %204 = vmatprep.subr.mxu0 0.0
  %205 = vmatpush1.msra.mxu0 0.0
  %206 = vmatprep.subr.mxu0 0.0
  %207 = vmatpush1.msra.mxu0 0.0
  %208 = vmatprep.subr.mxu0 0.0
  %209 = vmatpush1.msra.mxu0 0.0
  %210 = vmatprep.subr.mxu0 0.0
  %211 = vmatpush1.msra.mxu0 0.0
  %212 = vmatprep.subr.mxu0 0.0
  %213 = vmatpush1.msra.mxu0 0.0
  %214 = vmatprep.subr.mxu0 0.0
  %215 = vmatpush1.msra.mxu0 0.0
  %216 = vmatprep.subr.mxu0 0.0
  %217 = vmatpush1.msra.mxu0 0.0
  %218 = vmatprep.subr.mxu0 0.0
  %219 = vmatpush1.msra.mxu0 0.0
  %220 = vmatprep.subr.mxu0 0.0
  %221 = vmatpush1.msra.mxu0 0.0
  %222 = vmatprep.subr.mxu0 0.0
  %223 = vmatpush1.msra.mxu0 0.0
  %224 = vmatprep.subr.mxu0 0.0
  %225 = vmatpush1.msra.mxu0 0.0
  %226 = vmatprep.subr.mxu0 0.0
  %227 = vmatpush1.msra.mxu0 0.0
  %228 = vmatprep.mubr.f32.mxu0 0.0
  %229 = vmatmul.mubr.f32.gmra.mrb[0].mxu0 %v59
  %v230 = vpop.f32.mrb[0].mxu0
  %v231 = vadd.f32 %v55, %v230
  %v232 = vpop.f32.mrb[0].mxu0
  %233 = vmatprep.mubr.f32.mxu0 0.0
  %234 = vmatmul.mubr.f32.gmra.mrb[0].mxu0 %v62
  %v235 = vpop.f32.mrb[0].mxu0
  %v236 = vadd.f32 %v55, %v235
  %v237 = vpop.f32.mrb[0].mxu0
  %238 = vmatprep.mubr.f32.mxu0 0.0
  %239 = vmatmul.mubr.f32.gmra.mrb[0].mxu0 %v65
  %v240 = vpop.f32.mrb[0].mxu0
  %v241 = vadd.f32 %v55, %v240
  %v242 = vpop.f32.mrb[0].mxu0
  %243 = vmatprep.mubr.f32.mxu0 0.0
  %244 = vmatmul.mubr.f32.gmra.mrb[0].mxu0 %v68
  %v245 = vpop.f32.mrb[0].mxu0
  %v246 = vadd.f32 %v55, %v245
  %v247 = vpop.f32.mrb[0].mxu0
  %248 = vmatprep.mubr.f32.mxu0 0.0
  %249 = vmatmul.mubr.f32.gmra.mrb[0].mxu0 %v71
  %v250 = vpop.f32.mrb[0].mxu0
  %v251 = vadd.f32 %v55, %v250
  %v252 = vpop.f32.mrb[0].mxu0
  %253 = vmatprep.mubr.f32.mxu0 0.0
  %254 = vmatmul.mubr.f32.gmra.mrb[0].mxu0 %v74
  %v255 = vpop.f32.mrb[0].mxu0
  %v256 = vadd.f32 %v55, %v255
  %v257 = vpop.f32.mrb[0].mxu0
  %258 = vmatprep.mubr.f32.mxu0 0.0
  %259 = vmatmul.mubr.f32.gmra.mrb[0].mxu0 %v77
  %v260 = vpop.f32.mrb[0].mxu0
  %v261 = vadd.f32 %v55, %v260
  %v262 = vpop.f32.mrb[0].mxu0
  %263 = vmatprep.mubr.f32.mxu0 0.0
  %264 = vmatmul.mubr.f32.gmra.mrb[0].mxu0 %v80
  %v265 = vpop.f32.mrb[0].mxu0
  %v266 = vadd.f32 %v55, %v265
  %v267 = vpop.f32.mrb[0].mxu0
  %268 = vmatprep.mubr.f32.mxu0 0.0
  %269 = vmatmul.mubr.f32.gmra.mrb[0].mxu0 %v83
  %v270 = vpop.f32.mrb[0].mxu0
  %v271 = vadd.f32 %v55, %v270
  %v272 = vpop.f32.mrb[0].mxu0
  %273 = vmatprep.mubr.f32.mxu0 0.0
  %274 = vmatmul.mubr.f32.gmra.mrb[0].mxu0 %v86
  %v275 = vpop.f32.mrb[0].mxu0
  %v276 = vadd.f32 %v55, %v275
  %v277 = vpop.f32.mrb[0].mxu0
  %278 = vmatprep.mubr.f32.mxu0 0.0
  %279 = vmatmul.mubr.f32.gmra.mrb[0].mxu0 %v89
  %v280 = vpop.f32.mrb[0].mxu0
  %v281 = vadd.f32 %v55, %v280
  %v282 = vpop.f32.mrb[0].mxu0
  %283 = vmatprep.mubr.f32.mxu0 0.0
  %284 = vmatmul.mubr.f32.gmra.mrb[0].mxu0 %v92
  %v285 = vpop.f32.mrb[0].mxu0
  %v286 = vadd.f32 %v55, %v285
  %v287 = vpop.f32.mrb[0].mxu0
  %288 = vmatprep.mubr.f32.mxu0 0.0
  %289 = vmatmul.mubr.f32.gmra.mrb[0].mxu0 %v95
  %v290 = vpop.f32.mrb[0].mxu0
  %v291 = vadd.f32 %v55, %v290
  %v292 = vpop.f32.mrb[0].mxu0
  %293 = vmatprep.mubr.f32.mxu0 0.0
  %294 = vmatmul.mubr.f32.gmra.mrb[0].mxu0 %v98
  %v295 = vpop.f32.mrb[0].mxu0
  %v296 = vadd.f32 %v55, %v295
  %v297 = vpop.f32.mrb[0].mxu0
  %298 = vmatprep.mubr.f32.mxu0 0.0
  %299 = vmatmul.mubr.f32.gmra.mrb[0].mxu0 %v101
  %v300 = vpop.f32.mrb[0].mxu0
  %v301 = vadd.f32 %v55, %v300
  %v302 = vpop.f32.mrb[0].mxu0
  %303 = vmatprep.mubr.f32.mxu0 0.0
  %304 = vmatmul.mubr.f32.gmra.mrb[0].mxu0 %v104
  %v305 = vpop.f32.mrb[0].mxu0
  %v306 = vadd.f32 %v55, %v305
  %v307 = vpop.f32.mrb[0].mxu0
  %308 = vmatprep.mubr.f32.mxu0 0.0
  %309 = vmatmul.mubr.f32.gmra.mrb[0].mxu0 %v107
  %v310 = vpop.f32.mrb[0].mxu0
  %v311 = vadd.f32 %v55, %v310
  %v312 = vpop.f32.mrb[0].mxu0
  %313 = vmatprep.mubr.f32.mxu0 0.0
  %314 = vmatmul.mubr.f32.gmra.mrb[0].mxu0 %v110
  %v315 = vpop.f32.mrb[0].mxu0
  %v316 = vadd.f32 %v55, %v315
  %v317 = vpop.f32.mrb[0].mxu0
  %318 = vmatprep.mubr.f32.mxu0 0.0
  %319 = vmatmul.mubr.f32.gmra.mrb[0].mxu0 %v113
  %v320 = vpop.f32.mrb[0].mxu0
  %v321 = vadd.f32 %v55, %v320
  %v322 = vpop.f32.mrb[0].mxu0
  %323 = vmatprep.mubr.f32.mxu0 0.0
  %324 = vmatmul.mubr.f32.gmra.mrb[0].mxu0 %v116
  %v325 = vpop.f32.mrb[0].mxu0
  %v326 = vadd.f32 %v55, %v325
  %v327 = vpop.f32.mrb[0].mxu0
  %328 = vmatprep.mubr.f32.mxu0 0.0
  %329 = vmatmul.mubr.f32.gmra.mrb[0].mxu0 %v119
  %v330 = vpop.f32.mrb[0].mxu0
  %v331 = vadd.f32 %v55, %v330
  %v332 = vpop.f32.mrb[0].mxu0
  %333 = vmatprep.mubr.f32.mxu0 0.0
  %334 = vmatmul.mubr.f32.gmra.mrb[0].mxu0 %v122
  %v335 = vpop.f32.mrb[0].mxu0
  %v336 = vadd.f32 %v55, %v335
  %v337 = vpop.f32.mrb[0].mxu0
  %338 = vmatprep.mubr.f32.mxu0 0.0
  %339 = vmatmul.mubr.f32.gmra.mrb[0].mxu0 %v125
  %v340 = vpop.f32.mrb[0].mxu0
  %v341 = vadd.f32 %v55, %v340
  %v342 = vpop.f32.mrb[0].mxu0
  %343 = vmatprep.mubr.f32.mxu0 0.0
  %344 = vmatmul.mubr.f32.gmra.mrb[0].mxu0 %v128
  %v345 = vpop.f32.mrb[0].mxu0
  %v346 = vadd.f32 %v55, %v345
  %v347 = vpop.f32.mrb[0].mxu0
  %348 = vmatprep.mubr.f32.mxu0 0.0
  %349 = vmatmul.mubr.f32.gmra.mrb[0].mxu0 %v131
  %v350 = vpop.f32.mrb[0].mxu0
  %v351 = vadd.f32 %v55, %v350
  %v352 = vpop.f32.mrb[0].mxu0
  %353 = vmatprep.mubr.f32.mxu0 0.0
  %354 = vmatmul.mubr.f32.gmra.mrb[0].mxu0 %v134
  %v355 = vpop.f32.mrb[0].mxu0
  %v356 = vadd.f32 %v55, %v355
  %v357 = vpop.f32.mrb[0].mxu0
  %358 = vmatprep.mubr.f32.mxu0 0.0
  %359 = vmatmul.mubr.f32.gmra.mrb[0].mxu0 %v137
  %v360 = vpop.f32.mrb[0].mxu0
  %v361 = vadd.f32 %v55, %v360
  %v362 = vpop.f32.mrb[0].mxu0
  %363 = vmatprep.mubr.f32.mxu0 0.0
  %364 = vmatmul.mubr.f32.gmra.mrb[0].mxu0 %v140
  %v365 = vpop.f32.mrb[0].mxu0
  %v366 = vadd.f32 %v55, %v365
  %v367 = vpop.f32.mrb[0].mxu0
  %368 = vmatprep.mubr.f32.mxu0 0.0
  %369 = vmatmul.mubr.f32.gmra.mrb[0].mxu0 %v143
  %v370 = vpop.f32.mrb[0].mxu0
  %v371 = vadd.f32 %v55, %v370
  %v372 = vpop.f32.mrb[0].mxu0
  %373 = vmatprep.mubr.f32.mxu0 0.0
  %374 = vmatmul.mubr.f32.gmra.mrb[0].mxu0 %v146
  %v375 = vpop.f32.mrb[0].mxu0
  %v376 = vadd.f32 %v55, %v375
  %v377 = vpop.f32.mrb[0].mxu0
  %378 = vmatprep.mubr.f32.mxu0 0.0
  %379 = vmatmul.mubr.f32.gmra.mrb[0].mxu0 %v149
  %v380 = vpop.f32.mrb[0].mxu0
  %v381 = vadd.f32 %v55, %v380
  %v382 = vpop.f32.mrb[0].mxu0
  %383 = vmatprep.mubr.f32.mxu0 0.0
  %384 = vmatmul.mubr.f32.gmra.mrb[0].mxu0 %v152
  %v385 = vpop.f32.mrb[0].mxu0
  %v386 = vadd.f32 %v55, %v385
  %v387 = vpop.f32.mrb[0].mxu0
  %388 = vmatprep.mubr.f32.mxu0 0.0
  %389 = vmatmul.mubr.f32.gmra.mrb[0].mxu0 %v155
  %v390 = vpop.f32.mrb[0].mxu0
  %v391 = vadd.f32 %v55, %v390
  %v392 = vpop.f32.mrb[0].mxu0
  %393 = vmatprep.mubr.f32.mxu0 0.0
  %394 = vmatmul.mubr.f32.gmra.mrb[0].mxu0 %v158
  %v395 = vpop.f32.mrb[0].mxu0
  %v396 = vadd.f32 %v55, %v395
  %v397 = vpop.f32.mrb[0].mxu0
  %398 = vdwg.mxu0
  %v399 = vmul.f32 %v231, 0.5
  %v400 = vmul.f32 %v236, 0.5
  %v401 = vmul.f32 %v241, 0.5
  %v402 = vmul.f32 %v246, 0.5
  %v403 = vmul.f32 %v251, 0.5
  %v404 = vmul.f32 %v256, 0.5
  %v405 = vmul.f32 %v261, 0.5
  %v406 = vmul.f32 %v266, 0.5
  %v407 = vmul.f32 %v271, 0.5
  %v408 = vmul.f32 %v276, 0.5
  %v409 = vmul.f32 %v281, 0.5
  %v410 = vmul.f32 %v286, 0.5
  %v411 = vmul.f32 %v291, 0.5
  %v412 = vmul.f32 %v296, 0.5
  %v413 = vmul.f32 %v301, 0.5
  %v414 = vmul.f32 %v306, 0.5
  %v415 = vmul.f32 %v311, 0.5
  %v416 = vmul.f32 %v316, 0.5
  %v417 = vmul.f32 %v321, 0.5
  %v418 = vmul.f32 %v326, 0.5
  %v419 = vmul.f32 %v331, 0.5
  %v420 = vmul.f32 %v336, 0.5
  %v421 = vmul.f32 %v341, 0.5
  %v422 = vmul.f32 %v346, 0.5
  %v423 = vmul.f32 %v351, 0.5
  %v424 = vmul.f32 %v356, 0.5
  %v425 = vmul.f32 %v361, 0.5
  %v426 = vmul.f32 %v366, 0.5
  %v427 = vmul.f32 %v371, 0.5
  %v428 = vmul.f32 %v376, 0.5
  %v429 = vmul.f32 %v381, 0.5
  %v430 = vmul.f32 %v386, 0.5
  %v431 = vmul.f32 %v391, 0.5
  %v432 = vmul.f32 %v396, 0.5
  %v433 = vmul.f32 %v231, 0.70710677
  %v434 = vmul.f32 %v236, 0.70710677
  %v435 = vmul.f32 %v241, 0.70710677
  %v436 = vmul.f32 %v246, 0.70710677
  %v437 = vmul.f32 %v251, 0.70710677
  %v438 = vmul.f32 %v256, 0.70710677
  %v439 = vmul.f32 %v261, 0.70710677
  %v440 = vmul.f32 %v266, 0.70710677
  %v441 = vmul.f32 %v271, 0.70710677
  %v442 = vmul.f32 %v276, 0.70710677
  %v443 = vmul.f32 %v281, 0.70710677
  %v444 = vmul.f32 %v286, 0.70710677
  %v445 = vmul.f32 %v291, 0.70710677
  %v446 = vmul.f32 %v296, 0.70710677
  %v447 = vmul.f32 %v301, 0.70710677
  %v448 = vmul.f32 %v306, 0.70710677
  %v449 = vmul.f32 %v311, 0.70710677
  %v450 = vmul.f32 %v316, 0.70710677
  %v451 = vmul.f32 %v321, 0.70710677
  %v452 = vmul.f32 %v326, 0.70710677
  %v453 = vmul.f32 %v331, 0.70710677
  %v454 = vmul.f32 %v336, 0.70710677
  %v455 = vmul.f32 %v341, 0.70710677
  %v456 = vmul.f32 %v346, 0.70710677
  %v457 = vmul.f32 %v351, 0.70710677
  %v458 = vmul.f32 %v356, 0.70710677
  %v459 = vmul.f32 %v361, 0.70710677
  %v460 = vmul.f32 %v366, 0.70710677
  %v461 = vmul.f32 %v371, 0.70710677
  %v462 = vmul.f32 %v376, 0.70710677
  %v463 = vmul.f32 %v381, 0.70710677
  %v464 = vmul.f32 %v386, 0.70710677
  %v465 = vmul.f32 %v391, 0.70710677
  %v466 = vmul.f32 %v396, 0.70710677
  %v467 = vand.u32 2147483647, %v433
  %v468 = vand.u32 2147483647, %v434
  %v469 = vand.u32 2147483647, %v435
  %v470 = vand.u32 2147483647, %v436
  %v471 = vand.u32 2147483647, %v437
  %v472 = vand.u32 2147483647, %v438
  %v473 = vand.u32 2147483647, %v439
  %v474 = vand.u32 2147483647, %v440
  %v475 = vand.u32 2147483647, %v441
  %v476 = vand.u32 2147483647, %v442
  %v477 = vand.u32 2147483647, %v443
  %v478 = vand.u32 2147483647, %v444
  %v479 = vand.u32 2147483647, %v445
  %v480 = vand.u32 2147483647, %v446
  %v481 = vand.u32 2147483647, %v447
  %v482 = vand.u32 2147483647, %v448
  %v483 = vand.u32 2147483647, %v449
  %v484 = vand.u32 2147483647, %v450
  %v485 = vand.u32 2147483647, %v451
  %v486 = vand.u32 2147483647, %v452
  %v487 = vand.u32 2147483647, %v453
  %v488 = vand.u32 2147483647, %v454
  %v489 = vand.u32 2147483647, %v455
  %v490 = vand.u32 2147483647, %v456
  %v491 = vand.u32 2147483647, %v457
  %v492 = vand.u32 2147483647, %v458
  %v493 = vand.u32 2147483647, %v459
  %v494 = vand.u32 2147483647, %v460
  %v495 = vand.u32 2147483647, %v461
  %v496 = vand.u32 2147483647, %v462
  %v497 = vand.u32 2147483647, %v463
  %v498 = vand.u32 2147483647, %v464
  %v499 = vand.u32 2147483647, %v465
  %v500 = vand.u32 2147483647, %v466
  %v501 = vmul.f32 %v467, 0.3275911
  %v502 = vmul.f32 %v468, 0.3275911
  %v503 = vmul.f32 %v469, 0.3275911
  %v504 = vmul.f32 %v470, 0.3275911
  %v505 = vmul.f32 %v471, 0.3275911
  %v506 = vmul.f32 %v472, 0.3275911
  %v507 = vmul.f32 %v473, 0.3275911
  %v508 = vmul.f32 %v474, 0.3275911
  %v509 = vmul.f32 %v475, 0.3275911
  %v510 = vmul.f32 %v476, 0.3275911
  %v511 = vmul.f32 %v477, 0.3275911
  %v512 = vmul.f32 %v478, 0.3275911
  %v513 = vmul.f32 %v479, 0.3275911
  %v514 = vmul.f32 %v480, 0.3275911
  %v515 = vmul.f32 %v481, 0.3275911
  %v516 = vmul.f32 %v482, 0.3275911
  %v517 = vmul.f32 %v483, 0.3275911
  %v518 = vmul.f32 %v484, 0.3275911
  %v519 = vmul.f32 %v485, 0.3275911
  %v520 = vmul.f32 %v486, 0.3275911
  %v521 = vmul.f32 %v487, 0.3275911
  %v522 = vmul.f32 %v488, 0.3275911
  %v523 = vmul.f32 %v489, 0.3275911
  %v524 = vmul.f32 %v490, 0.3275911
  %v525 = vmul.f32 %v491, 0.3275911
  %v526 = vmul.f32 %v492, 0.3275911
  %v527 = vmul.f32 %v493, 0.3275911
  %v528 = vmul.f32 %v494, 0.3275911
  %v529 = vmul.f32 %v495, 0.3275911
  %v530 = vmul.f32 %v496, 0.3275911
  %v531 = vmul.f32 %v497, 0.3275911
  %v532 = vmul.f32 %v498, 0.3275911
  %v533 = vmul.f32 %v499, 0.3275911
  %v534 = vmul.f32 %v500, 0.3275911
  %v535 = vadd.f32 %v501, 1.0
  %v536 = vadd.f32 %v502, 1.0
  %v537 = vadd.f32 %v503, 1.0
  %v538 = vadd.f32 %v504, 1.0
  %v539 = vadd.f32 %v505, 1.0
  %v540 = vadd.f32 %v506, 1.0
  %v541 = vadd.f32 %v507, 1.0
  %v542 = vadd.f32 %v508, 1.0
  %v543 = vadd.f32 %v509, 1.0
  %v544 = vadd.f32 %v510, 1.0
  %v545 = vadd.f32 %v511, 1.0
  %v546 = vadd.f32 %v512, 1.0
  %v547 = vadd.f32 %v513, 1.0
  %v548 = vadd.f32 %v514, 1.0
  %v549 = vadd.f32 %v515, 1.0
  %v550 = vadd.f32 %v516, 1.0
  %v551 = vadd.f32 %v517, 1.0
  %v552 = vadd.f32 %v518, 1.0
  %v553 = vadd.f32 %v519, 1.0
  %v554 = vadd.f32 %v520, 1.0
  %v555 = vadd.f32 %v521, 1.0
  %v556 = vadd.f32 %v522, 1.0
  %v557 = vadd.f32 %v523, 1.0
  %v558 = vadd.f32 %v524, 1.0
  %v559 = vadd.f32 %v525, 1.0
  %v560 = vadd.f32 %v526, 1.0
  %v561 = vadd.f32 %v527, 1.0
  %v562 = vadd.f32 %v528, 1.0
  %v563 = vadd.f32 %v529, 1.0
  %v564 = vadd.f32 %v530, 1.0
  %v565 = vadd.f32 %v531, 1.0
  %v566 = vadd.f32 %v532, 1.0
  %v567 = vadd.f32 %v533, 1.0
  %v568 = vadd.f32 %v534, 1.0
  %v569 = vrcp.pop %v535
  %v570 = vmul.f32 1.0, %v569
  %v571 = vrcp.pop %v536
  %v572 = vmul.f32 1.0, %v571
  %v573 = vrcp.pop %v537
  %v574 = vmul.f32 1.0, %v573
  %v575 = vrcp.pop %v538
  %v576 = vmul.f32 1.0, %v575
  %v577 = vrcp.pop %v539
  %v578 = vmul.f32 1.0, %v577
  %v579 = vrcp.pop %v540
  %v580 = vmul.f32 1.0, %v579
  %v581 = vrcp.pop %v541
  %v582 = vmul.f32 1.0, %v581
  %v583 = vrcp.pop %v542
  %v584 = vmul.f32 1.0, %v583
  %v585 = vrcp.pop %v543
  %v586 = vmul.f32 1.0, %v585
  %v587 = vrcp.pop %v544
  %v588 = vmul.f32 1.0, %v587
  %v589 = vrcp.pop %v545
  %v590 = vmul.f32 1.0, %v589
  %v591 = vrcp.pop %v546
  %v592 = vmul.f32 1.0, %v591
  %v593 = vrcp.pop %v547
  %v594 = vmul.f32 1.0, %v593
  %v595 = vrcp.pop %v548
  %v596 = vmul.f32 1.0, %v595
  %v597 = vrcp.pop %v549
  %v598 = vmul.f32 1.0, %v597
  %v599 = vrcp.pop %v550
  %v600 = vmul.f32 1.0, %v599
  %v601 = vrcp.pop %v551
  %v602 = vmul.f32 1.0, %v601
  %v603 = vrcp.pop %v552
  %v604 = vmul.f32 1.0, %v603
  %v605 = vrcp.pop %v553
  %v606 = vmul.f32 1.0, %v605
  %v607 = vrcp.pop %v554
  %v608 = vmul.f32 1.0, %v607
  %v609 = vrcp.pop %v555
  %v610 = vmul.f32 1.0, %v609
  %v611 = vrcp.pop %v556
  %v612 = vmul.f32 1.0, %v611
  %v613 = vrcp.pop %v557
  %v614 = vmul.f32 1.0, %v613
  %v615 = vrcp.pop %v558
  %v616 = vmul.f32 1.0, %v615
  %v617 = vrcp.pop %v559
  %v618 = vmul.f32 1.0, %v617
  %v619 = vrcp.pop %v560
  %v620 = vmul.f32 1.0, %v619
  %v621 = vrcp.pop %v561
  %v622 = vmul.f32 1.0, %v621
  %v623 = vrcp.pop %v562
  %v624 = vmul.f32 1.0, %v623
  %v625 = vrcp.pop %v563
  %v626 = vmul.f32 1.0, %v625
  %v627 = vrcp.pop %v564
  %v628 = vmul.f32 1.0, %v627
  %v629 = vrcp.pop %v565
  %v630 = vmul.f32 1.0, %v629
  %v631 = vrcp.pop %v566
  %v632 = vmul.f32 1.0, %v631
  %v633 = vrcp.pop %v567
  %v634 = vmul.f32 1.0, %v633
  %v635 = vrcp.pop %v568
  %v636 = vmul.f32 1.0, %v635
  %v637 = vmul.f32 %v570, 1.0614054
  %v638 = vmul.f32 %v572, 1.0614054
  %v639 = vmul.f32 %v574, 1.0614054
  %v640 = vmul.f32 %v576, 1.0614054
  %v641 = vmul.f32 %v578, 1.0614054
  %v642 = vmul.f32 %v580, 1.0614054
  %v643 = vmul.f32 %v582, 1.0614054
  %v644 = vmul.f32 %v584, 1.0614054
  %v645 = vmul.f32 %v586, 1.0614054
  %v646 = vmul.f32 %v588, 1.0614054
  %v647 = vmul.f32 %v590, 1.0614054
  %v648 = vmul.f32 %v592, 1.0614054
  %v649 = vmul.f32 %v594, 1.0614054
  %v650 = vmul.f32 %v596, 1.0614054
  %v651 = vmul.f32 %v598, 1.0614054
  %v652 = vmul.f32 %v600, 1.0614054
  %v653 = vmul.f32 %v602, 1.0614054
  %v654 = vmul.f32 %v604, 1.0614054
  %v655 = vmul.f32 %v606, 1.0614054
  %v656 = vmul.f32 %v608, 1.0614054
  %v657 = vmul.f32 %v610, 1.0614054
  %v658 = vmul.f32 %v612, 1.0614054
  %v659 = vmul.f32 %v614, 1.0614054
  %v660 = vmul.f32 %v616, 1.0614054
  %v661 = vmul.f32 %v618, 1.0614054
  %v662 = vmul.f32 %v620, 1.0614054
  %v663 = vmul.f32 %v622, 1.0614054
  %v664 = vmul.f32 %v624, 1.0614054
  %v665 = vmul.f32 %v626, 1.0614054
  %v666 = vmul.f32 %v628, 1.0614054
  %v667 = vmul.f32 %v630, 1.0614054
  %v668 = vmul.f32 %v632, 1.0614054
  %v669 = vmul.f32 %v634, 1.0614054
  %v670 = vmul.f32 %v636, 1.0614054
  %v671 = vadd.f32 %v637, -1.4531521
  %v672 = vadd.f32 %v638, -1.4531521
  %v673 = vadd.f32 %v639, -1.4531521
  %v674 = vadd.f32 %v640, -1.4531521
  %v675 = vadd.f32 %v641, -1.4531521
  %v676 = vadd.f32 %v642, -1.4531521
  %v677 = vadd.f32 %v643, -1.4531521
  %v678 = vadd.f32 %v644, -1.4531521
  %v679 = vadd.f32 %v645, -1.4531521
  %v680 = vadd.f32 %v646, -1.4531521
  %v681 = vadd.f32 %v647, -1.4531521
  %v682 = vadd.f32 %v648, -1.4531521
  %v683 = vadd.f32 %v649, -1.4531521
  %v684 = vadd.f32 %v650, -1.4531521
  %v685 = vadd.f32 %v651, -1.4531521
  %v686 = vadd.f32 %v652, -1.4531521
  %v687 = vadd.f32 %v653, -1.4531521
  %v688 = vadd.f32 %v654, -1.4531521
  %v689 = vadd.f32 %v655, -1.4531521
  %v690 = vadd.f32 %v656, -1.4531521
  %v691 = vadd.f32 %v657, -1.4531521
  %v692 = vadd.f32 %v658, -1.4531521
  %v693 = vadd.f32 %v659, -1.4531521
  %v694 = vadd.f32 %v660, -1.4531521
  %v695 = vadd.f32 %v661, -1.4531521
  %v696 = vadd.f32 %v662, -1.4531521
  %v697 = vadd.f32 %v663, -1.4531521
  %v698 = vadd.f32 %v664, -1.4531521
  %v699 = vadd.f32 %v665, -1.4531521
  %v700 = vadd.f32 %v666, -1.4531521
  %v701 = vadd.f32 %v667, -1.4531521
  %v702 = vadd.f32 %v668, -1.4531521
  %v703 = vadd.f32 %v669, -1.4531521
  %v704 = vadd.f32 %v670, -1.4531521
  %v705 = vmul.f32 %v671, %v570
  %v706 = vmul.f32 %v672, %v572
  %v707 = vmul.f32 %v673, %v574
  %v708 = vmul.f32 %v674, %v576
  %v709 = vmul.f32 %v675, %v578
  %v710 = vmul.f32 %v676, %v580
  %v711 = vmul.f32 %v677, %v582
  %v712 = vmul.f32 %v678, %v584
  %v713 = vmul.f32 %v679, %v586
  %v714 = vmul.f32 %v680, %v588
  %v715 = vmul.f32 %v681, %v590
  %v716 = vmul.f32 %v682, %v592
  %v717 = vmul.f32 %v683, %v594
  %v718 = vmul.f32 %v684, %v596
  %v719 = vmul.f32 %v685, %v598
  %v720 = vmul.f32 %v686, %v600
  %v721 = vmul.f32 %v687, %v602
  %v722 = vmul.f32 %v688, %v604
  %v723 = vmul.f32 %v689, %v606
  %v724 = vmul.f32 %v690, %v608
  %v725 = vmul.f32 %v691, %v610
  %v726 = vmul.f32 %v692, %v612
  %v727 = vmul.f32 %v693, %v614
  %v728 = vmul.f32 %v694, %v616
  %v729 = vmul.f32 %v695, %v618
  %v730 = vmul.f32 %v696, %v620
  %v731 = vmul.f32 %v697, %v622
  %v732 = vmul.f32 %v698, %v624
  %v733 = vmul.f32 %v699, %v626
  %v734 = vmul.f32 %v700, %v628
  %v735 = vmul.f32 %v701, %v630
  %v736 = vmul.f32 %v702, %v632
  %v737 = vmul.f32 %v703, %v634
  %v738 = vmul.f32 %v704, %v636
  %v739 = vadd.f32 %v705, 1.4214138
  %v740 = vadd.f32 %v706, 1.4214138
  %v741 = vadd.f32 %v707, 1.4214138
  %v742 = vadd.f32 %v708, 1.4214138
  %v743 = vadd.f32 %v709, 1.4214138
  %v744 = vadd.f32 %v710, 1.4214138
  %v745 = vadd.f32 %v711, 1.4214138
  %v746 = vadd.f32 %v712, 1.4214138
  %v747 = vadd.f32 %v713, 1.4214138
  %v748 = vadd.f32 %v714, 1.4214138
  %v749 = vadd.f32 %v715, 1.4214138
  %v750 = vadd.f32 %v716, 1.4214138
  %v751 = vadd.f32 %v717, 1.4214138
  %v752 = vadd.f32 %v718, 1.4214138
  %v753 = vadd.f32 %v719, 1.4214138
  %v754 = vadd.f32 %v720, 1.4214138
  %v755 = vadd.f32 %v721, 1.4214138
  %v756 = vadd.f32 %v722, 1.4214138
  %v757 = vadd.f32 %v723, 1.4214138
  %v758 = vadd.f32 %v724, 1.4214138
  %v759 = vadd.f32 %v725, 1.4214138
  %v760 = vadd.f32 %v726, 1.4214138
  %v761 = vadd.f32 %v727, 1.4214138
  %v762 = vadd.f32 %v728, 1.4214138
  %v763 = vadd.f32 %v729, 1.4214138
  %v764 = vadd.f32 %v730, 1.4214138
  %v765 = vadd.f32 %v731, 1.4214138
  %v766 = vadd.f32 %v732, 1.4214138
  %v767 = vadd.f32 %v733, 1.4214138
  %v768 = vadd.f32 %v734, 1.4214138
  %v769 = vadd.f32 %v735, 1.4214138
  %v770 = vadd.f32 %v736, 1.4214138
  %v771 = vadd.f32 %v737, 1.4214138
  %v772 = vadd.f32 %v738, 1.4214138
  %v773 = vmul.f32 %v739, %v570
  %v774 = vmul.f32 %v740, %v572
  %v775 = vmul.f32 %v741, %v574
  %v776 = vmul.f32 %v742, %v576
  %v777 = vmul.f32 %v743, %v578
  %v778 = vmul.f32 %v744, %v580
  %v779 = vmul.f32 %v745, %v582
  %v780 = vmul.f32 %v746, %v584
  %v781 = vmul.f32 %v747, %v586
  %v782 = vmul.f32 %v748, %v588
  %v783 = vmul.f32 %v749, %v590
  %v784 = vmul.f32 %v750, %v592
  %v785 = vmul.f32 %v751, %v594
  %v786 = vmul.f32 %v752, %v596
  %v787 = vmul.f32 %v753, %v598
  %v788 = vmul.f32 %v754, %v600
  %v789 = vmul.f32 %v755, %v602
  %v790 = vmul.f32 %v756, %v604
  %v791 = vmul.f32 %v757, %v606
  %v792 = vmul.f32 %v758, %v608
  %v793 = vmul.f32 %v759, %v610
  %v794 = vmul.f32 %v760, %v612
  %v795 = vmul.f32 %v761, %v614
  %v796 = vmul.f32 %v762, %v616
  %v797 = vmul.f32 %v763, %v618
  %v798 = vmul.f32 %v764, %v620
  %v799 = vmul.f32 %v765, %v622
  %v800 = vmul.f32 %v766, %v624
  %v801 = vmul.f32 %v767, %v626
  %v802 = vmul.f32 %v768, %v628
  %v803 = vmul.f32 %v769, %v630
  %v804 = vmul.f32 %v770, %v632
  %v805 = vmul.f32 %v771, %v634
  %v806 = vmul.f32 %v772, %v636
  %v807 = vadd.f32 %v773, -0.28449672
  %v808 = vadd.f32 %v774, -0.28449672
  %v809 = vadd.f32 %v775, -0.28449672
  %v810 = vadd.f32 %v776, -0.28449672
  %v811 = vadd.f32 %v777, -0.28449672
  %v812 = vadd.f32 %v778, -0.28449672
  %v813 = vadd.f32 %v779, -0.28449672
  %v814 = vadd.f32 %v780, -0.28449672
  %v815 = vadd.f32 %v781, -0.28449672
  %v816 = vadd.f32 %v782, -0.28449672
  %v817 = vadd.f32 %v783, -0.28449672
  %v818 = vadd.f32 %v784, -0.28449672
  %v819 = vadd.f32 %v785, -0.28449672
  %v820 = vadd.f32 %v786, -0.28449672
  %v821 = vadd.f32 %v787, -0.28449672
  %v822 = vadd.f32 %v788, -0.28449672
  %v823 = vadd.f32 %v789, -0.28449672
  %v824 = vadd.f32 %v790, -0.28449672
  %v825 = vadd.f32 %v791, -0.28449672
  %v826 = vadd.f32 %v792, -0.28449672
  %v827 = vadd.f32 %v793, -0.28449672
  %v828 = vadd.f32 %v794, -0.28449672
  %v829 = vadd.f32 %v795, -0.28449672
  %v830 = vadd.f32 %v796, -0.28449672
  %v831 = vadd.f32 %v797, -0.28449672
  %v832 = vadd.f32 %v798, -0.28449672
  %v833 = vadd.f32 %v799, -0.28449672
  %v834 = vadd.f32 %v800, -0.28449672
  %v835 = vadd.f32 %v801, -0.28449672
  %v836 = vadd.f32 %v802, -0.28449672
  %v837 = vadd.f32 %v803, -0.28449672
  %v838 = vadd.f32 %v804, -0.28449672
  %v839 = vadd.f32 %v805, -0.28449672
  %v840 = vadd.f32 %v806, -0.28449672
  %v841 = vmul.f32 %v807, %v570
  %v842 = vmul.f32 %v808, %v572
  %v843 = vmul.f32 %v809, %v574
  %v844 = vmul.f32 %v810, %v576
  %v845 = vmul.f32 %v811, %v578
  %v846 = vmul.f32 %v812, %v580
  %v847 = vmul.f32 %v813, %v582
  %v848 = vmul.f32 %v814, %v584
  %v849 = vmul.f32 %v815, %v586
  %v850 = vmul.f32 %v816, %v588
  %v851 = vmul.f32 %v817, %v590
  %v852 = vmul.f32 %v818, %v592
  %v853 = vmul.f32 %v819, %v594
  %v854 = vmul.f32 %v820, %v596
  %v855 = vmul.f32 %v821, %v598
  %v856 = vmul.f32 %v822, %v600
  %v857 = vmul.f32 %v823, %v602
  %v858 = vmul.f32 %v824, %v604
  %v859 = vmul.f32 %v825, %v606
  %v860 = vmul.f32 %v826, %v608
  %v861 = vmul.f32 %v827, %v610
  %v862 = vmul.f32 %v828, %v612
  %v863 = vmul.f32 %v829, %v614
  %v864 = vmul.f32 %v830, %v616
  %v865 = vmul.f32 %v831, %v618
  %v866 = vmul.f32 %v832, %v620
  %v867 = vmul.f32 %v833, %v622
  %v868 = vmul.f32 %v834, %v624
  %v869 = vmul.f32 %v835, %v626
  %v870 = vmul.f32 %v836, %v628
  %v871 = vmul.f32 %v837, %v630
  %v872 = vmul.f32 %v838, %v632
  %v873 = vmul.f32 %v839, %v634
  %v874 = vmul.f32 %v840, %v636
  %v875 = vadd.f32 %v841, 0.2548296
  %v876 = vadd.f32 %v842, 0.2548296
  %v877 = vadd.f32 %v843, 0.2548296
  %v878 = vadd.f32 %v844, 0.2548296
  %v879 = vadd.f32 %v845, 0.2548296
  %v880 = vadd.f32 %v846, 0.2548296
  %v881 = vadd.f32 %v847, 0.2548296
  %v882 = vadd.f32 %v848, 0.2548296
  %v883 = vadd.f32 %v849, 0.2548296
  %v884 = vadd.f32 %v850, 0.2548296
  %v885 = vadd.f32 %v851, 0.2548296
  %v886 = vadd.f32 %v852, 0.2548296
  %v887 = vadd.f32 %v853, 0.2548296
  %v888 = vadd.f32 %v854, 0.2548296
  %v889 = vadd.f32 %v855, 0.2548296
  %v890 = vadd.f32 %v856, 0.2548296
  %v891 = vadd.f32 %v857, 0.2548296
  %v892 = vadd.f32 %v858, 0.2548296
  %v893 = vadd.f32 %v859, 0.2548296
  %v894 = vadd.f32 %v860, 0.2548296
  %v895 = vadd.f32 %v861, 0.2548296
  %v896 = vadd.f32 %v862, 0.2548296
  %v897 = vadd.f32 %v863, 0.2548296
  %v898 = vadd.f32 %v864, 0.2548296
  %v899 = vadd.f32 %v865, 0.2548296
  %v900 = vadd.f32 %v866, 0.2548296
  %v901 = vadd.f32 %v867, 0.2548296
  %v902 = vadd.f32 %v868, 0.2548296
  %v903 = vadd.f32 %v869, 0.2548296
  %v904 = vadd.f32 %v870, 0.2548296
  %v905 = vadd.f32 %v871, 0.2548296
  %v906 = vadd.f32 %v872, 0.2548296
  %v907 = vadd.f32 %v873, 0.2548296
  %v908 = vadd.f32 %v874, 0.2548296
  %v909 = vmul.f32 %v875, %v570
  %v910 = vmul.f32 %v876, %v572
  %v911 = vmul.f32 %v877, %v574
  %v912 = vmul.f32 %v878, %v576
  %v913 = vmul.f32 %v879, %v578
  %v914 = vmul.f32 %v880, %v580
  %v915 = vmul.f32 %v881, %v582
  %v916 = vmul.f32 %v882, %v584
  %v917 = vmul.f32 %v883, %v586
  %v918 = vmul.f32 %v884, %v588
  %v919 = vmul.f32 %v885, %v590
  %v920 = vmul.f32 %v886, %v592
  %v921 = vmul.f32 %v887, %v594
  %v922 = vmul.f32 %v888, %v596
  %v923 = vmul.f32 %v889, %v598
  %v924 = vmul.f32 %v890, %v600
  %v925 = vmul.f32 %v891, %v602
  %v926 = vmul.f32 %v892, %v604
  %v927 = vmul.f32 %v893, %v606
  %v928 = vmul.f32 %v894, %v608
  %v929 = vmul.f32 %v895, %v610
  %v930 = vmul.f32 %v896, %v612
  %v931 = vmul.f32 %v897, %v614
  %v932 = vmul.f32 %v898, %v616
  %v933 = vmul.f32 %v899, %v618
  %v934 = vmul.f32 %v900, %v620
  %v935 = vmul.f32 %v901, %v622
  %v936 = vmul.f32 %v902, %v624
  %v937 = vmul.f32 %v903, %v626
  %v938 = vmul.f32 %v904, %v628
  %v939 = vmul.f32 %v905, %v630
  %v940 = vmul.f32 %v906, %v632
  %v941 = vmul.f32 %v907, %v634
  %v942 = vmul.f32 %v908, %v636
  %v943 = vsub.f32 0.0, %v467
  %v944 = vsub.f32 0.0, %v468
  %v945 = vsub.f32 0.0, %v469
  %v946 = vsub.f32 0.0, %v470
  %v947 = vsub.f32 0.0, %v471
  %v948 = vsub.f32 0.0, %v472
  %v949 = vsub.f32 0.0, %v473
  %v950 = vsub.f32 0.0, %v474
  %v951 = vsub.f32 0.0, %v475
  %v952 = vsub.f32 0.0, %v476
  %v953 = vsub.f32 0.0, %v477
  %v954 = vsub.f32 0.0, %v478
  %v955 = vsub.f32 0.0, %v479
  %v956 = vsub.f32 0.0, %v480
  %v957 = vsub.f32 0.0, %v481
  %v958 = vsub.f32 0.0, %v482
  %v959 = vsub.f32 0.0, %v483
  %v960 = vsub.f32 0.0, %v484
  %v961 = vsub.f32 0.0, %v485
  %v962 = vsub.f32 0.0, %v486
  %v963 = vsub.f32 0.0, %v487
  %v964 = vsub.f32 0.0, %v488
  %v965 = vsub.f32 0.0, %v489
  %v966 = vsub.f32 0.0, %v490
  %v967 = vsub.f32 0.0, %v491
  %v968 = vsub.f32 0.0, %v492
  %v969 = vsub.f32 0.0, %v493
  %v970 = vsub.f32 0.0, %v494
  %v971 = vsub.f32 0.0, %v495
  %v972 = vsub.f32 0.0, %v496
  %v973 = vsub.f32 0.0, %v497
  %v974 = vsub.f32 0.0, %v498
  %v975 = vsub.f32 0.0, %v499
  %v976 = vsub.f32 0.0, %v500
  %v977 = vmul.f32 %v943, %v467
  %v978 = vmul.f32 %v944, %v468
  %v979 = vmul.f32 %v945, %v469
  %v980 = vmul.f32 %v946, %v470
  %v981 = vmul.f32 %v947, %v471
  %v982 = vmul.f32 %v948, %v472
  %v983 = vmul.f32 %v949, %v473
  %v984 = vmul.f32 %v950, %v474
  %v985 = vmul.f32 %v951, %v475
  %v986 = vmul.f32 %v952, %v476
  %v987 = vmul.f32 %v953, %v477
  %v988 = vmul.f32 %v954, %v478
  %v989 = vmul.f32 %v955, %v479
  %v990 = vmul.f32 %v956, %v480
  %v991 = vmul.f32 %v957, %v481
  %v992 = vmul.f32 %v958, %v482
  %v993 = vmul.f32 %v959, %v483
  %v994 = vmul.f32 %v960, %v484
  %v995 = vmul.f32 %v961, %v485
  %v996 = vmul.f32 %v962, %v486
  %v997 = vmul.f32 %v963, %v487
  %v998 = vmul.f32 %v964, %v488
  %v999 = vmul.f32 %v965, %v489
  %v1000 = vmul.f32 %v966, %v490
  %v1001 = vmul.f32 %v967, %v491
  %v1002 = vmul.f32 %v968, %v492
  %v1003 = vmul.f32 %v969, %v493
  %v1004 = vmul.f32 %v970, %v494
  %v1005 = vmul.f32 %v971, %v495
  %v1006 = vmul.f32 %v972, %v496
  %v1007 = vmul.f32 %v973, %v497
  %v1008 = vmul.f32 %v974, %v498
  %v1009 = vmul.f32 %v975, %v499
  %v1010 = vmul.f32 %v976, %v500
  %v1011 = vmul.f32 %v977, 1.442695
  %v1012 = vpow.pop %v1011
  %v1013 = vmul.f32 %v978, 1.442695
  %v1014 = vpow.pop %v1013
  %v1015 = vmul.f32 %v979, 1.442695
  %v1016 = vpow.pop %v1015
  %v1017 = vmul.f32 %v980, 1.442695
  %v1018 = vpow.pop %v1017
  %v1019 = vmul.f32 %v981, 1.442695
  %v1020 = vpow.pop %v1019
  %v1021 = vmul.f32 %v982, 1.442695
  %v1022 = vpow.pop %v1021
  %v1023 = vmul.f32 %v983, 1.442695
  %v1024 = vpow.pop %v1023
  %v1025 = vmul.f32 %v984, 1.442695
  %v1026 = vpow.pop %v1025
  %v1027 = vmul.f32 %v985, 1.442695
  %v1028 = vpow.pop %v1027
  %v1029 = vmul.f32 %v986, 1.442695
  %v1030 = vpow.pop %v1029
  %v1031 = vmul.f32 %v987, 1.442695
  %v1032 = vpow.pop %v1031
  %v1033 = vmul.f32 %v988, 1.442695
  %v1034 = vpow.pop %v1033
  %v1035 = vmul.f32 %v989, 1.442695
  %v1036 = vpow.pop %v1035
  %v1037 = vmul.f32 %v990, 1.442695
  %v1038 = vpow.pop %v1037
  %v1039 = vmul.f32 %v991, 1.442695
  %v1040 = vpow.pop %v1039
  %v1041 = vmul.f32 %v992, 1.442695
  %v1042 = vpow.pop %v1041
  %v1043 = vmul.f32 %v993, 1.442695
  %v1044 = vpow.pop %v1043
  %v1045 = vmul.f32 %v994, 1.442695
  %v1046 = vpow.pop %v1045
  %v1047 = vmul.f32 %v995, 1.442695
  %v1048 = vpow.pop %v1047
  %v1049 = vmul.f32 %v996, 1.442695
  %v1050 = vpow.pop %v1049
  %v1051 = vmul.f32 %v997, 1.442695
  %v1052 = vpow.pop %v1051
  %v1053 = vmul.f32 %v998, 1.442695
  %v1054 = vpow.pop %v1053
  %v1055 = vmul.f32 %v999, 1.442695
  %v1056 = vpow.pop %v1055
  %v1057 = vmul.f32 %v1000, 1.442695
  %v1058 = vpow.pop %v1057
  %v1059 = vmul.f32 %v1001, 1.442695
  %v1060 = vpow.pop %v1059
  %v1061 = vmul.f32 %v1002, 1.442695
  %v1062 = vpow.pop %v1061
  %v1063 = vmul.f32 %v1003, 1.442695
  %v1064 = vpow.pop %v1063
  %v1065 = vmul.f32 %v1004, 1.442695
  %v1066 = vpow.pop %v1065
  %v1067 = vmul.f32 %v1005, 1.442695
  %v1068 = vpow.pop %v1067
  %v1069 = vmul.f32 %v1006, 1.442695
  %v1070 = vpow.pop %v1069
  %v1071 = vmul.f32 %v1007, 1.442695
  %v1072 = vpow.pop %v1071
  %v1073 = vmul.f32 %v1008, 1.442695
  %v1074 = vpow.pop %v1073
  %v1075 = vmul.f32 %v1009, 1.442695
  %v1076 = vpow.pop %v1075
  %v1077 = vmul.f32 %v1010, 1.442695
  %v1078 = vpow.pop %v1077
  %v1079 = vmul.f32 %v909, %v1012
  %v1080 = vmul.f32 %v910, %v1014
  %v1081 = vmul.f32 %v911, %v1016
  %v1082 = vmul.f32 %v912, %v1018
  %v1083 = vmul.f32 %v913, %v1020
  %v1084 = vmul.f32 %v914, %v1022
  %v1085 = vmul.f32 %v915, %v1024
  %v1086 = vmul.f32 %v916, %v1026
  %v1087 = vmul.f32 %v917, %v1028
  %v1088 = vmul.f32 %v918, %v1030
  %v1089 = vmul.f32 %v919, %v1032
  %v1090 = vmul.f32 %v920, %v1034
  %v1091 = vmul.f32 %v921, %v1036
  %v1092 = vmul.f32 %v922, %v1038
  %v1093 = vmul.f32 %v923, %v1040
  %v1094 = vmul.f32 %v924, %v1042
  %v1095 = vmul.f32 %v925, %v1044
  %v1096 = vmul.f32 %v926, %v1046
  %v1097 = vmul.f32 %v927, %v1048
  %v1098 = vmul.f32 %v928, %v1050
  %v1099 = vmul.f32 %v929, %v1052
  %v1100 = vmul.f32 %v930, %v1054
  %v1101 = vmul.f32 %v931, %v1056
  %v1102 = vmul.f32 %v932, %v1058
  %v1103 = vmul.f32 %v933, %v1060
  %v1104 = vmul.f32 %v934, %v1062
  %v1105 = vmul.f32 %v935, %v1064
  %v1106 = vmul.f32 %v936, %v1066
  %v1107 = vmul.f32 %v937, %v1068
  %v1108 = vmul.f32 %v938, %v1070
  %v1109 = vmul.f32 %v939, %v1072
  %v1110 = vmul.f32 %v940, %v1074
  %v1111 = vmul.f32 %v941, %v1076
  %v1112 = vmul.f32 %v942, %v1078
  %v1113 = vsub.f32 1.0, %v1079
  %v1114 = vsub.f32 1.0, %v1080
  %v1115 = vsub.f32 1.0, %v1081
  %v1116 = vsub.f32 1.0, %v1082
  %v1117 = vsub.f32 1.0, %v1083
  %v1118 = vsub.f32 1.0, %v1084
  %v1119 = vsub.f32 1.0, %v1085
  %v1120 = vsub.f32 1.0, %v1086
  %v1121 = vsub.f32 1.0, %v1087
  %v1122 = vsub.f32 1.0, %v1088
  %v1123 = vsub.f32 1.0, %v1089
  %v1124 = vsub.f32 1.0, %v1090
  %v1125 = vsub.f32 1.0, %v1091
  %v1126 = vsub.f32 1.0, %v1092
  %v1127 = vsub.f32 1.0, %v1093
  %v1128 = vsub.f32 1.0, %v1094
  %v1129 = vsub.f32 1.0, %v1095
  %v1130 = vsub.f32 1.0, %v1096
  %v1131 = vsub.f32 1.0, %v1097
  %v1132 = vsub.f32 1.0, %v1098
  %v1133 = vsub.f32 1.0, %v1099
  %v1134 = vsub.f32 1.0, %v1100
  %v1135 = vsub.f32 1.0, %v1101
  %v1136 = vsub.f32 1.0, %v1102
  %v1137 = vsub.f32 1.0, %v1103
  %v1138 = vsub.f32 1.0, %v1104
  %v1139 = vsub.f32 1.0, %v1105
  %v1140 = vsub.f32 1.0, %v1106
  %v1141 = vsub.f32 1.0, %v1107
  %v1142 = vsub.f32 1.0, %v1108
  %v1143 = vsub.f32 1.0, %v1109
  %v1144 = vsub.f32 1.0, %v1110
  %v1145 = vsub.f32 1.0, %v1111
  %v1146 = vsub.f32 1.0, %v1112
  %vm1147 = vcmp.ge.f32.partialorder %v433, 0.0
  %vm1148 = vcmp.ge.f32.partialorder %v434, 0.0
  %vm1149 = vcmp.ge.f32.partialorder %v435, 0.0
  %vm1150 = vcmp.ge.f32.partialorder %v436, 0.0
  %vm1151 = vcmp.ge.f32.partialorder %v437, 0.0
  %vm1152 = vcmp.ge.f32.partialorder %v438, 0.0
  %vm1153 = vcmp.ge.f32.partialorder %v439, 0.0
  %vm1154 = vcmp.ge.f32.partialorder %v440, 0.0
  %vm1155 = vcmp.ge.f32.partialorder %v441, 0.0
  %vm1156 = vcmp.ge.f32.partialorder %v442, 0.0
  %vm1157 = vcmp.ge.f32.partialorder %v443, 0.0
  %vm1158 = vcmp.ge.f32.partialorder %v444, 0.0
  %vm1159 = vcmp.ge.f32.partialorder %v445, 0.0
  %vm1160 = vcmp.ge.f32.partialorder %v446, 0.0
  %vm1161 = vcmp.ge.f32.partialorder %v447, 0.0
  %vm1162 = vcmp.ge.f32.partialorder %v448, 0.0
  %vm1163 = vcmp.ge.f32.partialorder %v449, 0.0
  %vm1164 = vcmp.ge.f32.partialorder %v450, 0.0
  %vm1165 = vcmp.ge.f32.partialorder %v451, 0.0
  %vm1166 = vcmp.ge.f32.partialorder %v452, 0.0
  %vm1167 = vcmp.ge.f32.partialorder %v453, 0.0
  %vm1168 = vcmp.ge.f32.partialorder %v454, 0.0
  %vm1169 = vcmp.ge.f32.partialorder %v455, 0.0
  %vm1170 = vcmp.ge.f32.partialorder %v456, 0.0
  %vm1171 = vcmp.ge.f32.partialorder %v457, 0.0
  %vm1172 = vcmp.ge.f32.partialorder %v458, 0.0
  %vm1173 = vcmp.ge.f32.partialorder %v459, 0.0
  %vm1174 = vcmp.ge.f32.partialorder %v460, 0.0
  %vm1175 = vcmp.ge.f32.partialorder %v461, 0.0
  %vm1176 = vcmp.ge.f32.partialorder %v462, 0.0
  %vm1177 = vcmp.ge.f32.partialorder %v463, 0.0
  %vm1178 = vcmp.ge.f32.partialorder %v464, 0.0
  %vm1179 = vcmp.ge.f32.partialorder %v465, 0.0
  %vm1180 = vcmp.ge.f32.partialorder %v466, 0.0
  %v1181 = vsub.f32 0.0, %v1113
  %v1182 = vsub.f32 0.0, %v1114
  %v1183 = vsub.f32 0.0, %v1115
  %v1184 = vsub.f32 0.0, %v1116
  %v1185 = vsub.f32 0.0, %v1117
  %v1186 = vsub.f32 0.0, %v1118
  %v1187 = vsub.f32 0.0, %v1119
  %v1188 = vsub.f32 0.0, %v1120
  %v1189 = vsub.f32 0.0, %v1121
  %v1190 = vsub.f32 0.0, %v1122
  %v1191 = vsub.f32 0.0, %v1123
  %v1192 = vsub.f32 0.0, %v1124
  %v1193 = vsub.f32 0.0, %v1125
  %v1194 = vsub.f32 0.0, %v1126
  %v1195 = vsub.f32 0.0, %v1127
  %v1196 = vsub.f32 0.0, %v1128
  %v1197 = vsub.f32 0.0, %v1129
  %v1198 = vsub.f32 0.0, %v1130
  %v1199 = vsub.f32 0.0, %v1131
  %v1200 = vsub.f32 0.0, %v1132
  %v1201 = vsub.f32 0.0, %v1133
  %v1202 = vsub.f32 0.0, %v1134
  %v1203 = vsub.f32 0.0, %v1135
  %v1204 = vsub.f32 0.0, %v1136
  %v1205 = vsub.f32 0.0, %v1137
  %v1206 = vsub.f32 0.0, %v1138
  %v1207 = vsub.f32 0.0, %v1139
  %v1208 = vsub.f32 0.0, %v1140
  %v1209 = vsub.f32 0.0, %v1141
  %v1210 = vsub.f32 0.0, %v1142
  %v1211 = vsub.f32 0.0, %v1143
  %v1212 = vsub.f32 0.0, %v1144
  %v1213 = vsub.f32 0.0, %v1145
  %v1214 = vsub.f32 0.0, %v1146
  %v1215 = vsel %vm1147, %v1113, %v1181
  %v1216 = vsel %vm1148, %v1114, %v1182
  %v1217 = vsel %vm1149, %v1115, %v1183
  %v1218 = vsel %vm1150, %v1116, %v1184
  %v1219 = vsel %vm1151, %v1117, %v1185
  %v1220 = vsel %vm1152, %v1118, %v1186
  %v1221 = vsel %vm1153, %v1119, %v1187
  %v1222 = vsel %vm1154, %v1120, %v1188
  %v1223 = vsel %vm1155, %v1121, %v1189
  %v1224 = vsel %vm1156, %v1122, %v1190
  %v1225 = vsel %vm1157, %v1123, %v1191
  %v1226 = vsel %vm1158, %v1124, %v1192
  %v1227 = vsel %vm1159, %v1125, %v1193
  %v1228 = vsel %vm1160, %v1126, %v1194
  %v1229 = vsel %vm1161, %v1127, %v1195
  %v1230 = vsel %vm1162, %v1128, %v1196
  %v1231 = vsel %vm1163, %v1129, %v1197
  %v1232 = vsel %vm1164, %v1130, %v1198
  %v1233 = vsel %vm1165, %v1131, %v1199
  %v1234 = vsel %vm1166, %v1132, %v1200
  %v1235 = vsel %vm1167, %v1133, %v1201
  %v1236 = vsel %vm1168, %v1134, %v1202
  %v1237 = vsel %vm1169, %v1135, %v1203
  %v1238 = vsel %vm1170, %v1136, %v1204
  %v1239 = vsel %vm1171, %v1137, %v1205
  %v1240 = vsel %vm1172, %v1138, %v1206
  %v1241 = vsel %vm1173, %v1139, %v1207
  %v1242 = vsel %vm1174, %v1140, %v1208
  %v1243 = vsel %vm1175, %v1141, %v1209
  %v1244 = vsel %vm1176, %v1142, %v1210
  %v1245 = vsel %vm1177, %v1143, %v1211
  %v1246 = vsel %vm1178, %v1144, %v1212
  %v1247 = vsel %vm1179, %v1145, %v1213
  %v1248 = vsel %vm1180, %v1146, %v1214
  %v1249 = vadd.f32 %v1215, 1.0
  %v1250 = vadd.f32 %v1216, 1.0
  %v1251 = vadd.f32 %v1217, 1.0
  %v1252 = vadd.f32 %v1218, 1.0
  %v1253 = vadd.f32 %v1219, 1.0
  %v1254 = vadd.f32 %v1220, 1.0
  %v1255 = vadd.f32 %v1221, 1.0
  %v1256 = vadd.f32 %v1222, 1.0
  %v1257 = vadd.f32 %v1223, 1.0
  %v1258 = vadd.f32 %v1224, 1.0
  %v1259 = vadd.f32 %v1225, 1.0
  %v1260 = vadd.f32 %v1226, 1.0
  %v1261 = vadd.f32 %v1227, 1.0
  %v1262 = vadd.f32 %v1228, 1.0
  %v1263 = vadd.f32 %v1229, 1.0
  %v1264 = vadd.f32 %v1230, 1.0
  %v1265 = vadd.f32 %v1231, 1.0
  %v1266 = vadd.f32 %v1232, 1.0
  %v1267 = vadd.f32 %v1233, 1.0
  %v1268 = vadd.f32 %v1234, 1.0
  %v1269 = vadd.f32 %v1235, 1.0
  %v1270 = vadd.f32 %v1236, 1.0
  %v1271 = vadd.f32 %v1237, 1.0
  %v1272 = vadd.f32 %v1238, 1.0
  %v1273 = vadd.f32 %v1239, 1.0
  %v1274 = vadd.f32 %v1240, 1.0
  %v1275 = vadd.f32 %v1241, 1.0
  %v1276 = vadd.f32 %v1242, 1.0
  %v1277 = vadd.f32 %v1243, 1.0
  %v1278 = vadd.f32 %v1244, 1.0
  %v1279 = vadd.f32 %v1245, 1.0
  %v1280 = vadd.f32 %v1246, 1.0
  %v1281 = vadd.f32 %v1247, 1.0
  %v1282 = vadd.f32 %v1248, 1.0
  %v1283 = vmul.f32 %v399, %v1249
  %v1284 = vmul.f32 %v400, %v1250
  %v1285 = vmul.f32 %v401, %v1251
  %v1286 = vmul.f32 %v402, %v1252
  %v1287 = vmul.f32 %v403, %v1253
  %v1288 = vmul.f32 %v404, %v1254
  %v1289 = vmul.f32 %v405, %v1255
  %v1290 = vmul.f32 %v406, %v1256
  %v1291 = vmul.f32 %v407, %v1257
  %v1292 = vmul.f32 %v408, %v1258
  %v1293 = vmul.f32 %v409, %v1259
  %v1294 = vmul.f32 %v410, %v1260
  %v1295 = vmul.f32 %v411, %v1261
  %v1296 = vmul.f32 %v412, %v1262
  %v1297 = vmul.f32 %v413, %v1263
  %v1298 = vmul.f32 %v414, %v1264
  %v1299 = vmul.f32 %v415, %v1265
  %v1300 = vmul.f32 %v416, %v1266
  %v1301 = vmul.f32 %v417, %v1267
  %v1302 = vmul.f32 %v418, %v1268
  %v1303 = vmul.f32 %v419, %v1269
  %v1304 = vmul.f32 %v420, %v1270
  %v1305 = vmul.f32 %v421, %v1271
  %v1306 = vmul.f32 %v422, %v1272
  %v1307 = vmul.f32 %v423, %v1273
  %v1308 = vmul.f32 %v424, %v1274
  %v1309 = vmul.f32 %v425, %v1275
  %v1310 = vmul.f32 %v426, %v1276
  %v1311 = vmul.f32 %v427, %v1277
  %v1312 = vmul.f32 %v428, %v1278
  %v1313 = vmul.f32 %v429, %v1279
  %v1314 = vmul.f32 %v430, %v1280
  %v1315 = vmul.f32 %v431, %v1281
  %v1316 = vmul.f32 %v432, %v1282
  %vm1317 = vcmask 31744
  %1318 = vst.msk [vmem:[%s3] sm:$0xff] %vm1317, %v1283
  %1319 = vst.msk [vmem:[%s3 + $0x8] sm:$0xff] %vm1317, %v1284
  %1320 = vst.msk [vmem:[%s3 + $0x10] sm:$0xff] %vm1317, %v1285
  %1321 = vst.msk [vmem:[%s3 + $0x18] sm:$0xff] %vm1317, %v1286
  %1322 = vst.msk [vmem:[%s3 + $0x20] sm:$0xff] %vm1317, %v1287
  %1323 = vst.msk [vmem:[%s3 + $0x28] sm:$0xff] %vm1317, %v1288
  %1324 = vst.msk [vmem:[%s3 + $0x30] sm:$0xff] %vm1317, %v1289
  %1325 = vst.msk [vmem:[%s3 + $0x38] sm:$0xff] %vm1317, %v1290
  %1326 = vst.msk [vmem:[%s3 + $0x40] sm:$0xff] %vm1317, %v1291
  %1327 = vst.msk [vmem:[%s3 + $0x48] sm:$0xff] %vm1317, %v1292
  %1328 = vst.msk [vmem:[%s3 + $0x50] sm:$0xff] %vm1317, %v1293
  %1329 = vst.msk [vmem:[%s3 + $0x58] sm:$0xff] %vm1317, %v1294
  %1330 = vst.msk [vmem:[%s3 + $0x60] sm:$0xff] %vm1317, %v1295
  %1331 = vst.msk [vmem:[%s3 + $0x68] sm:$0xff] %vm1317, %v1296
  %1332 = vst.msk [vmem:[%s3 + $0x70] sm:$0xff] %vm1317, %v1297
  %1333 = vst.msk [vmem:[%s3 + $0x78] sm:$0xff] %vm1317, %v1298
  %1334 = vst.msk [vmem:[%s3 + $0x80] sm:$0xff] %vm1317, %v1299
  %1335 = vst.msk [vmem:[%s3 + $0x88] sm:$0xff] %vm1317, %v1300
  %1336 = vst.msk [vmem:[%s3 + $0x90] sm:$0xff] %vm1317, %v1301
  %1337 = vst.msk [vmem:[%s3 + $0x98] sm:$0xff] %vm1317, %v1302
  %1338 = vst.msk [vmem:[%s3 + $0xa0] sm:$0xff] %vm1317, %v1303
  %1339 = vst.msk [vmem:[%s3 + $0xa8] sm:$0xff] %vm1317, %v1304
  %1340 = vst.msk [vmem:[%s3 + $0xb0] sm:$0xff] %vm1317, %v1305
  %1341 = vst.msk [vmem:[%s3 + $0xb8] sm:$0xff] %vm1317, %v1306
  %1342 = vst.msk [vmem:[%s3 + $0xc0] sm:$0xff] %vm1317, %v1307
  %1343 = vst.msk [vmem:[%s3 + $0xc8] sm:$0xff] %vm1317, %v1308
  %1344 = vst.msk [vmem:[%s3 + $0xd0] sm:$0xff] %vm1317, %v1309
  %1345 = vst.msk [vmem:[%s3 + $0xd8] sm:$0xff] %vm1317, %v1310
  %1346 = vst.msk [vmem:[%s3 + $0xe0] sm:$0xff] %vm1317, %v1311
  %1347 = vst.msk [vmem:[%s3 + $0xe8] sm:$0xff] %vm1317, %v1312
  %1348 = vst.msk [vmem:[%s3 + $0xf0] sm:$0xff] %vm1317, %v1313
  %1349 = vst.msk [vmem:[%s3 + $0xf8] sm:$0xff] %vm1317, %v1314
  %1350 = vst.msk [vmem:[%s3 + $0x100] sm:$0xff] %vm1317, %v1315
  %1351 = vst.msk [vmem:[%s3 + $0x108] sm:$0xff] %vm1317, %v1316
  // Predicated region
  $region14: #{forward.6} parent=0 // pred_check
    _
  $region15: #{forward.6} parent=0 // pred_check_branch
    %1353 = sbr.rel (0) target = $region17
  $region16: #{forward.6} parent=0 // pred_region
    _
  $region17: #{forward.6} parent=0 // pred_fallthru
    _
  // Predicated region
  $region18: #{forward.6} parent=0 // pred_check
    _
  $region19: #{forward.6} parent=0 // pred_check_branch
    %1355 = sbr.rel (0) target = $region21
  $region20: #{forward.6} parent=0 // pred_region
    _
  $region21: #{forward.6} parent=0 // pred_fallthru
    _

// kernel: forward.7
$region0: #{forward.7}
  #allocation0 [shape = 'u32[]', space=smem, size = 0x4, offset = 0x4, fixed_abs, tag = 'smem constant byte address 0x4 - core index']
  #allocation1 [shape = 'u32[144,128]{1,0:T(1,128)}', space=vmem, size = 0x12000, scoped, tag = 'internal scratch']
  %s0 = inlined_call_operand.vmem [shape: f32[72,36], index: 0, kind: input, shape index: {}]
  %s1 = inlined_call_operand.vmem [shape: f32[36,8], index: 1, kind: input, shape index: {}]
  %s2 = inlined_call_operand.vmem [shape: f32[1,8], index: 2, kind: input, shape index: {}]
  %s3 = inlined_call_operand.vmem [shape: f32[72,8], index: 3, kind: output, shape index: {}]
  %s4 = sld [smem:[#allocation0]]
  $region22: #{forward.7} parent=0
    _
  %s6 = ssub.s32 1, %s4
  %s7 = scalar_select 0, %s6, %s4
  // Predicated region
  $region2: #{forward.7} parent=0 // pred_check
    _
  $region3: #{forward.7} parent=0 // pred_check_branch
    %9 = sbr.rel (0) target = $region5
  $region4: #{forward.7} parent=0 // pred_region
    _
  $region5: #{forward.7} parent=0 // pred_fallthru
    _
  // Predicated region
  $region6: #{forward.7} parent=0 // pred_check
    _
  $region7: #{forward.7} parent=0 // pred_check_branch
    %11 = sbr.rel (0) target = $region9
  $region8: #{forward.7} parent=0 // pred_region
    _
  $region9: #{forward.7} parent=0 // pred_fallthru
    _
  // Predicated region
  $region10: #{forward.7} parent=0 // pred_check
    _
  $region11: #{forward.7} parent=0 // pred_check_branch
    %13 = sbr.rel (0) target = $region13
  $region12: #{forward.7} parent=0 // pred_region
    _
  $region13: #{forward.7} parent=0 // pred_fallthru
    _
  %v14 = vld [vmem:[%s0] sm:$0xff]
  %v15 = vld [vmem:[%s0 + $0x8] sm:$0xff]
  %v16 = vld [vmem:[%s0 + $0x10] sm:$0xff]
  %v17 = vld [vmem:[%s0 + $0x18] sm:$0xff]
  %v18 = vld [vmem:[%s0 + $0x20] sm:$0xff]
  %v19 = vld [vmem:[%s0 + $0x28] sm:$0xff]
  %v20 = vld [vmem:[%s0 + $0x30] sm:$0xff]
  %v21 = vld [vmem:[%s0 + $0x38] sm:$0xff]
  %v22 = vld [vmem:[%s0 + $0x40] sm:$0xff]
  %v23 = vld [vmem:[%s1] sm:$0xff]
  %v24 = vld [vmem:[%s1 + $0x8] sm:$0xff]
  %v25 = vld [vmem:[%s1 + $0x10] sm:$0xff]
  %v26 = vld [vmem:[%s1 + $0x18] sm:$0xff]
  %v27 = vld [vmem:[%s1 + $0x20] sm:$0xf]
  %v28 = vld [vmem:[%s2] sm:$0x1]
  %v30 = vlaneseq
  %v31 = vshrl.u32 %v30, 7
  %v32 = vsub.s32 0, %v31
  %v33 = vrot.slane %v28, %v32
  %vm35 = vcmask 293888
  %v37 = vsel %vm35, %v14, 0
  %v40 = vsel %vm35, %v15, 0
  %v43 = vsel %vm35, %v16, 0
  %v46 = vsel %vm35, %v17, 0
  %v49 = vsel %vm35, %v18, 0
  %v52 = vsel %vm35, %v19, 0
  %v55 = vsel %vm35, %v20, 0
  %v58 = vsel %vm35, %v21, 0
  %v61 = vsel %vm35, %v22, 0
  %vm63 = vcmask 1043456
  %v65 = vsel %vm63, %v27, 0
  %67 = vmatprep.subr.mxu0 0.0
  %68 = vmatpush1.msra.mxu0 %v23
  %69 = vmatprep.subr.mxu0 0.0
  %70 = vmatpush1.msra.mxu0 %v24
  %71 = vmatprep.subr.mxu0 0.0
  %72 = vmatpush1.msra.mxu0 %v25
  %73 = vmatprep.subr.mxu0 0.0
  %74 = vmatpush1.msra.mxu0 %v26
  %75 = vmatprep.subr.mxu0 0.0
  %76 = vmatpush1.msra.mxu0 %v65
  %77 = vmatprep.subr.mxu0 0.0
  %78 = vmatpush1.msra.mxu0 0.0
  %79 = vmatprep.subr.mxu0 0.0
  %80 = vmatpush1.msra.mxu0 0.0
  %81 = vmatprep.subr.mxu0 0.0
  %82 = vmatpush1.msra.mxu0 0.0
  %83 = vmatprep.subr.mxu0 0.0
  %84 = vmatpush1.msra.mxu0 0.0
  %85 = vmatprep.subr.mxu0 0.0
  %86 = vmatpush1.msra.mxu0 0.0
  %87 = vmatprep.subr.mxu0 0.0
  %88 = vmatpush1.msra.mxu0 0.0
  %89 = vmatprep.subr.mxu0 0.0
  %90 = vmatpush1.msra.mxu0 0.0
  %91 = vmatprep.subr.mxu0 0.0
  %92 = vmatpush1.msra.mxu0 0.0
  %93 = vmatprep.subr.mxu0 0.0
  %94 = vmatpush1.msra.mxu0 0.0
  %95 = vmatprep.subr.mxu0 0.0
  %96 = vmatpush1.msra.mxu0 0.0
  %97 = vmatprep.subr.mxu0 0.0
  %98 = vmatpush1.msra.mxu0 0.0
  %99 = vmatprep.subr.mxu0 0.0
  %100 = vmatpush1.msra.mxu0 0.0
  %101 = vmatprep.subr.mxu0 0.0
  %102 = vmatpush1.msra.mxu0 0.0
  %103 = vmatprep.subr.mxu0 0.0
  %104 = vmatpush1.msra.mxu0 0.0
  %105 = vmatprep.subr.mxu0 0.0
  %106 = vmatpush1.msra.mxu0 0.0
  %107 = vmatprep.subr.mxu0 0.0
  %108 = vmatpush1.msra.mxu0 0.0
  %109 = vmatprep.subr.mxu0 0.0
  %110 = vmatpush1.msra.mxu0 0.0
  %111 = vmatprep.subr.mxu0 0.0
  %112 = vmatpush1.msra.mxu0 0.0
  %113 = vmatprep.subr.mxu0 0.0
  %114 = vmatpush1.msra.mxu0 0.0
  %115 = vmatprep.subr.mxu0 0.0
  %116 = vmatpush1.msra.mxu0 0.0
  %117 = vmatprep.subr.mxu0 0.0
  %118 = vmatpush1.msra.mxu0 0.0
  %119 = vmatprep.subr.mxu0 0.0
  %120 = vmatpush1.msra.mxu0 0.0
  %121 = vmatprep.subr.mxu0 0.0
  %122 = vmatpush1.msra.mxu0 0.0
  %123 = vmatprep.subr.mxu0 0.0
  %124 = vmatpush1.msra.mxu0 0.0
  %125 = vmatprep.subr.mxu0 0.0
  %126 = vmatpush1.msra.mxu0 0.0
  %127 = vmatprep.subr.mxu0 0.0
  %128 = vmatpush1.msra.mxu0 0.0
  %129 = vmatprep.subr.mxu0 0.0
  %130 = vmatpush1.msra.mxu0 0.0
  %131 = vmatprep.mubr.f32.mxu0 0.0
  %132 = vmatmul.mubr.f32.gmra.mrb[0].mxu0 %v37
  %v133 = vpop.f32.mrb[0].mxu0
  %v134 = vadd.f32 %v33, %v133
  %v135 = vpop.f32.mrb[0].mxu0
  %136 = vmatprep.mubr.f32.mxu0 0.0
  %137 = vmatmul.mubr.f32.gmra.mrb[0].mxu0 %v40
  %v138 = vpop.f32.mrb[0].mxu0
  %v139 = vadd.f32 %v33, %v138
  %v140 = vpop.f32.mrb[0].mxu0
  %141 = vmatprep.mubr.f32.mxu0 0.0
  %142 = vmatmul.mubr.f32.gmra.mrb[0].mxu0 %v43
  %v143 = vpop.f32.mrb[0].mxu0
  %v144 = vadd.f32 %v33, %v143
  %v145 = vpop.f32.mrb[0].mxu0
  %146 = vmatprep.mubr.f32.mxu0 0.0
  %147 = vmatmul.mubr.f32.gmra.mrb[0].mxu0 %v46
  %v148 = vpop.f32.mrb[0].mxu0
  %v149 = vadd.f32 %v33, %v148
  %v150 = vpop.f32.mrb[0].mxu0
  %151 = vmatprep.mubr.f32.mxu0 0.0
  %152 = vmatmul.mubr.f32.gmra.mrb[0].mxu0 %v49
  %v153 = vpop.f32.mrb[0].mxu0
  %v154 = vadd.f32 %v33, %v153
  %v155 = vpop.f32.mrb[0].mxu0
  %156 = vmatprep.mubr.f32.mxu0 0.0
  %157 = vmatmul.mubr.f32.gmra.mrb[0].mxu0 %v52
  %v158 = vpop.f32.mrb[0].mxu0
  %v159 = vadd.f32 %v33, %v158
  %v160 = vpop.f32.mrb[0].mxu0
  %161 = vmatprep.mubr.f32.mxu0 0.0
  %162 = vmatmul.mubr.f32.gmra.mrb[0].mxu0 %v55
  %v163 = vpop.f32.mrb[0].mxu0
  %v164 = vadd.f32 %v33, %v163
  %v165 = vpop.f32.mrb[0].mxu0
  %166 = vmatprep.mubr.f32.mxu0 0.0
  %167 = vmatmul.mubr.f32.gmra.mrb[0].mxu0 %v58
  %v168 = vpop.f32.mrb[0].mxu0
  %v169 = vadd.f32 %v33, %v168
  %v170 = vpop.f32.mrb[0].mxu0
  %171 = vmatprep.mubr.f32.mxu0 0.0
  %172 = vmatmul.mubr.f32.gmra.mrb[0].mxu0 %v61
  %v173 = vpop.f32.mrb[0].mxu0
  %v174 = vadd.f32 %v33, %v173
  %v175 = vpop.f32.mrb[0].mxu0
  %176 = vdwg.mxu0
  %v177 = vmul.f32 %v134, 0.5
  %v178 = vmul.f32 %v139, 0.5
  %v179 = vmul.f32 %v144, 0.5
  %v180 = vmul.f32 %v149, 0.5
  %v181 = vmul.f32 %v154, 0.5
  %v182 = vmul.f32 %v159, 0.5
  %v183 = vmul.f32 %v164, 0.5
  %v184 = vmul.f32 %v169, 0.5
  %v185 = vmul.f32 %v174, 0.5
  %v186 = vmul.f32 %v134, 0.70710677
  %v187 = vmul.f32 %v139, 0.70710677
  %v188 = vmul.f32 %v144, 0.70710677
  %v189 = vmul.f32 %v149, 0.70710677
  %v190 = vmul.f32 %v154, 0.70710677
  %v191 = vmul.f32 %v159, 0.70710677
  %v192 = vmul.f32 %v164, 0.70710677
  %v193 = vmul.f32 %v169, 0.70710677
  %v194 = vmul.f32 %v174, 0.70710677
  %v195 = vand.u32 2147483647, %v186
  %v196 = vand.u32 2147483647, %v187
  %v197 = vand.u32 2147483647, %v188
  %v198 = vand.u32 2147483647, %v189
  %v199 = vand.u32 2147483647, %v190
  %v200 = vand.u32 2147483647, %v191
  %v201 = vand.u32 2147483647, %v192
  %v202 = vand.u32 2147483647, %v193
  %v203 = vand.u32 2147483647, %v194
  %v204 = vmul.f32 %v195, 0.3275911
  %v205 = vmul.f32 %v196, 0.3275911
  %v206 = vmul.f32 %v197, 0.3275911
  %v207 = vmul.f32 %v198, 0.3275911
  %v208 = vmul.f32 %v199, 0.3275911
  %v209 = vmul.f32 %v200, 0.3275911
  %v210 = vmul.f32 %v201, 0.3275911
  %v211 = vmul.f32 %v202, 0.3275911
  %v212 = vmul.f32 %v203, 0.3275911
  %v213 = vadd.f32 %v204, 1.0
  %v214 = vadd.f32 %v205, 1.0
  %v215 = vadd.f32 %v206, 1.0
  %v216 = vadd.f32 %v207, 1.0
  %v217 = vadd.f32 %v208, 1.0
  %v218 = vadd.f32 %v209, 1.0
  %v219 = vadd.f32 %v210, 1.0
  %v220 = vadd.f32 %v211, 1.0
  %v221 = vadd.f32 %v212, 1.0
  %v222 = vrcp.pop %v213
  %v223 = vmul.f32 1.0, %v222
  %v224 = vrcp.pop %v214
  %v225 = vmul.f32 1.0, %v224
  %v226 = vrcp.pop %v215
  %v227 = vmul.f32 1.0, %v226
  %v228 = vrcp.pop %v216
  %v229 = vmul.f32 1.0, %v228
  %v230 = vrcp.pop %v217
  %v231 = vmul.f32 1.0, %v230
  %v232 = vrcp.pop %v218
  %v233 = vmul.f32 1.0, %v232
  %v234 = vrcp.pop %v219
  %v235 = vmul.f32 1.0, %v234
  %v236 = vrcp.pop %v220
  %v237 = vmul.f32 1.0, %v236
  %v238 = vrcp.pop %v221
  %v239 = vmul.f32 1.0, %v238
  %v240 = vmul.f32 %v223, 1.0614054
  %v241 = vmul.f32 %v225, 1.0614054
  %v242 = vmul.f32 %v227, 1.0614054
  %v243 = vmul.f32 %v229, 1.0614054
  %v244 = vmul.f32 %v231, 1.0614054
  %v245 = vmul.f32 %v233, 1.0614054
  %v246 = vmul.f32 %v235, 1.0614054
  %v247 = vmul.f32 %v237, 1.0614054
  %v248 = vmul.f32 %v239, 1.0614054
  %v249 = vadd.f32 %v240, -1.4531521
  %v250 = vadd.f32 %v241, -1.4531521
  %v251 = vadd.f32 %v242, -1.4531521
  %v252 = vadd.f32 %v243, -1.4531521
  %v253 = vadd.f32 %v244, -1.4531521
  %v254 = vadd.f32 %v245, -1.4531521
  %v255 = vadd.f32 %v246, -1.4531521
  %v256 = vadd.f32 %v247, -1.4531521
  %v257 = vadd.f32 %v248, -1.4531521
  %v258 = vmul.f32 %v249, %v223
  %v259 = vmul.f32 %v250, %v225
  %v260 = vmul.f32 %v251, %v227
  %v261 = vmul.f32 %v252, %v229
  %v262 = vmul.f32 %v253, %v231
  %v263 = vmul.f32 %v254, %v233
  %v264 = vmul.f32 %v255, %v235
  %v265 = vmul.f32 %v256, %v237
  %v266 = vmul.f32 %v257, %v239
  %v267 = vadd.f32 %v258, 1.4214138
  %v268 = vadd.f32 %v259, 1.4214138
  %v269 = vadd.f32 %v260, 1.4214138
  %v270 = vadd.f32 %v261, 1.4214138
  %v271 = vadd.f32 %v262, 1.4214138
  %v272 = vadd.f32 %v263, 1.4214138
  %v273 = vadd.f32 %v264, 1.4214138
  %v274 = vadd.f32 %v265, 1.4214138
  %v275 = vadd.f32 %v266, 1.4214138
  %v276 = vmul.f32 %v267, %v223
  %v277 = vmul.f32 %v268, %v225
  %v278 = vmul.f32 %v269, %v227
  %v279 = vmul.f32 %v270, %v229
  %v280 = vmul.f32 %v271, %v231
  %v281 = vmul.f32 %v272, %v233
  %v282 = vmul.f32 %v273, %v235
  %v283 = vmul.f32 %v274, %v237
  %v284 = vmul.f32 %v275, %v239
  %v285 = vadd.f32 %v276, -0.28449672
  %v286 = vadd.f32 %v277, -0.28449672
  %v287 = vadd.f32 %v278, -0.28449672
  %v288 = vadd.f32 %v279, -0.28449672
  %v289 = vadd.f32 %v280, -0.28449672
  %v290 = vadd.f32 %v281, -0.28449672
  %v291 = vadd.f32 %v282, -0.28449672
  %v292 = vadd.f32 %v283, -0.28449672
  %v293 = vadd.f32 %v284, -0.28449672
  %v294 = vmul.f32 %v285, %v223
  %v295 = vmul.f32 %v286, %v225
  %v296 = vmul.f32 %v287, %v227
  %v297 = vmul.f32 %v288, %v229
  %v298 = vmul.f32 %v289, %v231
  %v299 = vmul.f32 %v290, %v233
  %v300 = vmul.f32 %v291, %v235
  %v301 = vmul.f32 %v292, %v237
  %v302 = vmul.f32 %v293, %v239
  %v303 = vadd.f32 %v294, 0.2548296
  %v304 = vadd.f32 %v295, 0.2548296
  %v305 = vadd.f32 %v296, 0.2548296
  %v306 = vadd.f32 %v297, 0.2548296
  %v307 = vadd.f32 %v298, 0.2548296
  %v308 = vadd.f32 %v299, 0.2548296
  %v309 = vadd.f32 %v300, 0.2548296
  %v310 = vadd.f32 %v301, 0.2548296
  %v311 = vadd.f32 %v302, 0.2548296
  %v312 = vmul.f32 %v303, %v223
  %v313 = vmul.f32 %v304, %v225
  %v314 = vmul.f32 %v305, %v227
  %v315 = vmul.f32 %v306, %v229
  %v316 = vmul.f32 %v307, %v231
  %v317 = vmul.f32 %v308, %v233
  %v318 = vmul.f32 %v309, %v235
  %v319 = vmul.f32 %v310, %v237
  %v320 = vmul.f32 %v311, %v239
  %v321 = vsub.f32 0.0, %v195
  %v322 = vsub.f32 0.0, %v196
  %v323 = vsub.f32 0.0, %v197
  %v324 = vsub.f32 0.0, %v198
  %v325 = vsub.f32 0.0, %v199
  %v326 = vsub.f32 0.0, %v200
  %v327 = vsub.f32 0.0, %v201
  %v328 = vsub.f32 0.0, %v202
  %v329 = vsub.f32 0.0, %v203
  %v330 = vmul.f32 %v321, %v195
  %v331 = vmul.f32 %v322, %v196
  %v332 = vmul.f32 %v323, %v197
  %v333 = vmul.f32 %v324, %v198
  %v334 = vmul.f32 %v325, %v199
  %v335 = vmul.f32 %v326, %v200
  %v336 = vmul.f32 %v327, %v201
  %v337 = vmul.f32 %v328, %v202
  %v338 = vmul.f32 %v329, %v203
  %v339 = vmul.f32 %v330, 1.442695
  %v340 = vpow.pop %v339
  %v341 = vmul.f32 %v331, 1.442695
  %v342 = vpow.pop %v341
  %v343 = vmul.f32 %v332, 1.442695
  %v344 = vpow.pop %v343
  %v345 = vmul.f32 %v333, 1.442695
  %v346 = vpow.pop %v345
  %v347 = vmul.f32 %v334, 1.442695
  %v348 = vpow.pop %v347
  %v349 = vmul.f32 %v335, 1.442695
  %v350 = vpow.pop %v349
  %v351 = vmul.f32 %v336, 1.442695
  %v352 = vpow.pop %v351
  %v353 = vmul.f32 %v337, 1.442695
  %v354 = vpow.pop %v353
  %v355 = vmul.f32 %v338, 1.442695
  %v356 = vpow.pop %v355
  %v357 = vmul.f32 %v312, %v340
  %v358 = vmul.f32 %v313, %v342
  %v359 = vmul.f32 %v314, %v344
  %v360 = vmul.f32 %v315, %v346
  %v361 = vmul.f32 %v316, %v348
  %v362 = vmul.f32 %v317, %v350
  %v363 = vmul.f32 %v318, %v352
  %v364 = vmul.f32 %v319, %v354
  %v365 = vmul.f32 %v320, %v356
  %v366 = vsub.f32 1.0, %v357
  %v367 = vsub.f32 1.0, %v358
  %v368 = vsub.f32 1.0, %v359
  %v369 = vsub.f32 1.0, %v360
  %v370 = vsub.f32 1.0, %v361
  %v371 = vsub.f32 1.0, %v362
  %v372 = vsub.f32 1.0, %v363
  %v373 = vsub.f32 1.0, %v364
  %v374 = vsub.f32 1.0, %v365
  %vm375 = vcmp.ge.f32.partialorder %v186, 0.0
  %vm376 = vcmp.ge.f32.partialorder %v187, 0.0
  %vm377 = vcmp.ge.f32.partialorder %v188, 0.0
  %vm378 = vcmp.ge.f32.partialorder %v189, 0.0
  %vm379 = vcmp.ge.f32.partialorder %v190, 0.0
  %vm380 = vcmp.ge.f32.partialorder %v191, 0.0
  %vm381 = vcmp.ge.f32.partialorder %v192, 0.0
  %vm382 = vcmp.ge.f32.partialorder %v193, 0.0
  %vm383 = vcmp.ge.f32.partialorder %v194, 0.0
  %v384 = vsub.f32 0.0, %v366
  %v385 = vsub.f32 0.0, %v367
  %v386 = vsub.f32 0.0, %v368
  %v387 = vsub.f32 0.0, %v369
  %v388 = vsub.f32 0.0, %v370
  %v389 = vsub.f32 0.0, %v371
  %v390 = vsub.f32 0.0, %v372
  %v391 = vsub.f32 0.0, %v373
  %v392 = vsub.f32 0.0, %v374
  %v393 = vsel %vm375, %v366, %v384
  %v394 = vsel %vm376, %v367, %v385
  %v395 = vsel %vm377, %v368, %v386
  %v396 = vsel %vm378, %v369, %v387
  %v397 = vsel %vm379, %v370, %v388
  %v398 = vsel %vm380, %v371, %v389
  %v399 = vsel %vm381, %v372, %v390
  %v400 = vsel %vm382, %v373, %v391
  %v401 = vsel %vm383, %v374, %v392
  %v402 = vadd.f32 %v393, 1.0
  %v403 = vadd.f32 %v394, 1.0
  %v404 = vadd.f32 %v395, 1.0
  %v405 = vadd.f32 %v396, 1.0
  %v406 = vadd.f32 %v397, 1.0
  %v407 = vadd.f32 %v398, 1.0
  %v408 = vadd.f32 %v399, 1.0
  %v409 = vadd.f32 %v400, 1.0
  %v410 = vadd.f32 %v401, 1.0
  %v411 = vmul.f32 %v177, %v402
  %v412 = vmul.f32 %v178, %v403
  %v413 = vmul.f32 %v179, %v404
  %v414 = vmul.f32 %v180, %v405
  %v415 = vmul.f32 %v181, %v406
  %v416 = vmul.f32 %v182, %v407
  %v417 = vmul.f32 %v183, %v408
  %v418 = vmul.f32 %v184, %v409
  %v419 = vmul.f32 %v185, %v410
  %vm420 = vcmask 64512
  %421 = vst.msk [vmem:[%s3] sm:$0xff] %vm420, %v411
  %422 = vst.msk [vmem:[%s3 + $0x8] sm:$0xff] %vm420, %v412
  %423 = vst.msk [vmem:[%s3 + $0x10] sm:$0xff] %vm420, %v413
  %424 = vst.msk [vmem:[%s3 + $0x18] sm:$0xff] %vm420, %v414
  %425 = vst.msk [vmem:[%s3 + $0x20] sm:$0xff] %vm420, %v415
  %426 = vst.msk [vmem:[%s3 + $0x28] sm:$0xff] %vm420, %v416
  %427 = vst.msk [vmem:[%s3 + $0x30] sm:$0xff] %vm420, %v417
  %428 = vst.msk [vmem:[%s3 + $0x38] sm:$0xff] %vm420, %v418
  %429 = vst.msk [vmem:[%s3 + $0x40] sm:$0xff] %vm420, %v419
  // Predicated region
  $region14: #{forward.7} parent=0 // pred_check
    _
  $region15: #{forward.7} parent=0 // pred_check_branch
    %431 = sbr.rel (0) target = $region17
  $region16: #{forward.7} parent=0 // pred_region
    _
  $region17: #{forward.7} parent=0 // pred_fallthru
    _
  // Predicated region
  $region18: #{forward.7} parent=0 // pred_check
    _
  $region19: #{forward.7} parent=0 // pred_check_branch
    %433 = sbr.rel (0) target = $region21
  $region20: #{forward.7} parent=0 // pred_region
    _
  $region21: #{forward.7} parent=0 // pred_fallthru
    _

// kernel: forward.8
$region0: #{forward.8}
  #allocation0 [shape = 'u32[]', space=smem, size = 0x4, offset = 0x4, fixed_abs, tag = 'smem constant byte address 0x4 - core index']
  #allocation1 [shape = 'u32[144,128]{1,0:T(1,128)}', space=vmem, size = 0x12000, scoped, tag = 'internal scratch']
  %s0 = inlined_call_operand.vmem [shape: f32[20,72], index: 0, kind: input, shape index: {}]
  %s1 = inlined_call_operand.vmem [shape: f32[72,16], index: 1, kind: input, shape index: {}]
  %s2 = inlined_call_operand.vmem [shape: f32[1,16], index: 2, kind: input, shape index: {}]
  %s3 = inlined_call_operand.vmem [shape: f32[20,16], index: 3, kind: output, shape index: {}]
  %s4 = sld [smem:[#allocation0]]
  $region22: #{forward.8} parent=0
    _
  %s6 = ssub.s32 1, %s4
  %s7 = scalar_select 0, %s6, %s4
  // Predicated region
  $region2: #{forward.8} parent=0 // pred_check
    _
  $region3: #{forward.8} parent=0 // pred_check_branch
    %9 = sbr.rel (0) target = $region5
  $region4: #{forward.8} parent=0 // pred_region
    _
  $region5: #{forward.8} parent=0 // pred_fallthru
    _
  // Predicated region
  $region6: #{forward.8} parent=0 // pred_check
    _
  $region7: #{forward.8} parent=0 // pred_check_branch
    %11 = sbr.rel (0) target = $region9
  $region8: #{forward.8} parent=0 // pred_region
    _
  $region9: #{forward.8} parent=0 // pred_fallthru
    _
  // Predicated region
  $region10: #{forward.8} parent=0 // pred_check
    _
  $region11: #{forward.8} parent=0 // pred_check_branch
    %13 = sbr.rel (0) target = $region13
  $region12: #{forward.8} parent=0 // pred_region
    _
  $region13: #{forward.8} parent=0 // pred_fallthru
    _
  %v14 = vld [vmem:[%s0] sm:$0xff]
  %v15 = vld [vmem:[%s0 + $0x8] sm:$0xff]
  %v16 = vld [vmem:[%s0 + $0x10] sm:$0xf]
  %v17 = vld [vmem:[%s1] sm:$0xff]
  %v18 = vld [vmem:[%s1 + $0x8] sm:$0xff]
  %v19 = vld [vmem:[%s1 + $0x10] sm:$0xff]
  %v20 = vld [vmem:[%s1 + $0x18] sm:$0xff]
  %v21 = vld [vmem:[%s1 + $0x20] sm:$0xff]
  %v22 = vld [vmem:[%s1 + $0x28] sm:$0xff]
  %v23 = vld [vmem:[%s1 + $0x30] sm:$0xff]
  %v24 = vld [vmem:[%s1 + $0x38] sm:$0xff]
  %v25 = vld [vmem:[%s1 + $0x40] sm:$0xff]
  %v26 = vld [vmem:[%s2] sm:$0x1]
  %v28 = vlaneseq
  %v29 = vshrl.u32 %v28, 7
  %v30 = vsub.s32 0, %v29
  %v31 = vrot.slane %v26, %v30
  %vm33 = vcmask 588800
  %v35 = vsel %vm33, %v14, 0
  %v38 = vsel %vm33, %v15, 0
  %v41 = vsel %vm33, %v16, 0
  %43 = vmatprep.subr.mxu0 0.0
  %44 = vmatpush1.msra.mxu0 %v17
  %45 = vmatprep.subr.mxu0 0.0
  %46 = vmatpush1.msra.mxu0 %v18
  %47 = vmatprep.subr.mxu0 0.0
  %48 = vmatpush1.msra.mxu0 %v19
  %49 = vmatprep.subr.mxu0 0.0
  %50 = vmatpush1.msra.mxu0 %v20
  %51 = vmatprep.subr.mxu0 0.0
  %52 = vmatpush1.msra.mxu0 %v21
  %53 = vmatprep.subr.mxu0 0.0
  %54 = vmatpush1.msra.mxu0 %v22
  %55 = vmatprep.subr.mxu0 0.0
  %56 = vmatpush1.msra.mxu0 %v23
  %57 = vmatprep.subr.mxu0 0.0
  %58 = vmatpush1.msra.mxu0 %v24
  %59 = vmatprep.subr.mxu0 0.0
  %60 = vmatpush1.msra.mxu0 %v25
  %61 = vmatprep.subr.mxu0 0.0
  %62 = vmatpush1.msra.mxu0 0.0
  %63 = vmatprep.subr.mxu0 0.0
  %64 = vmatpush1.msra.mxu0 0.0
  %65 = vmatprep.subr.mxu0 0.0
  %66 = vmatpush1.msra.mxu0 0.0
  %67 = vmatprep.subr.mxu0 0.0
  %68 = vmatpush1.msra.mxu0 0.0
  %69 = vmatprep.subr.mxu0 0.0
  %70 = vmatpush1.msra.mxu0 0.0
  %71 = vmatprep.subr.mxu0 0.0
  %72 = vmatpush1.msra.mxu0 0.0
  %73 = vmatprep.subr.mxu0 0.0
  %74 = vmatpush1.msra.mxu0 0.0
  %75 = vmatprep.subr.mxu0 0.0
  %76 = vmatpush1.msra.mxu0 0.0
  %77 = vmatprep.subr.mxu0 0.0
  %78 = vmatpush1.msra.mxu0 0.0
  %79 = vmatprep.subr.mxu0 0.0
  %80 = vmatpush1.msra.mxu0 0.0
  %81 = vmatprep.subr.mxu0 0.0
  %82 = vmatpush1.msra.mxu0 0.0
  %83 = vmatprep.subr.mxu0 0.0
  %84 = vmatpush1.msra.mxu0 0.0
  %85 = vmatprep.subr.mxu0 0.0
  %86 = vmatpush1.msra.mxu0 0.0
  %87 = vmatprep.subr.mxu0 0.0
  %88 = vmatpush1.msra.mxu0 0.0
  %89 = vmatprep.subr.mxu0 0.0
  %90 = vmatpush1.msra.mxu0 0.0
  %91 = vmatprep.subr.mxu0 0.0
  %92 = vmatpush1.msra.mxu0 0.0
  %93 = vmatprep.subr.mxu0 0.0
  %94 = vmatpush1.msra.mxu0 0.0
  %95 = vmatprep.subr.mxu0 0.0
  %96 = vmatpush1.msra.mxu0 0.0
  %97 = vmatprep.subr.mxu0 0.0
  %98 = vmatpush1.msra.mxu0 0.0
  %99 = vmatprep.subr.mxu0 0.0
  %100 = vmatpush1.msra.mxu0 0.0
  %101 = vmatprep.subr.mxu0 0.0
  %102 = vmatpush1.msra.mxu0 0.0
  %103 = vmatprep.subr.mxu0 0.0
  %104 = vmatpush1.msra.mxu0 0.0
  %105 = vmatprep.subr.mxu0 0.0
  %106 = vmatpush1.msra.mxu0 0.0
  %107 = vmatprep.mubr.f32.mxu0 0.0
  %108 = vmatmul.mubr.f32.gmra.mrb[0].mxu0 %v35
  %v109 = vpop.f32.mrb[0].mxu0
  %v110 = vadd.f32 %v31, %v109
  %v111 = vpop.f32.mrb[0].mxu0
  %112 = vmatprep.mubr.f32.mxu0 0.0
  %113 = vmatmul.mubr.f32.gmra.mrb[0].mxu0 %v38
  %v114 = vpop.f32.mrb[0].mxu0
  %v115 = vadd.f32 %v31, %v114
  %v116 = vpop.f32.mrb[0].mxu0
  %117 = vmatprep.mubr.f32.mxu0 0.0
  %118 = vmatmul.mubr.f32.gmra.mrb[0].mxu0 %v41
  %v119 = vpop.f32.mrb[0].mxu0
  %v120 = vadd.f32 %v31, %v119
  %v121 = vpop.f32.mrb[0].mxu0
  %122 = vdwg.mxu0
  %v123 = vmul.f32 %v110, 0.5
  %v124 = vmul.f32 %v115, 0.5
  %v125 = vmul.f32 %v120, 0.5
  %v126 = vmul.f32 %v110, 0.70710677
  %v127 = vmul.f32 %v115, 0.70710677
  %v128 = vmul.f32 %v120, 0.70710677
  %v129 = vand.u32 2147483647, %v126
  %v130 = vand.u32 2147483647, %v127
  %v131 = vand.u32 2147483647, %v128
  %v132 = vmul.f32 %v129, 0.3275911
  %v133 = vmul.f32 %v130, 0.3275911
  %v134 = vmul.f32 %v131, 0.3275911
  %v135 = vadd.f32 %v132, 1.0
  %v136 = vadd.f32 %v133, 1.0
  %v137 = vadd.f32 %v134, 1.0
  %v138 = vrcp.pop %v135
  %v139 = vmul.f32 1.0, %v138
  %v140 = vrcp.pop %v136
  %v141 = vmul.f32 1.0, %v140
  %v142 = vrcp.pop %v137
  %v143 = vmul.f32 1.0, %v142
  %v144 = vmul.f32 %v139, 1.0614054
  %v145 = vmul.f32 %v141, 1.0614054
  %v146 = vmul.f32 %v143, 1.0614054
  %v147 = vadd.f32 %v144, -1.4531521
  %v148 = vadd.f32 %v145, -1.4531521
  %v149 = vadd.f32 %v146, -1.4531521
  %v150 = vmul.f32 %v147, %v139
  %v151 = vmul.f32 %v148, %v141
  %v152 = vmul.f32 %v149, %v143
  %v153 = vadd.f32 %v150, 1.4214138
  %v154 = vadd.f32 %v151, 1.4214138
  %v155 = vadd.f32 %v152, 1.4214138
  %v156 = vmul.f32 %v153, %v139
  %v157 = vmul.f32 %v154, %v141
  %v158 = vmul.f32 %v155, %v143
  %v159 = vadd.f32 %v156, -0.28449672
  %v160 = vadd.f32 %v157, -0.28449672
  %v161 = vadd.f32 %v158, -0.28449672
  %v162 = vmul.f32 %v159, %v139
  %v163 = vmul.f32 %v160, %v141
  %v164 = vmul.f32 %v161, %v143
  %v165 = vadd.f32 %v162, 0.2548296
  %v166 = vadd.f32 %v163, 0.2548296
  %v167 = vadd.f32 %v164, 0.2548296
  %v168 = vmul.f32 %v165, %v139
  %v169 = vmul.f32 %v166, %v141
  %v170 = vmul.f32 %v167, %v143
  %v171 = vsub.f32 0.0, %v129
  %v172 = vsub.f32 0.0, %v130
  %v173 = vsub.f32 0.0, %v131
  %v174 = vmul.f32 %v171, %v129
  %v175 = vmul.f32 %v172, %v130
  %v176 = vmul.f32 %v173, %v131
  %v177 = vmul.f32 %v174, 1.442695
  %v178 = vpow.pop %v177
  %v179 = vmul.f32 %v175, 1.442695
  %v180 = vpow.pop %v179
  %v181 = vmul.f32 %v176, 1.442695
  %v182 = vpow.pop %v181
  %v183 = vmul.f32 %v168, %v178
  %v184 = vmul.f32 %v169, %v180
  %v185 = vmul.f32 %v170, %v182
  %v186 = vsub.f32 1.0, %v183
  %v187 = vsub.f32 1.0, %v184
  %v188 = vsub.f32 1.0, %v185
  %vm189 = vcmp.ge.f32.partialorder %v126, 0.0
  %vm190 = vcmp.ge.f32.partialorder %v127, 0.0
  %vm191 = vcmp.ge.f32.partialorder %v128, 0.0
  %v192 = vsub.f32 0.0, %v186
  %v193 = vsub.f32 0.0, %v187
  %v194 = vsub.f32 0.0, %v188
  %v195 = vsel %vm189, %v186, %v192
  %v196 = vsel %vm190, %v187, %v193
  %v197 = vsel %vm191, %v188, %v194
  %v198 = vadd.f32 %v195, 1.0
  %v199 = vadd.f32 %v196, 1.0
  %v200 = vadd.f32 %v197, 1.0
  %v201 = vmul.f32 %v123, %v198
  %v202 = vmul.f32 %v124, %v199
  %v203 = vmul.f32 %v125, %v200
  %vm204 = vcmask 130048
  %205 = vst.msk [vmem:[%s3] sm:$0xff] %vm204, %v201
  %206 = vst.msk [vmem:[%s3 + $0x8] sm:$0xff] %vm204, %v202
  %vm207 = vcmask 125952
  %208 = vst.msk [vmem:[%s3 + $0x10] sm:$0xf] %vm207, %v203
  // Predicated region
  $region14: #{forward.8} parent=0 // pred_check
    _
  $region15: #{forward.8} parent=0 // pred_check_branch
    %210 = sbr.rel (0) target = $region17
  $region16: #{forward.8} parent=0 // pred_region
    _
  $region17: #{forward.8} parent=0 // pred_fallthru
    _
  // Predicated region
  $region18: #{forward.8} parent=0 // pred_check
    _
  $region19: #{forward.8} parent=0 // pred_check_branch
    %212 = sbr.rel (0) target = $region21
  $region20: #{forward.8} parent=0 // pred_region
    _
  $region21: #{forward.8} parent=0 // pred_fallthru
    _

// kernel: forward.9
$region0: #{forward.9}
  #allocation0 [shape = 'u32[]', space=smem, size = 0x4, offset = 0x4, fixed_abs, tag = 'smem constant byte address 0x4 - core index']
  #allocation1 [shape = 'u32[144,128]{1,0:T(1,128)}', space=vmem, size = 0x12000, scoped, tag = 'internal scratch']
  %s0 = inlined_call_operand.vmem [shape: f32[2,5,32], index: 0, kind: input, shape index: {}]
  %s1 = inlined_call_operand.vmem [shape: f32[5,32], index: 1, kind: input, shape index: {}]
  %s2 = inlined_call_operand.vmem [shape: f32[32,32], index: 2, kind: input, shape index: {}]
  %s3 = inlined_call_operand.vmem [shape: f32[1,32], index: 3, kind: input, shape index: {}]
  %s4 = inlined_call_operand.vmem [shape: f32[2,1,32], index: 4, kind: input, shape index: {}]
  %s5 = inlined_call_operand.vmem [shape: f32[2,1,32], index: 5, kind: input, shape index: {}]
  %s6 = inlined_call_operand.vmem [shape: f32[2,32,96], index: 6, kind: input, shape index: {}]
  %s7 = inlined_call_operand.vmem [shape: f32[2,1,96], index: 7, kind: input, shape index: {}]
  %s8 = inlined_call_operand.vmem [shape: f32[2,32,32], index: 8, kind: input, shape index: {}]
  %s9 = inlined_call_operand.vmem [shape: f32[2,1,32], index: 9, kind: input, shape index: {}]
  %s10 = inlined_call_operand.vmem [shape: f32[2,1,32], index: 10, kind: input, shape index: {}]
  %s11 = inlined_call_operand.vmem [shape: f32[2,1,32], index: 11, kind: input, shape index: {}]
  %s12 = inlined_call_operand.vmem [shape: f32[2,32,64], index: 12, kind: input, shape index: {}]
  %s13 = inlined_call_operand.vmem [shape: f32[2,1,64], index: 13, kind: input, shape index: {}]
  %s14 = inlined_call_operand.vmem [shape: f32[2,64,32], index: 14, kind: input, shape index: {}]
  %s15 = inlined_call_operand.vmem [shape: f32[2,1,32], index: 15, kind: input, shape index: {}]
  %s16 = inlined_call_operand.vmem [shape: f32[32,32], index: 16, kind: input, shape index: {}]
  %s17 = inlined_call_operand.vmem [shape: f32[1,32], index: 17, kind: input, shape index: {}]
  %s18 = inlined_call_operand.vmem [shape: f32[1,32], index: 18, kind: input, shape index: {}]
  %s19 = inlined_call_operand.vmem [shape: f32[1,32], index: 19, kind: input, shape index: {}]
  %s20 = inlined_call_operand.vmem [shape: f32[32,10], index: 20, kind: input, shape index: {}]
  %s21 = inlined_call_operand.vmem [shape: f32[1,10], index: 21, kind: input, shape index: {}]
  %s22 = inlined_call_operand.hbm [shape: f32[2,1,10], index: 22, kind: output, shape index: {}]
  %s23 = sld [smem:[#allocation0]]
  $region121: #{forward.9} parent=0
    _
  %s25 = ssub.s32 1, %s23
  %s26 = scalar_select 0, %s25, %s23
  $region1: #{forward.9} parent=0
    #allocation2 [shape = 'u8[1024]{0}', space=vmem, size = 0x400, scoped, tag = 'output window, operand 0']
    #allocation3 [shape = 's32[2]{0}', space=sflag, size = 0x8, scoped, tag = 'scoped memory for forward.9']
    %27 = vsyncpa [#allocation3], 0
    %s28 = scalar_lea.sflag [#allocation3], 1
    %29 = vsyncpa %s28, 0
    loop: start=0, step=1, limit=4
    $region2: #{forward.9} parent=1 // loop_pre_header
      _
    $region3: #{forward.9} parent=1 // loop_header
      %s31 = sphi 0, %s35
      %p32 = scmp.ge.s32.totalorder %s31, 4
      %s41 = sphi 0, %s43
      %s44 = sphi 0, %s41
      %s45 = sphi 0, %s44
      %s61 = sphi 0, %s45
      %s65 = sphi 0, %s65
      %s67 = sphi 0, %s65
      %s68 = sphi 0, %s67
      %s82 = sphi 0, %s68
      %s86 = sphi 0, %s86
      %s88 = sphi 0, %s86
      %s89 = sphi 0, %s88
      %s103 = sphi 0, %s89
      %s107 = sphi 0, %s107
      %s109 = sphi 0, %s107
      %s110 = sphi 0, %s109
      %s124 = sphi 0, %s110
      %s128 = sphi 0, %s128
      %s130 = sphi 0, %s128
      %s131 = sphi 0, %s130
      %s145 = sphi 0, %s131
      %s149 = sphi 0, %s149
      %s151 = sphi 0, %s149
      %s152 = sphi 0, %s151
      %s166 = sphi 0, %s152
      %s170 = sphi 0, %s170
      %s172 = sphi 0, %s170
      %s173 = sphi 0, %s172
      %s187 = sphi 0, %s173
      %s191 = sphi 0, %s191
      %s193 = sphi 0, %s191
      %s194 = sphi 0, %s193
      %s208 = sphi 0, %s194
      %s212 = sphi 0, %s212
      %s214 = sphi 0, %s212
      %s215 = sphi 0, %s214
      %s229 = sphi 0, %s215
      %s233 = sphi 0, %s233
      %s235 = sphi 0, %s233
      %s236 = sphi 0, %s235
      %s250 = sphi 0, %s236
      %s254 = sphi 0, %s254
      %s256 = sphi 0, %s254
      %s257 = sphi 0, %s256
      %s271 = sphi 0, %s257
      %s275 = sphi 0, %s275
      %s277 = sphi 0, %s275
      %s278 = sphi 0, %s277
      %s292 = sphi 0, %s278
      %s296 = sphi 0, %s296
      %s298 = sphi 0, %s296
      %s299 = sphi 0, %s298
      %s313 = sphi 0, %s299
      %s317 = sphi 0, %s317
      %s319 = sphi 0, %s317
      %s320 = sphi 0, %s319
      %s334 = sphi 0, %s320
      %s338 = sphi 0, %s338
      %s340 = sphi 0, %s338
      %s341 = sphi 0, %s340
      %s355 = sphi 0, %s341
      %s359 = sphi 0, %s359
      %s361 = sphi 0, %s359
      %s362 = sphi 0, %s361
      %s376 = sphi 0, %s362
      %s380 = sphi 0, %s380
      %s382 = sphi 0, %s380
      %s383 = sphi 0, %s382
      %s397 = sphi 0, %s383
      %s401 = sphi 0, %s401
      %s403 = sphi 0, %s401
      %s404 = sphi 0, %s403
      %s418 = sphi 0, %s404
      %s422 = sphi 0, %s422
      %s424 = sphi 0, %s422
      %s425 = sphi 0, %s424
      %s439 = sphi 0, %s425
      %s443 = sphi 0, %s443
      %s445 = sphi 0, %s443
      %s446 = sphi 0, %s445
      %s460 = sphi 0, %s446
      %s464 = sphi 0, %s464
      %s466 = sphi 0, %s464
      %s467 = sphi 0, %s466
      %s481 = sphi 0, %s467
      %s485 = sphi 0, %s485
      %s487 = sphi 0, %s485
      %s488 = sphi 0, %s487
      %s502 = sphi 0, %s488
      %s508 = sphi 0, %s510
      %s511 = sphi 0, %s508
      %s512 = sphi 0, %s511
      %s528 = sphi 0, %s512
    $region4: #{forward.9} parent=1 // loop_header_branch
      %34 = sbr.rel (%p32) target = $region8
    $region5: #{forward.9} parent=1 // loop_body
      %s36 = ssub.s32 %s31, 1
      %s37 = ssub.s32 %s31, 2
      %s38 = sadd.s32 %s31, 1
      %s39 = ssub.s32 %s31, %s38
      %p40 = scmp.eq.s32.totalorder %s39, 0
      %s42 = sadd.s32 %s41, 1
      %s43 = scalar_select %p40, %s41, %s42
      %p46 = pneg %p40
      %p47 = scmp.eq.s32.totalorder %s31, 1
      %p48 = por %p46, %p47
      %p49 = scmp.ne.s32.totalorder %s41, %s44
      %p50 = scmp.eq.s32.totalorder %s31, 0
      %p51 = por %p49, %p50
      %p52 = scmp.ne.s32.totalorder %s41, %s44
      %p53 = scmp.eq.s32.totalorder %s36, 1
      %p54 = por %p52, %p53
      %p55 = scmp.ne.s32.totalorder %s44, %s45
      %p56 = scmp.eq.s32.totalorder %s36, 0
      %p57 = por %p55, %p56
      %p58 = scmp.ne.s32.totalorder %s44, %s45
      %p59 = scmp.eq.s32.totalorder %s37, 1
      %p60 = por %p58, %p59
      %p62 = scmp.ne.s32.totalorder %s45, %s61
      %p63 = scmp.eq.s32.totalorder %s37, 0
      %p64 = por %p62, %p63
      %s66 = sadd.s32 %s65, 1
      %p69 = scmp.eq.s32.totalorder %s31, 1
      %p70 = scmp.ne.s32.totalorder %s65, %s67
      %p71 = scmp.eq.s32.totalorder %s31, 0
      %p72 = por %p70, %p71
      %p73 = scmp.ne.s32.totalorder %s65, %s67
      %p74 = scmp.eq.s32.totalorder %s36, 1
      %p75 = por %p73, %p74
      %p76 = scmp.ne.s32.totalorder %s67, %s68
      %p77 = scmp.eq.s32.totalorder %s36, 0
      %p78 = por %p76, %p77
      %p79 = scmp.ne.s32.totalorder %s67, %s68
      %p80 = scmp.eq.s32.totalorder %s37, 1
      %p81 = por %p79, %p80
      %p83 = scmp.ne.s32.totalorder %s68, %s82
      %p84 = scmp.eq.s32.totalorder %s37, 0
      %p85 = por %p83, %p84
      %s87 = sadd.s32 %s86, 1
      %p90 = scmp.eq.s32.totalorder %s31, 1
      %p91 = scmp.ne.s32.totalorder %s86, %s88
      %p92 = scmp.eq.s32.totalorder %s31, 0
      %p93 = por %p91, %p92
      %p94 = scmp.ne.s32.totalorder %s86, %s88
      %p95 = scmp.eq.s32.totalorder %s36, 1
      %p96 = por %p94, %p95
      %p97 = scmp.ne.s32.totalorder %s88, %s89
      %p98 = scmp.eq.s32.totalorder %s36, 0
      %p99 = por %p97, %p98
      %p100 = scmp.ne.s32.totalorder %s88, %s89
      %p101 = scmp.eq.s32.totalorder %s37, 1
      %p102 = por %p100, %p101
      %p104 = scmp.ne.s32.totalorder %s89, %s103
      %p105 = scmp.eq.s32.totalorder %s37, 0
      %p106 = por %p104, %p105
      %s108 = sadd.s32 %s107, 1
      %p111 = scmp.eq.s32.totalorder %s31, 1
      %p112 = scmp.ne.s32.totalorder %s107, %s109
      %p113 = scmp.eq.s32.totalorder %s31, 0
      %p114 = por %p112, %p113
      %p115 = scmp.ne.s32.totalorder %s107, %s109
      %p116 = scmp.eq.s32.totalorder %s36, 1
      %p117 = por %p115, %p116
      %p118 = scmp.ne.s32.totalorder %s109, %s110
      %p119 = scmp.eq.s32.totalorder %s36, 0
      %p120 = por %p118, %p119
      %p121 = scmp.ne.s32.totalorder %s109, %s110
      %p122 = scmp.eq.s32.totalorder %s37, 1
      %p123 = por %p121, %p122
      %p125 = scmp.ne.s32.totalorder %s110, %s124
      %p126 = scmp.eq.s32.totalorder %s37, 0
      %p127 = por %p125, %p126
      %s129 = sadd.s32 %s128, 1
      %p132 = scmp.eq.s32.totalorder %s31, 1
      %p133 = scmp.ne.s32.totalorder %s128, %s130
      %p134 = scmp.eq.s32.totalorder %s31, 0
      %p135 = por %p133, %p134
      %p136 = scmp.ne.s32.totalorder %s128, %s130
      %p137 = scmp.eq.s32.totalorder %s36, 1
      %p138 = por %p136, %p137
      %p139 = scmp.ne.s32.totalorder %s130, %s131
      %p140 = scmp.eq.s32.totalorder %s36, 0
      %p141 = por %p139, %p140
      %p142 = scmp.ne.s32.totalorder %s130, %s131
      %p143 = scmp.eq.s32.totalorder %s37, 1
      %p144 = por %p142, %p143
      %p146 = scmp.ne.s32.totalorder %s131, %s145
      %p147 = scmp.eq.s32.totalorder %s37, 0
      %p148 = por %p146, %p147
      %s150 = sadd.s32 %s149, 1
      %p153 = scmp.eq.s32.totalorder %s31, 1
      %p154 = scmp.ne.s32.totalorder %s149, %s151
      %p155 = scmp.eq.s32.totalorder %s31, 0
      %p156 = por %p154, %p155
      %p157 = scmp.ne.s32.totalorder %s149, %s151
      %p158 = scmp.eq.s32.totalorder %s36, 1
      %p159 = por %p157, %p158
      %p160 = scmp.ne.s32.totalorder %s151, %s152
      %p161 = scmp.eq.s32.totalorder %s36, 0
      %p162 = por %p160, %p161
      %p163 = scmp.ne.s32.totalorder %s151, %s152
      %p164 = scmp.eq.s32.totalorder %s37, 1
      %p165 = por %p163, %p164
      %p167 = scmp.ne.s32.totalorder %s152, %s166
      %p168 = scmp.eq.s32.totalorder %s37, 0
      %p169 = por %p167, %p168
      %s171 = sadd.s32 %s170, 1
      %p174 = scmp.eq.s32.totalorder %s31, 1
      %p175 = scmp.ne.s32.totalorder %s170, %s172
      %p176 = scmp.eq.s32.totalorder %s31, 0
      %p177 = por %p175, %p176
      %p178 = scmp.ne.s32.totalorder %s170, %s172
      %p179 = scmp.eq.s32.totalorder %s36, 1
      %p180 = por %p178, %p179
      %p181 = scmp.ne.s32.totalorder %s172, %s173
      %p182 = scmp.eq.s32.totalorder %s36, 0
      %p183 = por %p181, %p182
      %p184 = scmp.ne.s32.totalorder %s172, %s173
      %p185 = scmp.eq.s32.totalorder %s37, 1
      %p186 = por %p184, %p185
      %p188 = scmp.ne.s32.totalorder %s173, %s187
      %p189 = scmp.eq.s32.totalorder %s37, 0
      %p190 = por %p188, %p189
      %s192 = sadd.s32 %s191, 1
      %p195 = scmp.eq.s32.totalorder %s31, 1
      %p196 = scmp.ne.s32.totalorder %s191, %s193
      %p197 = scmp.eq.s32.totalorder %s31, 0
      %p198 = por %p196, %p197
      %p199 = scmp.ne.s32.totalorder %s191, %s193
      %p200 = scmp.eq.s32.totalorder %s36, 1
      %p201 = por %p199, %p200
      %p202 = scmp.ne.s32.totalorder %s193, %s194
      %p203 = scmp.eq.s32.totalorder %s36, 0
      %p204 = por %p202, %p203
      %p205 = scmp.ne.s32.totalorder %s193, %s194
      %p206 = scmp.eq.s32.totalorder %s37, 1
      %p207 = por %p205, %p206
      %p209 = scmp.ne.s32.totalorder %s194, %s208
      %p210 = scmp.eq.s32.totalorder %s37, 0
      %p211 = por %p209, %p210
      %s213 = sadd.s32 %s212, 1
      %p216 = scmp.eq.s32.totalorder %s31, 1
      %p217 = scmp.ne.s32.totalorder %s212, %s214
      %p218 = scmp.eq.s32.totalorder %s31, 0
      %p219 = por %p217, %p218
      %p220 = scmp.ne.s32.totalorder %s212, %s214
      %p221 = scmp.eq.s32.totalorder %s36, 1
      %p222 = por %p220, %p221
      %p223 = scmp.ne.s32.totalorder %s214, %s215
      %p224 = scmp.eq.s32.totalorder %s36, 0
      %p225 = por %p223, %p224
      %p226 = scmp.ne.s32.totalorder %s214, %s215
      %p227 = scmp.eq.s32.totalorder %s37, 1
      %p228 = por %p226, %p227
      %p230 = scmp.ne.s32.totalorder %s215, %s229
      %p231 = scmp.eq.s32.totalorder %s37, 0
      %p232 = por %p230, %p231
      %s234 = sadd.s32 %s233, 1
      %p237 = scmp.eq.s32.totalorder %s31, 1
      %p238 = scmp.ne.s32.totalorder %s233, %s235
      %p239 = scmp.eq.s32.totalorder %s31, 0
      %p240 = por %p238, %p239
      %p241 = scmp.ne.s32.totalorder %s233, %s235
      %p242 = scmp.eq.s32.totalorder %s36, 1
      %p243 = por %p241, %p242
      %p244 = scmp.ne.s32.totalorder %s235, %s236
      %p245 = scmp.eq.s32.totalorder %s36, 0
      %p246 = por %p244, %p245
      %p247 = scmp.ne.s32.totalorder %s235, %s236
      %p248 = scmp.eq.s32.totalorder %s37, 1
      %p249 = por %p247, %p248
      %p251 = scmp.ne.s32.totalorder %s236, %s250
      %p252 = scmp.eq.s32.totalorder %s37, 0
      %p253 = por %p251, %p252
      %s255 = sadd.s32 %s254, 1
      %p258 = scmp.eq.s32.totalorder %s31, 1
      %p259 = scmp.ne.s32.totalorder %s254, %s256
      %p260 = scmp.eq.s32.totalorder %s31, 0
      %p261 = por %p259, %p260
      %p262 = scmp.ne.s32.totalorder %s254, %s256
      %p263 = scmp.eq.s32.totalorder %s36, 1
      %p264 = por %p262, %p263
      %p265 = scmp.ne.s32.totalorder %s256, %s257
      %p266 = scmp.eq.s32.totalorder %s36, 0
      %p267 = por %p265, %p266
      %p268 = scmp.ne.s32.totalorder %s256, %s257
      %p269 = scmp.eq.s32.totalorder %s37, 1
      %p270 = por %p268, %p269
      %p272 = scmp.ne.s32.totalorder %s257, %s271
      %p273 = scmp.eq.s32.totalorder %s37, 0
      %p274 = por %p272, %p273
      %s276 = sadd.s32 %s275, 1
      %p279 = scmp.eq.s32.totalorder %s31, 1
      %p280 = scmp.ne.s32.totalorder %s275, %s277
      %p281 = scmp.eq.s32.totalorder %s31, 0
      %p282 = por %p280, %p281
      %p283 = scmp.ne.s32.totalorder %s275, %s277
      %p284 = scmp.eq.s32.totalorder %s36, 1
      %p285 = por %p283, %p284
      %p286 = scmp.ne.s32.totalorder %s277, %s278
      %p287 = scmp.eq.s32.totalorder %s36, 0
      %p288 = por %p286, %p287
      %p289 = scmp.ne.s32.totalorder %s277, %s278
      %p290 = scmp.eq.s32.totalorder %s37, 1
      %p291 = por %p289, %p290
      %p293 = scmp.ne.s32.totalorder %s278, %s292
      %p294 = scmp.eq.s32.totalorder %s37, 0
      %p295 = por %p293, %p294
      %s297 = sadd.s32 %s296, 1
      %p300 = scmp.eq.s32.totalorder %s31, 1
      %p301 = scmp.ne.s32.totalorder %s296, %s298
      %p302 = scmp.eq.s32.totalorder %s31, 0
      %p303 = por %p301, %p302
      %p304 = scmp.ne.s32.totalorder %s296, %s298
      %p305 = scmp.eq.s32.totalorder %s36, 1
      %p306 = por %p304, %p305
      %p307 = scmp.ne.s32.totalorder %s298, %s299
      %p308 = scmp.eq.s32.totalorder %s36, 0
      %p309 = por %p307, %p308
      %p310 = scmp.ne.s32.totalorder %s298, %s299
      %p311 = scmp.eq.s32.totalorder %s37, 1
      %p312 = por %p310, %p311
      %p314 = scmp.ne.s32.totalorder %s299, %s313
      %p315 = scmp.eq.s32.totalorder %s37, 0
      %p316 = por %p314, %p315
      %s318 = sadd.s32 %s317, 1
      %p321 = scmp.eq.s32.totalorder %s31, 1
      %p322 = scmp.ne.s32.totalorder %s317, %s319
      %p323 = scmp.eq.s32.totalorder %s31, 0
      %p324 = por %p322, %p323
      %p325 = scmp.ne.s32.totalorder %s317, %s319
      %p326 = scmp.eq.s32.totalorder %s36, 1
      %p327 = por %p325, %p326
      %p328 = scmp.ne.s32.totalorder %s319, %s320
      %p329 = scmp.eq.s32.totalorder %s36, 0
      %p330 = por %p328, %p329
      %p331 = scmp.ne.s32.totalorder %s319, %s320
      %p332 = scmp.eq.s32.totalorder %s37, 1
      %p333 = por %p331, %p332
      %p335 = scmp.ne.s32.totalorder %s320, %s334
      %p336 = scmp.eq.s32.totalorder %s37, 0
      %p337 = por %p335, %p336
      %s339 = sadd.s32 %s338, 1
      %p342 = scmp.eq.s32.totalorder %s31, 1
      %p343 = scmp.ne.s32.totalorder %s338, %s340
      %p344 = scmp.eq.s32.totalorder %s31, 0
      %p345 = por %p343, %p344
      %p346 = scmp.ne.s32.totalorder %s338, %s340
      %p347 = scmp.eq.s32.totalorder %s36, 1
      %p348 = por %p346, %p347
      %p349 = scmp.ne.s32.totalorder %s340, %s341
      %p350 = scmp.eq.s32.totalorder %s36, 0
      %p351 = por %p349, %p350
      %p352 = scmp.ne.s32.totalorder %s340, %s341
      %p353 = scmp.eq.s32.totalorder %s37, 1
      %p354 = por %p352, %p353
      %p356 = scmp.ne.s32.totalorder %s341, %s355
      %p357 = scmp.eq.s32.totalorder %s37, 0
      %p358 = por %p356, %p357
      %s360 = sadd.s32 %s359, 1
      %p363 = scmp.eq.s32.totalorder %s31, 1
      %p364 = scmp.ne.s32.totalorder %s359, %s361
      %p365 = scmp.eq.s32.totalorder %s31, 0
      %p366 = por %p364, %p365
      %p367 = scmp.ne.s32.totalorder %s359, %s361
      %p368 = scmp.eq.s32.totalorder %s36, 1
      %p369 = por %p367, %p368
      %p370 = scmp.ne.s32.totalorder %s361, %s362
      %p371 = scmp.eq.s32.totalorder %s36, 0
      %p372 = por %p370, %p371
      %p373 = scmp.ne.s32.totalorder %s361, %s362
      %p374 = scmp.eq.s32.totalorder %s37, 1
      %p375 = por %p373, %p374
      %p377 = scmp.ne.s32.totalorder %s362, %s376
      %p378 = scmp.eq.s32.totalorder %s37, 0
      %p379 = por %p377, %p378
      %s381 = sadd.s32 %s380, 1
      %p384 = scmp.eq.s32.totalorder %s31, 1
      %p385 = scmp.ne.s32.totalorder %s380, %s382
      %p386 = scmp.eq.s32.totalorder %s31, 0
      %p387 = por %p385, %p386
      %p388 = scmp.ne.s32.totalorder %s380, %s382
      %p389 = scmp.eq.s32.totalorder %s36, 1
      %p390 = por %p388, %p389
      %p391 = scmp.ne.s32.totalorder %s382, %s383
      %p392 = scmp.eq.s32.totalorder %s36, 0
      %p393 = por %p391, %p392
      %p394 = scmp.ne.s32.totalorder %s382, %s383
      %p395 = scmp.eq.s32.totalorder %s37, 1
      %p396 = por %p394, %p395
      %p398 = scmp.ne.s32.totalorder %s383, %s397
      %p399 = scmp.eq.s32.totalorder %s37, 0
      %p400 = por %p398, %p399
      %s402 = sadd.s32 %s401, 1
      %p405 = scmp.eq.s32.totalorder %s31, 1
      %p406 = scmp.ne.s32.totalorder %s401, %s403
      %p407 = scmp.eq.s32.totalorder %s31, 0
      %p408 = por %p406, %p407
      %p409 = scmp.ne.s32.totalorder %s401, %s403
      %p410 = scmp.eq.s32.totalorder %s36, 1
      %p411 = por %p409, %p410
      %p412 = scmp.ne.s32.totalorder %s403, %s404
      %p413 = scmp.eq.s32.totalorder %s36, 0
      %p414 = por %p412, %p413
      %p415 = scmp.ne.s32.totalorder %s403, %s404
      %p416 = scmp.eq.s32.totalorder %s37, 1
      %p417 = por %p415, %p416
      %p419 = scmp.ne.s32.totalorder %s404, %s418
      %p420 = scmp.eq.s32.totalorder %s37, 0
      %p421 = por %p419, %p420
      %s423 = sadd.s32 %s422, 1
      %p426 = scmp.eq.s32.totalorder %s31, 1
      %p427 = scmp.ne.s32.totalorder %s422, %s424
      %p428 = scmp.eq.s32.totalorder %s31, 0
      %p429 = por %p427, %p428
      %p430 = scmp.ne.s32.totalorder %s422, %s424
      %p431 = scmp.eq.s32.totalorder %s36, 1
      %p432 = por %p430, %p431
      %p433 = scmp.ne.s32.totalorder %s424, %s425
      %p434 = scmp.eq.s32.totalorder %s36, 0
      %p435 = por %p433, %p434
      %p436 = scmp.ne.s32.totalorder %s424, %s425
      %p437 = scmp.eq.s32.totalorder %s37, 1
      %p438 = por %p436, %p437
      %p440 = scmp.ne.s32.totalorder %s425, %s439
      %p441 = scmp.eq.s32.totalorder %s37, 0
      %p442 = por %p440, %p441
      %s444 = sadd.s32 %s443, 1
      %p447 = scmp.eq.s32.totalorder %s31, 1
      %p448 = scmp.ne.s32.totalorder %s443, %s445
      %p449 = scmp.eq.s32.totalorder %s31, 0
      %p450 = por %p448, %p449
      %p451 = scmp.ne.s32.totalorder %s443, %s445
      %p452 = scmp.eq.s32.totalorder %s36, 1
      %p453 = por %p451, %p452
      %p454 = scmp.ne.s32.totalorder %s445, %s446
      %p455 = scmp.eq.s32.totalorder %s36, 0
      %p456 = por %p454, %p455
      %p457 = scmp.ne.s32.totalorder %s445, %s446
      %p458 = scmp.eq.s32.totalorder %s37, 1
      %p459 = por %p457, %p458
      %p461 = scmp.ne.s32.totalorder %s446, %s460
      %p462 = scmp.eq.s32.totalorder %s37, 0
      %p463 = por %p461, %p462
      %s465 = sadd.s32 %s464, 1
      %p468 = scmp.eq.s32.totalorder %s31, 1
      %p469 = scmp.ne.s32.totalorder %s464, %s466
      %p470 = scmp.eq.s32.totalorder %s31, 0
      %p471 = por %p469, %p470
      %p472 = scmp.ne.s32.totalorder %s464, %s466
      %p473 = scmp.eq.s32.totalorder %s36, 1
      %p474 = por %p472, %p473
      %p475 = scmp.ne.s32.totalorder %s466, %s467
      %p476 = scmp.eq.s32.totalorder %s36, 0
      %p477 = por %p475, %p476
      %p478 = scmp.ne.s32.totalorder %s466, %s467
      %p479 = scmp.eq.s32.totalorder %s37, 1
      %p480 = por %p478, %p479
      %p482 = scmp.ne.s32.totalorder %s467, %s481
      %p483 = scmp.eq.s32.totalorder %s37, 0
      %p484 = por %p482, %p483
      %s486 = sadd.s32 %s485, 1
      %p489 = scmp.eq.s32.totalorder %s31, 1
      %p490 = scmp.ne.s32.totalorder %s485, %s487
      %p491 = scmp.eq.s32.totalorder %s31, 0
      %p492 = por %p490, %p491
      %p493 = scmp.ne.s32.totalorder %s485, %s487
      %p494 = scmp.eq.s32.totalorder %s36, 1
      %p495 = por %p493, %p494
      %p496 = scmp.ne.s32.totalorder %s487, %s488
      %p497 = scmp.eq.s32.totalorder %s36, 0
      %p498 = por %p496, %p497
      %p499 = scmp.ne.s32.totalorder %s487, %s488
      %p500 = scmp.eq.s32.totalorder %s37, 1
      %p501 = por %p499, %p500
      %p503 = scmp.ne.s32.totalorder %s488, %s502
      %p504 = scmp.eq.s32.totalorder %s37, 0
      %p505 = por %p503, %p504
      %s506 = ssub.s32 %s31, %s38
      %p507 = scmp.eq.s32.totalorder %s506, 0
      %s509 = sadd.s32 %s508, 1
      %s510 = scalar_select %p507, %s508, %s509
      %p513 = pneg %p507
      %p514 = scmp.eq.s32.totalorder %s31, 1
      %p515 = por %p513, %p514
      %p516 = scmp.ne.s32.totalorder %s508, %s511
      %p517 = scmp.eq.s32.totalorder %s31, 0
      %p518 = por %p516, %p517
      %p519 = scmp.ne.s32.totalorder %s508, %s511
      %p520 = scmp.eq.s32.totalorder %s36, 1
      %p521 = por %p519, %p520
      %p522 = scmp.ne.s32.totalorder %s511, %s512
      %p523 = scmp.eq.s32.totalorder %s36, 0
      %p524 = por %p522, %p523
      %p525 = scmp.ne.s32.totalorder %s511, %s512
      %p526 = scmp.eq.s32.totalorder %s37, 1
      %p527 = por %p525, %p526
      %p529 = scmp.ne.s32.totalorder %s512, %s528
      %p530 = scmp.eq.s32.totalorder %s37, 0
      %p531 = por %p529, %p530
      %p532 = scmp.le.s32.totalorder 1, %s31
      %p533 = scmp.lt.s32.totalorder %s31, 3
      %p534 = pnand %p532, %p533
      %p535 = pneg %p534
      // Predicated region
      $region9: #{forward.9} parent=5 // pred_check
        _
      $region10: #{forward.9} parent=5 // pred_check_branch
        %537 = sbr.rel (%p534) target = $region12
      $region11: #{forward.9} parent=5 // pred_region
        %s538 = ssub.s32 %s31, 1
        // Predicated region
        $region13: #{forward.9} parent=11 // pred_check
          %p539 = pneg %p78
        $region14: #{forward.9} parent=11 // pred_check_branch
          %541 = sbr.rel (%p539) target = $region16
        $region15: #{forward.9} parent=11 // pred_region
          _
        $region16: #{forward.9} parent=11 // pred_fallthru
          _
        // Predicated region
        $region17: #{forward.9} parent=11 // pred_check
          %p542 = pneg %p99
        $region18: #{forward.9} parent=11 // pred_check_branch
          %544 = sbr.rel (%p542) target = $region20
        $region19: #{forward.9} parent=11 // pred_region
          _
        $region20: #{forward.9} parent=11 // pred_fallthru
          _
        // Predicated region
        $region21: #{forward.9} parent=11 // pred_check
          %p545 = pneg %p120
        $region22: #{forward.9} parent=11 // pred_check_branch
          %547 = sbr.rel (%p545) target = $region24
        $region23: #{forward.9} parent=11 // pred_region
          _
        $region24: #{forward.9} parent=11 // pred_fallthru
          _
        // Predicated region
        $region25: #{forward.9} parent=11 // pred_check
          %p548 = pneg %p141
        $region26: #{forward.9} parent=11 // pred_check_branch
          %550 = sbr.rel (%p548) target = $region28
        $region27: #{forward.9} parent=11 // pred_region
          _
        $region28: #{forward.9} parent=11 // pred_fallthru
          _
        // Predicated region
        $region29: #{forward.9} parent=11 // pred_check
          %p551 = pneg %p162
        $region30: #{forward.9} parent=11 // pred_check_branch
          %553 = sbr.rel (%p551) target = $region32
        $region31: #{forward.9} parent=11 // pred_region
          _
        $region32: #{forward.9} parent=11 // pred_fallthru
          _
        // Predicated region
        $region33: #{forward.9} parent=11 // pred_check
          %p554 = pneg %p183
        $region34: #{forward.9} parent=11 // pred_check_branch
          %556 = sbr.rel (%p554) target = $region36
        $region35: #{forward.9} parent=11 // pred_region
          _
        $region36: #{forward.9} parent=11 // pred_fallthru
          _
        // Predicated region
        $region37: #{forward.9} parent=11 // pred_check
          %p557 = pneg %p204
        $region38: #{forward.9} parent=11 // pred_check_branch
          %559 = sbr.rel (%p557) target = $region40
        $region39: #{forward.9} parent=11 // pred_region
          _
        $region40: #{forward.9} parent=11 // pred_fallthru
          _
        // Predicated region
        $region41: #{forward.9} parent=11 // pred_check
          %p560 = pneg %p225
        $region42: #{forward.9} parent=11 // pred_check_branch
          %562 = sbr.rel (%p560) target = $region44
        $region43: #{forward.9} parent=11 // pred_region
          _
        $region44: #{forward.9} parent=11 // pred_fallthru
          _
        // Predicated region
        $region45: #{forward.9} parent=11 // pred_check
          %p563 = pneg %p246
        $region46: #{forward.9} parent=11 // pred_check_branch
          %565 = sbr.rel (%p563) target = $region48
        $region47: #{forward.9} parent=11 // pred_region
          _
        $region48: #{forward.9} parent=11 // pred_fallthru
          _
        // Predicated region
        $region49: #{forward.9} parent=11 // pred_check
          %p566 = pneg %p267
        $region50: #{forward.9} parent=11 // pred_check_branch
          %568 = sbr.rel (%p566) target = $region52
        $region51: #{forward.9} parent=11 // pred_region
          _
        $region52: #{forward.9} parent=11 // pred_fallthru
          _
        // Predicated region
        $region53: #{forward.9} parent=11 // pred_check
          %p569 = pneg %p288
        $region54: #{forward.9} parent=11 // pred_check_branch
          %571 = sbr.rel (%p569) target = $region56
        $region55: #{forward.9} parent=11 // pred_region
          _
        $region56: #{forward.9} parent=11 // pred_fallthru
          _
        // Predicated region
        $region57: #{forward.9} parent=11 // pred_check
          %p572 = pneg %p309
        $region58: #{forward.9} parent=11 // pred_check_branch
          %574 = sbr.rel (%p572) target = $region60
        $region59: #{forward.9} parent=11 // pred_region
          _
        $region60: #{forward.9} parent=11 // pred_fallthru
          _
        // Predicated region
        $region61: #{forward.9} parent=11 // pred_check
          %p575 = pneg %p330
        $region62: #{forward.9} parent=11 // pred_check_branch
          %577 = sbr.rel (%p575) target = $region64
        $region63: #{forward.9} parent=11 // pred_region
          _
        $region64: #{forward.9} parent=11 // pred_fallthru
          _
        // Predicated region
        $region65: #{forward.9} parent=11 // pred_check
          %p578 = pneg %p351
        $region66: #{forward.9} parent=11 // pred_check_branch
          %580 = sbr.rel (%p578) target = $region68
        $region67: #{forward.9} parent=11 // pred_region
          _
        $region68: #{forward.9} parent=11 // pred_fallthru
          _
        // Predicated region
        $region69: #{forward.9} parent=11 // pred_check
          %p581 = pneg %p372
        $region70: #{forward.9} parent=11 // pred_check_branch
          %583 = sbr.rel (%p581) target = $region72
        $region71: #{forward.9} parent=11 // pred_region
          _
        $region72: #{forward.9} parent=11 // pred_fallthru
          _
        // Predicated region
        $region73: #{forward.9} parent=11 // pred_check
          %p584 = pneg %p393
        $region74: #{forward.9} parent=11 // pred_check_branch
          %586 = sbr.rel (%p584) target = $region76
        $region75: #{forward.9} parent=11 // pred_region
          _
        $region76: #{forward.9} parent=11 // pred_fallthru
          _
        // Predicated region
        $region77: #{forward.9} parent=11 // pred_check
          %p587 = pneg %p414
        $region78: #{forward.9} parent=11 // pred_check_branch
          %589 = sbr.rel (%p587) target = $region80
        $region79: #{forward.9} parent=11 // pred_region
          _
        $region80: #{forward.9} parent=11 // pred_fallthru
          _
        // Predicated region
        $region81: #{forward.9} parent=11 // pred_check
          %p590 = pneg %p435
        $region82: #{forward.9} parent=11 // pred_check_branch
          %592 = sbr.rel (%p590) target = $region84
        $region83: #{forward.9} parent=11 // pred_region
          _
        $region84: #{forward.9} parent=11 // pred_fallthru
          _
        // Predicated region
        $region85: #{forward.9} parent=11 // pred_check
          %p593 = pneg %p456
        $region86: #{forward.9} parent=11 // pred_check_branch
          %595 = sbr.rel (%p593) target = $region88
        $region87: #{forward.9} parent=11 // pred_region
          _
        $region88: #{forward.9} parent=11 // pred_fallthru
          _
        // Predicated region
        $region89: #{forward.9} parent=11 // pred_check
          %p596 = pneg %p477
        $region90: #{forward.9} parent=11 // pred_check_branch
          %598 = sbr.rel (%p596) target = $region92
        $region91: #{forward.9} parent=11 // pred_region
          _
        $region92: #{forward.9} parent=11 // pred_fallthru
          _
        // Predicated region
        $region93: #{forward.9} parent=11 // pred_check
          %p599 = pneg %p498
        $region94: #{forward.9} parent=11 // pred_check_branch
          %601 = sbr.rel (%p599) target = $region96
        $region95: #{forward.9} parent=11 // pred_region
          _
        $region96: #{forward.9} parent=11 // pred_fallthru
          _
      $region12: #{forward.9} parent=5 // pred_fallthru
        _
      %p602 = scmp.lt.s32.totalorder %s31, 2
      // Predicated region
      $region97: #{forward.9} parent=5 // pred_check
        %p603 = pneg %p602
      $region98: #{forward.9} parent=5 // pred_check_branch
        %605 = sbr.rel (%p603) target = $region100
      $region99: #{forward.9} parent=5 // pred_region
        // Predicated region
        $region101: #{forward.9} parent=99 // pred_check
          %p606 = pneg %p51
        $region102: #{forward.9} parent=99 // pred_check_branch
          %608 = sbr.rel (%p606) target = $region104
        $region103: #{forward.9} parent=99 // pred_region
          %p609 = scmp.lt.s32.totalorder %s31, 1
          %s610 = scalar_select %p609, %s31, 1
          %s611 = smul.addr %s610, 8
          %s612 = scalar_lea.vmem %s0, %s611
        $region104: #{forward.9} parent=99 // pred_fallthru
          _
      $region100: #{forward.9} parent=5 // pred_fallthru
        _
      %p613 = scmp.le.s32.totalorder 1, %s31
      %p614 = scmp.lt.s32.totalorder %s31, 3
      %p615 = pnand %p613, %p614
      %p616 = pneg %p615
      // Predicated region
      $region105: #{forward.9} parent=5 // pred_check
        _
      $region106: #{forward.9} parent=5 // pred_check_branch
        %618 = sbr.rel (%p615) target = $region108
      $region107: #{forward.9} parent=5 // pred_region
        %s619 = ssub.s32 %s31, 1
        %p620 = scmp.lt.s32.totalorder %s36, 1
        %s621 = scalar_select %p620, %s36, 1
        %s622 = smul.addr %s621, 8
        %s623 = scalar_lea.vmem %s0, %s622
        %p624 = pneg %p57
        %p625 = pneg %p54
        %p626 = pneg %p78
        %p627 = pneg %p75
        %p628 = pneg %p99
        %p629 = pneg %p96
        %p630 = pneg %p120
        %p631 = pneg %p117
        %p632 = pneg %p141
        %p633 = pneg %p138
        %p634 = pneg %p162
        %p635 = pneg %p159
        %p636 = pneg %p183
        %p637 = pneg %p180
        %p638 = pneg %p204
        %p639 = pneg %p201
        %p640 = pneg %p225
        %p641 = pneg %p222
        %p642 = pneg %p246
        %p643 = pneg %p243
        %p644 = pneg %p267
        %p645 = pneg %p264
        %p646 = pneg %p288
        %p647 = pneg %p285
        %p648 = pneg %p309
        %p649 = pneg %p306
        %p650 = pneg %p330
        %p651 = pneg %p327
        %p652 = pneg %p351
        %p653 = pneg %p348
        %p654 = pneg %p372
        %p655 = pneg %p369
        %p656 = pneg %p393
        %p657 = pneg %p390
        %p658 = pneg %p414
        %p659 = pneg %p411
        %p660 = pneg %p435
        %p661 = pneg %p432
        %p662 = pneg %p456
        %p663 = pneg %p453
        %p664 = pneg %p477
        %p665 = pneg %p474
        %p666 = pneg %p498
        %p667 = pneg %p495
        %p668 = pneg %p524
        %p669 = pneg %p521
        %s670 = sand.u32 %s511, 1
        %s671 = scalar_lea.sflag [#allocation3], %s670
        %s672 = sand.u32 %s511, 1
        %s673 = scalar_lea.vmem [#allocation2], %s672
        %p674 = scmp.lt.s32.totalorder %s36, 1
        %s675 = scalar_select %p674, %s36, 1
        %s676 = smul.addr %s675, 8
        %s677 = scalar_lea.vmem %s0, %s676
        %v678 = vld [vmem:[%s677] sm:$0x1f]
        %v679 = vld [vmem:[%s2] sm:$0xff]
        %v680 = vld [vmem:[%s2 + $0x8] sm:$0xff]
        %v681 = vld [vmem:[%s2 + $0x10] sm:$0xff]
        %v682 = vld [vmem:[%s2 + $0x18] sm:$0xff]
        %v683 = vld [vmem:[%s3] sm:$0x1]
        %v685 = vlaneseq
        %v686 = vshrl.u32 %v685, 7
        %v687 = vsub.s32 0, %v686
        %v688 = vrot.slane %v683, %v687
        %vm690 = vcmask 261120
        %v692 = vsel %vm690, %v678, 0
        %694 = vmatprep.subr.mxu0 0.0
        %695 = vmatpush1.msra.mxu0 %v679
        %696 = vmatprep.subr.mxu0 0.0
        %697 = vmatpush1.msra.mxu0 %v680
        %698 = vmatprep.subr.mxu0 0.0
        %699 = vmatpush1.msra.mxu0 %v681
        %700 = vmatprep.subr.mxu0 0.0
        %701 = vmatpush1.msra.mxu0 %v682
        %702 = vmatprep.subr.mxu0 0.0
        %703 = vmatpush1.msra.mxu0 0.0
        %704 = vmatprep.subr.mxu0 0.0
        %705 = vmatpush1.msra.mxu0 0.0
        %706 = vmatprep.subr.mxu0 0.0
        %707 = vmatpush1.msra.mxu0 0.0
        %708 = vmatprep.subr.mxu0 0.0
        %709 = vmatpush1.msra.mxu0 0.0
        %710 = vmatprep.subr.mxu0 0.0
        %711 = vmatpush1.msra.mxu0 0.0
        %712 = vmatprep.subr.mxu0 0.0
        %713 = vmatpush1.msra.mxu0 0.0
        %714 = vmatprep.subr.mxu0 0.0
        %715 = vmatpush1.msra.mxu0 0.0
        %716 = vmatprep.subr.mxu0 0.0
        %717 = vmatpush1.msra.mxu0 0.0
        %718 = vmatprep.subr.mxu0 0.0
        %719 = vmatpush1.msra.mxu0 0.0
        %720 = vmatprep.subr.mxu0 0.0
        %721 = vmatpush1.msra.mxu0 0.0
        %722 = vmatprep.subr.mxu0 0.0
        %723 = vmatpush1.msra.mxu0 0.0
        %724 = vmatprep.subr.mxu0 0.0
        %725 = vmatpush1.msra.mxu0 0.0
        %726 = vmatprep.subr.mxu0 0.0
        %727 = vmatpush1.msra.mxu0 0.0
        %728 = vmatprep.subr.mxu0 0.0
        %729 = vmatpush1.msra.mxu0 0.0
        %730 = vmatprep.subr.mxu0 0.0
        %731 = vmatpush1.msra.mxu0 0.0
        %732 = vmatprep.subr.mxu0 0.0
        %733 = vmatpush1.msra.mxu0 0.0
        %734 = vmatprep.subr.mxu0 0.0
        %735 = vmatpush1.msra.mxu0 0.0
        %736 = vmatprep.subr.mxu0 0.0
        %737 = vmatpush1.msra.mxu0 0.0
        %738 = vmatprep.subr.mxu0 0.0
        %739 = vmatpush1.msra.mxu0 0.0
        %740 = vmatprep.subr.mxu0 0.0
        %741 = vmatpush1.msra.mxu0 0.0
        %742 = vmatprep.subr.mxu0 0.0
        %743 = vmatpush1.msra.mxu0 0.0
        %744 = vmatprep.subr.mxu0 0.0
        %745 = vmatpush1.msra.mxu0 0.0
        %746 = vmatprep.subr.mxu0 0.0
        %747 = vmatpush1.msra.mxu0 0.0
        %748 = vmatprep.subr.mxu0 0.0
        %749 = vmatpush1.msra.mxu0 0.0
        %750 = vmatprep.subr.mxu0 0.0
        %751 = vmatpush1.msra.mxu0 0.0
        %752 = vmatprep.subr.mxu0 0.0
        %753 = vmatpush1.msra.mxu0 0.0
        %754 = vmatprep.subr.mxu0 0.0
        %755 = vmatpush1.msra.mxu0 0.0
        %756 = vmatprep.subr.mxu0 0.0
        %757 = vmatpush1.msra.mxu0 0.0
        %758 = vmatprep.mubr.f32.mxu0 0.0
        %759 = vmatmul.mubr.f32.gmra.mrb[0].mxu0 %v692
        %v760 = vpop.f32.mrb[0].mxu0
        %v761 = vadd.f32 %v688, %v760
        %v762 = vpop.f32.mrb[0].mxu0
        %763 = vdwg.mxu0
        %v764 = vld [vmem:[%s1] sm:$0x1f]
        %v765 = vadd.f32 %v761, %v764
        %v766 = vld [vmem:[%s4] sm:$0x1]
        %v767 = vld [vmem:[%s5] sm:$0x1]
        %vm768 = vcmask 258048
        %v769 = vsel %vm768, %v765, 0.0
        %770 = vadd.xlane.f32.xlu0 %v769
        %v771 = vpop.xlane.xlu0 %770
        %v772 = vrcp.pop 32.0
        %v773 = vmul.f32 %v771, %v772
        %v774 = vsub.f32 %v765, %v773
        %v775 = vmul.f32 %v774, %v774
        %v776 = vsel %vm768, %v775, 0.0
        %777 = vadd.xlane.f32.xlu0 %v776
        %v778 = vpop.xlane.xlu0 %777
        %v779 = vmul.f32 %v778, %v772
        %v780 = vadd.f32 %v779, 1e-05
        %v781 = vrsqrt.pop %v780
        %v782 = vmul.f32 %v774, %v781
        %v784 = vlaneseq
        %v785 = vshrl.u32 %v784, 7
        %v786 = vsub.s32 0, %v785
        %v787 = vrot.slane %v766, %v786
        %v789 = vmul.f32 %v782, %v787
        %v791 = vlaneseq
        %v792 = vshrl.u32 %v791, 7
        %v793 = vsub.s32 0, %v792
        %v794 = vrot.slane %v767, %v793
        %v796 = vadd.f32 %v789, %v794
        %v797 = vld [vmem:[%s6] sm:$0xff]
        %v798 = vld [vmem:[%s6 + $0x8] sm:$0xff]
        %v799 = vld [vmem:[%s6 + $0x10] sm:$0xff]
        %v800 = vld [vmem:[%s6 + $0x18] sm:$0xff]
        %v801 = vld [vmem:[%s7] sm:$0x1]
        %v803 = vlaneseq
        %v804 = vshrl.u32 %v803, 7
        %v805 = vsub.s32 0, %v804
        %v806 = vrot.slane %v801, %v805
        %v809 = vsel %vm690, %v796, 0
        %811 = vmatprep.subr.mxu0 0.0
        %812 = vmatpush1.msra.mxu0 %v797
        %813 = vmatprep.subr.mxu0 0.0
        %814 = vmatpush1.msra.mxu0 %v798
        %815 = vmatprep.subr.mxu0 0.0
        %816 = vmatpush1.msra.mxu0 %v799
        %817 = vmatprep.subr.mxu0 0.0
        %818 = vmatpush1.msra.mxu0 %v800
        %819 = vmatprep.subr.mxu0 0.0
        %820 = vmatpush1.msra.mxu0 0.0
        %821 = vmatprep.subr.mxu0 0.0
        %822 = vmatpush1.msra.mxu0 0.0
        %823 = vmatprep.subr.mxu0 0.0
        %824 = vmatpush1.msra.mxu0 0.0
        %825 = vmatprep.subr.mxu0 0.0
        %826 = vmatpush1.msra.mxu0 0.0
        %827 = vmatprep.subr.mxu0 0.0
        %828 = vmatpush1.msra.mxu0 0.0
        %829 = vmatprep.subr.mxu0 0.0
        %830 = vmatpush1.msra.mxu0 0.0
        %831 = vmatprep.subr.mxu0 0.0
        %832 = vmatpush1.msra.mxu0 0.0
        %833 = vmatprep.subr.mxu0 0.0
        %834 = vmatpush1.msra.mxu0 0.0
        %835 = vmatprep.subr.mxu0 0.0
        %836 = vmatpush1.msra.mxu0 0.0
        %837 = vmatprep.subr.mxu0 0.0
        %838 = vmatpush1.msra.mxu0 0.0
        %839 = vmatprep.subr.mxu0 0.0
        %840 = vmatpush1.msra.mxu0 0.0
        %841 = vmatprep.subr.mxu0 0.0
        %842 = vmatpush1.msra.mxu0 0.0
        %843 = vmatprep.subr.mxu0 0.0
        %844 = vmatpush1.msra.mxu0 0.0
        %845 = vmatprep.subr.mxu0 0.0
        %846 = vmatpush1.msra.mxu0 0.0
        %847 = vmatprep.subr.mxu0 0.0
        %848 = vmatpush1.msra.mxu0 0.0
        %849 = vmatprep.subr.mxu0 0.0
        %850 = vmatpush1.msra.mxu0 0.0
        %851 = vmatprep.subr.mxu0 0.0
        %852 = vmatpush1.msra.mxu0 0.0
        %853 = vmatprep.subr.mxu0 0.0
        %854 = vmatpush1.msra.mxu0 0.0
        %855 = vmatprep.subr.mxu0 0.0
        %856 = vmatpush1.msra.mxu0 0.0
        %857 = vmatprep.subr.mxu0 0.0
        %858 = vmatpush1.msra.mxu0 0.0
        %859 = vmatprep.subr.mxu0 0.0
        %860 = vmatpush1.msra.mxu0 0.0
        %861 = vmatprep.subr.mxu0 0.0
        %862 = vmatpush1.msra.mxu0 0.0
        %863 = vmatprep.subr.mxu0 0.0
        %864 = vmatpush1.msra.mxu0 0.0
        %865 = vmatprep.subr.mxu0 0.0
        %866 = vmatpush1.msra.mxu0 0.0
        %867 = vmatprep.subr.mxu0 0.0
        %868 = vmatpush1.msra.mxu0 0.0
        %869 = vmatprep.subr.mxu0 0.0
        %870 = vmatpush1.msra.mxu0 0.0
        %871 = vmatprep.subr.mxu0 0.0
        %872 = vmatpush1.msra.mxu0 0.0
        %873 = vmatprep.subr.mxu0 0.0
        %874 = vmatpush1.msra.mxu0 0.0
        %875 = vmatprep.mubr.f32.mxu0 0.0
        %876 = vmatmul.mubr.f32.gmra.mrb[0].mxu0 %v809
        %v877 = vpop.f32.mrb[0].mxu0
        %v878 = vadd.f32 %v806, %v877
        %v879 = vpop.f32.mrb[0].mxu0
        %880 = vdwg.mxu0
        %v881 = vld [vmem:[%s8] sm:$0xff]
        %v882 = vld [vmem:[%s8 + $0x8] sm:$0xff]
        %v883 = vld [vmem:[%s8 + $0x10] sm:$0xff]
        %v884 = vld [vmem:[%s8 + $0x18] sm:$0xff]
        %886 = vrot.lane.b32.xlu0 %v878, 96
        %v887 = vpop.permute.xlu0 %886
        %vm888 = vcmask 64512
        %v889 = vsel %vm888, %v878, 0
        %v891 = vsel %vm888, %v887, 0
        %893 = vmatprep.subr.mxu0 0.0
        %894 = vmatpush1.xpose.msra.mxu0 %v891
        %895 = vmatprep.subr.mxu0 0.0
        %896 = vmatpush1.xpose.msra.mxu0 0.0
        %897 = vmatprep.subr.mxu0 0.0
        %898 = vmatpush1.xpose.msra.mxu0 0.0
        %899 = vmatprep.subr.mxu0 0.0
        %900 = vmatpush1.xpose.msra.mxu0 0.0
        %901 = vmatprep.subr.mxu0 0.0
        %902 = vmatpush1.xpose.msra.mxu0 0.0
        %903 = vmatprep.subr.mxu0 0.0
        %904 = vmatpush1.xpose.msra.mxu0 0.0
        %905 = vmatprep.subr.mxu0 0.0
        %906 = vmatpush1.xpose.msra.mxu0 0.0
        %907 = vmatprep.subr.mxu0 0.0
        %908 = vmatpush1.xpose.msra.mxu0 0.0
        %909 = vmatprep.subr.mxu0 0.0
        %910 = vmatpush1.xpose.msra.mxu0 0.0
        %911 = vmatprep.subr.mxu0 0.0
        %912 = vmatpush1.xpose.msra.mxu0 0.0
        %913 = vmatprep.subr.mxu0 0.0
        %914 = vmatpush1.xpose.msra.mxu0 0.0
        %915 = vmatprep.subr.mxu0 0.0
        %916 = vmatpush1.xpose.msra.mxu0 0.0
        %917 = vmatprep.subr.mxu0 0.0
        %918 = vmatpush1.xpose.msra.mxu0 0.0
        %919 = vmatprep.subr.mxu0 0.0
        %920 = vmatpush1.xpose.msra.mxu0 0.0
        %921 = vmatprep.subr.mxu0 0.0
        %922 = vmatpush1.xpose.msra.mxu0 0.0
        %923 = vmatprep.subr.mxu0 0.0
        %924 = vmatpush1.xpose.msra.mxu0 0.0
        %925 = vmatprep.subr.mxu0 0.0
        %926 = vmatpush1.xpose.msra.mxu0 0.0
        %927 = vmatprep.subr.mxu0 0.0
        %928 = vmatpush1.xpose.msra.mxu0 0.0
        %929 = vmatprep.subr.mxu0 0.0
        %930 = vmatpush1.xpose.msra.mxu0 0.0
        %931 = vmatprep.subr.mxu0 0.0
        %932 = vmatpush1.xpose.msra.mxu0 0.0
        %933 = vmatprep.subr.mxu0 0.0
        %934 = vmatpush1.xpose.msra.mxu0 0.0
        %935 = vmatprep.subr.mxu0 0.0
        %936 = vmatpush1.xpose.msra.mxu0 0.0
        %937 = vmatprep.subr.mxu0 0.0
        %938 = vmatpush1.xpose.msra.mxu0 0.0
        %939 = vmatprep.subr.mxu0 0.0
        %940 = vmatpush1.xpose.msra.mxu0 0.0
        %941 = vmatprep.subr.mxu0 0.0
        %942 = vmatpush1.xpose.msra.mxu0 0.0
        %943 = vmatprep.subr.mxu0 0.0
        %944 = vmatpush1.xpose.msra.mxu0 0.0
        %945 = vmatprep.subr.mxu0 0.0
        %946 = vmatpush1.xpose.msra.mxu0 0.0
        %947 = vmatprep.subr.mxu0 0.0
        %948 = vmatpush1.xpose.msra.mxu0 0.0
        %949 = vmatprep.subr.mxu0 0.0
        %950 = vmatpush1.xpose.msra.mxu0 0.0
        %951 = vmatprep.subr.mxu0 0.0
        %952 = vmatpush1.xpose.msra.mxu0 0.0
        %953 = vmatprep.subr.mxu0 0.0
        %954 = vmatpush1.xpose.msra.mxu0 0.0
        %955 = vmatprep.subr.mxu0 0.0
        %956 = vmatpush1.xpose.msra.mxu0 0.0
        %957 = vmatprep.mubr.f32.mxu0 0.0
        %958 = vmatmul.mubr.f32.gmra.mrb[0].mxu0 %v889
        %v959 = vpop.f32.mrb[0].mxu0
        %v960 = vadd.f32 0.0, %v959
        %v961 = vpop.f32.mrb[0].mxu0
        %962 = vdwg.mxu0
        %v963 = vmul.f32 %v960, 0.35355338
        %vm964 = vcmask 36864
        %v965 = vsel %vm964, %v963, -inf
        %966 = vmax.xlane.f32.xlu0 %v965
        %v967 = vpop.xlane.xlu0 %966
        %v968 = vsub.f32 %v963, %v967
        %v969 = vmul.f32 %v968, 1.442695
        %v970 = vpow.pop %v969
        %v971 = vsel %vm964, %v970, 0.0
        %972 = vadd.xlane.f32.xlu0 %v971
        %v973 = vpop.xlane.xlu0 %972
        %v974 = vrcp.pop %v973
        %v975 = vmul.f32 %v970, %v974
        %976 = vrot.lane.b32.xlu0 %v878, 64
        %v977 = vpop.permute.xlu0 %976
        %vm978 = vcmask 39936
        %v980 = vsel %vm978, %v975, 0
        %vm982 = vcmask 1044480
        %v983 = vsel %vm982, %v977, 0
        %985 = vmatprep.subr.mxu0 0.0
        %986 = vmatpush1.msra.mxu0 %v983
        %987 = vmatprep.subr.mxu0 0.0
        %988 = vmatpush1.msra.mxu0 0.0
        %989 = vmatprep.subr.mxu0 0.0
        %990 = vmatpush1.msra.mxu0 0.0
        %991 = vmatprep.subr.mxu0 0.0
        %992 = vmatpush1.msra.mxu0 0.0
        %993 = vmatprep.subr.mxu0 0.0
        %994 = vmatpush1.msra.mxu0 0.0
        %995 = vmatprep.subr.mxu0 0.0
        %996 = vmatpush1.msra.mxu0 0.0
        %997 = vmatprep.subr.mxu0 0.0
        %998 = vmatpush1.msra.mxu0 0.0
        %999 = vmatprep.subr.mxu0 0.0
        %1000 = vmatpush1.msra.mxu0 0.0
        %1001 = vmatprep.subr.mxu0 0.0
        %1002 = vmatpush1.msra.mxu0 0.0
        %1003 = vmatprep.subr.mxu0 0.0
        %1004 = vmatpush1.msra.mxu0 0.0
        %1005 = vmatprep.subr.mxu0 0.0
        %1006 = vmatpush1.msra.mxu0 0.0
        %1007 = vmatprep.subr.mxu0 0.0
        %1008 = vmatpush1.msra.mxu0 0.0
        %1009 = vmatprep.subr.mxu0 0.0
        %1010 = vmatpush1.msra.mxu0 0.0
        %1011 = vmatprep.subr.mxu0 0.0
        %1012 = vmatpush1.msra.mxu0 0.0
        %1013 = vmatprep.subr.mxu0 0.0
        %1014 = vmatpush1.msra.mxu0 0.0
        %1015 = vmatprep.subr.mxu0 0.0
        %1016 = vmatpush1.msra.mxu0 0.0
        %1017 = vmatprep.subr.mxu0 0.0
        %1018 = vmatpush1.msra.mxu0 0.0
        %1019 = vmatprep.subr.mxu0 0.0
        %1020 = vmatpush1.msra.mxu0 0.0
        %1021 = vmatprep.subr.mxu0 0.0
        %1022 = vmatpush1.msra.mxu0 0.0
        %1023 = vmatprep.subr.mxu0 0.0
        %1024 = vmatpush1.msra.mxu0 0.0
        %1025 = vmatprep.subr.mxu0 0.0
        %1026 = vmatpush1.msra.mxu0 0.0
        %1027 = vmatprep.subr.mxu0 0.0
        %1028 = vmatpush1.msra.mxu0 0.0
        %1029 = vmatprep.subr.mxu0 0.0
        %1030 = vmatpush1.msra.mxu0 0.0
        %1031 = vmatprep.subr.mxu0 0.0
        %1032 = vmatpush1.msra.mxu0 0.0
        %1033 = vmatprep.subr.mxu0 0.0
        %1034 = vmatpush1.msra.mxu0 0.0
        %1035 = vmatprep.subr.mxu0 0.0
        %1036 = vmatpush1.msra.mxu0 0.0
        %1037 = vmatprep.subr.mxu0 0.0
        %1038 = vmatpush1.msra.mxu0 0.0
        %1039 = vmatprep.subr.mxu0 0.0
        %1040 = vmatpush1.msra.mxu0 0.0
        %1041 = vmatprep.subr.mxu0 0.0
        %1042 = vmatpush1.msra.mxu0 0.0
        %1043 = vmatprep.subr.mxu0 0.0
        %1044 = vmatpush1.msra.mxu0 0.0
        %1045 = vmatprep.subr.mxu0 0.0
        %1046 = vmatpush1.msra.mxu0 0.0
        %1047 = vmatprep.subr.mxu0 0.0
        %1048 = vmatpush1.msra.mxu0 0.0
        %1049 = vmatprep.mubr.f32.mxu0 0.0
        %1050 = vmatmul.mubr.f32.gmra.mrb[0].mxu0 %v980
        %v1051 = vpop.f32.mrb[0].mxu0
        %v1052 = vadd.f32 0.0, %v1051
        %v1053 = vpop.f32.mrb[0].mxu0
        %1054 = vdwg.mxu0
        %1055 = vrot.lane.b32.xlu0 %v878, 120
        %v1056 = vpop.permute.xlu0 %1055
        %1057 = vrot.lane.b32.xlu0 %v878, 88
        %v1058 = vpop.permute.xlu0 %1057
        %v1059 = vsel %vm888, %v1056, 0
        %v1061 = vsel %vm888, %v1058, 0
        %1063 = vmatprep.subr.mxu0 0.0
        %1064 = vmatpush1.xpose.msra.mxu0 %v1061
        %1065 = vmatprep.subr.mxu0 0.0
        %1066 = vmatpush1.xpose.msra.mxu0 0.0
        %1067 = vmatprep.subr.mxu0 0.0
        %1068 = vmatpush1.xpose.msra.mxu0 0.0
        %1069 = vmatprep.subr.mxu0 0.0
        %1070 = vmatpush1.xpose.msra.mxu0 0.0
        %1071 = vmatprep.subr.mxu0 0.0
        %1072 = vmatpush1.xpose.msra.mxu0 0.0
        %1073 = vmatprep.subr.mxu0 0.0
        %1074 = vmatpush1.xpose.msra.mxu0 0.0
        %1075 = vmatprep.subr.mxu0 0.0
        %1076 = vmatpush1.xpose.msra.mxu0 0.0
        %1077 = vmatprep.subr.mxu0 0.0
        %1078 = vmatpush1.xpose.msra.mxu0 0.0
        %1079 = vmatprep.subr.mxu0 0.0
        %1080 = vmatpush1.xpose.msra.mxu0 0.0
        %1081 = vmatprep.subr.mxu0 0.0
        %1082 = vmatpush1.xpose.msra.mxu0 0.0
        %1083 = vmatprep.subr.mxu0 0.0
        %1084 = vmatpush1.xpose.msra.mxu0 0.0
        %1085 = vmatprep.subr.mxu0 0.0
        %1086 = vmatpush1.xpose.msra.mxu0 0.0
        %1087 = vmatprep.subr.mxu0 0.0
        %1088 = vmatpush1.xpose.msra.mxu0 0.0
        %1089 = vmatprep.subr.mxu0 0.0
        %1090 = vmatpush1.xpose.msra.mxu0 0.0
        %1091 = vmatprep.subr.mxu0 0.0
        %1092 = vmatpush1.xpose.msra.mxu0 0.0
        %1093 = vmatprep.subr.mxu0 0.0
        %1094 = vmatpush1.xpose.msra.mxu0 0.0
        %1095 = vmatprep.subr.mxu0 0.0
        %1096 = vmatpush1.xpose.msra.mxu0 0.0
        %1097 = vmatprep.subr.mxu0 0.0
        %1098 = vmatpush1.xpose.msra.mxu0 0.0
        %1099 = vmatprep.subr.mxu0 0.0
        %1100 = vmatpush1.xpose.msra.mxu0 0.0
        %1101 = vmatprep.subr.mxu0 0.0
        %1102 = vmatpush1.xpose.msra.mxu0 0.0
        %1103 = vmatprep.subr.mxu0 0.0
        %1104 = vmatpush1.xpose.msra.mxu0 0.0
        %1105 = vmatprep.subr.mxu0 0.0
        %1106 = vmatpush1.xpose.msra.mxu0 0.0
        %1107 = vmatprep.subr.mxu0 0.0
        %1108 = vmatpush1.xpose.msra.mxu0 0.0
        %1109 = vmatprep.subr.mxu0 0.0
        %1110 = vmatpush1.xpose.msra.mxu0 0.0
        %1111 = vmatprep.subr.mxu0 0.0
        %1112 = vmatpush1.xpose.msra.mxu0 0.0
        %1113 = vmatprep.subr.mxu0 0.0
        %1114 = vmatpush1.xpose.msra.mxu0 0.0
        %1115 = vmatprep.subr.mxu0 0.0
        %1116 = vmatpush1.xpose.msra.mxu0 0.0
        %1117 = vmatprep.subr.mxu0 0.0
        %1118 = vmatpush1.xpose.msra.mxu0 0.0
        %1119 = vmatprep.subr.mxu0 0.0
        %1120 = vmatpush1.xpose.msra.mxu0 0.0
        %1121 = vmatprep.subr.mxu0 0.0
        %1122 = vmatpush1.xpose.msra.mxu0 0.0
        %1123 = vmatprep.subr.mxu0 0.0
        %1124 = vmatpush1.xpose.msra.mxu0 0.0
        %1125 = vmatprep.subr.mxu0 0.0
        %1126 = vmatpush1.xpose.msra.mxu0 0.0
        %1127 = vmatprep.mubr.f32.mxu0 0.0
        %1128 = vmatmul.mubr.f32.gmra.mrb[0].mxu0 %v1059
        %v1129 = vpop.f32.mrb[0].mxu0
        %v1130 = vadd.f32 0.0, %v1129
        %v1131 = vpop.f32.mrb[0].mxu0
        %1132 = vdwg.mxu0
        %v1133 = vmul.f32 %v1130, 0.35355338
        %v1134 = vsel %vm964, %v1133, -inf
        %1135 = vmax.xlane.f32.xlu0 %v1134
        %v1136 = vpop.xlane.xlu0 %1135
        %v1137 = vsub.f32 %v1133, %v1136
        %v1138 = vmul.f32 %v1137, 1.442695
        %v1139 = vpow.pop %v1138
        %v1140 = vsel %vm964, %v1139, 0.0
        %1141 = vadd.xlane.f32.xlu0 %v1140
        %v1142 = vpop.xlane.xlu0 %1141
        %v1143 = vrcp.pop %v1142
        %v1144 = vmul.f32 %v1139, %v1143
        %1145 = vrot.lane.b32.xlu0 %v878, 56
        %v1146 = vpop.permute.xlu0 %1145
        %v1148 = vsel %vm978, %v1144, 0
        %v1150 = vsel %vm982, %v1146, 0
        %1152 = vmatprep.subr.mxu0 0.0
        %1153 = vmatpush1.msra.mxu0 %v1150
        %1154 = vmatprep.subr.mxu0 0.0
        %1155 = vmatpush1.msra.mxu0 0.0
        %1156 = vmatprep.subr.mxu0 0.0
        %1157 = vmatpush1.msra.mxu0 0.0
        %1158 = vmatprep.subr.mxu0 0.0
        %1159 = vmatpush1.msra.mxu0 0.0
        %1160 = vmatprep.subr.mxu0 0.0
        %1161 = vmatpush1.msra.mxu0 0.0
        %1162 = vmatprep.subr.mxu0 0.0
        %1163 = vmatpush1.msra.mxu0 0.0
        %1164 = vmatprep.subr.mxu0 0.0
        %1165 = vmatpush1.msra.mxu0 0.0
        %1166 = vmatprep.subr.mxu0 0.0
        %1167 = vmatpush1.msra.mxu0 0.0
        %1168 = vmatprep.subr.mxu0 0.0
        %1169 = vmatpush1.msra.mxu0 0.0
        %1170 = vmatprep.subr.mxu0 0.0
        %1171 = vmatpush1.msra.mxu0 0.0
        %1172 = vmatprep.subr.mxu0 0.0
        %1173 = vmatpush1.msra.mxu0 0.0
        %1174 = vmatprep.subr.mxu0 0.0
        %1175 = vmatpush1.msra.mxu0 0.0
        %1176 = vmatprep.subr.mxu0 0.0
        %1177 = vmatpush1.msra.mxu0 0.0
        %1178 = vmatprep.subr.mxu0 0.0
        %1179 = vmatpush1.msra.mxu0 0.0
        %1180 = vmatprep.subr.mxu0 0.0
        %1181 = vmatpush1.msra.mxu0 0.0
        %1182 = vmatprep.subr.mxu0 0.0
        %1183 = vmatpush1.msra.mxu0 0.0
        %1184 = vmatprep.subr.mxu0 0.0
        %1185 = vmatpush1.msra.mxu0 0.0
        %1186 = vmatprep.subr.mxu0 0.0
        %1187 = vmatpush1.msra.mxu0 0.0
        %1188 = vmatprep.subr.mxu0 0.0
        %1189 = vmatpush1.msra.mxu0 0.0
        %1190 = vmatprep.subr.mxu0 0.0
        %1191 = vmatpush1.msra.mxu0 0.0
        %1192 = vmatprep.subr.mxu0 0.0
        %1193 = vmatpush1.msra.mxu0 0.0
        %1194 = vmatprep.subr.mxu0 0.0
        %1195 = vmatpush1.msra.mxu0 0.0
        %1196 = vmatprep.subr.mxu0 0.0
        %1197 = vmatpush1.msra.mxu0 0.0
        %1198 = vmatprep.subr.mxu0 0.0
        %1199 = vmatpush1.msra.mxu0 0.0
        %1200 = vmatprep.subr.mxu0 0.0
        %1201 = vmatpush1.msra.mxu0 0.0
        %1202 = vmatprep.subr.mxu0 0.0
        %1203 = vmatpush1.msra.mxu0 0.0
        %1204 = vmatprep.subr.mxu0 0.0
        %1205 = vmatpush1.msra.mxu0 0.0
        %1206 = vmatprep.subr.mxu0 0.0
        %1207 = vmatpush1.msra.mxu0 0.0
        %1208 = vmatprep.subr.mxu0 0.0
        %1209 = vmatpush1.msra.mxu0 0.0
        %1210 = vmatprep.subr.mxu0 0.0
        %1211 = vmatpush1.msra.mxu0 0.0
        %1212 = vmatprep.subr.mxu0 0.0
        %1213 = vmatpush1.msra.mxu0 0.0
        %1214 = vmatprep.subr.mxu0 0.0
        %1215 = vmatpush1.msra.mxu0 0.0
        %1216 = vmatprep.mubr.f32.mxu0 0.0
        %1217 = vmatmul.mubr.f32.gmra.mrb[0].mxu0 %v1148
        %v1218 = vpop.f32.mrb[0].mxu0
        %v1219 = vadd.f32 0.0, %v1218
        %v1220 = vpop.f32.mrb[0].mxu0
        %1221 = vdwg.mxu0
        %v1223 = vsel %vm888, %v1219, 0
        %1225 = vmatprep.subr.mxu0 0.0
        %1226 = vmatpush1.msra.mxu0 %v882
        %1227 = vmatprep.subr.mxu0 0.0
        %1228 = vmatpush1.msra.mxu0 0.0
        %1229 = vmatprep.subr.mxu0 0.0
        %1230 = vmatpush1.msra.mxu0 0.0
        %1231 = vmatprep.subr.mxu0 0.0
        %1232 = vmatpush1.msra.mxu0 0.0
        %1233 = vmatprep.subr.mxu0 0.0
        %1234 = vmatpush1.msra.mxu0 0.0
        %1235 = vmatprep.subr.mxu0 0.0
        %1236 = vmatpush1.msra.mxu0 0.0
        %1237 = vmatprep.subr.mxu0 0.0
        %1238 = vmatpush1.msra.mxu0 0.0
        %1239 = vmatprep.subr.mxu0 0.0
        %1240 = vmatpush1.msra.mxu0 0.0
        %1241 = vmatprep.subr.mxu0 0.0
        %1242 = vmatpush1.msra.mxu0 0.0
        %1243 = vmatprep.subr.mxu0 0.0
        %1244 = vmatpush1.msra.mxu0 0.0
        %1245 = vmatprep.subr.mxu0 0.0
        %1246 = vmatpush1.msra.mxu0 0.0
        %1247 = vmatprep.subr.mxu0 0.0
        %1248 = vmatpush1.msra.mxu0 0.0
        %1249 = vmatprep.subr.mxu0 0.0
        %1250 = vmatpush1.msra.mxu0 0.0
        %1251 = vmatprep.subr.mxu0 0.0
        %1252 = vmatpush1.msra.mxu0 0.0
        %1253 = vmatprep.subr.mxu0 0.0
        %1254 = vmatpush1.msra.mxu0 0.0
        %1255 = vmatprep.subr.mxu0 0.0
        %1256 = vmatpush1.msra.mxu0 0.0
        %1257 = vmatprep.subr.mxu0 0.0
        %1258 = vmatpush1.msra.mxu0 0.0
        %1259 = vmatprep.subr.mxu0 0.0
        %1260 = vmatpush1.msra.mxu0 0.0
        %1261 = vmatprep.subr.mxu0 0.0
        %1262 = vmatpush1.msra.mxu0 0.0
        %1263 = vmatprep.subr.mxu0 0.0
        %1264 = vmatpush1.msra.mxu0 0.0
        %1265 = vmatprep.subr.mxu0 0.0
        %1266 = vmatpush1.msra.mxu0 0.0
        %1267 = vmatprep.subr.mxu0 0.0
        %1268 = vmatpush1.msra.mxu0 0.0
        %1269 = vmatprep.subr.mxu0 0.0
        %1270 = vmatpush1.msra.mxu0 0.0
        %1271 = vmatprep.subr.mxu0 0.0
        %1272 = vmatpush1.msra.mxu0 0.0
        %1273 = vmatprep.subr.mxu0 0.0
        %1274 = vmatpush1.msra.mxu0 0.0
        %1275 = vmatprep.subr.mxu0 0.0
        %1276 = vmatpush1.msra.mxu0 0.0
        %1277 = vmatprep.subr.mxu0 0.0
        %1278 = vmatpush1.msra.mxu0 0.0
        %1279 = vmatprep.subr.mxu0 0.0
        %1280 = vmatpush1.msra.mxu0 0.0
        %1281 = vmatprep.subr.mxu0 0.0
        %1282 = vmatpush1.msra.mxu0 0.0
        %1283 = vmatprep.subr.mxu0 0.0
        %1284 = vmatpush1.msra.mxu0 0.0
        %1285 = vmatprep.subr.mxu0 0.0
        %1286 = vmatpush1.msra.mxu0 0.0
        %1287 = vmatprep.subr.mxu0 0.0
        %1288 = vmatpush1.msra.mxu0 0.0
        %1289 = vmatprep.mubr.f32.mxu0 0.0
        %1290 = vmatmul.mubr.f32.gmra.mrb[0].mxu0 %v1223
        %v1291 = vpop.f32.mrb[0].mxu0
        %v1292 = vadd.f32 0.0, %v1291
        %v1293 = vpop.f32.mrb[0].mxu0
        %1294 = vdwg.mxu0
        %v1296 = vsel %vm888, %v1052, 0
        %1298 = vmatprep.subr.mxu0 0.0
        %1299 = vmatpush1.msra.mxu0 %v881
        %1300 = vmatprep.subr.mxu0 0.0
        %1301 = vmatpush1.msra.mxu0 0.0
        %1302 = vmatprep.subr.mxu0 0.0
        %1303 = vmatpush1.msra.mxu0 0.0
        %1304 = vmatprep.subr.mxu0 0.0
        %1305 = vmatpush1.msra.mxu0 0.0
        %1306 = vmatprep.subr.mxu0 0.0
        %1307 = vmatpush1.msra.mxu0 0.0
        %1308 = vmatprep.subr.mxu0 0.0
        %1309 = vmatpush1.msra.mxu0 0.0
        %1310 = vmatprep.subr.mxu0 0.0
        %1311 = vmatpush1.msra.mxu0 0.0
        %1312 = vmatprep.subr.mxu0 0.0
        %1313 = vmatpush1.msra.mxu0 0.0
        %1314 = vmatprep.subr.mxu0 0.0
        %1315 = vmatpush1.msra.mxu0 0.0
        %1316 = vmatprep.subr.mxu0 0.0
        %1317 = vmatpush1.msra.mxu0 0.0
        %1318 = vmatprep.subr.mxu0 0.0
        %1319 = vmatpush1.msra.mxu0 0.0
        %1320 = vmatprep.subr.mxu0 0.0
        %1321 = vmatpush1.msra.mxu0 0.0
        %1322 = vmatprep.subr.mxu0 0.0
        %1323 = vmatpush1.msra.mxu0 0.0
        %1324 = vmatprep.subr.mxu0 0.0
        %1325 = vmatpush1.msra.mxu0 0.0
        %1326 = vmatprep.subr.mxu0 0.0
        %1327 = vmatpush1.msra.mxu0 0.0
        %1328 = vmatprep.subr.mxu0 0.0
        %1329 = vmatpush1.msra.mxu0 0.0
        %1330 = vmatprep.subr.mxu0 0.0
        %1331 = vmatpush1.msra.mxu0 0.0
        %1332 = vmatprep.subr.mxu0 0.0
        %1333 = vmatpush1.msra.mxu0 0.0
        %1334 = vmatprep.subr.mxu0 0.0
        %1335 = vmatpush1.msra.mxu0 0.0
        %1336 = vmatprep.subr.mxu0 0.0
        %1337 = vmatpush1.msra.mxu0 0.0
        %1338 = vmatprep.subr.mxu0 0.0
        %1339 = vmatpush1.msra.mxu0 0.0
        %1340 = vmatprep.subr.mxu0 0.0
        %1341 = vmatpush1.msra.mxu0 0.0
        %1342 = vmatprep.subr.mxu0 0.0
        %1343 = vmatpush1.msra.mxu0 0.0
        %1344 = vmatprep.subr.mxu0 0.0
        %1345 = vmatpush1.msra.mxu0 0.0
        %1346 = vmatprep.subr.mxu0 0.0
        %1347 = vmatpush1.msra.mxu0 0.0
        %1348 = vmatprep.subr.mxu0 0.0
        %1349 = vmatpush1.msra.mxu0 0.0
        %1350 = vmatprep.subr.mxu0 0.0
        %1351 = vmatpush1.msra.mxu0 0.0
        %1352 = vmatprep.subr.mxu0 0.0
        %1353 = vmatpush1.msra.mxu0 0.0
        %1354 = vmatprep.subr.mxu0 0.0
        %1355 = vmatpush1.msra.mxu0 0.0
        %1356 = vmatprep.subr.mxu0 0.0
        %1357 = vmatpush1.msra.mxu0 0.0
        %1358 = vmatprep.subr.mxu0 0.0
        %1359 = vmatpush1.msra.mxu0 0.0
        %1360 = vmatprep.subr.mxu0 0.0
        %1361 = vmatpush1.msra.mxu0 0.0
        %1362 = vmatprep.mubr.f32.mxu0 0.0
        %1363 = vmatmul.mubr.f32.gmra.mrb[0].mxu0 %v1296
        %v1364 = vpop.f32.mrb[0].mxu0
        %v1365 = vadd.f32 %v1292, %v1364
        %v1366 = vpop.f32.mrb[0].mxu0
        %1367 = vdwg.mxu0
        %1368 = vrot.lane.b32.xlu0 %v878, 112
        %v1369 = vpop.permute.xlu0 %1368
        %1370 = vrot.lane.b32.xlu0 %v878, 80
        %v1371 = vpop.permute.xlu0 %1370
        %v1372 = vsel %vm888, %v1369, 0
        %v1374 = vsel %vm888, %v1371, 0
        %1376 = vmatprep.subr.mxu0 0.0
        %1377 = vmatpush1.xpose.msra.mxu0 %v1374
        %1378 = vmatprep.subr.mxu0 0.0
        %1379 = vmatpush1.xpose.msra.mxu0 0.0
        %1380 = vmatprep.subr.mxu0 0.0
        %1381 = vmatpush1.xpose.msra.mxu0 0.0
        %1382 = vmatprep.subr.mxu0 0.0
        %1383 = vmatpush1.xpose.msra.mxu0 0.0
        %1384 = vmatprep.subr.mxu0 0.0
        %1385 = vmatpush1.xpose.msra.mxu0 0.0
        %1386 = vmatprep.subr.mxu0 0.0
        %1387 = vmatpush1.xpose.msra.mxu0 0.0
        %1388 = vmatprep.subr.mxu0 0.0
        %1389 = vmatpush1.xpose.msra.mxu0 0.0
        %1390 = vmatprep.subr.mxu0 0.0
        %1391 = vmatpush1.xpose.msra.mxu0 0.0
        %1392 = vmatprep.subr.mxu0 0.0
        %1393 = vmatpush1.xpose.msra.mxu0 0.0
        %1394 = vmatprep.subr.mxu0 0.0
        %1395 = vmatpush1.xpose.msra.mxu0 0.0
        %1396 = vmatprep.subr.mxu0 0.0
        %1397 = vmatpush1.xpose.msra.mxu0 0.0
        %1398 = vmatprep.subr.mxu0 0.0
        %1399 = vmatpush1.xpose.msra.mxu0 0.0
        %1400 = vmatprep.subr.mxu0 0.0
        %1401 = vmatpush1.xpose.msra.mxu0 0.0
        %1402 = vmatprep.subr.mxu0 0.0
        %1403 = vmatpush1.xpose.msra.mxu0 0.0
        %1404 = vmatprep.subr.mxu0 0.0
        %1405 = vmatpush1.xpose.msra.mxu0 0.0
        %1406 = vmatprep.subr.mxu0 0.0
        %1407 = vmatpush1.xpose.msra.mxu0 0.0
        %1408 = vmatprep.subr.mxu0 0.0
        %1409 = vmatpush1.xpose.msra.mxu0 0.0
        %1410 = vmatprep.subr.mxu0 0.0
        %1411 = vmatpush1.xpose.msra.mxu0 0.0
        %1412 = vmatprep.subr.mxu0 0.0
        %1413 = vmatpush1.xpose.msra.mxu0 0.0
        %1414 = vmatprep.subr.mxu0 0.0
        %1415 = vmatpush1.xpose.msra.mxu0 0.0
        %1416 = vmatprep.subr.mxu0 0.0
        %1417 = vmatpush1.xpose.msra.mxu0 0.0
        %1418 = vmatprep.subr.mxu0 0.0
        %1419 = vmatpush1.xpose.msra.mxu0 0.0
        %1420 = vmatprep.subr.mxu0 0.0
        %1421 = vmatpush1.xpose.msra.mxu0 0.0
        %1422 = vmatprep.subr.mxu0 0.0
        %1423 = vmatpush1.xpose.msra.mxu0 0.0
        %1424 = vmatprep.subr.mxu0 0.0
        %1425 = vmatpush1.xpose.msra.mxu0 0.0
        %1426 = vmatprep.subr.mxu0 0.0
        %1427 = vmatpush1.xpose.msra.mxu0 0.0
        %1428 = vmatprep.subr.mxu0 0.0
        %1429 = vmatpush1.xpose.msra.mxu0 0.0
        %1430 = vmatprep.subr.mxu0 0.0
        %1431 = vmatpush1.xpose.msra.mxu0 0.0
        %1432 = vmatprep.subr.mxu0 0.0
        %1433 = vmatpush1.xpose.msra.mxu0 0.0
        %1434 = vmatprep.subr.mxu0 0.0
        %1435 = vmatpush1.xpose.msra.mxu0 0.0
        %1436 = vmatprep.subr.mxu0 0.0
        %1437 = vmatpush1.xpose.msra.mxu0 0.0
        %1438 = vmatprep.subr.mxu0 0.0
        %1439 = vmatpush1.xpose.msra.mxu0 0.0
        %1440 = vmatprep.mubr.f32.mxu0 0.0
        %1441 = vmatmul.mubr.f32.gmra.mrb[0].mxu0 %v1372
        %v1442 = vpop.f32.mrb[0].mxu0
        %v1443 = vadd.f32 0.0, %v1442
        %v1444 = vpop.f32.mrb[0].mxu0
        %1445 = vdwg.mxu0
        %v1446 = vmul.f32 %v1443, 0.35355338
        %v1447 = vsel %vm964, %v1446, -inf
        %1448 = vmax.xlane.f32.xlu0 %v1447
        %v1449 = vpop.xlane.xlu0 %1448
        %v1450 = vsub.f32 %v1446, %v1449
        %v1451 = vmul.f32 %v1450, 1.442695
        %v1452 = vpow.pop %v1451
        %v1453 = vsel %vm964, %v1452, 0.0
        %1454 = vadd.xlane.f32.xlu0 %v1453
        %v1455 = vpop.xlane.xlu0 %1454
        %v1456 = vrcp.pop %v1455
        %v1457 = vmul.f32 %v1452, %v1456
        %1458 = vrot.lane.b32.xlu0 %v878, 48
        %v1459 = vpop.permute.xlu0 %1458
        %v1461 = vsel %vm978, %v1457, 0
        %v1463 = vsel %vm982, %v1459, 0
        %1465 = vmatprep.subr.mxu0 0.0
        %1466 = vmatpush1.msra.mxu0 %v1463
        %1467 = vmatprep.subr.mxu0 0.0
        %1468 = vmatpush1.msra.mxu0 0.0
        %1469 = vmatprep.subr.mxu0 0.0
        %1470 = vmatpush1.msra.mxu0 0.0
        %1471 = vmatprep.subr.mxu0 0.0
        %1472 = vmatpush1.msra.mxu0 0.0
        %1473 = vmatprep.subr.mxu0 0.0
        %1474 = vmatpush1.msra.mxu0 0.0
        %1475 = vmatprep.subr.mxu0 0.0
        %1476 = vmatpush1.msra.mxu0 0.0
        %1477 = vmatprep.subr.mxu0 0.0
        %1478 = vmatpush1.msra.mxu0 0.0
        %1479 = vmatprep.subr.mxu0 0.0
        %1480 = vmatpush1.msra.mxu0 0.0
        %1481 = vmatprep.subr.mxu0 0.0
        %1482 = vmatpush1.msra.mxu0 0.0
        %1483 = vmatprep.subr.mxu0 0.0
        %1484 = vmatpush1.msra.mxu0 0.0
        %1485 = vmatprep.subr.mxu0 0.0
        %1486 = vmatpush1.msra.mxu0 0.0
        %1487 = vmatprep.subr.mxu0 0.0
        %1488 = vmatpush1.msra.mxu0 0.0
        %1489 = vmatprep.subr.mxu0 0.0
        %1490 = vmatpush1.msra.mxu0 0.0
        %1491 = vmatprep.subr.mxu0 0.0
        %1492 = vmatpush1.msra.mxu0 0.0
        %1493 = vmatprep.subr.mxu0 0.0
        %1494 = vmatpush1.msra.mxu0 0.0
        %1495 = vmatprep.subr.mxu0 0.0
        %1496 = vmatpush1.msra.mxu0 0.0
        %1497 = vmatprep.subr.mxu0 0.0
        %1498 = vmatpush1.msra.mxu0 0.0
        %1499 = vmatprep.subr.mxu0 0.0
        %1500 = vmatpush1.msra.mxu0 0.0
        %1501 = vmatprep.subr.mxu0 0.0
        %1502 = vmatpush1.msra.mxu0 0.0
        %1503 = vmatprep.subr.mxu0 0.0
        %1504 = vmatpush1.msra.mxu0 0.0
        %1505 = vmatprep.subr.mxu0 0.0
        %1506 = vmatpush1.msra.mxu0 0.0
        %1507 = vmatprep.subr.mxu0 0.0
        %1508 = vmatpush1.msra.mxu0 0.0
        %1509 = vmatprep.subr.mxu0 0.0
        %1510 = vmatpush1.msra.mxu0 0.0
        %1511 = vmatprep.subr.mxu0 0.0
        %1512 = vmatpush1.msra.mxu0 0.0
        %1513 = vmatprep.subr.mxu0 0.0
        %1514 = vmatpush1.msra.mxu0 0.0
        %1515 = vmatprep.subr.mxu0 0.0
        %1516 = vmatpush1.msra.mxu0 0.0
        %1517 = vmatprep.subr.mxu0 0.0
        %1518 = vmatpush1.msra.mxu0 0.0
        %1519 = vmatprep.subr.mxu0 0.0
        %1520 = vmatpush1.msra.mxu0 0.0
        %1521 = vmatprep.subr.mxu0 0.0
        %1522 = vmatpush1.msra.mxu0 0.0
        %1523 = vmatprep.subr.mxu0 0.0
        %1524 = vmatpush1.msra.mxu0 0.0
        %1525 = vmatprep.subr.mxu0 0.0
        %1526 = vmatpush1.msra.mxu0 0.0
        %1527 = vmatprep.subr.mxu0 0.0
        %1528 = vmatpush1.msra.mxu0 0.0
        %1529 = vmatprep.mubr.f32.mxu0 0.0
        %1530 = vmatmul.mubr.f32.gmra.mrb[0].mxu0 %v1461
        %v1531 = vpop.f32.mrb[0].mxu0
        %v1532 = vadd.f32 0.0, %v1531
        %v1533 = vpop.f32.mrb[0].mxu0
        %1534 = vdwg.mxu0
        %v1536 = vsel %vm888, %v1532, 0
        %1538 = vmatprep.subr.mxu0 0.0
        %1539 = vmatpush1.msra.mxu0 %v883
        %1540 = vmatprep.subr.mxu0 0.0
        %1541 = vmatpush1.msra.mxu0 0.0
        %1542 = vmatprep.subr.mxu0 0.0
        %1543 = vmatpush1.msra.mxu0 0.0
        %1544 = vmatprep.subr.mxu0 0.0
        %1545 = vmatpush1.msra.mxu0 0.0
        %1546 = vmatprep.subr.mxu0 0.0
        %1547 = vmatpush1.msra.mxu0 0.0
        %1548 = vmatprep.subr.mxu0 0.0
        %1549 = vmatpush1.msra.mxu0 0.0
        %1550 = vmatprep.subr.mxu0 0.0
        %1551 = vmatpush1.msra.mxu0 0.0
        %1552 = vmatprep.subr.mxu0 0.0
        %1553 = vmatpush1.msra.mxu0 0.0
        %1554 = vmatprep.subr.mxu0 0.0
        %1555 = vmatpush1.msra.mxu0 0.0
        %1556 = vmatprep.subr.mxu0 0.0
        %1557 = vmatpush1.msra.mxu0 0.0
        %1558 = vmatprep.subr.mxu0 0.0
        %1559 = vmatpush1.msra.mxu0 0.0
        %1560 = vmatprep.subr.mxu0 0.0
        %1561 = vmatpush1.msra.mxu0 0.0
        %1562 = vmatprep.subr.mxu0 0.0
        %1563 = vmatpush1.msra.mxu0 0.0
        %1564 = vmatprep.subr.mxu0 0.0
        %1565 = vmatpush1.msra.mxu0 0.0
        %1566 = vmatprep.subr.mxu0 0.0
        %1567 = vmatpush1.msra.mxu0 0.0
        %1568 = vmatprep.subr.mxu0 0.0
        %1569 = vmatpush1.msra.mxu0 0.0
        %1570 = vmatprep.subr.mxu0 0.0
        %1571 = vmatpush1.msra.mxu0 0.0
        %1572 = vmatprep.subr.mxu0 0.0
        %1573 = vmatpush1.msra.mxu0 0.0
        %1574 = vmatprep.subr.mxu0 0.0
        %1575 = vmatpush1.msra.mxu0 0.0
        %1576 = vmatprep.subr.mxu0 0.0
        %1577 = vmatpush1.msra.mxu0 0.0
        %1578 = vmatprep.subr.mxu0 0.0
        %1579 = vmatpush1.msra.mxu0 0.0
        %1580 = vmatprep.subr.mxu0 0.0
        %1581 = vmatpush1.msra.mxu0 0.0
        %1582 = vmatprep.subr.mxu0 0.0
        %1583 = vmatpush1.msra.mxu0 0.0
        %1584 = vmatprep.subr.mxu0 0.0
        %1585 = vmatpush1.msra.mxu0 0.0
        %1586 = vmatprep.subr.mxu0 0.0
        %1587 = vmatpush1.msra.mxu0 0.0
        %1588 = vmatprep.subr.mxu0 0.0
        %1589 = vmatpush1.msra.mxu0 0.0
        %1590 = vmatprep.subr.mxu0 0.0
        %1591 = vmatpush1.msra.mxu0 0.0
        %1592 = vmatprep.subr.mxu0 0.0
        %1593 = vmatpush1.msra.mxu0 0.0
        %1594 = vmatprep.subr.mxu0 0.0
        %1595 = vmatpush1.msra.mxu0 0.0
        %1596 = vmatprep.subr.mxu0 0.0
        %1597 = vmatpush1.msra.mxu0 0.0
        %1598 = vmatprep.subr.mxu0 0.0
        %1599 = vmatpush1.msra.mxu0 0.0
        %1600 = vmatprep.subr.mxu0 0.0
        %1601 = vmatpush1.msra.mxu0 0.0
        %1602 = vmatprep.mubr.f32.mxu0 0.0
        %1603 = vmatmul.mubr.f32.gmra.mrb[0].mxu0 %v1536
        %v1604 = vpop.f32.mrb[0].mxu0
        %v1605 = vadd.f32 0.0, %v1604
        %v1606 = vpop.f32.mrb[0].mxu0
        %1607 = vdwg.mxu0
        %v1608 = vadd.f32 %v1365, %v1605
        %1609 = vrot.lane.b32.xlu0 %v878, 104
        %v1610 = vpop.permute.xlu0 %1609
        %1611 = vrot.lane.b32.xlu0 %v878, 72
        %v1612 = vpop.permute.xlu0 %1611
        %v1613 = vsel %vm888, %v1610, 0
        %v1615 = vsel %vm888, %v1612, 0
        %1617 = vmatprep.subr.mxu0 0.0
        %1618 = vmatpush1.xpose.msra.mxu0 %v1615
        %1619 = vmatprep.subr.mxu0 0.0
        %1620 = vmatpush1.xpose.msra.mxu0 0.0
        %1621 = vmatprep.subr.mxu0 0.0
        %1622 = vmatpush1.xpose.msra.mxu0 0.0
        %1623 = vmatprep.subr.mxu0 0.0
        %1624 = vmatpush1.xpose.msra.mxu0 0.0
        %1625 = vmatprep.subr.mxu0 0.0
        %1626 = vmatpush1.xpose.msra.mxu0 0.0
        %1627 = vmatprep.subr.mxu0 0.0
        %1628 = vmatpush1.xpose.msra.mxu0 0.0
        %1629 = vmatprep.subr.mxu0 0.0
        %1630 = vmatpush1.xpose.msra.mxu0 0.0
        %1631 = vmatprep.subr.mxu0 0.0
        %1632 = vmatpush1.xpose.msra.mxu0 0.0
        %1633 = vmatprep.subr.mxu0 0.0
        %1634 = vmatpush1.xpose.msra.mxu0 0.0
        %1635 = vmatprep.subr.mxu0 0.0
        %1636 = vmatpush1.xpose.msra.mxu0 0.0
        %1637 = vmatprep.subr.mxu0 0.0
        %1638 = vmatpush1.xpose.msra.mxu0 0.0
        %1639 = vmatprep.subr.mxu0 0.0
        %1640 = vmatpush1.xpose.msra.mxu0 0.0
        %1641 = vmatprep.subr.mxu0 0.0
        %1642 = vmatpush1.xpose.msra.mxu0 0.0
        %1643 = vmatprep.subr.mxu0 0.0
        %1644 = vmatpush1.xpose.msra.mxu0 0.0
        %1645 = vmatprep.subr.mxu0 0.0
        %1646 = vmatpush1.xpose.msra.mxu0 0.0
        %1647 = vmatprep.subr.mxu0 0.0
        %1648 = vmatpush1.xpose.msra.mxu0 0.0
        %1649 = vmatprep.subr.mxu0 0.0
        %1650 = vmatpush1.xpose.msra.mxu0 0.0
        %1651 = vmatprep.subr.mxu0 0.0
        %1652 = vmatpush1.xpose.msra.mxu0 0.0
        %1653 = vmatprep.subr.mxu0 0.0
        %1654 = vmatpush1.xpose.msra.mxu0 0.0
        %1655 = vmatprep.subr.mxu0 0.0
        %1656 = vmatpush1.xpose.msra.mxu0 0.0
        %1657 = vmatprep.subr.mxu0 0.0
        %1658 = vmatpush1.xpose.msra.mxu0 0.0
        %1659 = vmatprep.subr.mxu0 0.0
        %1660 = vmatpush1.xpose.msra.mxu0 0.0
        %1661 = vmatprep.subr.mxu0 0.0
        %1662 = vmatpush1.xpose.msra.mxu0 0.0
        %1663 = vmatprep.subr.mxu0 0.0
        %1664 = vmatpush1.xpose.msra.mxu0 0.0
        %1665 = vmatprep.subr.mxu0 0.0
        %1666 = vmatpush1.xpose.msra.mxu0 0.0
        %1667 = vmatprep.subr.mxu0 0.0
        %1668 = vmatpush1.xpose.msra.mxu0 0.0
        %1669 = vmatprep.subr.mxu0 0.0
        %1670 = vmatpush1.xpose.msra.mxu0 0.0
        %1671 = vmatprep.subr.mxu0 0.0
        %1672 = vmatpush1.xpose.msra.mxu0 0.0
        %1673 = vmatprep.subr.mxu0 0.0
        %1674 = vmatpush1.xpose.msra.mxu0 0.0
        %1675 = vmatprep.subr.mxu0 0.0
        %1676 = vmatpush1.xpose.msra.mxu0 0.0
        %1677 = vmatprep.subr.mxu0 0.0
        %1678 = vmatpush1.xpose.msra.mxu0 0.0
        %1679 = vmatprep.subr.mxu0 0.0
        %1680 = vmatpush1.xpose.msra.mxu0 0.0
        %1681 = vmatprep.mubr.f32.mxu0 0.0
        %1682 = vmatmul.mubr.f32.gmra.mrb[0].mxu0 %v1613
        %v1683 = vpop.f32.mrb[0].mxu0
        %v1684 = vadd.f32 0.0, %v1683
        %v1685 = vpop.f32.mrb[0].mxu0
        %1686 = vdwg.mxu0
        %v1687 = vmul.f32 %v1684, 0.35355338
        %v1688 = vsel %vm964, %v1687, -inf
        %1689 = vmax.xlane.f32.xlu0 %v1688
        %v1690 = vpop.xlane.xlu0 %1689
        %v1691 = vsub.f32 %v1687, %v1690
        %v1692 = vmul.f32 %v1691, 1.442695
        %v1693 = vpow.pop %v1692
        %v1694 = vsel %vm964, %v1693, 0.0
        %1695 = vadd.xlane.f32.xlu0 %v1694
        %v1696 = vpop.xlane.xlu0 %1695
        %v1697 = vrcp.pop %v1696
        %v1698 = vmul.f32 %v1693, %v1697
        %1699 = vrot.lane.b32.xlu0 %v878, 40
        %v1700 = vpop.permute.xlu0 %1699
        %v1702 = vsel %vm978, %v1698, 0
        %v1704 = vsel %vm982, %v1700, 0
        %1706 = vmatprep.subr.mxu0 0.0
        %1707 = vmatpush1.msra.mxu0 %v1704
        %1708 = vmatprep.subr.mxu0 0.0
        %1709 = vmatpush1.msra.mxu0 0.0
        %1710 = vmatprep.subr.mxu0 0.0
        %1711 = vmatpush1.msra.mxu0 0.0
        %1712 = vmatprep.subr.mxu0 0.0
        %1713 = vmatpush1.msra.mxu0 0.0
        %1714 = vmatprep.subr.mxu0 0.0
        %1715 = vmatpush1.msra.mxu0 0.0
        %1716 = vmatprep.subr.mxu0 0.0
        %1717 = vmatpush1.msra.mxu0 0.0
        %1718 = vmatprep.subr.mxu0 0.0
        %1719 = vmatpush1.msra.mxu0 0.0
        %1720 = vmatprep.subr.mxu0 0.0
        %1721 = vmatpush1.msra.mxu0 0.0
        %1722 = vmatprep.subr.mxu0 0.0
        %1723 = vmatpush1.msra.mxu0 0.0
        %1724 = vmatprep.subr.mxu0 0.0
        %1725 = vmatpush1.msra.mxu0 0.0
        %1726 = vmatprep.subr.mxu0 0.0
        %1727 = vmatpush1.msra.mxu0 0.0
        %1728 = vmatprep.subr.mxu0 0.0
        %1729 = vmatpush1.msra.mxu0 0.0
        %1730 = vmatprep.subr.mxu0 0.0
        %1731 = vmatpush1.msra.mxu0 0.0
        %1732 = vmatprep.subr.mxu0 0.0
        %1733 = vmatpush1.msra.mxu0 0.0
        %1734 = vmatprep.subr.mxu0 0.0
        %1735 = vmatpush1.msra.mxu0 0.0
        %1736 = vmatprep.subr.mxu0 0.0
        %1737 = vmatpush1.msra.mxu0 0.0
        %1738 = vmatprep.subr.mxu0 0.0
        %1739 = vmatpush1.msra.mxu0 0.0
        %1740 = vmatprep.subr.mxu0 0.0
        %1741 = vmatpush1.msra.mxu0 0.0
        %1742 = vmatprep.subr.mxu0 0.0
        %1743 = vmatpush1.msra.mxu0 0.0
        %1744 = vmatprep.subr.mxu0 0.0
        %1745 = vmatpush1.msra.mxu0 0.0
        %1746 = vmatprep.subr.mxu0 0.0
        %1747 = vmatpush1.msra.mxu0 0.0
        %1748 = vmatprep.subr.mxu0 0.0
        %1749 = vmatpush1.msra.mxu0 0.0
        %1750 = vmatprep.subr.mxu0 0.0
        %1751 = vmatpush1.msra.mxu0 0.0
        %1752 = vmatprep.subr.mxu0 0.0
        %1753 = vmatpush1.msra.mxu0 0.0
        %1754 = vmatprep.subr.mxu0 0.0
        %1755 = vmatpush1.msra.mxu0 0.0
        %1756 = vmatprep.subr.mxu0 0.0
        %1757 = vmatpush1.msra.mxu0 0.0
        %1758 = vmatprep.subr.mxu0 0.0
        %1759 = vmatpush1.msra.mxu0 0.0
        %1760 = vmatprep.subr.mxu0 0.0
        %1761 = vmatpush1.msra.mxu0 0.0
        %1762 = vmatprep.subr.mxu0 0.0
        %1763 = vmatpush1.msra.mxu0 0.0
        %1764 = vmatprep.subr.mxu0 0.0
        %1765 = vmatpush1.msra.mxu0 0.0
        %1766 = vmatprep.subr.mxu0 0.0
        %1767 = vmatpush1.msra.mxu0 0.0
        %1768 = vmatprep.subr.mxu0 0.0
        %1769 = vmatpush1.msra.mxu0 0.0
        %1770 = vmatprep.mubr.f32.mxu0 0.0
        %1771 = vmatmul.mubr.f32.gmra.mrb[0].mxu0 %v1702
        %v1772 = vpop.f32.mrb[0].mxu0
        %v1773 = vadd.f32 0.0, %v1772
        %v1774 = vpop.f32.mrb[0].mxu0
        %1775 = vdwg.mxu0
        %v1777 = vsel %vm888, %v1773, 0
        %1779 = vmatprep.subr.mxu0 0.0
        %1780 = vmatpush1.msra.mxu0 %v884
        %1781 = vmatprep.subr.mxu0 0.0
        %1782 = vmatpush1.msra.mxu0 0.0
        %1783 = vmatprep.subr.mxu0 0.0
        %1784 = vmatpush1.msra.mxu0 0.0
        %1785 = vmatprep.subr.mxu0 0.0
        %1786 = vmatpush1.msra.mxu0 0.0
        %1787 = vmatprep.subr.mxu0 0.0
        %1788 = vmatpush1.msra.mxu0 0.0
        %1789 = vmatprep.subr.mxu0 0.0
        %1790 = vmatpush1.msra.mxu0 0.0
        %1791 = vmatprep.subr.mxu0 0.0
        %1792 = vmatpush1.msra.mxu0 0.0
        %1793 = vmatprep.subr.mxu0 0.0
        %1794 = vmatpush1.msra.mxu0 0.0
        %1795 = vmatprep.subr.mxu0 0.0
        %1796 = vmatpush1.msra.mxu0 0.0
        %1797 = vmatprep.subr.mxu0 0.0
        %1798 = vmatpush1.msra.mxu0 0.0
        %1799 = vmatprep.subr.mxu0 0.0
        %1800 = vmatpush1.msra.mxu0 0.0
        %1801 = vmatprep.subr.mxu0 0.0
        %1802 = vmatpush1.msra.mxu0 0.0
        %1803 = vmatprep.subr.mxu0 0.0
        %1804 = vmatpush1.msra.mxu0 0.0
        %1805 = vmatprep.subr.mxu0 0.0
        %1806 = vmatpush1.msra.mxu0 0.0
        %1807 = vmatprep.subr.mxu0 0.0
        %1808 = vmatpush1.msra.mxu0 0.0
        %1809 = vmatprep.subr.mxu0 0.0
        %1810 = vmatpush1.msra.mxu0 0.0
        %1811 = vmatprep.subr.mxu0 0.0
        %1812 = vmatpush1.msra.mxu0 0.0
        %1813 = vmatprep.subr.mxu0 0.0
        %1814 = vmatpush1.msra.mxu0 0.0
        %1815 = vmatprep.subr.mxu0 0.0
        %1816 = vmatpush1.msra.mxu0 0.0
        %1817 = vmatprep.subr.mxu0 0.0
        %1818 = vmatpush1.msra.mxu0 0.0
        %1819 = vmatprep.subr.mxu0 0.0
        %1820 = vmatpush1.msra.mxu0 0.0
        %1821 = vmatprep.subr.mxu0 0.0
        %1822 = vmatpush1.msra.mxu0 0.0
        %1823 = vmatprep.subr.mxu0 0.0
        %1824 = vmatpush1.msra.mxu0 0.0
        %1825 = vmatprep.subr.mxu0 0.0
        %1826 = vmatpush1.msra.mxu0 0.0
        %1827 = vmatprep.subr.mxu0 0.0
        %1828 = vmatpush1.msra.mxu0 0.0
        %1829 = vmatprep.subr.mxu0 0.0
        %1830 = vmatpush1.msra.mxu0 0.0
        %1831 = vmatprep.subr.mxu0 0.0
        %1832 = vmatpush1.msra.mxu0 0.0
        %1833 = vmatprep.subr.mxu0 0.0
        %1834 = vmatpush1.msra.mxu0 0.0
        %1835 = vmatprep.subr.mxu0 0.0
        %1836 = vmatpush1.msra.mxu0 0.0
        %1837 = vmatprep.subr.mxu0 0.0
        %1838 = vmatpush1.msra.mxu0 0.0
        %1839 = vmatprep.subr.mxu0 0.0
        %1840 = vmatpush1.msra.mxu0 0.0
        %1841 = vmatprep.subr.mxu0 0.0
        %1842 = vmatpush1.msra.mxu0 0.0
        %1843 = vmatprep.mubr.f32.mxu0 0.0
        %1844 = vmatmul.mubr.f32.gmra.mrb[0].mxu0 %v1777
        %v1845 = vpop.f32.mrb[0].mxu0
        %v1846 = vadd.f32 0.0, %v1845
        %v1847 = vpop.f32.mrb[0].mxu0
        %1848 = vdwg.mxu0
        %v1849 = vadd.f32 %v1608, %v1846
        %v1850 = vadd.f32 %v765, %v1849
        %v1851 = vld [vmem:[%s9] sm:$0x1]
        %v1853 = vlaneseq
        %v1854 = vshrl.u32 %v1853, 7
        %v1855 = vsub.s32 0, %v1854
        %v1856 = vrot.slane %v1851, %v1855
        %v1858 = vadd.f32 %v1850, %v1856
        %v1859 = vld [vmem:[%s10] sm:$0x1]
        %v1860 = vld [vmem:[%s11] sm:$0x1]
        %v1861 = vsel %vm768, %v1858, 0.0
        %1862 = vadd.xlane.f32.xlu0 %v1861
        %v1863 = vpop.xlane.xlu0 %1862
        %v1864 = vmul.f32 %v1863, %v772
        %v1865 = vsub.f32 %v1858, %v1864
        %v1866 = vmul.f32 %v1865, %v1865
        %v1867 = vsel %vm768, %v1866, 0.0
        %1868 = vadd.xlane.f32.xlu0 %v1867
        %v1869 = vpop.xlane.xlu0 %1868
        %v1870 = vmul.f32 %v1869, %v772
        %v1871 = vadd.f32 %v1870, 1e-05
        %v1872 = vrsqrt.pop %v1871
        %v1873 = vmul.f32 %v1865, %v1872
        %v1875 = vlaneseq
        %v1876 = vshrl.u32 %v1875, 7
        %v1877 = vsub.s32 0, %v1876
        %v1878 = vrot.slane %v1859, %v1877
        %v1880 = vmul.f32 %v1873, %v1878
        %v1882 = vlaneseq
        %v1883 = vshrl.u32 %v1882, 7
        %v1884 = vsub.s32 0, %v1883
        %v1885 = vrot.slane %v1860, %v1884
        %v1887 = vadd.f32 %v1880, %v1885
        %v1888 = vld [vmem:[%s12] sm:$0xff]
        %v1889 = vld [vmem:[%s12 + $0x8] sm:$0xff]
        %v1890 = vld [vmem:[%s12 + $0x10] sm:$0xff]
        %v1891 = vld [vmem:[%s12 + $0x18] sm:$0xff]
        %v1892 = vld [vmem:[%s13] sm:$0x1]
        %v1894 = vlaneseq
        %v1895 = vshrl.u32 %v1894, 7
        %v1896 = vsub.s32 0, %v1895
        %v1897 = vrot.slane %v1892, %v1896
        %v1900 = vsel %vm690, %v1887, 0
        %1902 = vmatprep.subr.mxu0 0.0
        %1903 = vmatpush1.msra.mxu0 %v1888
        %1904 = vmatprep.subr.mxu0 0.0
        %1905 = vmatpush1.msra.mxu0 %v1889
        %1906 = vmatprep.subr.mxu0 0.0
        %1907 = vmatpush1.msra.mxu0 %v1890
        %1908 = vmatprep.subr.mxu0 0.0
        %1909 = vmatpush1.msra.mxu0 %v1891
        %1910 = vmatprep.subr.mxu0 0.0
        %1911 = vmatpush1.msra.mxu0 0.0
        %1912 = vmatprep.subr.mxu0 0.0
        %1913 = vmatpush1.msra.mxu0 0.0
        %1914 = vmatprep.subr.mxu0 0.0
        %1915 = vmatpush1.msra.mxu0 0.0
        %1916 = vmatprep.subr.mxu0 0.0
        %1917 = vmatpush1.msra.mxu0 0.0
        %1918 = vmatprep.subr.mxu0 0.0
        %1919 = vmatpush1.msra.mxu0 0.0
        %1920 = vmatprep.subr.mxu0 0.0
        %1921 = vmatpush1.msra.mxu0 0.0
        %1922 = vmatprep.subr.mxu0 0.0
        %1923 = vmatpush1.msra.mxu0 0.0
        %1924 = vmatprep.subr.mxu0 0.0
        %1925 = vmatpush1.msra.mxu0 0.0
        %1926 = vmatprep.subr.mxu0 0.0
        %1927 = vmatpush1.msra.mxu0 0.0
        %1928 = vmatprep.subr.mxu0 0.0
        %1929 = vmatpush1.msra.mxu0 0.0
        %1930 = vmatprep.subr.mxu0 0.0
        %1931 = vmatpush1.msra.mxu0 0.0
        %1932 = vmatprep.subr.mxu0 0.0
        %1933 = vmatpush1.msra.mxu0 0.0
        %1934 = vmatprep.subr.mxu0 0.0
        %1935 = vmatpush1.msra.mxu0 0.0
        %1936 = vmatprep.subr.mxu0 0.0
        %1937 = vmatpush1.msra.mxu0 0.0
        %1938 = vmatprep.subr.mxu0 0.0
        %1939 = vmatpush1.msra.mxu0 0.0
        %1940 = vmatprep.subr.mxu0 0.0
        %1941 = vmatpush1.msra.mxu0 0.0
        %1942 = vmatprep.subr.mxu0 0.0
        %1943 = vmatpush1.msra.mxu0 0.0
        %1944 = vmatprep.subr.mxu0 0.0
        %1945 = vmatpush1.msra.mxu0 0.0
        %1946 = vmatprep.subr.mxu0 0.0
        %1947 = vmatpush1.msra.mxu0 0.0
        %1948 = vmatprep.subr.mxu0 0.0
        %1949 = vmatpush1.msra.mxu0 0.0
        %1950 = vmatprep.subr.mxu0 0.0
        %1951 = vmatpush1.msra.mxu0 0.0
        %1952 = vmatprep.subr.mxu0 0.0
        %1953 = vmatpush1.msra.mxu0 0.0
        %1954 = vmatprep.subr.mxu0 0.0
        %1955 = vmatpush1.msra.mxu0 0.0
        %1956 = vmatprep.subr.mxu0 0.0
        %1957 = vmatpush1.msra.mxu0 0.0
        %1958 = vmatprep.subr.mxu0 0.0
        %1959 = vmatpush1.msra.mxu0 0.0
        %1960 = vmatprep.subr.mxu0 0.0
        %1961 = vmatpush1.msra.mxu0 0.0
        %1962 = vmatprep.subr.mxu0 0.0
        %1963 = vmatpush1.msra.mxu0 0.0
        %1964 = vmatprep.subr.mxu0 0.0
        %1965 = vmatpush1.msra.mxu0 0.0
        %1966 = vmatprep.mubr.f32.mxu0 0.0
        %1967 = vmatmul.mubr.f32.gmra.mrb[0].mxu0 %v1900
        %v1968 = vpop.f32.mrb[0].mxu0
        %v1969 = vadd.f32 %v1897, %v1968
        %v1970 = vpop.f32.mrb[0].mxu0
        %1971 = vdwg.mxu0
        %v1972 = vmul.f32 %v1969, 0.5
        %v1973 = vmul.f32 %v1969, 0.70710677
        %v1974 = vand.u32 2147483647, %v1973
        %v1975 = vmul.f32 %v1974, 0.3275911
        %v1976 = vadd.f32 %v1975, 1.0
        %v1977 = vrcp.pop %v1976
        %v1978 = vmul.f32 1.0, %v1977
        %v1979 = vmul.f32 %v1978, 1.0614054
        %v1980 = vadd.f32 %v1979, -1.4531521
        %v1981 = vmul.f32 %v1980, %v1978
        %v1982 = vadd.f32 %v1981, 1.4214138
        %v1983 = vmul.f32 %v1982, %v1978
        %v1984 = vadd.f32 %v1983, -0.28449672
        %v1985 = vmul.f32 %v1984, %v1978
        %v1986 = vadd.f32 %v1985, 0.2548296
        %v1987 = vmul.f32 %v1986, %v1978
        %v1988 = vsub.f32 0.0, %v1974
        %v1989 = vmul.f32 %v1988, %v1974
        %v1990 = vmul.f32 %v1989, 1.442695
        %v1991 = vpow.pop %v1990
        %v1992 = vmul.f32 %v1987, %v1991
        %v1993 = vsub.f32 1.0, %v1992
        %vm1994 = vcmp.ge.f32.partialorder %v1973, 0.0
        %v1995 = vsub.f32 0.0, %v1993
        %v1996 = vsel %vm1994, %v1993, %v1995
        %v1997 = vadd.f32 %v1996, 1.0
        %v1998 = vmul.f32 %v1972, %v1997
        %v1999 = vld [vmem:[%s14] sm:$0xff]
        %v2000 = vld [vmem:[%s14 + $0x8] sm:$0xff]
        %v2001 = vld [vmem:[%s14 + $0x10] sm:$0xff]
        %v2002 = vld [vmem:[%s14 + $0x18] sm:$0xff]
        %v2003 = vld [vmem:[%s14 + $0x20] sm:$0xff]
        %v2004 = vld [vmem:[%s14 + $0x28] sm:$0xff]
        %v2005 = vld [vmem:[%s14 + $0x30] sm:$0xff]
        %v2006 = vld [vmem:[%s14 + $0x38] sm:$0xff]
        %v2007 = vld [vmem:[%s15] sm:$0x1]
        %v2009 = vlaneseq
        %v2010 = vshrl.u32 %v2009, 7
        %v2011 = vsub.s32 0, %v2010
        %v2012 = vrot.slane %v2007, %v2011
        %vm2014 = vcmask 523264
        %v2016 = vsel %vm2014, %v1998, 0
        %2018 = vmatprep.subr.mxu0 0.0
        %2019 = vmatpush1.msra.mxu0 %v1999
        %2020 = vmatprep.subr.mxu0 0.0
        %2021 = vmatpush1.msra.mxu0 %v2000
        %2022 = vmatprep.subr.mxu0 0.0
        %2023 = vmatpush1.msra.mxu0 %v2001
        %2024 = vmatprep.subr.mxu0 0.0
        %2025 = vmatpush1.msra.mxu0 %v2002
        %2026 = vmatprep.subr.mxu0 0.0
        %2027 = vmatpush1.msra.mxu0 %v2003
        %2028 = vmatprep.subr.mxu0 0.0
        %2029 = vmatpush1.msra.mxu0 %v2004
        %2030 = vmatprep.subr.mxu0 0.0
        %2031 = vmatpush1.msra.mxu0 %v2005
        %2032 = vmatprep.subr.mxu0 0.0
        %2033 = vmatpush1.msra.mxu0 %v2006
        %2034 = vmatprep.subr.mxu0 0.0
        %2035 = vmatpush1.msra.mxu0 0.0
        %2036 = vmatprep.subr.mxu0 0.0
        %2037 = vmatpush1.msra.mxu0 0.0
        %2038 = vmatprep.subr.mxu0 0.0
        %2039 = vmatpush1.msra.mxu0 0.0
        %2040 = vmatprep.subr.mxu0 0.0
        %2041 = vmatpush1.msra.mxu0 0.0
        %2042 = vmatprep.subr.mxu0 0.0
        %2043 = vmatpush1.msra.mxu0 0.0
        %2044 = vmatprep.subr.mxu0 0.0
        %2045 = vmatpush1.msra.mxu0 0.0
        %2046 = vmatprep.subr.mxu0 0.0
        %2047 = vmatpush1.msra.mxu0 0.0
        %2048 = vmatprep.subr.mxu0 0.0
        %2049 = vmatpush1.msra.mxu0 0.0
        %2050 = vmatprep.subr.mxu0 0.0
        %2051 = vmatpush1.msra.mxu0 0.0
        %2052 = vmatprep.subr.mxu0 0.0
        %2053 = vmatpush1.msra.mxu0 0.0
        %2054 = vmatprep.subr.mxu0 0.0
        %2055 = vmatpush1.msra.mxu0 0.0
        %2056 = vmatprep.subr.mxu0 0.0
        %2057 = vmatpush1.msra.mxu0 0.0
        %2058 = vmatprep.subr.mxu0 0.0
        %2059 = vmatpush1.msra.mxu0 0.0
        %2060 = vmatprep.subr.mxu0 0.0
        %2061 = vmatpush1.msra.mxu0 0.0
        %2062 = vmatprep.subr.mxu0 0.0
        %2063 = vmatpush1.msra.mxu0 0.0
        %2064 = vmatprep.subr.mxu0 0.0
        %2065 = vmatpush1.msra.mxu0 0.0
        %2066 = vmatprep.subr.mxu0 0.0
        %2067 = vmatpush1.msra.mxu0 0.0
        %2068 = vmatprep.subr.mxu0 0.0
        %2069 = vmatpush1.msra.mxu0 0.0
        %2070 = vmatprep.subr.mxu0 0.0
        %2071 = vmatpush1.msra.mxu0 0.0
        %2072 = vmatprep.subr.mxu0 0.0
        %2073 = vmatpush1.msra.mxu0 0.0
        %2074 = vmatprep.subr.mxu0 0.0
        %2075 = vmatpush1.msra.mxu0 0.0
        %2076 = vmatprep.subr.mxu0 0.0
        %2077 = vmatpush1.msra.mxu0 0.0
        %2078 = vmatprep.subr.mxu0 0.0
        %2079 = vmatpush1.msra.mxu0 0.0
        %2080 = vmatprep.subr.mxu0 0.0
        %2081 = vmatpush1.msra.mxu0 0.0
        %2082 = vmatprep.mubr.f32.mxu0 0.0
        %2083 = vmatmul.mubr.f32.gmra.mrb[0].mxu0 %v2016
        %v2084 = vpop.f32.mrb[0].mxu0
        %v2085 = vadd.f32 %v2012, %v2084
        %v2086 = vpop.f32.mrb[0].mxu0
        %2087 = vdwg.mxu0
        %v2088 = vadd.f32 %v1858, %v2085
        %s2089 = scalar_lea.vmem %s4, 1
        %v2090 = vld [vmem:[%s2089] sm:$0x1]
        %s2091 = scalar_lea.vmem %s5, 1
        %v2092 = vld [vmem:[%s2091] sm:$0x1]
        %v2093 = vsel %vm768, %v2088, 0.0
        %2094 = vadd.xlane.f32.xlu0 %v2093
        %v2095 = vpop.xlane.xlu0 %2094
        %v2096 = vmul.f32 %v2095, %v772
        %v2097 = vsub.f32 %v2088, %v2096
        %v2098 = vmul.f32 %v2097, %v2097
        %v2099 = vsel %vm768, %v2098, 0.0
        %2100 = vadd.xlane.f32.xlu0 %v2099
        %v2101 = vpop.xlane.xlu0 %2100
        %v2102 = vmul.f32 %v2101, %v772
        %v2103 = vadd.f32 %v2102, 1e-05
        %v2104 = vrsqrt.pop %v2103
        %v2105 = vmul.f32 %v2097, %v2104
        %v2107 = vlaneseq
        %v2108 = vshrl.u32 %v2107, 7
        %v2109 = vsub.s32 0, %v2108
        %v2110 = vrot.slane %v2090, %v2109
        %v2112 = vmul.f32 %v2105, %v2110
        %v2114 = vlaneseq
        %v2115 = vshrl.u32 %v2114, 7
        %v2116 = vsub.s32 0, %v2115
        %v2117 = vrot.slane %v2092, %v2116
        %v2119 = vadd.f32 %v2112, %v2117
        %s2120 = scalar_lea.vmem %s6, 32
        %v2121 = vld [vmem:[%s2120] sm:$0xff]
        %v2122 = vld [vmem:[%s2120 + $0x8] sm:$0xff]
        %v2123 = vld [vmem:[%s2120 + $0x10] sm:$0xff]
        %v2124 = vld [vmem:[%s2120 + $0x18] sm:$0xff]
        %s2125 = scalar_lea.vmem %s7, 1
        %v2126 = vld [vmem:[%s2125] sm:$0x1]
        %v2128 = vlaneseq
        %v2129 = vshrl.u32 %v2128, 7
        %v2130 = vsub.s32 0, %v2129
        %v2131 = vrot.slane %v2126, %v2130
        %v2134 = vsel %vm690, %v2119, 0
        %2136 = vmatprep.subr.mxu0 0.0
        %2137 = vmatpush1.msra.mxu0 %v2121
        %2138 = vmatprep.subr.mxu0 0.0
        %2139 = vmatpush1.msra.mxu0 %v2122
        %2140 = vmatprep.subr.mxu0 0.0
        %2141 = vmatpush1.msra.mxu0 %v2123
        %2142 = vmatprep.subr.mxu0 0.0
        %2143 = vmatpush1.msra.mxu0 %v2124
        %2144 = vmatprep.subr.mxu0 0.0
        %2145 = vmatpush1.msra.mxu0 0.0
        %2146 = vmatprep.subr.mxu0 0.0
        %2147 = vmatpush1.msra.mxu0 0.0
        %2148 = vmatprep.subr.mxu0 0.0
        %2149 = vmatpush1.msra.mxu0 0.0
        %2150 = vmatprep.subr.mxu0 0.0
        %2151 = vmatpush1.msra.mxu0 0.0
        %2152 = vmatprep.subr.mxu0 0.0
        %2153 = vmatpush1.msra.mxu0 0.0
        %2154 = vmatprep.subr.mxu0 0.0
        %2155 = vmatpush1.msra.mxu0 0.0
        %2156 = vmatprep.subr.mxu0 0.0
        %2157 = vmatpush1.msra.mxu0 0.0
        %2158 = vmatprep.subr.mxu0 0.0
        %2159 = vmatpush1.msra.mxu0 0.0
        %2160 = vmatprep.subr.mxu0 0.0
        %2161 = vmatpush1.msra.mxu0 0.0
        %2162 = vmatprep.subr.mxu0 0.0
        %2163 = vmatpush1.msra.mxu0 0.0
        %2164 = vmatprep.subr.mxu0 0.0
        %2165 = vmatpush1.msra.mxu0 0.0
        %2166 = vmatprep.subr.mxu0 0.0
        %2167 = vmatpush1.msra.mxu0 0.0
        %2168 = vmatprep.subr.mxu0 0.0
        %2169 = vmatpush1.msra.mxu0 0.0
        %2170 = vmatprep.subr.mxu0 0.0
        %2171 = vmatpush1.msra.mxu0 0.0
        %2172 = vmatprep.subr.mxu0 0.0
        %2173 = vmatpush1.msra.mxu0 0.0
        %2174 = vmatprep.subr.mxu0 0.0
        %2175 = vmatpush1.msra.mxu0 0.0
        %2176 = vmatprep.subr.mxu0 0.0
        %2177 = vmatpush1.msra.mxu0 0.0
        %2178 = vmatprep.subr.mxu0 0.0
        %2179 = vmatpush1.msra.mxu0 0.0
        %2180 = vmatprep.subr.mxu0 0.0
        %2181 = vmatpush1.msra.mxu0 0.0
        %2182 = vmatprep.subr.mxu0 0.0
        %2183 = vmatpush1.msra.mxu0 0.0
        %2184 = vmatprep.subr.mxu0 0.0
        %2185 = vmatpush1.msra.mxu0 0.0
        %2186 = vmatprep.subr.mxu0 0.0
        %2187 = vmatpush1.msra.mxu0 0.0
        %2188 = vmatprep.subr.mxu0 0.0
        %2189 = vmatpush1.msra.mxu0 0.0
        %2190 = vmatprep.subr.mxu0 0.0
        %2191 = vmatpush1.msra.mxu0 0.0
        %2192 = vmatprep.subr.mxu0 0.0
        %2193 = vmatpush1.msra.mxu0 0.0
        %2194 = vmatprep.subr.mxu0 0.0
        %2195 = vmatpush1.msra.mxu0 0.0
        %2196 = vmatprep.subr.mxu0 0.0
        %2197 = vmatpush1.msra.mxu0 0.0
        %2198 = vmatprep.subr.mxu0 0.0
        %2199 = vmatpush1.msra.mxu0 0.0
        %2200 = vmatprep.mubr.f32.mxu0 0.0
        %2201 = vmatmul.mubr.f32.gmra.mrb[0].mxu0 %v2134
        %v2202 = vpop.f32.mrb[0].mxu0
        %v2203 = vadd.f32 %v2131, %v2202
        %v2204 = vpop.f32.mrb[0].mxu0
        %2205 = vdwg.mxu0
        %s2206 = scalar_lea.vmem %s8, 32
        %v2207 = vld [vmem:[%s2206] sm:$0xff]
        %v2208 = vld [vmem:[%s2206 + $0x8] sm:$0xff]
        %v2209 = vld [vmem:[%s2206 + $0x10] sm:$0xff]
        %v2210 = vld [vmem:[%s2206 + $0x18] sm:$0xff]
        %2212 = vrot.lane.b32.xlu0 %v2203, 96
        %v2213 = vpop.permute.xlu0 %2212
        %v2214 = vsel %vm888, %v2203, 0
        %v2216 = vsel %vm888, %v2213, 0
        %2218 = vmatprep.subr.mxu0 0.0
        %2219 = vmatpush1.xpose.msra.mxu0 %v2216
        %2220 = vmatprep.subr.mxu0 0.0
        %2221 = vmatpush1.xpose.msra.mxu0 0.0
        %2222 = vmatprep.subr.mxu0 0.0
        %2223 = vmatpush1.xpose.msra.mxu0 0.0
        %2224 = vmatprep.subr.mxu0 0.0
        %2225 = vmatpush1.xpose.msra.mxu0 0.0
        %2226 = vmatprep.subr.mxu0 0.0
        %2227 = vmatpush1.xpose.msra.mxu0 0.0
        %2228 = vmatprep.subr.mxu0 0.0
        %2229 = vmatpush1.xpose.msra.mxu0 0.0
        %2230 = vmatprep.subr.mxu0 0.0
        %2231 = vmatpush1.xpose.msra.mxu0 0.0
        %2232 = vmatprep.subr.mxu0 0.0
        %2233 = vmatpush1.xpose.msra.mxu0 0.0
        %2234 = vmatprep.subr.mxu0 0.0
        %2235 = vmatpush1.xpose.msra.mxu0 0.0
        %2236 = vmatprep.subr.mxu0 0.0
        %2237 = vmatpush1.xpose.msra.mxu0 0.0
        %2238 = vmatprep.subr.mxu0 0.0
        %2239 = vmatpush1.xpose.msra.mxu0 0.0
        %2240 = vmatprep.subr.mxu0 0.0
        %2241 = vmatpush1.xpose.msra.mxu0 0.0
        %2242 = vmatprep.subr.mxu0 0.0
        %2243 = vmatpush1.xpose.msra.mxu0 0.0
        %2244 = vmatprep.subr.mxu0 0.0
        %2245 = vmatpush1.xpose.msra.mxu0 0.0
        %2246 = vmatprep.subr.mxu0 0.0
        %2247 = vmatpush1.xpose.msra.mxu0 0.0
        %2248 = vmatprep.subr.mxu0 0.0
        %2249 = vmatpush1.xpose.msra.mxu0 0.0
        %2250 = vmatprep.subr.mxu0 0.0
        %2251 = vmatpush1.xpose.msra.mxu0 0.0
        %2252 = vmatprep.subr.mxu0 0.0
        %2253 = vmatpush1.xpose.msra.mxu0 0.0
        %2254 = vmatprep.subr.mxu0 0.0
        %2255 = vmatpush1.xpose.msra.mxu0 0.0
        %2256 = vmatprep.subr.mxu0 0.0
        %2257 = vmatpush1.xpose.msra.mxu0 0.0
        %2258 = vmatprep.subr.mxu0 0.0
        %2259 = vmatpush1.xpose.msra.mxu0 0.0
        %2260 = vmatprep.subr.mxu0 0.0
        %2261 = vmatpush1.xpose.msra.mxu0 0.0
        %2262 = vmatprep.subr.mxu0 0.0
        %2263 = vmatpush1.xpose.msra.mxu0 0.0
        %2264 = vmatprep.subr.mxu0 0.0
        %2265 = vmatpush1.xpose.msra.mxu0 0.0
        %2266 = vmatprep.subr.mxu0 0.0
        %2267 = vmatpush1.xpose.msra.mxu0 0.0
        %2268 = vmatprep.subr.mxu0 0.0
        %2269 = vmatpush1.xpose.msra.mxu0 0.0
        %2270 = vmatprep.subr.mxu0 0.0
        %2271 = vmatpush1.xpose.msra.mxu0 0.0
        %2272 = vmatprep.subr.mxu0 0.0
        %2273 = vmatpush1.xpose.msra.mxu0 0.0
        %2274 = vmatprep.subr.mxu0 0.0
        %2275 = vmatpush1.xpose.msra.mxu0 0.0
        %2276 = vmatprep.subr.mxu0 0.0
        %2277 = vmatpush1.xpose.msra.mxu0 0.0
        %2278 = vmatprep.subr.mxu0 0.0
        %2279 = vmatpush1.xpose.msra.mxu0 0.0
        %2280 = vmatprep.subr.mxu0 0.0
        %2281 = vmatpush1.xpose.msra.mxu0 0.0
        %2282 = vmatprep.mubr.f32.mxu0 0.0
        %2283 = vmatmul.mubr.f32.gmra.mrb[0].mxu0 %v2214
        %v2284 = vpop.f32.mrb[0].mxu0
        %v2285 = vadd.f32 0.0, %v2284
        %v2286 = vpop.f32.mrb[0].mxu0
        %2287 = vdwg.mxu0
        %v2288 = vmul.f32 %v2285, 0.35355338
        %v2289 = vsel %vm964, %v2288, -inf
        %2290 = vmax.xlane.f32.xlu0 %v2289
        %v2291 = vpop.xlane.xlu0 %2290
        %v2292 = vsub.f32 %v2288, %v2291
        %v2293 = vmul.f32 %v2292, 1.442695
        %v2294 = vpow.pop %v2293
        %v2295 = vsel %vm964, %v2294, 0.0
        %2296 = vadd.xlane.f32.xlu0 %v2295
        %v2297 = vpop.xlane.xlu0 %2296
        %v2298 = vrcp.pop %v2297
        %v2299 = vmul.f32 %v2294, %v2298
        %2300 = vrot.lane.b32.xlu0 %v2203, 64
        %v2301 = vpop.permute.xlu0 %2300
        %v2303 = vsel %vm978, %v2299, 0
        %v2305 = vsel %vm982, %v2301, 0
        %2307 = vmatprep.subr.mxu0 0.0
        %2308 = vmatpush1.msra.mxu0 %v2305
        %2309 = vmatprep.subr.mxu0 0.0
        %2310 = vmatpush1.msra.mxu0 0.0
        %2311 = vmatprep.subr.mxu0 0.0
        %2312 = vmatpush1.msra.mxu0 0.0
        %2313 = vmatprep.subr.mxu0 0.0
        %2314 = vmatpush1.msra.mxu0 0.0
        %2315 = vmatprep.subr.mxu0 0.0
        %2316 = vmatpush1.msra.mxu0 0.0
        %2317 = vmatprep.subr.mxu0 0.0
        %2318 = vmatpush1.msra.mxu0 0.0
        %2319 = vmatprep.subr.mxu0 0.0
        %2320 = vmatpush1.msra.mxu0 0.0
        %2321 = vmatprep.subr.mxu0 0.0
        %2322 = vmatpush1.msra.mxu0 0.0
        %2323 = vmatprep.subr.mxu0 0.0
        %2324 = vmatpush1.msra.mxu0 0.0
        %2325 = vmatprep.subr.mxu0 0.0
        %2326 = vmatpush1.msra.mxu0 0.0
        %2327 = vmatprep.subr.mxu0 0.0
        %2328 = vmatpush1.msra.mxu0 0.0
        %2329 = vmatprep.subr.mxu0 0.0
        %2330 = vmatpush1.msra.mxu0 0.0
        %2331 = vmatprep.subr.mxu0 0.0
        %2332 = vmatpush1.msra.mxu0 0.0
        %2333 = vmatprep.subr.mxu0 0.0
        %2334 = vmatpush1.msra.mxu0 0.0
        %2335 = vmatprep.subr.mxu0 0.0
        %2336 = vmatpush1.msra.mxu0 0.0
        %2337 = vmatprep.subr.mxu0 0.0
        %2338 = vmatpush1.msra.mxu0 0.0
        %2339 = vmatprep.subr.mxu0 0.0
        %2340 = vmatpush1.msra.mxu0 0.0
        %2341 = vmatprep.subr.mxu0 0.0
        %2342 = vmatpush1.msra.mxu0 0.0
        %2343 = vmatprep.subr.mxu0 0.0
        %2344 = vmatpush1.msra.mxu0 0.0
        %2345 = vmatprep.subr.mxu0 0.0
        %2346 = vmatpush1.msra.mxu0 0.0
        %2347 = vmatprep.subr.mxu0 0.0
        %2348 = vmatpush1.msra.mxu0 0.0
        %2349 = vmatprep.subr.mxu0 0.0
        %2350 = vmatpush1.msra.mxu0 0.0
        %2351 = vmatprep.subr.mxu0 0.0
        %2352 = vmatpush1.msra.mxu0 0.0
        %2353 = vmatprep.subr.mxu0 0.0
        %2354 = vmatpush1.msra.mxu0 0.0
        %2355 = vmatprep.subr.mxu0 0.0
        %2356 = vmatpush1.msra.mxu0 0.0
        %2357 = vmatprep.subr.mxu0 0.0
        %2358 = vmatpush1.msra.mxu0 0.0
        %2359 = vmatprep.subr.mxu0 0.0
        %2360 = vmatpush1.msra.mxu0 0.0
        %2361 = vmatprep.subr.mxu0 0.0
        %2362 = vmatpush1.msra.mxu0 0.0
        %2363 = vmatprep.subr.mxu0 0.0
        %2364 = vmatpush1.msra.mxu0 0.0
        %2365 = vmatprep.subr.mxu0 0.0
        %2366 = vmatpush1.msra.mxu0 0.0
        %2367 = vmatprep.subr.mxu0 0.0
        %2368 = vmatpush1.msra.mxu0 0.0
        %2369 = vmatprep.subr.mxu0 0.0
        %2370 = vmatpush1.msra.mxu0 0.0
        %2371 = vmatprep.mubr.f32.mxu0 0.0
        %2372 = vmatmul.mubr.f32.gmra.mrb[0].mxu0 %v2303
        %v2373 = vpop.f32.mrb[0].mxu0
        %v2374 = vadd.f32 0.0, %v2373
        %v2375 = vpop.f32.mrb[0].mxu0
        %2376 = vdwg.mxu0
        %2377 = vrot.lane.b32.xlu0 %v2203, 120
        %v2378 = vpop.permute.xlu0 %2377
        %2379 = vrot.lane.b32.xlu0 %v2203, 88
        %v2380 = vpop.permute.xlu0 %2379
        %v2381 = vsel %vm888, %v2378, 0
        %v2383 = vsel %vm888, %v2380, 0
        %2385 = vmatprep.subr.mxu0 0.0
        %2386 = vmatpush1.xpose.msra.mxu0 %v2383
        %2387 = vmatprep.subr.mxu0 0.0
        %2388 = vmatpush1.xpose.msra.mxu0 0.0
        %2389 = vmatprep.subr.mxu0 0.0
        %2390 = vmatpush1.xpose.msra.mxu0 0.0
        %2391 = vmatprep.subr.mxu0 0.0
        %2392 = vmatpush1.xpose.msra.mxu0 0.0
        %2393 = vmatprep.subr.mxu0 0.0
        %2394 = vmatpush1.xpose.msra.mxu0 0.0
        %2395 = vmatprep.subr.mxu0 0.0
        %2396 = vmatpush1.xpose.msra.mxu0 0.0
        %2397 = vmatprep.subr.mxu0 0.0
        %2398 = vmatpush1.xpose.msra.mxu0 0.0
        %2399 = vmatprep.subr.mxu0 0.0
        %2400 = vmatpush1.xpose.msra.mxu0 0.0
        %2401 = vmatprep.subr.mxu0 0.0
        %2402 = vmatpush1.xpose.msra.mxu0 0.0
        %2403 = vmatprep.subr.mxu0 0.0
        %2404 = vmatpush1.xpose.msra.mxu0 0.0
        %2405 = vmatprep.subr.mxu0 0.0
        %2406 = vmatpush1.xpose.msra.mxu0 0.0
        %2407 = vmatprep.subr.mxu0 0.0
        %2408 = vmatpush1.xpose.msra.mxu0 0.0
        %2409 = vmatprep.subr.mxu0 0.0
        %2410 = vmatpush1.xpose.msra.mxu0 0.0
        %2411 = vmatprep.subr.mxu0 0.0
        %2412 = vmatpush1.xpose.msra.mxu0 0.0
        %2413 = vmatprep.subr.mxu0 0.0
        %2414 = vmatpush1.xpose.msra.mxu0 0.0
        %2415 = vmatprep.subr.mxu0 0.0
        %2416 = vmatpush1.xpose.msra.mxu0 0.0
        %2417 = vmatprep.subr.mxu0 0.0
        %2418 = vmatpush1.xpose.msra.mxu0 0.0
        %2419 = vmatprep.subr.mxu0 0.0
        %2420 = vmatpush1.xpose.msra.mxu0 0.0
        %2421 = vmatprep.subr.mxu0 0.0
        %2422 = vmatpush1.xpose.msra.mxu0 0.0
        %2423 = vmatprep.subr.mxu0 0.0
        %2424 = vmatpush1.xpose.msra.mxu0 0.0
        %2425 = vmatprep.subr.mxu0 0.0
        %2426 = vmatpush1.xpose.msra.mxu0 0.0
        %2427 = vmatprep.subr.mxu0 0.0
        %2428 = vmatpush1.xpose.msra.mxu0 0.0
        %2429 = vmatprep.subr.mxu0 0.0
        %2430 = vmatpush1.xpose.msra.mxu0 0.0
        %2431 = vmatprep.subr.mxu0 0.0
        %2432 = vmatpush1.xpose.msra.mxu0 0.0
        %2433 = vmatprep.subr.mxu0 0.0
        %2434 = vmatpush1.xpose.msra.mxu0 0.0
        %2435 = vmatprep.subr.mxu0 0.0
        %2436 = vmatpush1.xpose.msra.mxu0 0.0
        %2437 = vmatprep.subr.mxu0 0.0
        %2438 = vmatpush1.xpose.msra.mxu0 0.0
        %2439 = vmatprep.subr.mxu0 0.0
        %2440 = vmatpush1.xpose.msra.mxu0 0.0
        %2441 = vmatprep.subr.mxu0 0.0
        %2442 = vmatpush1.xpose.msra.mxu0 0.0
        %2443 = vmatprep.subr.mxu0 0.0
        %2444 = vmatpush1.xpose.msra.mxu0 0.0
        %2445 = vmatprep.subr.mxu0 0.0
        %2446 = vmatpush1.xpose.msra.mxu0 0.0
        %2447 = vmatprep.subr.mxu0 0.0
        %2448 = vmatpush1.xpose.msra.mxu0 0.0
        %2449 = vmatprep.mubr.f32.mxu0 0.0
        %2450 = vmatmul.mubr.f32.gmra.mrb[0].mxu0 %v2381
        %v2451 = vpop.f32.mrb[0].mxu0
        %v2452 = vadd.f32 0.0, %v2451
        %v2453 = vpop.f32.mrb[0].mxu0
        %2454 = vdwg.mxu0
        %v2455 = vmul.f32 %v2452, 0.35355338
        %v2456 = vsel %vm964, %v2455, -inf
        %2457 = vmax.xlane.f32.xlu0 %v2456
        %v2458 = vpop.xlane.xlu0 %2457
        %v2459 = vsub.f32 %v2455, %v2458
        %v2460 = vmul.f32 %v2459, 1.442695
        %v2461 = vpow.pop %v2460
        %v2462 = vsel %vm964, %v2461, 0.0
        %2463 = vadd.xlane.f32.xlu0 %v2462
        %v2464 = vpop.xlane.xlu0 %2463
        %v2465 = vrcp.pop %v2464
        %v2466 = vmul.f32 %v2461, %v2465
        %2467 = vrot.lane.b32.xlu0 %v2203, 56
        %v2468 = vpop.permute.xlu0 %2467
        %v2470 = vsel %vm978, %v2466, 0
        %v2472 = vsel %vm982, %v2468, 0
        %2474 = vmatprep.subr.mxu0 0.0
        %2475 = vmatpush1.msra.mxu0 %v2472
        %2476 = vmatprep.subr.mxu0 0.0
        %2477 = vmatpush1.msra.mxu0 0.0
        %2478 = vmatprep.subr.mxu0 0.0
        %2479 = vmatpush1.msra.mxu0 0.0
        %2480 = vmatprep.subr.mxu0 0.0
        %2481 = vmatpush1.msra.mxu0 0.0
        %2482 = vmatprep.subr.mxu0 0.0
        %2483 = vmatpush1.msra.mxu0 0.0
        %2484 = vmatprep.subr.mxu0 0.0
        %2485 = vmatpush1.msra.mxu0 0.0
        %2486 = vmatprep.subr.mxu0 0.0
        %2487 = vmatpush1.msra.mxu0 0.0
        %2488 = vmatprep.subr.mxu0 0.0
        %2489 = vmatpush1.msra.mxu0 0.0
        %2490 = vmatprep.subr.mxu0 0.0
        %2491 = vmatpush1.msra.mxu0 0.0
        %2492 = vmatprep.subr.mxu0 0.0
        %2493 = vmatpush1.msra.mxu0 0.0
        %2494 = vmatprep.subr.mxu0 0.0
        %2495 = vmatpush1.msra.mxu0 0.0
        %2496 = vmatprep.subr.mxu0 0.0
        %2497 = vmatpush1.msra.mxu0 0.0
        %2498 = vmatprep.subr.mxu0 0.0
        %2499 = vmatpush1.msra.mxu0 0.0
        %2500 = vmatprep.subr.mxu0 0.0
        %2501 = vmatpush1.msra.mxu0 0.0
        %2502 = vmatprep.subr.mxu0 0.0
        %2503 = vmatpush1.msra.mxu0 0.0
        %2504 = vmatprep.subr.mxu0 0.0
        %2505 = vmatpush1.msra.mxu0 0.0
        %2506 = vmatprep.subr.mxu0 0.0
        %2507 = vmatpush1.msra.mxu0 0.0
        %2508 = vmatprep.subr.mxu0 0.0
        %2509 = vmatpush1.msra.mxu0 0.0
        %2510 = vmatprep.subr.mxu0 0.0
        %2511 = vmatpush1.msra.mxu0 0.0
        %2512 = vmatprep.subr.mxu0 0.0
        %2513 = vmatpush1.msra.mxu0 0.0
        %2514 = vmatprep.subr.mxu0 0.0
        %2515 = vmatpush1.msra.mxu0 0.0
        %2516 = vmatprep.subr.mxu0 0.0
        %2517 = vmatpush1.msra.mxu0 0.0
        %2518 = vmatprep.subr.mxu0 0.0
        %2519 = vmatpush1.msra.mxu0 0.0
        %2520 = vmatprep.subr.mxu0 0.0
        %2521 = vmatpush1.msra.mxu0 0.0
        %2522 = vmatprep.subr.mxu0 0.0
        %2523 = vmatpush1.msra.mxu0 0.0
        %2524 = vmatprep.subr.mxu0 0.0
        %2525 = vmatpush1.msra.mxu0 0.0
        %2526 = vmatprep.subr.mxu0 0.0
        %2527 = vmatpush1.msra.mxu0 0.0
        %2528 = vmatprep.subr.mxu0 0.0
        %2529 = vmatpush1.msra.mxu0 0.0
        %2530 = vmatprep.subr.mxu0 0.0
        %2531 = vmatpush1.msra.mxu0 0.0
        %2532 = vmatprep.subr.mxu0 0.0
        %2533 = vmatpush1.msra.mxu0 0.0
        %2534 = vmatprep.subr.mxu0 0.0
        %2535 = vmatpush1.msra.mxu0 0.0
        %2536 = vmatprep.subr.mxu0 0.0
        %2537 = vmatpush1.msra.mxu0 0.0
        %2538 = vmatprep.mubr.f32.mxu0 0.0
        %2539 = vmatmul.mubr.f32.gmra.mrb[0].mxu0 %v2470
        %v2540 = vpop.f32.mrb[0].mxu0
        %v2541 = vadd.f32 0.0, %v2540
        %v2542 = vpop.f32.mrb[0].mxu0
        %2543 = vdwg.mxu0
        %v2545 = vsel %vm888, %v2541, 0
        %2547 = vmatprep.subr.mxu0 0.0
        %2548 = vmatpush1.msra.mxu0 %v2208
        %2549 = vmatprep.subr.mxu0 0.0
        %2550 = vmatpush1.msra.mxu0 0.0
        %2551 = vmatprep.subr.mxu0 0.0
        %2552 = vmatpush1.msra.mxu0 0.0
        %2553 = vmatprep.subr.mxu0 0.0
        %2554 = vmatpush1.msra.mxu0 0.0
        %2555 = vmatprep.subr.mxu0 0.0
        %2556 = vmatpush1.msra.mxu0 0.0
        %2557 = vmatprep.subr.mxu0 0.0
        %2558 = vmatpush1.msra.mxu0 0.0
        %2559 = vmatprep.subr.mxu0 0.0
        %2560 = vmatpush1.msra.mxu0 0.0
        %2561 = vmatprep.subr.mxu0 0.0
        %2562 = vmatpush1.msra.mxu0 0.0
        %2563 = vmatprep.subr.mxu0 0.0
        %2564 = vmatpush1.msra.mxu0 0.0
        %2565 = vmatprep.subr.mxu0 0.0
        %2566 = vmatpush1.msra.mxu0 0.0
        %2567 = vmatprep.subr.mxu0 0.0
        %2568 = vmatpush1.msra.mxu0 0.0
        %2569 = vmatprep.subr.mxu0 0.0
        %2570 = vmatpush1.msra.mxu0 0.0
        %2571 = vmatprep.subr.mxu0 0.0
        %2572 = vmatpush1.msra.mxu0 0.0
        %2573 = vmatprep.subr.mxu0 0.0
        %2574 = vmatpush1.msra.mxu0 0.0
        %2575 = vmatprep.subr.mxu0 0.0
        %2576 = vmatpush1.msra.mxu0 0.0
        %2577 = vmatprep.subr.mxu0 0.0
        %2578 = vmatpush1.msra.mxu0 0.0
        %2579 = vmatprep.subr.mxu0 0.0
        %2580 = vmatpush1.msra.mxu0 0.0
        %2581 = vmatprep.subr.mxu0 0.0
        %2582 = vmatpush1.msra.mxu0 0.0
        %2583 = vmatprep.subr.mxu0 0.0
        %2584 = vmatpush1.msra.mxu0 0.0
        %2585 = vmatprep.subr.mxu0 0.0
        %2586 = vmatpush1.msra.mxu0 0.0
        %2587 = vmatprep.subr.mxu0 0.0
        %2588 = vmatpush1.msra.mxu0 0.0
        %2589 = vmatprep.subr.mxu0 0.0
        %2590 = vmatpush1.msra.mxu0 0.0
        %2591 = vmatprep.subr.mxu0 0.0
        %2592 = vmatpush1.msra.mxu0 0.0
        %2593 = vmatprep.subr.mxu0 0.0
        %2594 = vmatpush1.msra.mxu0 0.0
        %2595 = vmatprep.subr.mxu0 0.0
        %2596 = vmatpush1.msra.mxu0 0.0
        %2597 = vmatprep.subr.mxu0 0.0
        %2598 = vmatpush1.msra.mxu0 0.0
        %2599 = vmatprep.subr.mxu0 0.0
        %2600 = vmatpush1.msra.mxu0 0.0
        %2601 = vmatprep.subr.mxu0 0.0
        %2602 = vmatpush1.msra.mxu0 0.0
        %2603 = vmatprep.subr.mxu0 0.0
        %2604 = vmatpush1.msra.mxu0 0.0
        %2605 = vmatprep.subr.mxu0 0.0
        %2606 = vmatpush1.msra.mxu0 0.0
        %2607 = vmatprep.subr.mxu0 0.0
        %2608 = vmatpush1.msra.mxu0 0.0
        %2609 = vmatprep.subr.mxu0 0.0
        %2610 = vmatpush1.msra.mxu0 0.0
        %2611 = vmatprep.mubr.f32.mxu0 0.0
        %2612 = vmatmul.mubr.f32.gmra.mrb[0].mxu0 %v2545
        %v2613 = vpop.f32.mrb[0].mxu0
        %v2614 = vadd.f32 0.0, %v2613
        %v2615 = vpop.f32.mrb[0].mxu0
        %2616 = vdwg.mxu0
        %v2618 = vsel %vm888, %v2374, 0
        %2620 = vmatprep.subr.mxu0 0.0
        %2621 = vmatpush1.msra.mxu0 %v2207
        %2622 = vmatprep.subr.mxu0 0.0
        %2623 = vmatpush1.msra.mxu0 0.0
        %2624 = vmatprep.subr.mxu0 0.0
        %2625 = vmatpush1.msra.mxu0 0.0
        %2626 = vmatprep.subr.mxu0 0.0
        %2627 = vmatpush1.msra.mxu0 0.0
        %2628 = vmatprep.subr.mxu0 0.0
        %2629 = vmatpush1.msra.mxu0 0.0
        %2630 = vmatprep.subr.mxu0 0.0
        %2631 = vmatpush1.msra.mxu0 0.0
        %2632 = vmatprep.subr.mxu0 0.0
        %2633 = vmatpush1.msra.mxu0 0.0
        %2634 = vmatprep.subr.mxu0 0.0
        %2635 = vmatpush1.msra.mxu0 0.0
        %2636 = vmatprep.subr.mxu0 0.0
        %2637 = vmatpush1.msra.mxu0 0.0
        %2638 = vmatprep.subr.mxu0 0.0
        %2639 = vmatpush1.msra.mxu0 0.0
        %2640 = vmatprep.subr.mxu0 0.0
        %2641 = vmatpush1.msra.mxu0 0.0
        %2642 = vmatprep.subr.mxu0 0.0
        %2643 = vmatpush1.msra.mxu0 0.0
        %2644 = vmatprep.subr.mxu0 0.0
        %2645 = vmatpush1.msra.mxu0 0.0
        %2646 = vmatprep.subr.mxu0 0.0
        %2647 = vmatpush1.msra.mxu0 0.0
        %2648 = vmatprep.subr.mxu0 0.0
        %2649 = vmatpush1.msra.mxu0 0.0
        %2650 = vmatprep.subr.mxu0 0.0
        %2651 = vmatpush1.msra.mxu0 0.0
        %2652 = vmatprep.subr.mxu0 0.0
        %2653 = vmatpush1.msra.mxu0 0.0
        %2654 = vmatprep.subr.mxu0 0.0
        %2655 = vmatpush1.msra.mxu0 0.0
        %2656 = vmatprep.subr.mxu0 0.0
        %2657 = vmatpush1.msra.mxu0 0.0
        %2658 = vmatprep.subr.mxu0 0.0
        %2659 = vmatpush1.msra.mxu0 0.0
        %2660 = vmatprep.subr.mxu0 0.0
        %2661 = vmatpush1.msra.mxu0 0.0
        %2662 = vmatprep.subr.mxu0 0.0
        %2663 = vmatpush1.msra.mxu0 0.0
        %2664 = vmatprep.subr.mxu0 0.0
        %2665 = vmatpush1.msra.mxu0 0.0
        %2666 = vmatprep.subr.mxu0 0.0
        %2667 = vmatpush1.msra.mxu0 0.0
        %2668 = vmatprep.subr.mxu0 0.0
        %2669 = vmatpush1.msra.mxu0 0.0
        %2670 = vmatprep.subr.mxu0 0.0
        %2671 = vmatpush1.msra.mxu0 0.0
        %2672 = vmatprep.subr.mxu0 0.0
        %2673 = vmatpush1.msra.mxu0 0.0
        %2674 = vmatprep.subr.mxu0 0.0
        %2675 = vmatpush1.msra.mxu0 0.0
        %2676 = vmatprep.subr.mxu0 0.0
        %2677 = vmatpush1.msra.mxu0 0.0
        %2678 = vmatprep.subr.mxu0 0.0
        %2679 = vmatpush1.msra.mxu0 0.0
        %2680 = vmatprep.subr.mxu0 0.0
        %2681 = vmatpush1.msra.mxu0 0.0
        %2682 = vmatprep.subr.mxu0 0.0
        %2683 = vmatpush1.msra.mxu0 0.0
        %2684 = vmatprep.mubr.f32.mxu0 0.0
        %2685 = vmatmul.mubr.f32.gmra.mrb[0].mxu0 %v2618
        %v2686 = vpop.f32.mrb[0].mxu0
        %v2687 = vadd.f32 %v2614, %v2686
        %v2688 = vpop.f32.mrb[0].mxu0
        %2689 = vdwg.mxu0
        %2690 = vrot.lane.b32.xlu0 %v2203, 112
        %v2691 = vpop.permute.xlu0 %2690
        %2692 = vrot.lane.b32.xlu0 %v2203, 80
        %v2693 = vpop.permute.xlu0 %2692
        %v2694 = vsel %vm888, %v2691, 0
        %v2696 = vsel %vm888, %v2693, 0
        %2698 = vmatprep.subr.mxu0 0.0
        %2699 = vmatpush1.xpose.msra.mxu0 %v2696
        %2700 = vmatprep.subr.mxu0 0.0
        %2701 = vmatpush1.xpose.msra.mxu0 0.0
        %2702 = vmatprep.subr.mxu0 0.0
        %2703 = vmatpush1.xpose.msra.mxu0 0.0
        %2704 = vmatprep.subr.mxu0 0.0
        %2705 = vmatpush1.xpose.msra.mxu0 0.0
        %2706 = vmatprep.subr.mxu0 0.0
        %2707 = vmatpush1.xpose.msra.mxu0 0.0
        %2708 = vmatprep.subr.mxu0 0.0
        %2709 = vmatpush1.xpose.msra.mxu0 0.0
        %2710 = vmatprep.subr.mxu0 0.0
        %2711 = vmatpush1.xpose.msra.mxu0 0.0
        %2712 = vmatprep.subr.mxu0 0.0
        %2713 = vmatpush1.xpose.msra.mxu0 0.0
        %2714 = vmatprep.subr.mxu0 0.0
        %2715 = vmatpush1.xpose.msra.mxu0 0.0
        %2716 = vmatprep.subr.mxu0 0.0
        %2717 = vmatpush1.xpose.msra.mxu0 0.0
        %2718 = vmatprep.subr.mxu0 0.0
        %2719 = vmatpush1.xpose.msra.mxu0 0.0
        %2720 = vmatprep.subr.mxu0 0.0
        %2721 = vmatpush1.xpose.msra.mxu0 0.0
        %2722 = vmatprep.subr.mxu0 0.0
        %2723 = vmatpush1.xpose.msra.mxu0 0.0
        %2724 = vmatprep.subr.mxu0 0.0
        %2725 = vmatpush1.xpose.msra.mxu0 0.0
        %2726 = vmatprep.subr.mxu0 0.0
        %2727 = vmatpush1.xpose.msra.mxu0 0.0
        %2728 = vmatprep.subr.mxu0 0.0
        %2729 = vmatpush1.xpose.msra.mxu0 0.0
        %2730 = vmatprep.subr.mxu0 0.0
        %2731 = vmatpush1.xpose.msra.mxu0 0.0
        %2732 = vmatprep.subr.mxu0 0.0
        %2733 = vmatpush1.xpose.msra.mxu0 0.0
        %2734 = vmatprep.subr.mxu0 0.0
        %2735 = vmatpush1.xpose.msra.mxu0 0.0
        %2736 = vmatprep.subr.mxu0 0.0
        %2737 = vmatpush1.xpose.msra.mxu0 0.0
        %2738 = vmatprep.subr.mxu0 0.0
        %2739 = vmatpush1.xpose.msra.mxu0 0.0
        %2740 = vmatprep.subr.mxu0 0.0
        %2741 = vmatpush1.xpose.msra.mxu0 0.0
        %2742 = vmatprep.subr.mxu0 0.0
        %2743 = vmatpush1.xpose.msra.mxu0 0.0
        %2744 = vmatprep.subr.mxu0 0.0
        %2745 = vmatpush1.xpose.msra.mxu0 0.0
        %2746 = vmatprep.subr.mxu0 0.0
        %2747 = vmatpush1.xpose.msra.mxu0 0.0
        %2748 = vmatprep.subr.mxu0 0.0
        %2749 = vmatpush1.xpose.msra.mxu0 0.0
        %2750 = vmatprep.subr.mxu0 0.0
        %2751 = vmatpush1.xpose.msra.mxu0 0.0
        %2752 = vmatprep.subr.mxu0 0.0
        %2753 = vmatpush1.xpose.msra.mxu0 0.0
        %2754 = vmatprep.subr.mxu0 0.0
        %2755 = vmatpush1.xpose.msra.mxu0 0.0
        %2756 = vmatprep.subr.mxu0 0.0
        %2757 = vmatpush1.xpose.msra.mxu0 0.0
        %2758 = vmatprep.subr.mxu0 0.0
        %2759 = vmatpush1.xpose.msra.mxu0 0.0
        %2760 = vmatprep.subr.mxu0 0.0
        %2761 = vmatpush1.xpose.msra.mxu0 0.0
        %2762 = vmatprep.mubr.f32.mxu0 0.0
        %2763 = vmatmul.mubr.f32.gmra.mrb[0].mxu0 %v2694
        %v2764 = vpop.f32.mrb[0].mxu0
        %v2765 = vadd.f32 0.0, %v2764
        %v2766 = vpop.f32.mrb[0].mxu0
        %2767 = vdwg.mxu0
        %v2768 = vmul.f32 %v2765, 0.35355338
        %v2769 = vsel %vm964, %v2768, -inf
        %2770 = vmax.xlane.f32.xlu0 %v2769
        %v2771 = vpop.xlane.xlu0 %2770
        %v2772 = vsub.f32 %v2768, %v2771
        %v2773 = vmul.f32 %v2772, 1.442695
        %v2774 = vpow.pop %v2773
        %v2775 = vsel %vm964, %v2774, 0.0
        %2776 = vadd.xlane.f32.xlu0 %v2775
        %v2777 = vpop.xlane.xlu0 %2776
        %v2778 = vrcp.pop %v2777
        %v2779 = vmul.f32 %v2774, %v2778
        %2780 = vrot.lane.b32.xlu0 %v2203, 48
        %v2781 = vpop.permute.xlu0 %2780
        %v2783 = vsel %vm978, %v2779, 0
        %v2785 = vsel %vm982, %v2781, 0
        %2787 = vmatprep.subr.mxu0 0.0
        %2788 = vmatpush1.msra.mxu0 %v2785
        %2789 = vmatprep.subr.mxu0 0.0
        %2790 = vmatpush1.msra.mxu0 0.0
        %2791 = vmatprep.subr.mxu0 0.0
        %2792 = vmatpush1.msra.mxu0 0.0
        %2793 = vmatprep.subr.mxu0 0.0
        %2794 = vmatpush1.msra.mxu0 0.0
        %2795 = vmatprep.subr.mxu0 0.0
        %2796 = vmatpush1.msra.mxu0 0.0
        %2797 = vmatprep.subr.mxu0 0.0
        %2798 = vmatpush1.msra.mxu0 0.0
        %2799 = vmatprep.subr.mxu0 0.0
        %2800 = vmatpush1.msra.mxu0 0.0
        %2801 = vmatprep.subr.mxu0 0.0
        %2802 = vmatpush1.msra.mxu0 0.0
        %2803 = vmatprep.subr.mxu0 0.0
        %2804 = vmatpush1.msra.mxu0 0.0
        %2805 = vmatprep.subr.mxu0 0.0
        %2806 = vmatpush1.msra.mxu0 0.0
        %2807 = vmatprep.subr.mxu0 0.0
        %2808 = vmatpush1.msra.mxu0 0.0
        %2809 = vmatprep.subr.mxu0 0.0
        %2810 = vmatpush1.msra.mxu0 0.0
        %2811 = vmatprep.subr.mxu0 0.0
        %2812 = vmatpush1.msra.mxu0 0.0
        %2813 = vmatprep.subr.mxu0 0.0
        %2814 = vmatpush1.msra.mxu0 0.0
        %2815 = vmatprep.subr.mxu0 0.0
        %2816 = vmatpush1.msra.mxu0 0.0
        %2817 = vmatprep.subr.mxu0 0.0
        %2818 = vmatpush1.msra.mxu0 0.0
        %2819 = vmatprep.subr.mxu0 0.0
        %2820 = vmatpush1.msra.mxu0 0.0
        %2821 = vmatprep.subr.mxu0 0.0
        %2822 = vmatpush1.msra.mxu0 0.0
        %2823 = vmatprep.subr.mxu0 0.0
        %2824 = vmatpush1.msra.mxu0 0.0
        %2825 = vmatprep.subr.mxu0 0.0
        %2826 = vmatpush1.msra.mxu0 0.0
        %2827 = vmatprep.subr.mxu0 0.0
        %2828 = vmatpush1.msra.mxu0 0.0
        %2829 = vmatprep.subr.mxu0 0.0
        %2830 = vmatpush1.msra.mxu0 0.0
        %2831 = vmatprep.subr.mxu0 0.0
        %2832 = vmatpush1.msra.mxu0 0.0
        %2833 = vmatprep.subr.mxu0 0.0
        %2834 = vmatpush1.msra.mxu0 0.0
        %2835 = vmatprep.subr.mxu0 0.0
        %2836 = vmatpush1.msra.mxu0 0.0
        %2837 = vmatprep.subr.mxu0 0.0
        %2838 = vmatpush1.msra.mxu0 0.0
        %2839 = vmatprep.subr.mxu0 0.0
        %2840 = vmatpush1.msra.mxu0 0.0
        %2841 = vmatprep.subr.mxu0 0.0
        %2842 = vmatpush1.msra.mxu0 0.0
        %2843 = vmatprep.subr.mxu0 0.0
        %2844 = vmatpush1.msra.mxu0 0.0
        %2845 = vmatprep.subr.mxu0 0.0
        %2846 = vmatpush1.msra.mxu0 0.0
        %2847 = vmatprep.subr.mxu0 0.0
        %2848 = vmatpush1.msra.mxu0 0.0
        %2849 = vmatprep.subr.mxu0 0.0
        %2850 = vmatpush1.msra.mxu0 0.0
        %2851 = vmatprep.mubr.f32.mxu0 0.0
        %2852 = vmatmul.mubr.f32.gmra.mrb[0].mxu0 %v2783
        %v2853 = vpop.f32.mrb[0].mxu0
        %v2854 = vadd.f32 0.0, %v2853
        %v2855 = vpop.f32.mrb[0].mxu0
        %2856 = vdwg.mxu0
        %v2858 = vsel %vm888, %v2854, 0
        %2860 = vmatprep.subr.mxu0 0.0
        %2861 = vmatpush1.msra.mxu0 %v2209
        %2862 = vmatprep.subr.mxu0 0.0
        %2863 = vmatpush1.msra.mxu0 0.0
        %2864 = vmatprep.subr.mxu0 0.0
        %2865 = vmatpush1.msra.mxu0 0.0
        %2866 = vmatprep.subr.mxu0 0.0
        %2867 = vmatpush1.msra.mxu0 0.0
        %2868 = vmatprep.subr.mxu0 0.0
        %2869 = vmatpush1.msra.mxu0 0.0
        %2870 = vmatprep.subr.mxu0 0.0
        %2871 = vmatpush1.msra.mxu0 0.0
        %2872 = vmatprep.subr.mxu0 0.0
        %2873 = vmatpush1.msra.mxu0 0.0
        %2874 = vmatprep.subr.mxu0 0.0
        %2875 = vmatpush1.msra.mxu0 0.0
        %2876 = vmatprep.subr.mxu0 0.0
        %2877 = vmatpush1.msra.mxu0 0.0
        %2878 = vmatprep.subr.mxu0 0.0
        %2879 = vmatpush1.msra.mxu0 0.0
        %2880 = vmatprep.subr.mxu0 0.0
        %2881 = vmatpush1.msra.mxu0 0.0
        %2882 = vmatprep.subr.mxu0 0.0
        %2883 = vmatpush1.msra.mxu0 0.0
        %2884 = vmatprep.subr.mxu0 0.0
        %2885 = vmatpush1.msra.mxu0 0.0
        %2886 = vmatprep.subr.mxu0 0.0
        %2887 = vmatpush1.msra.mxu0 0.0
        %2888 = vmatprep.subr.mxu0 0.0
        %2889 = vmatpush1.msra.mxu0 0.0
        %2890 = vmatprep.subr.mxu0 0.0
        %2891 = vmatpush1.msra.mxu0 0.0
        %2892 = vmatprep.subr.mxu0 0.0
        %2893 = vmatpush1.msra.mxu0 0.0
        %2894 = vmatprep.subr.mxu0 0.0
        %2895 = vmatpush1.msra.mxu0 0.0
        %2896 = vmatprep.subr.mxu0 0.0
        %2897 = vmatpush1.msra.mxu0 0.0
        %2898 = vmatprep.subr.mxu0 0.0
        %2899 = vmatpush1.msra.mxu0 0.0
        %2900 = vmatprep.subr.mxu0 0.0
        %2901 = vmatpush1.msra.mxu0 0.0
        %2902 = vmatprep.subr.mxu0 0.0
        %2903 = vmatpush1.msra.mxu0 0.0
        %2904 = vmatprep.subr.mxu0 0.0
        %2905 = vmatpush1.msra.mxu0 0.0
        %2906 = vmatprep.subr.mxu0 0.0
        %2907 = vmatpush1.msra.mxu0 0.0
        %2908 = vmatprep.subr.mxu0 0.0
        %2909 = vmatpush1.msra.mxu0 0.0
        %2910 = vmatprep.subr.mxu0 0.0
        %2911 = vmatpush1.msra.mxu0 0.0
        %2912 = vmatprep.subr.mxu0 0.0
        %2913 = vmatpush1.msra.mxu0 0.0
        %2914 = vmatprep.subr.mxu0 0.0
        %2915 = vmatpush1.msra.mxu0 0.0
        %2916 = vmatprep.subr.mxu0 0.0
        %2917 = vmatpush1.msra.mxu0 0.0
        %2918 = vmatprep.subr.mxu0 0.0
        %2919 = vmatpush1.msra.mxu0 0.0
        %2920 = vmatprep.subr.mxu0 0.0
        %2921 = vmatpush1.msra.mxu0 0.0
        %2922 = vmatprep.subr.mxu0 0.0
        %2923 = vmatpush1.msra.mxu0 0.0
        %2924 = vmatprep.mubr.f32.mxu0 0.0
        %2925 = vmatmul.mubr.f32.gmra.mrb[0].mxu0 %v2858
        %v2926 = vpop.f32.mrb[0].mxu0
        %v2927 = vadd.f32 0.0, %v2926
        %v2928 = vpop.f32.mrb[0].mxu0
        %2929 = vdwg.mxu0
        %v2930 = vadd.f32 %v2687, %v2927
        %2931 = vrot.lane.b32.xlu0 %v2203, 104
        %v2932 = vpop.permute.xlu0 %2931
        %2933 = vrot.lane.b32.xlu0 %v2203, 72
        %v2934 = vpop.permute.xlu0 %2933
        %v2935 = vsel %vm888, %v2932, 0
        %v2937 = vsel %vm888, %v2934, 0
        %2939 = vmatprep.subr.mxu0 0.0
        %2940 = vmatpush1.xpose.msra.mxu0 %v2937
        %2941 = vmatprep.subr.mxu0 0.0
        %2942 = vmatpush1.xpose.msra.mxu0 0.0
        %2943 = vmatprep.subr.mxu0 0.0
        %2944 = vmatpush1.xpose.msra.mxu0 0.0
        %2945 = vmatprep.subr.mxu0 0.0
        %2946 = vmatpush1.xpose.msra.mxu0 0.0
        %2947 = vmatprep.subr.mxu0 0.0
        %2948 = vmatpush1.xpose.msra.mxu0 0.0
        %2949 = vmatprep.subr.mxu0 0.0
        %2950 = vmatpush1.xpose.msra.mxu0 0.0
        %2951 = vmatprep.subr.mxu0 0.0
        %2952 = vmatpush1.xpose.msra.mxu0 0.0
        %2953 = vmatprep.subr.mxu0 0.0
        %2954 = vmatpush1.xpose.msra.mxu0 0.0
        %2955 = vmatprep.subr.mxu0 0.0
        %2956 = vmatpush1.xpose.msra.mxu0 0.0
        %2957 = vmatprep.subr.mxu0 0.0
        %2958 = vmatpush1.xpose.msra.mxu0 0.0
        %2959 = vmatprep.subr.mxu0 0.0
        %2960 = vmatpush1.xpose.msra.mxu0 0.0
        %2961 = vmatprep.subr.mxu0 0.0
        %2962 = vmatpush1.xpose.msra.mxu0 0.0
        %2963 = vmatprep.subr.mxu0 0.0
        %2964 = vmatpush1.xpose.msra.mxu0 0.0
        %2965 = vmatprep.subr.mxu0 0.0
        %2966 = vmatpush1.xpose.msra.mxu0 0.0
        %2967 = vmatprep.subr.mxu0 0.0
        %2968 = vmatpush1.xpose.msra.mxu0 0.0
        %2969 = vmatprep.subr.mxu0 0.0
        %2970 = vmatpush1.xpose.msra.mxu0 0.0
        %2971 = vmatprep.subr.mxu0 0.0
        %2972 = vmatpush1.xpose.msra.mxu0 0.0
        %2973 = vmatprep.subr.mxu0 0.0
        %2974 = vmatpush1.xpose.msra.mxu0 0.0
        %2975 = vmatprep.subr.mxu0 0.0
        %2976 = vmatpush1.xpose.msra.mxu0 0.0
        %2977 = vmatprep.subr.mxu0 0.0
        %2978 = vmatpush1.xpose.msra.mxu0 0.0
        %2979 = vmatprep.subr.mxu0 0.0
        %2980 = vmatpush1.xpose.msra.mxu0 0.0
        %2981 = vmatprep.subr.mxu0 0.0
        %2982 = vmatpush1.xpose.msra.mxu0 0.0
        %2983 = vmatprep.subr.mxu0 0.0
        %2984 = vmatpush1.xpose.msra.mxu0 0.0
        %2985 = vmatprep.subr.mxu0 0.0
        %2986 = vmatpush1.xpose.msra.mxu0 0.0
        %2987 = vmatprep.subr.mxu0 0.0
        %2988 = vmatpush1.xpose.msra.mxu0 0.0
        %2989 = vmatprep.subr.mxu0 0.0
        %2990 = vmatpush1.xpose.msra.mxu0 0.0
        %2991 = vmatprep.subr.mxu0 0.0
        %2992 = vmatpush1.xpose.msra.mxu0 0.0
        %2993 = vmatprep.subr.mxu0 0.0
        %2994 = vmatpush1.xpose.msra.mxu0 0.0
        %2995 = vmatprep.subr.mxu0 0.0
        %2996 = vmatpush1.xpose.msra.mxu0 0.0
        %2997 = vmatprep.subr.mxu0 0.0
        %2998 = vmatpush1.xpose.msra.mxu0 0.0
        %2999 = vmatprep.subr.mxu0 0.0
        %3000 = vmatpush1.xpose.msra.mxu0 0.0
        %3001 = vmatprep.subr.mxu0 0.0
        %3002 = vmatpush1.xpose.msra.mxu0 0.0
        %3003 = vmatprep.mubr.f32.mxu0 0.0
        %3004 = vmatmul.mubr.f32.gmra.mrb[0].mxu0 %v2935
        %v3005 = vpop.f32.mrb[0].mxu0
        %v3006 = vadd.f32 0.0, %v3005
        %v3007 = vpop.f32.mrb[0].mxu0
        %3008 = vdwg.mxu0
        %v3009 = vmul.f32 %v3006, 0.35355338
        %v3010 = vsel %vm964, %v3009, -inf
        %3011 = vmax.xlane.f32.xlu0 %v3010
        %v3012 = vpop.xlane.xlu0 %3011
        %v3013 = vsub.f32 %v3009, %v3012
        %v3014 = vmul.f32 %v3013, 1.442695
        %v3015 = vpow.pop %v3014
        %v3016 = vsel %vm964, %v3015, 0.0
        %3017 = vadd.xlane.f32.xlu0 %v3016
        %v3018 = vpop.xlane.xlu0 %3017
        %v3019 = vrcp.pop %v3018
        %v3020 = vmul.f32 %v3015, %v3019
        %3021 = vrot.lane.b32.xlu0 %v2203, 40
        %v3022 = vpop.permute.xlu0 %3021
        %v3024 = vsel %vm978, %v3020, 0
        %v3026 = vsel %vm982, %v3022, 0
        %3028 = vmatprep.subr.mxu0 0.0
        %3029 = vmatpush1.msra.mxu0 %v3026
        %3030 = vmatprep.subr.mxu0 0.0
        %3031 = vmatpush1.msra.mxu0 0.0
        %3032 = vmatprep.subr.mxu0 0.0
        %3033 = vmatpush1.msra.mxu0 0.0
        %3034 = vmatprep.subr.mxu0 0.0
        %3035 = vmatpush1.msra.mxu0 0.0
        %3036 = vmatprep.subr.mxu0 0.0
        %3037 = vmatpush1.msra.mxu0 0.0
        %3038 = vmatprep.subr.mxu0 0.0
        %3039 = vmatpush1.msra.mxu0 0.0
        %3040 = vmatprep.subr.mxu0 0.0
        %3041 = vmatpush1.msra.mxu0 0.0
        %3042 = vmatprep.subr.mxu0 0.0
        %3043 = vmatpush1.msra.mxu0 0.0
        %3044 = vmatprep.subr.mxu0 0.0
        %3045 = vmatpush1.msra.mxu0 0.0
        %3046 = vmatprep.subr.mxu0 0.0
        %3047 = vmatpush1.msra.mxu0 0.0
        %3048 = vmatprep.subr.mxu0 0.0
        %3049 = vmatpush1.msra.mxu0 0.0
        %3050 = vmatprep.subr.mxu0 0.0
        %3051 = vmatpush1.msra.mxu0 0.0
        %3052 = vmatprep.subr.mxu0 0.0
        %3053 = vmatpush1.msra.mxu0 0.0
        %3054 = vmatprep.subr.mxu0 0.0
        %3055 = vmatpush1.msra.mxu0 0.0
        %3056 = vmatprep.subr.mxu0 0.0
        %3057 = vmatpush1.msra.mxu0 0.0
        %3058 = vmatprep.subr.mxu0 0.0
        %3059 = vmatpush1.msra.mxu0 0.0
        %3060 = vmatprep.subr.mxu0 0.0
        %3061 = vmatpush1.msra.mxu0 0.0
        %3062 = vmatprep.subr.mxu0 0.0
        %3063 = vmatpush1.msra.mxu0 0.0
        %3064 = vmatprep.subr.mxu0 0.0
        %3065 = vmatpush1.msra.mxu0 0.0
        %3066 = vmatprep.subr.mxu0 0.0
        %3067 = vmatpush1.msra.mxu0 0.0
        %3068 = vmatprep.subr.mxu0 0.0
        %3069 = vmatpush1.msra.mxu0 0.0
        %3070 = vmatprep.subr.mxu0 0.0
        %3071 = vmatpush1.msra.mxu0 0.0
        %3072 = vmatprep.subr.mxu0 0.0
        %3073 = vmatpush1.msra.mxu0 0.0
        %3074 = vmatprep.subr.mxu0 0.0
        %3075 = vmatpush1.msra.mxu0 0.0
        %3076 = vmatprep.subr.mxu0 0.0
        %3077 = vmatpush1.msra.mxu0 0.0
        %3078 = vmatprep.subr.mxu0 0.0
        %3079 = vmatpush1.msra.mxu0 0.0
        %3080 = vmatprep.subr.mxu0 0.0
        %3081 = vmatpush1.msra.mxu0 0.0
        %3082 = vmatprep.subr.mxu0 0.0
        %3083 = vmatpush1.msra.mxu0 0.0
        %3084 = vmatprep.subr.mxu0 0.0
        %3085 = vmatpush1.msra.mxu0 0.0
        %3086 = vmatprep.subr.mxu0 0.0
        %3087 = vmatpush1.msra.mxu0 0.0
        %3088 = vmatprep.subr.mxu0 0.0
        %3089 = vmatpush1.msra.mxu0 0.0
        %3090 = vmatprep.subr.mxu0 0.0
        %3091 = vmatpush1.msra.mxu0 0.0
        %3092 = vmatprep.mubr.f32.mxu0 0.0
        %3093 = vmatmul.mubr.f32.gmra.mrb[0].mxu0 %v3024
        %v3094 = vpop.f32.mrb[0].mxu0
        %v3095 = vadd.f32 0.0, %v3094
        %v3096 = vpop.f32.mrb[0].mxu0
        %3097 = vdwg.mxu0
        %v3099 = vsel %vm888, %v3095, 0
        %3101 = vmatprep.subr.mxu0 0.0
        %3102 = vmatpush1.msra.mxu0 %v2210
        %3103 = vmatprep.subr.mxu0 0.0
        %3104 = vmatpush1.msra.mxu0 0.0
        %3105 = vmatprep.subr.mxu0 0.0
        %3106 = vmatpush1.msra.mxu0 0.0
        %3107 = vmatprep.subr.mxu0 0.0
        %3108 = vmatpush1.msra.mxu0 0.0
        %3109 = vmatprep.subr.mxu0 0.0
        %3110 = vmatpush1.msra.mxu0 0.0
        %3111 = vmatprep.subr.mxu0 0.0
        %3112 = vmatpush1.msra.mxu0 0.0
        %3113 = vmatprep.subr.mxu0 0.0
        %3114 = vmatpush1.msra.mxu0 0.0
        %3115 = vmatprep.subr.mxu0 0.0
        %3116 = vmatpush1.msra.mxu0 0.0
        %3117 = vmatprep.subr.mxu0 0.0
        %3118 = vmatpush1.msra.mxu0 0.0
        %3119 = vmatprep.subr.mxu0 0.0
        %3120 = vmatpush1.msra.mxu0 0.0
        %3121 = vmatprep.subr.mxu0 0.0
        %3122 = vmatpush1.msra.mxu0 0.0
        %3123 = vmatprep.subr.mxu0 0.0
        %3124 = vmatpush1.msra.mxu0 0.0
        %3125 = vmatprep.subr.mxu0 0.0
        %3126 = vmatpush1.msra.mxu0 0.0
        %3127 = vmatprep.subr.mxu0 0.0
        %3128 = vmatpush1.msra.mxu0 0.0
        %3129 = vmatprep.subr.mxu0 0.0
        %3130 = vmatpush1.msra.mxu0 0.0
        %3131 = vmatprep.subr.mxu0 0.0
        %3132 = vmatpush1.msra.mxu0 0.0
        %3133 = vmatprep.subr.mxu0 0.0
        %3134 = vmatpush1.msra.mxu0 0.0
        %3135 = vmatprep.subr.mxu0 0.0
        %3136 = vmatpush1.msra.mxu0 0.0
        %3137 = vmatprep.subr.mxu0 0.0
        %3138 = vmatpush1.msra.mxu0 0.0
        %3139 = vmatprep.subr.mxu0 0.0
        %3140 = vmatpush1.msra.mxu0 0.0
        %3141 = vmatprep.subr.mxu0 0.0
        %3142 = vmatpush1.msra.mxu0 0.0
        %3143 = vmatprep.subr.mxu0 0.0
        %3144 = vmatpush1.msra.mxu0 0.0
        %3145 = vmatprep.subr.mxu0 0.0
        %3146 = vmatpush1.msra.mxu0 0.0
        %3147 = vmatprep.subr.mxu0 0.0
        %3148 = vmatpush1.msra.mxu0 0.0
        %3149 = vmatprep.subr.mxu0 0.0
        %3150 = vmatpush1.msra.mxu0 0.0
        %3151 = vmatprep.subr.mxu0 0.0
        %3152 = vmatpush1.msra.mxu0 0.0
        %3153 = vmatprep.subr.mxu0 0.0
        %3154 = vmatpush1.msra.mxu0 0.0
        %3155 = vmatprep.subr.mxu0 0.0
        %3156 = vmatpush1.msra.mxu0 0.0
        %3157 = vmatprep.subr.mxu0 0.0
        %3158 = vmatpush1.msra.mxu0 0.0
        %3159 = vmatprep.subr.mxu0 0.0
        %3160 = vmatpush1.msra.mxu0 0.0
        %3161 = vmatprep.subr.mxu0 0.0
        %3162 = vmatpush1.msra.mxu0 0.0
        %3163 = vmatprep.subr.mxu0 0.0
        %3164 = vmatpush1.msra.mxu0 0.0
        %3165 = vmatprep.mubr.f32.mxu0 0.0
        %3166 = vmatmul.mubr.f32.gmra.mrb[0].mxu0 %v3099
        %v3167 = vpop.f32.mrb[0].mxu0
        %v3168 = vadd.f32 0.0, %v3167
        %v3169 = vpop.f32.mrb[0].mxu0
        %3170 = vdwg.mxu0
        %v3171 = vadd.f32 %v2930, %v3168
        %v3172 = vadd.f32 %v2088, %v3171
        %s3173 = scalar_lea.vmem %s9, 1
        %v3174 = vld [vmem:[%s3173] sm:$0x1]
        %v3176 = vlaneseq
        %v3177 = vshrl.u32 %v3176, 7
        %v3178 = vsub.s32 0, %v3177
        %v3179 = vrot.slane %v3174, %v3178
        %v3181 = vadd.f32 %v3172, %v3179
        %s3182 = scalar_lea.vmem %s10, 1
        %v3183 = vld [vmem:[%s3182] sm:$0x1]
        %s3184 = scalar_lea.vmem %s11, 1
        %v3185 = vld [vmem:[%s3184] sm:$0x1]
        %v3186 = vsel %vm768, %v3181, 0.0
        %3187 = vadd.xlane.f32.xlu0 %v3186
        %v3188 = vpop.xlane.xlu0 %3187
        %v3189 = vmul.f32 %v3188, %v772
        %v3190 = vsub.f32 %v3181, %v3189
        %v3191 = vmul.f32 %v3190, %v3190
        %v3192 = vsel %vm768, %v3191, 0.0
        %3193 = vadd.xlane.f32.xlu0 %v3192
        %v3194 = vpop.xlane.xlu0 %3193
        %v3195 = vmul.f32 %v3194, %v772
        %v3196 = vadd.f32 %v3195, 1e-05
        %v3197 = vrsqrt.pop %v3196
        %v3198 = vmul.f32 %v3190, %v3197
        %v3200 = vlaneseq
        %v3201 = vshrl.u32 %v3200, 7
        %v3202 = vsub.s32 0, %v3201
        %v3203 = vrot.slane %v3183, %v3202
        %v3205 = vmul.f32 %v3198, %v3203
        %v3207 = vlaneseq
        %v3208 = vshrl.u32 %v3207, 7
        %v3209 = vsub.s32 0, %v3208
        %v3210 = vrot.slane %v3185, %v3209
        %v3212 = vadd.f32 %v3205, %v3210
        %s3213 = scalar_lea.vmem %s12, 32
        %v3214 = vld [vmem:[%s3213] sm:$0xff]
        %v3215 = vld [vmem:[%s3213 + $0x8] sm:$0xff]
        %v3216 = vld [vmem:[%s3213 + $0x10] sm:$0xff]
        %v3217 = vld [vmem:[%s3213 + $0x18] sm:$0xff]
        %s3218 = scalar_lea.vmem %s13, 1
        %v3219 = vld [vmem:[%s3218] sm:$0x1]
        %v3221 = vlaneseq
        %v3222 = vshrl.u32 %v3221, 7
        %v3223 = vsub.s32 0, %v3222
        %v3224 = vrot.slane %v3219, %v3223
        %v3227 = vsel %vm690, %v3212, 0
        %3229 = vmatprep.subr.mxu0 0.0
        %3230 = vmatpush1.msra.mxu0 %v3214
        %3231 = vmatprep.subr.mxu0 0.0
        %3232 = vmatpush1.msra.mxu0 %v3215
        %3233 = vmatprep.subr.mxu0 0.0
        %3234 = vmatpush1.msra.mxu0 %v3216
        %3235 = vmatprep.subr.mxu0 0.0
        %3236 = vmatpush1.msra.mxu0 %v3217
        %3237 = vmatprep.subr.mxu0 0.0
        %3238 = vmatpush1.msra.mxu0 0.0
        %3239 = vmatprep.subr.mxu0 0.0
        %3240 = vmatpush1.msra.mxu0 0.0
        %3241 = vmatprep.subr.mxu0 0.0
        %3242 = vmatpush1.msra.mxu0 0.0
        %3243 = vmatprep.subr.mxu0 0.0
        %3244 = vmatpush1.msra.mxu0 0.0
        %3245 = vmatprep.subr.mxu0 0.0
        %3246 = vmatpush1.msra.mxu0 0.0
        %3247 = vmatprep.subr.mxu0 0.0
        %3248 = vmatpush1.msra.mxu0 0.0
        %3249 = vmatprep.subr.mxu0 0.0
        %3250 = vmatpush1.msra.mxu0 0.0
        %3251 = vmatprep.subr.mxu0 0.0
        %3252 = vmatpush1.msra.mxu0 0.0
        %3253 = vmatprep.subr.mxu0 0.0
        %3254 = vmatpush1.msra.mxu0 0.0
        %3255 = vmatprep.subr.mxu0 0.0
        %3256 = vmatpush1.msra.mxu0 0.0
        %3257 = vmatprep.subr.mxu0 0.0
        %3258 = vmatpush1.msra.mxu0 0.0
        %3259 = vmatprep.subr.mxu0 0.0
        %3260 = vmatpush1.msra.mxu0 0.0
        %3261 = vmatprep.subr.mxu0 0.0
        %3262 = vmatpush1.msra.mxu0 0.0
        %3263 = vmatprep.subr.mxu0 0.0
        %3264 = vmatpush1.msra.mxu0 0.0
        %3265 = vmatprep.subr.mxu0 0.0
        %3266 = vmatpush1.msra.mxu0 0.0
        %3267 = vmatprep.subr.mxu0 0.0
        %3268 = vmatpush1.msra.mxu0 0.0
        %3269 = vmatprep.subr.mxu0 0.0
        %3270 = vmatpush1.msra.mxu0 0.0
        %3271 = vmatprep.subr.mxu0 0.0
        %3272 = vmatpush1.msra.mxu0 0.0
        %3273 = vmatprep.subr.mxu0 0.0
        %3274 = vmatpush1.msra.mxu0 0.0
        %3275 = vmatprep.subr.mxu0 0.0
        %3276 = vmatpush1.msra.mxu0 0.0
        %3277 = vmatprep.subr.mxu0 0.0
        %3278 = vmatpush1.msra.mxu0 0.0
        %3279 = vmatprep.subr.mxu0 0.0
        %3280 = vmatpush1.msra.mxu0 0.0
        %3281 = vmatprep.subr.mxu0 0.0
        %3282 = vmatpush1.msra.mxu0 0.0
        %3283 = vmatprep.subr.mxu0 0.0
        %3284 = vmatpush1.msra.mxu0 0.0
        %3285 = vmatprep.subr.mxu0 0.0
        %3286 = vmatpush1.msra.mxu0 0.0
        %3287 = vmatprep.subr.mxu0 0.0
        %3288 = vmatpush1.msra.mxu0 0.0
        %3289 = vmatprep.subr.mxu0 0.0
        %3290 = vmatpush1.msra.mxu0 0.0
        %3291 = vmatprep.subr.mxu0 0.0
        %3292 = vmatpush1.msra.mxu0 0.0
        %3293 = vmatprep.mubr.f32.mxu0 0.0
        %3294 = vmatmul.mubr.f32.gmra.mrb[0].mxu0 %v3227
        %v3295 = vpop.f32.mrb[0].mxu0
        %v3296 = vadd.f32 %v3224, %v3295
        %v3297 = vpop.f32.mrb[0].mxu0
        %3298 = vdwg.mxu0
        %v3299 = vmul.f32 %v3296, 0.5
        %v3300 = vmul.f32 %v3296, 0.70710677
        %v3301 = vand.u32 2147483647, %v3300
        %v3302 = vmul.f32 %v3301, 0.3275911
        %v3303 = vadd.f32 %v3302, 1.0
        %v3304 = vrcp.pop %v3303
        %v3305 = vmul.f32 1.0, %v3304
        %v3306 = vmul.f32 %v3305, 1.0614054
        %v3307 = vadd.f32 %v3306, -1.4531521
        %v3308 = vmul.f32 %v3307, %v3305
        %v3309 = vadd.f32 %v3308, 1.4214138
        %v3310 = vmul.f32 %v3309, %v3305
        %v3311 = vadd.f32 %v3310, -0.28449672
        %v3312 = vmul.f32 %v3311, %v3305
        %v3313 = vadd.f32 %v3312, 0.2548296
        %v3314 = vmul.f32 %v3313, %v3305
        %v3315 = vsub.f32 0.0, %v3301
        %v3316 = vmul.f32 %v3315, %v3301
        %v3317 = vmul.f32 %v3316, 1.442695
        %v3318 = vpow.pop %v3317
        %v3319 = vmul.f32 %v3314, %v3318
        %v3320 = vsub.f32 1.0, %v3319
        %vm3321 = vcmp.ge.f32.partialorder %v3300, 0.0
        %v3322 = vsub.f32 0.0, %v3320
        %v3323 = vsel %vm3321, %v3320, %v3322
        %v3324 = vadd.f32 %v3323, 1.0
        %v3325 = vmul.f32 %v3299, %v3324
        %s3326 = scalar_lea.vmem %s14, 64
        %v3327 = vld [vmem:[%s3326] sm:$0xff]
        %v3328 = vld [vmem:[%s3326 + $0x8] sm:$0xff]
        %v3329 = vld [vmem:[%s3326 + $0x10] sm:$0xff]
        %v3330 = vld [vmem:[%s3326 + $0x18] sm:$0xff]
        %v3331 = vld [vmem:[%s3326 + $0x20] sm:$0xff]
        %v3332 = vld [vmem:[%s3326 + $0x28] sm:$0xff]
        %v3333 = vld [vmem:[%s3326 + $0x30] sm:$0xff]
        %v3334 = vld [vmem:[%s3326 + $0x38] sm:$0xff]
        %s3335 = scalar_lea.vmem %s15, 1
        %v3336 = vld [vmem:[%s3335] sm:$0x1]
        %v3338 = vlaneseq
        %v3339 = vshrl.u32 %v3338, 7
        %v3340 = vsub.s32 0, %v3339
        %v3341 = vrot.slane %v3336, %v3340
        %v3344 = vsel %vm2014, %v3325, 0
        %3346 = vmatprep.subr.mxu0 0.0
        %3347 = vmatpush1.msra.mxu0 %v3327
        %3348 = vmatprep.subr.mxu0 0.0
        %3349 = vmatpush1.msra.mxu0 %v3328
        %3350 = vmatprep.subr.mxu0 0.0
        %3351 = vmatpush1.msra.mxu0 %v3329
        %3352 = vmatprep.subr.mxu0 0.0
        %3353 = vmatpush1.msra.mxu0 %v3330
        %3354 = vmatprep.subr.mxu0 0.0
        %3355 = vmatpush1.msra.mxu0 %v3331
        %3356 = vmatprep.subr.mxu0 0.0
        %3357 = vmatpush1.msra.mxu0 %v3332
        %3358 = vmatprep.subr.mxu0 0.0
        %3359 = vmatpush1.msra.mxu0 %v3333
        %3360 = vmatprep.subr.mxu0 0.0
        %3361 = vmatpush1.msra.mxu0 %v3334
        %3362 = vmatprep.subr.mxu0 0.0
        %3363 = vmatpush1.msra.mxu0 0.0
        %3364 = vmatprep.subr.mxu0 0.0
        %3365 = vmatpush1.msra.mxu0 0.0
        %3366 = vmatprep.subr.mxu0 0.0
        %3367 = vmatpush1.msra.mxu0 0.0
        %3368 = vmatprep.subr.mxu0 0.0
        %3369 = vmatpush1.msra.mxu0 0.0
        %3370 = vmatprep.subr.mxu0 0.0
        %3371 = vmatpush1.msra.mxu0 0.0
        %3372 = vmatprep.subr.mxu0 0.0
        %3373 = vmatpush1.msra.mxu0 0.0
        %3374 = vmatprep.subr.mxu0 0.0
        %3375 = vmatpush1.msra.mxu0 0.0
        %3376 = vmatprep.subr.mxu0 0.0
        %3377 = vmatpush1.msra.mxu0 0.0
        %3378 = vmatprep.subr.mxu0 0.0
        %3379 = vmatpush1.msra.mxu0 0.0
        %3380 = vmatprep.subr.mxu0 0.0
        %3381 = vmatpush1.msra.mxu0 0.0
        %3382 = vmatprep.subr.mxu0 0.0
        %3383 = vmatpush1.msra.mxu0 0.0
        %3384 = vmatprep.subr.mxu0 0.0
        %3385 = vmatpush1.msra.mxu0 0.0
        %3386 = vmatprep.subr.mxu0 0.0
        %3387 = vmatpush1.msra.mxu0 0.0
        %3388 = vmatprep.subr.mxu0 0.0
        %3389 = vmatpush1.msra.mxu0 0.0
        %3390 = vmatprep.subr.mxu0 0.0
        %3391 = vmatpush1.msra.mxu0 0.0
        %3392 = vmatprep.subr.mxu0 0.0
        %3393 = vmatpush1.msra.mxu0 0.0
        %3394 = vmatprep.subr.mxu0 0.0
        %3395 = vmatpush1.msra.mxu0 0.0
        %3396 = vmatprep.subr.mxu0 0.0
        %3397 = vmatpush1.msra.mxu0 0.0
        %3398 = vmatprep.subr.mxu0 0.0
        %3399 = vmatpush1.msra.mxu0 0.0
        %3400 = vmatprep.subr.mxu0 0.0
        %3401 = vmatpush1.msra.mxu0 0.0
        %3402 = vmatprep.subr.mxu0 0.0
        %3403 = vmatpush1.msra.mxu0 0.0
        %3404 = vmatprep.subr.mxu0 0.0
        %3405 = vmatpush1.msra.mxu0 0.0
        %3406 = vmatprep.subr.mxu0 0.0
        %3407 = vmatpush1.msra.mxu0 0.0
        %3408 = vmatprep.subr.mxu0 0.0
        %3409 = vmatpush1.msra.mxu0 0.0
        %3410 = vmatprep.mubr.f32.mxu0 0.0
        %3411 = vmatmul.mubr.f32.gmra.mrb[0].mxu0 %v3344
        %v3412 = vpop.f32.mrb[0].mxu0
        %v3413 = vadd.f32 %v3341, %v3412
        %v3414 = vpop.f32.mrb[0].mxu0
        %3415 = vdwg.mxu0
        %v3416 = vadd.f32 %v3181, %v3413
        %v3417 = vsel %vm768, %v3416, 0.0
        %v3418 = vrot.slane %v3417, 4
        %v3419 = vadd.f32 %v3417, %v3418
        %v3420 = vrot.slane %v3419, 2
        %v3421 = vadd.f32 %v3419, %v3420
        %v3422 = vrot.slane %v3421, 1
        %v3423 = vadd.f32 %v3421, %v3422
        %v3424 = vrcp.pop 5.0
        %v3425 = vmul.f32 %v3423, %v3424
        %v3426 = vld [vmem:[%s16] sm:$0xff]
        %v3427 = vld [vmem:[%s16 + $0x8] sm:$0xff]
        %v3428 = vld [vmem:[%s16 + $0x10] sm:$0xff]
        %v3429 = vld [vmem:[%s16 + $0x18] sm:$0xff]
        %v3430 = vld [vmem:[%s17] sm:$0x1]
        %v3432 = vsel %vm690, %v3425, 0
        %3434 = vmatprep.subr.mxu0 0.0
        %3435 = vmatpush1.msra.mxu0 %v3426
        %3436 = vmatprep.subr.mxu0 0.0
        %3437 = vmatpush1.msra.mxu0 %v3427
        %3438 = vmatprep.subr.mxu0 0.0
        %3439 = vmatpush1.msra.mxu0 %v3428
        %3440 = vmatprep.subr.mxu0 0.0
        %3441 = vmatpush1.msra.mxu0 %v3429
        %3442 = vmatprep.subr.mxu0 0.0
        %3443 = vmatpush1.msra.mxu0 0.0
        %3444 = vmatprep.subr.mxu0 0.0
        %3445 = vmatpush1.msra.mxu0 0.0
        %3446 = vmatprep.subr.mxu0 0.0
        %3447 = vmatpush1.msra.mxu0 0.0
        %3448 = vmatprep.subr.mxu0 0.0
        %3449 = vmatpush1.msra.mxu0 0.0
        %3450 = vmatprep.subr.mxu0 0.0
        %3451 = vmatpush1.msra.mxu0 0.0
        %3452 = vmatprep.subr.mxu0 0.0
        %3453 = vmatpush1.msra.mxu0 0.0
        %3454 = vmatprep.subr.mxu0 0.0
        %3455 = vmatpush1.msra.mxu0 0.0
        %3456 = vmatprep.subr.mxu0 0.0
        %3457 = vmatpush1.msra.mxu0 0.0
        %3458 = vmatprep.subr.mxu0 0.0
        %3459 = vmatpush1.msra.mxu0 0.0
        %3460 = vmatprep.subr.mxu0 0.0
        %3461 = vmatpush1.msra.mxu0 0.0
        %3462 = vmatprep.subr.mxu0 0.0
        %3463 = vmatpush1.msra.mxu0 0.0
        %3464 = vmatprep.subr.mxu0 0.0
        %3465 = vmatpush1.msra.mxu0 0.0
        %3466 = vmatprep.subr.mxu0 0.0
        %3467 = vmatpush1.msra.mxu0 0.0
        %3468 = vmatprep.subr.mxu0 0.0
        %3469 = vmatpush1.msra.mxu0 0.0
        %3470 = vmatprep.subr.mxu0 0.0
        %3471 = vmatpush1.msra.mxu0 0.0
        %3472 = vmatprep.subr.mxu0 0.0
        %3473 = vmatpush1.msra.mxu0 0.0
        %3474 = vmatprep.subr.mxu0 0.0
        %3475 = vmatpush1.msra.mxu0 0.0
        %3476 = vmatprep.subr.mxu0 0.0
        %3477 = vmatpush1.msra.mxu0 0.0
        %3478 = vmatprep.subr.mxu0 0.0
        %3479 = vmatpush1.msra.mxu0 0.0
        %3480 = vmatprep.subr.mxu0 0.0
        %3481 = vmatpush1.msra.mxu0 0.0
        %3482 = vmatprep.subr.mxu0 0.0
        %3483 = vmatpush1.msra.mxu0 0.0
        %3484 = vmatprep.subr.mxu0 0.0
        %3485 = vmatpush1.msra.mxu0 0.0
        %3486 = vmatprep.subr.mxu0 0.0
        %3487 = vmatpush1.msra.mxu0 0.0
        %3488 = vmatprep.subr.mxu0 0.0
        %3489 = vmatpush1.msra.mxu0 0.0
        %3490 = vmatprep.subr.mxu0 0.0
        %3491 = vmatpush1.msra.mxu0 0.0
        %3492 = vmatprep.subr.mxu0 0.0
        %3493 = vmatpush1.msra.mxu0 0.0
        %3494 = vmatprep.subr.mxu0 0.0
        %3495 = vmatpush1.msra.mxu0 0.0
        %3496 = vmatprep.subr.mxu0 0.0
        %3497 = vmatpush1.msra.mxu0 0.0
        %3498 = vmatprep.mubr.f32.mxu0 0.0
        %3499 = vmatmul.mubr.f32.gmra.mrb[0].mxu0 %v3432
        %v3500 = vpop.f32.mrb[0].mxu0
        %v3501 = vadd.f32 %v3430, %v3500
        %v3502 = vpop.f32.mrb[0].mxu0
        %3503 = vdwg.mxu0
        %v3504 = vld [vmem:[%s18] sm:$0x1]
        %v3505 = vld [vmem:[%s19] sm:$0x1]
        %vm3506 = vcmask 253952
        %v3507 = vsel %vm3506, %v3501, 0.0
        %3508 = vadd.xlane.f32.xlu0 %v3507
        %v3509 = vpop.xlane.xlu0 %3508
        %v3510 = vmul.f32 %v3509, %v772
        %v3511 = vsub.f32 %v3501, %v3510
        %v3512 = vmul.f32 %v3511, %v3511
        %v3513 = vsel %vm3506, %v3512, 0.0
        %3514 = vadd.xlane.f32.xlu0 %v3513
        %v3515 = vpop.xlane.xlu0 %3514
        %v3516 = vmul.f32 %v3515, %v772
        %v3517 = vadd.f32 %v3516, 1e-05
        %v3518 = vrsqrt.pop %v3517
        %v3519 = vmul.f32 %v3511, %v3518
        %v3520 = vmul.f32 %v3519, %v3504
        %v3521 = vadd.f32 %v3520, %v3505
        %v3522 = vmul.f32 %v3521, 0.5
        %v3523 = vmul.f32 %v3521, 0.70710677
        %v3524 = vand.u32 2147483647, %v3523
        %v3525 = vmul.f32 %v3524, 0.3275911
        %v3526 = vadd.f32 %v3525, 1.0
        %v3527 = vrcp.pop %v3526
        %v3528 = vmul.f32 1.0, %v3527
        %v3529 = vmul.f32 %v3528, 1.0614054
        %v3530 = vadd.f32 %v3529, -1.4531521
        %v3531 = vmul.f32 %v3530, %v3528
        %v3532 = vadd.f32 %v3531, 1.4214138
        %v3533 = vmul.f32 %v3532, %v3528
        %v3534 = vadd.f32 %v3533, -0.28449672
        %v3535 = vmul.f32 %v3534, %v3528
        %v3536 = vadd.f32 %v3535, 0.2548296
        %v3537 = vmul.f32 %v3536, %v3528
        %v3538 = vsub.f32 0.0, %v3524
        %v3539 = vmul.f32 %v3538, %v3524
        %v3540 = vmul.f32 %v3539, 1.442695
        %v3541 = vpow.pop %v3540
        %v3542 = vmul.f32 %v3537, %v3541
        %v3543 = vsub.f32 1.0, %v3542
        %vm3544 = vcmp.ge.f32.partialorder %v3523, 0.0
        %v3545 = vsub.f32 0.0, %v3543
        %v3546 = vsel %vm3544, %v3543, %v3545
        %v3547 = vadd.f32 %v3546, 1.0
        %v3548 = vmul.f32 %v3522, %v3547
        %v3549 = vld [vmem:[%s20] sm:$0xff]
        %v3550 = vld [vmem:[%s20 + $0x8] sm:$0xff]
        %v3551 = vld [vmem:[%s20 + $0x10] sm:$0xff]
        %v3552 = vld [vmem:[%s20 + $0x18] sm:$0xff]
        %v3553 = vld [vmem:[%s21] sm:$0x1]
        %v3555 = vsel %vm690, %v3548, 0
        %3557 = vmatprep.subr.mxu0 0.0
        %3558 = vmatpush1.msra.mxu0 %v3549
        %3559 = vmatprep.subr.mxu0 0.0
        %3560 = vmatpush1.msra.mxu0 %v3550
        %3561 = vmatprep.subr.mxu0 0.0
        %3562 = vmatpush1.msra.mxu0 %v3551
        %3563 = vmatprep.subr.mxu0 0.0
        %3564 = vmatpush1.msra.mxu0 %v3552
        %3565 = vmatprep.subr.mxu0 0.0
        %3566 = vmatpush1.msra.mxu0 0.0
        %3567 = vmatprep.subr.mxu0 0.0
        %3568 = vmatpush1.msra.mxu0 0.0
        %3569 = vmatprep.subr.mxu0 0.0
        %3570 = vmatpush1.msra.mxu0 0.0
        %3571 = vmatprep.subr.mxu0 0.0
        %3572 = vmatpush1.msra.mxu0 0.0
        %3573 = vmatprep.subr.mxu0 0.0
        %3574 = vmatpush1.msra.mxu0 0.0
        %3575 = vmatprep.subr.mxu0 0.0
        %3576 = vmatpush1.msra.mxu0 0.0
        %3577 = vmatprep.subr.mxu0 0.0
        %3578 = vmatpush1.msra.mxu0 0.0
        %3579 = vmatprep.subr.mxu0 0.0
        %3580 = vmatpush1.msra.mxu0 0.0
        %3581 = vmatprep.subr.mxu0 0.0
        %3582 = vmatpush1.msra.mxu0 0.0
        %3583 = vmatprep.subr.mxu0 0.0
        %3584 = vmatpush1.msra.mxu0 0.0
        %3585 = vmatprep.subr.mxu0 0.0
        %3586 = vmatpush1.msra.mxu0 0.0
        %3587 = vmatprep.subr.mxu0 0.0
        %3588 = vmatpush1.msra.mxu0 0.0
        %3589 = vmatprep.subr.mxu0 0.0
        %3590 = vmatpush1.msra.mxu0 0.0
        %3591 = vmatprep.subr.mxu0 0.0
        %3592 = vmatpush1.msra.mxu0 0.0
        %3593 = vmatprep.subr.mxu0 0.0
        %3594 = vmatpush1.msra.mxu0 0.0
        %3595 = vmatprep.subr.mxu0 0.0
        %3596 = vmatpush1.msra.mxu0 0.0
        %3597 = vmatprep.subr.mxu0 0.0
        %3598 = vmatpush1.msra.mxu0 0.0
        %3599 = vmatprep.subr.mxu0 0.0
        %3600 = vmatpush1.msra.mxu0 0.0
        %3601 = vmatprep.subr.mxu0 0.0
        %3602 = vmatpush1.msra.mxu0 0.0
        %3603 = vmatprep.subr.mxu0 0.0
        %3604 = vmatpush1.msra.mxu0 0.0
        %3605 = vmatprep.subr.mxu0 0.0
        %3606 = vmatpush1.msra.mxu0 0.0
        %3607 = vmatprep.subr.mxu0 0.0
        %3608 = vmatpush1.msra.mxu0 0.0
        %3609 = vmatprep.subr.mxu0 0.0
        %3610 = vmatpush1.msra.mxu0 0.0
        %3611 = vmatprep.subr.mxu0 0.0
        %3612 = vmatpush1.msra.mxu0 0.0
        %3613 = vmatprep.subr.mxu0 0.0
        %3614 = vmatpush1.msra.mxu0 0.0
        %3615 = vmatprep.subr.mxu0 0.0
        %3616 = vmatpush1.msra.mxu0 0.0
        %3617 = vmatprep.subr.mxu0 0.0
        %3618 = vmatpush1.msra.mxu0 0.0
        %3619 = vmatprep.subr.mxu0 0.0
        %3620 = vmatpush1.msra.mxu0 0.0
        %3621 = vmatprep.mubr.f32.mxu0 0.0
        %3622 = vmatmul.mubr.f32.gmra.mrb[0].mxu0 %v3555
        %v3623 = vpop.f32.mrb[0].mxu0
        %v3624 = vadd.f32 %v3553, %v3623
        %v3625 = vpop.f32.mrb[0].mxu0
        %3626 = vdwg.mxu0
        %vm3627 = vcmask 73728
        %3628 = vst.msk [vmem:[%s673] sm:$0x1] %vm3627, %v3624
        %s3629 = sand.u32 %s511, 1
        %s3630 = scalar_lea.sflag [#allocation3], %s3629
        %s3631 = sand.u32 %s511, 1
        %s3632 = scalar_lea.vmem [#allocation2], %s3631
        // Predicated region
        $region109: #{forward.9} parent=107 // pred_check
          %p3633 = pneg %p521
        $region110: #{forward.9} parent=107 // pred_check_branch
          %3635 = sbr.rel (%p3633) target = $region112
        $region111: #{forward.9} parent=107 // pred_region
          %s3637 = ssub.s32 16, 16
          %3638 = vsyncadd %s3630, %s3637
          %s3639 = smul.addr %s36, 16
          %s3640 = scalar_lea.hbm %s22, %s3639
          %s3642 = sshll.u32 %s3632, 4
          %s3643 = int_to_ptr.vmem [resolvable:$true] %s3642
          %3645 = dma.vmem_to_hbm [thread:$0]  %s3643, 16, %s3640, %s3630
        $region112: #{forward.9} parent=107 // pred_fallthru
          _
      $region108: #{forward.9} parent=5 // pred_fallthru
        _
      %p3646 = scmp.le.s32.totalorder 2, %s31
      // Predicated region
      $region113: #{forward.9} parent=5 // pred_check
        %p3647 = pneg %p3646
      $region114: #{forward.9} parent=5 // pred_check_branch
        %3649 = sbr.rel (%p3647) target = $region116
      $region115: #{forward.9} parent=5 // pred_region
        %s3650 = ssub.s32 %s31, 2
        // Predicated region
        $region117: #{forward.9} parent=115 // pred_check
          %p3651 = pneg %p527
        $region118: #{forward.9} parent=115 // pred_check_branch
          %3653 = sbr.rel (%p3651) target = $region120
        $region119: #{forward.9} parent=115 // pred_region
          %s3654 = sand.u32 %s512, 1
          %s3655 = scalar_lea.sflag [#allocation3], %s3654
          %s3656 = sand.u32 %s512, 1
          %s3657 = scalar_lea.vmem [#allocation2], %s3656
          %3658 = dma.done %s3655, 16
        $region120: #{forward.9} parent=115 // pred_fallthru
          _
      $region116: #{forward.9} parent=5 // pred_fallthru
        _
    $region6: #{forward.9} parent=1 // loop_footer
      %s35 = sadd.s32 1, %s31
    $region7: #{forward.9} parent=1 // loop_footer_branch
      %30 = sbr.rel target = $region3
    $region8: #{forward.9} parent=1 // loop_exit
      _
    %3659 = vsyncpa [#allocation3], 1
    %s3660 = scalar_lea.sflag [#allocation3], 1
    %3661 = vsyncpa %s3660, 1

</llo_original>
